<compile_context>
chip_gen: v7x
topology: tpu7x:2x2x1
jax: 0.10.0
libtpu: 0.0.40
codegen_flags: <defaults>
</compile_context>

<pallas_src>
import math

import jax
import jax.numpy as jnp
from jax.experimental import pallas as pl
from jax.experimental.pallas import tpu as pltpu

# Make the pure-JAX reference (and the traced in-kernel dots) use true f32
# matmul precision so the correctness check below can be tight.
jax.config.update("jax_default_matmul_precision", "highest")

D_MODEL = 32
NUM_HEADS = 4
HEAD_DIM = D_MODEL // NUM_HEADS
SCALE = math.sqrt(HEAD_DIM)


def make_mha_kernel(B, T):
    D = D_MODEL
    H = NUM_HEADS
    hd = HEAD_DIM

    def kernel(q_ref, k_ref, v_ref, wq_ref, wk_ref, wv_ref, b_ref, wo_ref,
               out_ref, attn_ref):
        # q/k/v_ref: (B*T, D)
        # wq/wk/wv/wo_ref: (D, D)   (wq pre-scaled by 1/sqrt(head_dim))
        # b_ref: (4, D) rows = [bq/scale, bk, bv, bo]
        # out_ref:  (B*T, D)
        # attn_ref: (B, H, T, T)   -- final layout, no wrapper transpose

        q = (jnp.dot(q_ref[...], wq_ref[...],
                     preferred_element_type=jnp.float32)
             + b_ref[0:1, :]).reshape(B, T, D)
        k = (jnp.dot(k_ref[...], wk_ref[...],
                     preferred_element_type=jnp.float32)
             + b_ref[1:2, :]).reshape(B, T, D)
        v = (jnp.dot(v_ref[...], wv_ref[...],
                     preferred_element_type=jnp.float32)
             + b_ref[2:3, :]).reshape(B, T, D)

        # Static loop over heads (H=4); each head is batched over B via a
        # 3-D einsum (single leading batch dim -> known-good Mosaic lowering).
        head_outs = []
        for h in range(H):
            lo = h * hd
            qh = q[:, :, lo:lo + hd]            # (B, T, hd)
            kh = k[:, :, lo:lo + hd]
            vh = v[:, :, lo:lo + hd]

            # scores (the 1/sqrt(head_dim) scale is folded into wq/bq)
            s = jnp.einsum('btd,bsd->bts', qh, kh,
                           preferred_element_type=jnp.float32)      # (B, T, T)

            # numerically-stable softmax; EXACT reciprocal so the stored
            # attention weights sum to 1 (PyTorch parity).
            m = jnp.max(s, axis=-1, keepdims=True)
            e = jnp.exp(s - m)
            denom = jnp.sum(e, axis=-1, keepdims=True)
            w = e * pl.reciprocal(denom, approx=False)

            # store this head directly into the (B, H, T, T) output layout
            attn_ref[:, h, :, :] = w

            head_outs.append(
                jnp.einsum('bts,bsd->btd', w, vh,
                           preferred_element_type=jnp.float32))      # (B, T, hd)

        # One lane-concatenate + a single K=D output projection (instead of
        # four K=hd partial matmuls + accumulator adds).
        ao = jnp.concatenate(head_outs, axis=-1).reshape(B * T, D)    # (B*T, D)
        out_ref[...] = (jnp.dot(ao, wo_ref[...],
                                preferred_element_type=jnp.float32)
                        + b_ref[3:4, :])

    return kernel


@jax.jit
def mha_forward(q, k, v, wq_s, wk, wv, wo, biases):
    """Fused MHA Pallas kernel.

    Takes the pre-packed parameters from pack_params().
    Returns (output (B,T,D), attn_weights (B,H,T,T)).
    """
    B, T, D = q.shape
    H = NUM_HEADS

    q2 = q.reshape(B * T, D)
    k2 = k.reshape(B * T, D)
    v2 = v.reshape(B * T, D)

    flops = (4 * 2 * B * T * D * D                    # 3 input proj + out proj
             + 2 * 2 * B * H * T * T * HEAD_DIM)      # scores + attn @ V
    transcendentals = B * H * T * T                   # exp
    bytes_accessed = 4 * (3 * B * T * D + 4 * D * D + 4 * D
                          + B * T * D + B * H * T * T)

    kernel = make_mha_kernel(B, T)

    out2d, attn = pl.pallas_call(
        kernel,
        # Whole problem in a single grid step (no per-step pipeline overhead).
        # TODO(synk): on v7x add a leading core-parallel batch axis for the 2 TCs.
        grid=(1,),
        in_specs=[
            pl.BlockSpec((B * T, D), lambda i: (0, 0)),    # q
            pl.BlockSpec((B * T, D), lambda i: (0, 0)),    # k
            pl.BlockSpec((B * T, D), lambda i: (0, 0)),    # v
            pl.BlockSpec((D, D), lambda i: (0, 0)),        # wq (pre-scaled)
            pl.BlockSpec((D, D), lambda i: (0, 0)),        # wk
            pl.BlockSpec((D, D), lambda i: (0, 0)),        # wv
            pl.BlockSpec((4, D), lambda i: (0, 0)),        # biases [bq/s, bk, bv, bo]
            pl.BlockSpec((D, D), lambda i: (0, 0)),        # wo
        ],
        out_specs=[
            pl.BlockSpec((B * T, D), lambda i: (0, 0)),
            pl.BlockSpec((B, H, T, T), lambda i: (0, 0, 0, 0)),
        ],
        out_shape=(
            jax.ShapeDtypeStruct((B * T, D), jnp.float32),
            jax.ShapeDtypeStruct((B, H, T, T), jnp.float32),
        ),
        compiler_params=pltpu.CompilerParams(
            dimension_semantics=("arbitrary",)),
        cost_estimate=pl.CostEstimate(
            flops=flops,
            transcendentals=transcendentals,
            bytes_accessed=bytes_accessed),
    )(q2, k2, v2, wq_s, wk, wv, biases, wo)

    return out2d.reshape(B, T, D), attn


def pack_params(params):
    """One-time packing (do NOT call per forward step):
    fold 1/sqrt(head_dim) into the Q projection and stack biases into (4, D)."""
    wq, bq, wk, bk, wv, bv, wo, bo = params
    wq_s = wq / SCALE
    bq_s = bq / SCALE
    biases = jnp.concatenate([bq_s, bk, bv, bo], axis=0)   # (4, D)
    return wq_s, wk, wv, wo, biases


def init_params(key):
    """Deterministic PyTorch-Linear-like init. Weights returned as (in, out)."""
    ks = jax.random.split(key, 8)
    bound = 1.0 / math.sqrt(D_MODEL)

    def lin(kw, kb):
        w = jax.random.uniform(kw, (D_MODEL, D_MODEL), jnp.float32, -bound, bound)
        b = jax.random.uniform(kb, (1, D_MODEL), jnp.float32, -bound, bound)
        return w, b  # w already (in_features, out_features)

    wq, bq = lin(ks[0], ks[1])
    wk, bk = lin(ks[2], ks[3])
    wv, bv = lin(ks[4], ks[5])
    wo, bo = lin(ks[6], ks[7])
    return (wq, bq, wk, bk, wv, bv, wo, bo)


def mha_reference(q, k, v, params):
    """Pure-JAX reference matching the PyTorch forward (mask=None, dropout=0)."""
    wq, bq, wk, bk, wv, bv, wo, bo = params
    B, T, D = q.shape
    Q = q @ wq + bq
    K = k @ wk + bk
    V = v @ wv + bv
    Q = Q.reshape(B, T, NUM_HEADS, HEAD_DIM).transpose(0, 2, 1, 3)
    K = K.reshape(B, T, NUM_HEADS, HEAD_DIM).transpose(0, 2, 1, 3)
    V = V.reshape(B, T, NUM_HEADS, HEAD_DIM).transpose(0, 2, 1, 3)
    scores = jnp.einsum('bhtd,bhsd->bhts', Q, K) / SCALE
    w = jax.nn.softmax(scores, axis=-1)
    ao = jnp.einsum('bhts,bhsd->bhtd', w, V)
    ao = ao.transpose(0, 2, 1, 3).reshape(B, T, D)
    return ao @ wo + bo, w


if __name__ == "__main__":
    B, T = 2, 8
    key = jax.random.PRNGKey(0)
    kp, kq, kk, kv = jax.random.split(key, 4)

    params = init_params(kp)
    packed = pack_params(params)   # cached once; reused for every forward call

    q = jax.random.normal(kq, (B, T, D_MODEL), jnp.float32)
    k = jax.random.normal(kk, (B, T, D_MODEL), jnp.float32)
    v = jax.random.normal(kv, (B, T, D_MODEL), jnp.float32)

    out, attn = mha_forward(q, k, v, *packed)
    out = jax.block_until_ready(out)
    attn = jax.block_until_ready(attn)

    # The softmax now uses the exact reciprocal: rows of the returned attention
    # weights sum to 1 (this was the correctness concern with approx=True).
    assert jnp.allclose(jnp.sum(attn, axis=-1), 1.0, atol=1e-6)

    out_ref, attn_ref = mha_reference(q, k, v, params)
    # Tolerance tightened vs the previous 5e-3 (which had to absorb the approx
    # reciprocal); remaining slack only covers matmul rounding differences.
    assert jnp.allclose(out, out_ref, atol=2e-3, rtol=2e-3)
    assert jnp.allclose(attn, attn_ref, atol=2e-3, rtol=2e-3)

    print("KERNEL_OK")
</pallas_src>

<mosaic_0001>
module attributes {stable_mosaic.version = 11 : i64} {
  func.func @kernel(%arg0: i32, %arg1: memref<16x32xf32, #tpu.memory_space<vmem>>, %arg2: memref<16x32xf32, #tpu.memory_space<vmem>>, %arg3: memref<16x32xf32, #tpu.memory_space<vmem>>, %arg4: memref<32x32xf32, #tpu.memory_space<vmem>>, %arg5: memref<32x32xf32, #tpu.memory_space<vmem>>, %arg6: memref<32x32xf32, #tpu.memory_space<vmem>>, %arg7: memref<4x32xf32, #tpu.memory_space<vmem>>, %arg8: memref<32x32xf32, #tpu.memory_space<vmem>>, %arg9: memref<16x32xf32, #tpu.memory_space<vmem>>, %arg10: memref<2x4x8x8xf32, #tpu.memory_space<vmem>>) attributes {dimension_semantics = [#tpu.dimension_semantics<arbitrary>], iteration_bounds = array<i64: 1>, scalar_prefetch = 0 : i64, scratch_operands = 0 : i64, tpu.core_type = #tpu.core_type<tc>, window_params = [{pipeline_mode = #tpu.pipeline_mode<synchronous>, transform_indices = @transform_0, window_bounds = array<i64: 16, 32>}, {pipeline_mode = #tpu.pipeline_mode<synchronous>, transform_indices = @transform_1, window_bounds = array<i64: 16, 32>}, {pipeline_mode = #tpu.pipeline_mode<synchronous>, transform_indices = @transform_2, window_bounds = array<i64: 16, 32>}, {pipeline_mode = #tpu.pipeline_mode<synchronous>, transform_indices = @transform_3, window_bounds = array<i64: 32, 32>}, {pipeline_mode = #tpu.pipeline_mode<synchronous>, transform_indices = @transform_4, window_bounds = array<i64: 32, 32>}, {pipeline_mode = #tpu.pipeline_mode<synchronous>, transform_indices = @transform_5, window_bounds = array<i64: 32, 32>}, {pipeline_mode = #tpu.pipeline_mode<synchronous>, transform_indices = @transform_6, window_bounds = array<i64: 4, 32>}, {pipeline_mode = #tpu.pipeline_mode<synchronous>, transform_indices = @transform_7, window_bounds = array<i64: 32, 32>}, {pipeline_mode = #tpu.pipeline_mode<synchronous>, transform_indices = @transform_8, window_bounds = array<i64: 16, 32>}, {pipeline_mode = #tpu.pipeline_mode<synchronous>, transform_indices = @transform_9, window_bounds = array<i64: 2, 4, 8, 8>}]} {
    %c0 = arith.constant 0 : index
    %c0_0 = arith.constant 0 : index
    %0 = vector.load %arg1[%c0, %c0_0] : memref<16x32xf32, #tpu.memory_space<vmem>>, vector<16x32xf32>
    %c0_1 = arith.constant 0 : index
    %c0_2 = arith.constant 0 : index
    %1 = vector.load %arg4[%c0_1, %c0_2] : memref<32x32xf32, #tpu.memory_space<vmem>>, vector<32x32xf32>
    %cst = arith.constant dense<0.000000e+00> : vector<16x32xf32>
    %2 = tpu.matmul %0, %1, %cst {dimension_numbers = #tpu.dot_dimension_numbers<[1], [0], [0], [1], [0, 0, 1, 1], [], []>, precision = #tpu.contract_precision<fp32>} : vector<16x32xf32>, vector<32x32xf32>, vector<16x32xf32> -> vector<16x32xf32>
    %c0_3 = arith.constant 0 : index
    %c0_4 = arith.constant 0 : index
    %3 = vector.load %arg7[%c0_3, %c0_4] : memref<4x32xf32, #tpu.memory_space<vmem>>, vector<1x32xf32>
    %4 = vector.broadcast %3 : vector<1x32xf32> to vector<16x32xf32>
    %5 = arith.addf %2, %4 : vector<16x32xf32>
    %6 = vector.shape_cast %5 : vector<16x32xf32> to vector<2x8x32xf32>
    %c0_5 = arith.constant 0 : index
    %c0_6 = arith.constant 0 : index
    %7 = vector.load %arg2[%c0_5, %c0_6] : memref<16x32xf32, #tpu.memory_space<vmem>>, vector<16x32xf32>
    %c0_7 = arith.constant 0 : index
    %c0_8 = arith.constant 0 : index
    %8 = vector.load %arg5[%c0_7, %c0_8] : memref<32x32xf32, #tpu.memory_space<vmem>>, vector<32x32xf32>
    %cst_9 = arith.constant dense<0.000000e+00> : vector<16x32xf32>
    %9 = tpu.matmul %7, %8, %cst_9 {dimension_numbers = #tpu.dot_dimension_numbers<[1], [0], [0], [1], [0, 0, 1, 1], [], []>, precision = #tpu.contract_precision<fp32>} : vector<16x32xf32>, vector<32x32xf32>, vector<16x32xf32> -> vector<16x32xf32>
    %c1 = arith.constant 1 : index
    %c0_10 = arith.constant 0 : index
    %10 = vector.load %arg7[%c1, %c0_10] : memref<4x32xf32, #tpu.memory_space<vmem>>, vector<1x32xf32>
    %11 = vector.broadcast %10 : vector<1x32xf32> to vector<16x32xf32>
    %12 = arith.addf %9, %11 : vector<16x32xf32>
    %13 = vector.shape_cast %12 : vector<16x32xf32> to vector<2x8x32xf32>
    %c0_11 = arith.constant 0 : index
    %c0_12 = arith.constant 0 : index
    %14 = vector.load %arg3[%c0_11, %c0_12] : memref<16x32xf32, #tpu.memory_space<vmem>>, vector<16x32xf32>
    %c0_13 = arith.constant 0 : index
    %c0_14 = arith.constant 0 : index
    %15 = vector.load %arg6[%c0_13, %c0_14] : memref<32x32xf32, #tpu.memory_space<vmem>>, vector<32x32xf32>
    %cst_15 = arith.constant dense<0.000000e+00> : vector<16x32xf32>
    %16 = tpu.matmul %14, %15, %cst_15 {dimension_numbers = #tpu.dot_dimension_numbers<[1], [0], [0], [1], [0, 0, 1, 1], [], []>, precision = #tpu.contract_precision<fp32>} : vector<16x32xf32>, vector<32x32xf32>, vector<16x32xf32> -> vector<16x32xf32>
    %c2 = arith.constant 2 : index
    %c0_16 = arith.constant 0 : index
    %17 = vector.load %arg7[%c2, %c0_16] : memref<4x32xf32, #tpu.memory_space<vmem>>, vector<1x32xf32>
    %18 = vector.broadcast %17 : vector<1x32xf32> to vector<16x32xf32>
    %19 = arith.addf %16, %18 : vector<16x32xf32>
    %20 = vector.shape_cast %19 : vector<16x32xf32> to vector<2x8x32xf32>
    %21 = vector.extract_strided_slice %6 {offsets = [0, 0, 0], sizes = [2, 8, 8], strides = [1, 1, 1]} : vector<2x8x32xf32> to vector<2x8x8xf32>
    %22 = vector.extract_strided_slice %13 {offsets = [0, 0, 0], sizes = [2, 8, 8], strides = [1, 1, 1]} : vector<2x8x32xf32> to vector<2x8x8xf32>
    %23 = vector.extract_strided_slice %20 {offsets = [0, 0, 0], sizes = [2, 8, 8], strides = [1, 1, 1]} : vector<2x8x32xf32> to vector<2x8x8xf32>
    "tpu.trace_start"() <{level = 10 : i32, message = "btd,bsd->bts"}> : () -> ()
    %cst_17 = arith.constant dense<0.000000e+00> : vector<2x8x8xf32>
    %24 = tpu.matmul %21, %22, %cst_17 {dimension_numbers = #tpu.dot_dimension_numbers<[2], [2], [1], [1], [0, 0, 0, 1, 1, 1], [0], [0]>, precision = #tpu.contract_precision<fp32>} : vector<2x8x8xf32>, vector<2x8x8xf32>, vector<2x8x8xf32> -> vector<2x8x8xf32>
    "tpu.trace_stop"() : () -> ()
    %cst_18 = arith.constant dense<0xFF800000> : vector<2x8xf32>
    %25 = vector.multi_reduction <maximumf>, %24, %cst_18 [2] : vector<2x8x8xf32> to vector<2x8xf32>
    %26 = vector.shape_cast %25 : vector<2x8xf32> to vector<2x8x1xf32>
    %27 = vector.broadcast %26 : vector<2x8x1xf32> to vector<2x8x8xf32>
    %28 = arith.subf %24, %27 : vector<2x8x8xf32>
    %29 = math.exp %28 : vector<2x8x8xf32>
    %cst_19 = arith.constant dense<0.000000e+00> : vector<2x8xf32>
    %30 = vector.multi_reduction <add>, %29, %cst_19 [2] : vector<2x8x8xf32> to vector<2x8xf32>
    %31 = vector.shape_cast %30 : vector<2x8xf32> to vector<2x8x1xf32>
    %32 = tpu.reciprocal %31 : vector<2x8x1xf32> -> vector<2x8x1xf32>
    %33 = vector.broadcast %32 : vector<2x8x1xf32> to vector<2x8x8xf32>
    %34 = arith.mulf %29, %33 : vector<2x8x8xf32>
    %c0_20 = arith.constant 0 : index
    %c0_21 = arith.constant 0 : index
    %c0_22 = arith.constant 0 : index
    %c0_23 = arith.constant 0 : index
    %35 = vector.load %arg10[%c0_20, %c0_21, %c0_22, %c0_23] : memref<2x4x8x8xf32, #tpu.memory_space<vmem>>, vector<2x1x8x8xf32>
    %36 = vector.shape_cast %35 : vector<2x1x8x8xf32> to vector<2x8x8xf32>
    %37 = vector.shape_cast %34 : vector<2x8x8xf32> to vector<2x1x8x8xf32>
    tpu.vector_store %arg10[%c0_20, %c0_21, %c0_22, %c0_23], %37 {strides = array<i32>} : memref<2x4x8x8xf32, #tpu.memory_space<vmem>>, vector<2x1x8x8xf32>,
    "tpu.trace_start"() <{level = 10 : i32, message = "bts,bsd->btd"}> : () -> ()
    %cst_24 = arith.constant dense<0.000000e+00> : vector<2x8x8xf32>
    %38 = tpu.matmul %34, %23, %cst_24 {dimension_numbers = #tpu.dot_dimension_numbers<[2], [1], [1], [2], [0, 0, 0, 1, 1, 2], [0], [0]>, precision = #tpu.contract_precision<fp32>} : vector<2x8x8xf32>, vector<2x8x8xf32>, vector<2x8x8xf32> -> vector<2x8x8xf32>
    "tpu.trace_stop"() : () -> ()
    %39 = vector.extract_strided_slice %6 {offsets = [0, 0, 8], sizes = [2, 8, 8], strides = [1, 1, 1]} : vector<2x8x32xf32> to vector<2x8x8xf32>
    %40 = vector.extract_strided_slice %13 {offsets = [0, 0, 8], sizes = [2, 8, 8], strides = [1, 1, 1]} : vector<2x8x32xf32> to vector<2x8x8xf32>
    %41 = vector.extract_strided_slice %20 {offsets = [0, 0, 8], sizes = [2, 8, 8], strides = [1, 1, 1]} : vector<2x8x32xf32> to vector<2x8x8xf32>
    "tpu.trace_start"() <{level = 10 : i32, message = "btd,bsd->bts"}> : () -> ()
    %cst_25 = arith.constant dense<0.000000e+00> : vector<2x8x8xf32>
    %42 = tpu.matmul %39, %40, %cst_25 {dimension_numbers = #tpu.dot_dimension_numbers<[2], [2], [1], [1], [0, 0, 0, 1, 1, 1], [0], [0]>, precision = #tpu.contract_precision<fp32>} : vector<2x8x8xf32>, vector<2x8x8xf32>, vector<2x8x8xf32> -> vector<2x8x8xf32>
    "tpu.trace_stop"() : () -> ()
    %cst_26 = arith.constant dense<0xFF800000> : vector<2x8xf32>
    %43 = vector.multi_reduction <maximumf>, %42, %cst_26 [2] : vector<2x8x8xf32> to vector<2x8xf32>
    %44 = vector.shape_cast %43 : vector<2x8xf32> to vector<2x8x1xf32>
    %45 = vector.broadcast %44 : vector<2x8x1xf32> to vector<2x8x8xf32>
    %46 = arith.subf %42, %45 : vector<2x8x8xf32>
    %47 = math.exp %46 : vector<2x8x8xf32>
    %cst_27 = arith.constant dense<0.000000e+00> : vector<2x8xf32>
    %48 = vector.multi_reduction <add>, %47, %cst_27 [2] : vector<2x8x8xf32> to vector<2x8xf32>
    %49 = vector.shape_cast %48 : vector<2x8xf32> to vector<2x8x1xf32>
    %50 = tpu.reciprocal %49 : vector<2x8x1xf32> -> vector<2x8x1xf32>
    %51 = vector.broadcast %50 : vector<2x8x1xf32> to vector<2x8x8xf32>
    %52 = arith.mulf %47, %51 : vector<2x8x8xf32>
    %c0_28 = arith.constant 0 : index
    %c1_29 = arith.constant 1 : index
    %c0_30 = arith.constant 0 : index
    %c0_31 = arith.constant 0 : index
    %53 = vector.load %arg10[%c0_28, %c1_29, %c0_30, %c0_31] : memref<2x4x8x8xf32, #tpu.memory_space<vmem>>, vector<2x1x8x8xf32>
    %54 = vector.shape_cast %53 : vector<2x1x8x8xf32> to vector<2x8x8xf32>
    %55 = vector.shape_cast %52 : vector<2x8x8xf32> to vector<2x1x8x8xf32>
    tpu.vector_store %arg10[%c0_28, %c1_29, %c0_30, %c0_31], %55 {strides = array<i32>} : memref<2x4x8x8xf32, #tpu.memory_space<vmem>>, vector<2x1x8x8xf32>,
    "tpu.trace_start"() <{level = 10 : i32, message = "bts,bsd->btd"}> : () -> ()
    %cst_32 = arith.constant dense<0.000000e+00> : vector<2x8x8xf32>
    %56 = tpu.matmul %52, %41, %cst_32 {dimension_numbers = #tpu.dot_dimension_numbers<[2], [1], [1], [2], [0, 0, 0, 1, 1, 2], [0], [0]>, precision = #tpu.contract_precision<fp32>} : vector<2x8x8xf32>, vector<2x8x8xf32>, vector<2x8x8xf32> -> vector<2x8x8xf32>
    "tpu.trace_stop"() : () -> ()
    %57 = vector.extract_strided_slice %6 {offsets = [0, 0, 16], sizes = [2, 8, 8], strides = [1, 1, 1]} : vector<2x8x32xf32> to vector<2x8x8xf32>
    %58 = vector.extract_strided_slice %13 {offsets = [0, 0, 16], sizes = [2, 8, 8], strides = [1, 1, 1]} : vector<2x8x32xf32> to vector<2x8x8xf32>
    %59 = vector.extract_strided_slice %20 {offsets = [0, 0, 16], sizes = [2, 8, 8], strides = [1, 1, 1]} : vector<2x8x32xf32> to vector<2x8x8xf32>
    "tpu.trace_start"() <{level = 10 : i32, message = "btd,bsd->bts"}> : () -> ()
    %cst_33 = arith.constant dense<0.000000e+00> : vector<2x8x8xf32>
    %60 = tpu.matmul %57, %58, %cst_33 {dimension_numbers = #tpu.dot_dimension_numbers<[2], [2], [1], [1], [0, 0, 0, 1, 1, 1], [0], [0]>, precision = #tpu.contract_precision<fp32>} : vector<2x8x8xf32>, vector<2x8x8xf32>, vector<2x8x8xf32> -> vector<2x8x8xf32>
    "tpu.trace_stop"() : () -> ()
    %cst_34 = arith.constant dense<0xFF800000> : vector<2x8xf32>
    %61 = vector.multi_reduction <maximumf>, %60, %cst_34 [2] : vector<2x8x8xf32> to vector<2x8xf32>
    %62 = vector.shape_cast %61 : vector<2x8xf32> to vector<2x8x1xf32>
    %63 = vector.broadcast %62 : vector<2x8x1xf32> to vector<2x8x8xf32>
    %64 = arith.subf %60, %63 : vector<2x8x8xf32>
    %65 = math.exp %64 : vector<2x8x8xf32>
    %cst_35 = arith.constant dense<0.000000e+00> : vector<2x8xf32>
    %66 = vector.multi_reduction <add>, %65, %cst_35 [2] : vector<2x8x8xf32> to vector<2x8xf32>
    %67 = vector.shape_cast %66 : vector<2x8xf32> to vector<2x8x1xf32>
    %68 = tpu.reciprocal %67 : vector<2x8x1xf32> -> vector<2x8x1xf32>
    %69 = vector.broadcast %68 : vector<2x8x1xf32> to vector<2x8x8xf32>
    %70 = arith.mulf %65, %69 : vector<2x8x8xf32>
    %c0_36 = arith.constant 0 : index
    %c2_37 = arith.constant 2 : index
    %c0_38 = arith.constant 0 : index
    %c0_39 = arith.constant 0 : index
    %71 = vector.load %arg10[%c0_36, %c2_37, %c0_38, %c0_39] : memref<2x4x8x8xf32, #tpu.memory_space<vmem>>, vector<2x1x8x8xf32>
    %72 = vector.shape_cast %71 : vector<2x1x8x8xf32> to vector<2x8x8xf32>
    %73 = vector.shape_cast %70 : vector<2x8x8xf32> to vector<2x1x8x8xf32>
    tpu.vector_store %arg10[%c0_36, %c2_37, %c0_38, %c0_39], %73 {strides = array<i32>} : memref<2x4x8x8xf32, #tpu.memory_space<vmem>>, vector<2x1x8x8xf32>,
    "tpu.trace_start"() <{level = 10 : i32, message = "bts,bsd->btd"}> : () -> ()
    %cst_40 = arith.constant dense<0.000000e+00> : vector<2x8x8xf32>
    %74 = tpu.matmul %70, %59, %cst_40 {dimension_numbers = #tpu.dot_dimension_numbers<[2], [1], [1], [2], [0, 0, 0, 1, 1, 2], [0], [0]>, precision = #tpu.contract_precision<fp32>} : vector<2x8x8xf32>, vector<2x8x8xf32>, vector<2x8x8xf32> -> vector<2x8x8xf32>
    "tpu.trace_stop"() : () -> ()
    %75 = vector.extract_strided_slice %6 {offsets = [0, 0, 24], sizes = [2, 8, 8], strides = [1, 1, 1]} : vector<2x8x32xf32> to vector<2x8x8xf32>
    %76 = vector.extract_strided_slice %13 {offsets = [0, 0, 24], sizes = [2, 8, 8], strides = [1, 1, 1]} : vector<2x8x32xf32> to vector<2x8x8xf32>
    %77 = vector.extract_strided_slice %20 {offsets = [0, 0, 24], sizes = [2, 8, 8], strides = [1, 1, 1]} : vector<2x8x32xf32> to vector<2x8x8xf32>
    "tpu.trace_start"() <{level = 10 : i32, message = "btd,bsd->bts"}> : () -> ()
    %cst_41 = arith.constant dense<0.000000e+00> : vector<2x8x8xf32>
    %78 = tpu.matmul %75, %76, %cst_41 {dimension_numbers = #tpu.dot_dimension_numbers<[2], [2], [1], [1], [0, 0, 0, 1, 1, 1], [0], [0]>, precision = #tpu.contract_precision<fp32>} : vector<2x8x8xf32>, vector<2x8x8xf32>, vector<2x8x8xf32> -> vector<2x8x8xf32>
    "tpu.trace_stop"() : () -> ()
    %cst_42 = arith.constant dense<0xFF800000> : vector<2x8xf32>
    %79 = vector.multi_reduction <maximumf>, %78, %cst_42 [2] : vector<2x8x8xf32> to vector<2x8xf32>
    %80 = vector.shape_cast %79 : vector<2x8xf32> to vector<2x8x1xf32>
    %81 = vector.broadcast %80 : vector<2x8x1xf32> to vector<2x8x8xf32>
    %82 = arith.subf %78, %81 : vector<2x8x8xf32>
    %83 = math.exp %82 : vector<2x8x8xf32>
    %cst_43 = arith.constant dense<0.000000e+00> : vector<2x8xf32>
    %84 = vector.multi_reduction <add>, %83, %cst_43 [2] : vector<2x8x8xf32> to vector<2x8xf32>
    %85 = vector.shape_cast %84 : vector<2x8xf32> to vector<2x8x1xf32>
    %86 = tpu.reciprocal %85 : vector<2x8x1xf32> -> vector<2x8x1xf32>
    %87 = vector.broadcast %86 : vector<2x8x1xf32> to vector<2x8x8xf32>
    %88 = arith.mulf %83, %87 : vector<2x8x8xf32>
    %c0_44 = arith.constant 0 : index
    %c3 = arith.constant 3 : index
    %c0_45 = arith.constant 0 : index
    %c0_46 = arith.constant 0 : index
    %89 = vector.load %arg10[%c0_44, %c3, %c0_45, %c0_46] : memref<2x4x8x8xf32, #tpu.memory_space<vmem>>, vector<2x1x8x8xf32>
    %90 = vector.shape_cast %89 : vector<2x1x8x8xf32> to vector<2x8x8xf32>
    %91 = vector.shape_cast %88 : vector<2x8x8xf32> to vector<2x1x8x8xf32>
    tpu.vector_store %arg10[%c0_44, %c3, %c0_45, %c0_46], %91 {strides = array<i32>} : memref<2x4x8x8xf32, #tpu.memory_space<vmem>>, vector<2x1x8x8xf32>,
    "tpu.trace_start"() <{level = 10 : i32, message = "bts,bsd->btd"}> : () -> ()
    %cst_47 = arith.constant dense<0.000000e+00> : vector<2x8x8xf32>
    %92 = tpu.matmul %88, %77, %cst_47 {dimension_numbers = #tpu.dot_dimension_numbers<[2], [1], [1], [2], [0, 0, 0, 1, 1, 2], [0], [0]>, precision = #tpu.contract_precision<fp32>} : vector<2x8x8xf32>, vector<2x8x8xf32>, vector<2x8x8xf32> -> vector<2x8x8xf32>
    "tpu.trace_stop"() : () -> ()
    %93 = tpu.concatenate %38, %56, %74, %92 in 2 : vector<2x8x8xf32>, vector<2x8x8xf32>, vector<2x8x8xf32>, vector<2x8x8xf32> -> vector<2x8x32xf32>
    %94 = vector.shape_cast %93 : vector<2x8x32xf32> to vector<16x32xf32>
    %c0_48 = arith.constant 0 : index
    %c0_49 = arith.constant 0 : index
    %95 = vector.load %arg8[%c0_48, %c0_49] : memref<32x32xf32, #tpu.memory_space<vmem>>, vector<32x32xf32>
    %cst_50 = arith.constant dense<0.000000e+00> : vector<16x32xf32>
    %96 = tpu.matmul %94, %95, %cst_50 {dimension_numbers = #tpu.dot_dimension_numbers<[1], [0], [0], [1], [0, 0, 1, 1], [], []>, precision = #tpu.contract_precision<fp32>} : vector<16x32xf32>, vector<32x32xf32>, vector<16x32xf32> -> vector<16x32xf32>
    %c3_51 = arith.constant 3 : index
    %c0_52 = arith.constant 0 : index
    %97 = vector.load %arg7[%c3_51, %c0_52] : memref<4x32xf32, #tpu.memory_space<vmem>>, vector<1x32xf32>
    %98 = vector.broadcast %97 : vector<1x32xf32> to vector<16x32xf32>
    %99 = arith.addf %96, %98 : vector<16x32xf32>
    %c0_53 = arith.constant 0 : index
    %c0_54 = arith.constant 0 : index
    %100 = vector.load %arg9[%c0_53, %c0_54] : memref<16x32xf32, #tpu.memory_space<vmem>>, vector<16x32xf32>
    tpu.vector_store %arg9[%c0_53, %c0_54], %99 {strides = array<i32>} : memref<16x32xf32, #tpu.memory_space<vmem>>, vector<16x32xf32>,
    return
  }
  func.func @transform_0(%arg0: i32) -> (i32, i32) {
    %c0_i32 = arith.constant 0 : i32
    %c0_i32_0 = arith.constant 0 : i32
    %c0_i32_1 = arith.constant 0 : i32
    return %c0_i32, %c0_i32_0 : i32, i32
  }
  func.func @transform_1(%arg0: i32) -> (i32, i32) {
    %c0_i32 = arith.constant 0 : i32
    %c0_i32_0 = arith.constant 0 : i32
    %c0_i32_1 = arith.constant 0 : i32
    return %c0_i32, %c0_i32_0 : i32, i32
  }
  func.func @transform_2(%arg0: i32) -> (i32, i32) {
    %c0_i32 = arith.constant 0 : i32
    %c0_i32_0 = arith.constant 0 : i32
    %c0_i32_1 = arith.constant 0 : i32
    return %c0_i32, %c0_i32_0 : i32, i32
  }
  func.func @transform_3(%arg0: i32) -> (i32, i32) {
    %c0_i32 = arith.constant 0 : i32
    %c0_i32_0 = arith.constant 0 : i32
    %c0_i32_1 = arith.constant 0 : i32
    return %c0_i32, %c0_i32_0 : i32, i32
  }
  func.func @transform_4(%arg0: i32) -> (i32, i32) {
    %c0_i32 = arith.constant 0 : i32
    %c0_i32_0 = arith.constant 0 : i32
    %c0_i32_1 = arith.constant 0 : i32
    return %c0_i32, %c0_i32_0 : i32, i32
  }
  func.func @transform_5(%arg0: i32) -> (i32, i32) {
    %c0_i32 = arith.constant 0 : i32
    %c0_i32_0 = arith.constant 0 : i32
    %c0_i32_1 = arith.constant 0 : i32
    return %c0_i32, %c0_i32_0 : i32, i32
  }
  func.func @transform_6(%arg0: i32) -> (i32, i32) {
    %c0_i32 = arith.constant 0 : i32
    %c0_i32_0 = arith.constant 0 : i32
    %c0_i32_1 = arith.constant 0 : i32
    return %c0_i32, %c0_i32_0 : i32, i32
  }
  func.func @transform_7(%arg0: i32) -> (i32, i32) {
    %c0_i32 = arith.constant 0 : i32
    %c0_i32_0 = arith.constant 0 : i32
    %c0_i32_1 = arith.constant 0 : i32
    return %c0_i32, %c0_i32_0 : i32, i32
  }
  func.func @transform_8(%arg0: i32) -> (i32, i32) {
    %c0_i32 = arith.constant 0 : i32
    %c0_i32_0 = arith.constant 0 : i32
    %c0_i32_1 = arith.constant 0 : i32
    return %c0_i32, %c0_i32_0 : i32, i32
  }
  func.func @transform_9(%arg0: i32) -> (i32, i32, i32, i32) {
    %c0_i32 = arith.constant 0 : i32
    %c0_i32_0 = arith.constant 0 : i32
    %c0_i32_1 = arith.constant 0 : i32
    %c0_i32_2 = arith.constant 0 : i32
    %c0_i32_3 = arith.constant 0 : i32
    return %c0_i32, %c0_i32_0, %c0_i32_1, %c0_i32_2 : i32, i32, i32, i32
  }
}

</mosaic_0001>

<llo_original>
// kernel: mha_forward.1
$region0: #{mha_forward.1}
  #allocation0 [shape = 'u32[]', space=smem, size = 0x4, offset = 0x4, fixed_abs, tag = 'smem constant byte address 0x4 - core index']
  #allocation1 [shape = 'u32[144,128]{1,0:T(1,128)}', space=vmem, size = 0x12000, scoped, tag = 'internal scratch']
  %s0 = inlined_call_operand.hbm [shape: f32[16,32], index: 0, kind: input, shape index: {}]
  %s1 = inlined_call_operand.hbm [shape: f32[16,32], index: 1, kind: input, shape index: {}]
  %s2 = inlined_call_operand.hbm [shape: f32[16,32], index: 2, kind: input, shape index: {}]
  %s3 = inlined_call_operand.hbm [shape: f32[32,32], index: 3, kind: input, shape index: {}]
  %s4 = inlined_call_operand.hbm [shape: f32[32,32], index: 4, kind: input, shape index: {}]
  %s5 = inlined_call_operand.hbm [shape: f32[32,32], index: 5, kind: input, shape index: {}]
  %s6 = inlined_call_operand.vmem [shape: f32[4,32], index: 6, kind: input, shape index: {}]
  %s7 = inlined_call_operand.vmem [shape: f32[32,32], index: 7, kind: input, shape index: {}]
  %s8 = inlined_call_operand.hbm [shape: f32[16,32], index: 8, kind: output, shape index: {0}]
  %s9 = inlined_call_operand.hbm [shape: f32[2,4,8,8], index: 9, kind: output, shape index: {1}]
  %10 = xla_tuple %s8, %s9
  %s11 = sld [smem:[#allocation0]]
  $region74: #{mha_forward.1} parent=0
    _
  %s13 = ssub.s32 1, %s11
  %s14 = scalar_select 0, %s13, %s11
  $region1: #{mha_forward.1} parent=0
    #allocation2 [shape = 'u8[8192]{0}', space=vmem, size = 0x2000, scoped, tag = 'input window, operand 0, single buffered']
    #allocation3 [shape = 's32[1]{0}', space=sflag, size = 0x4, scoped, tag = 'scoped memory for mha_forward.1']
    #allocation4 [shape = 's32[1]{0}', space=sflag, size = 0x4, scoped, tag = 'scoped memory for mha_forward.1']
    #allocation5 [shape = 'u8[8192]{0}', space=vmem, size = 0x2000, scoped, tag = 'input window, operand 1, single buffered']
    #allocation6 [shape = 's32[1]{0}', space=sflag, size = 0x4, scoped, tag = 'scoped memory for mha_forward.1']
    #allocation7 [shape = 'u8[8192]{0}', space=vmem, size = 0x2000, scoped, tag = 'input window, operand 2, single buffered']
    #allocation8 [shape = 'u8[16384]{0}', space=vmem, size = 0x4000, scoped, tag = 'input window, operand 3, single buffered']
    #allocation9 [shape = 's32[1]{0}', space=sflag, size = 0x4, scoped, tag = 'scoped memory for mha_forward.1']
    #allocation10 [shape = 'u8[16384]{0}', space=vmem, size = 0x4000, scoped, tag = 'input window, operand 4, single buffered']
    #allocation11 [shape = 'u8[16384]{0}', space=vmem, size = 0x4000, scoped, tag = 'input window, operand 5, single buffered']
    #allocation12 [shape = 's32[1]{0}', space=sflag, size = 0x4, scoped, tag = 'scoped memory for mha_forward.1']
    #allocation13 [shape = 'u8[8192]{0}', space=vmem, size = 0x2000, scoped, tag = 'output window, operand 0, single buffered']
    #allocation14 [shape = 'u8[32768]{0}', space=vmem, size = 0x8000, scoped, tag = 'output window, operand 1, single buffered']
    #allocation15 [shape = 's32[1]{0}', space=sflag, size = 0x4, scoped, tag = 'scoped memory for mha_forward.1']
    %15 = vsyncpa [#allocation3], 0
    %16 = vsyncpa [#allocation6], 0
    %17 = vsyncpa [#allocation9], 0
    %18 = vsyncpa [#allocation12], 0
    %19 = vsyncpa [#allocation4], 0
    %20 = vsyncpa [#allocation15], 0
    // Predicated region
    $region2: #{mha_forward.1} parent=1 // pred_check
      _
    $region3: #{mha_forward.1} parent=1 // pred_check_branch
      %22 = sbr.rel (0) target = $region5
    $region4: #{mha_forward.1} parent=1 // pred_region
      %s24 = ssub.s32 256, 256
      %25 = vsyncadd [#allocation3], %s24
      %s26 = sshll.u32 [#allocation2], 4
      %s27 = int_to_ptr.vmem [resolvable:$true] %s26
      %32 = dma.hbm_to_vmem [thread:$0]  %s0, 256, %s27, [#allocation3], 128, 128, 8
    $region5: #{mha_forward.1} parent=1 // pred_fallthru
      _
    // Predicated region
    $region6: #{mha_forward.1} parent=1 // pred_check
      _
    $region7: #{mha_forward.1} parent=1 // pred_check_branch
      %34 = sbr.rel (0) target = $region9
    $region8: #{mha_forward.1} parent=1 // pred_region
      %s36 = ssub.s32 256, 256
      %37 = vsyncadd [#allocation6], %s36
      %s38 = sshll.u32 [#allocation5], 4
      %s39 = int_to_ptr.vmem [resolvable:$true] %s38
      %44 = dma.hbm_to_vmem [thread:$0]  %s1, 256, %s39, [#allocation6], 128, 128, 8
    $region9: #{mha_forward.1} parent=1 // pred_fallthru
      _
    // Predicated region
    $region10: #{mha_forward.1} parent=1 // pred_check
      _
    $region11: #{mha_forward.1} parent=1 // pred_check_branch
      %46 = sbr.rel (0) target = $region13
    $region12: #{mha_forward.1} parent=1 // pred_region
      %s48 = ssub.s32 256, 256
      %49 = vsyncadd [#allocation6], %s48
      %s50 = sshll.u32 [#allocation7], 4
      %s51 = int_to_ptr.vmem [resolvable:$true] %s50
      %56 = dma.hbm_to_vmem [thread:$0]  %s2, 256, %s51, [#allocation6], 128, 128, 8
    $region13: #{mha_forward.1} parent=1 // pred_fallthru
      _
    // Predicated region
    $region14: #{mha_forward.1} parent=1 // pred_check
      _
    $region15: #{mha_forward.1} parent=1 // pred_check_branch
      %58 = sbr.rel (0) target = $region17
    $region16: #{mha_forward.1} parent=1 // pred_region
      %s60 = ssub.s32 512, 512
      %61 = vsyncadd [#allocation9], %s60
      %s62 = sshll.u32 [#allocation8], 4
      %s63 = int_to_ptr.vmem [resolvable:$true] %s62
      %68 = dma.hbm_to_vmem [thread:$0]  %s3, 512, %s63, [#allocation9], 128, 128, 8
    $region17: #{mha_forward.1} parent=1 // pred_fallthru
      _
    // Predicated region
    $region18: #{mha_forward.1} parent=1 // pred_check
      _
    $region19: #{mha_forward.1} parent=1 // pred_check_branch
      %70 = sbr.rel (0) target = $region21
    $region20: #{mha_forward.1} parent=1 // pred_region
      %s72 = ssub.s32 512, 512
      %73 = vsyncadd [#allocation9], %s72
      %s74 = sshll.u32 [#allocation10], 4
      %s75 = int_to_ptr.vmem [resolvable:$true] %s74
      %80 = dma.hbm_to_vmem [thread:$0]  %s4, 512, %s75, [#allocation9], 128, 128, 8
    $region21: #{mha_forward.1} parent=1 // pred_fallthru
      _
    // Predicated region
    $region22: #{mha_forward.1} parent=1 // pred_check
      _
    $region23: #{mha_forward.1} parent=1 // pred_check_branch
      %82 = sbr.rel (0) target = $region25
    $region24: #{mha_forward.1} parent=1 // pred_region
      %s84 = ssub.s32 512, 512
      %85 = vsyncadd [#allocation12], %s84
      %s86 = sshll.u32 [#allocation11], 4
      %s87 = int_to_ptr.vmem [resolvable:$true] %s86
      %92 = dma.hbm_to_vmem [thread:$0]  %s5, 512, %s87, [#allocation12], 128, 128, 8
    $region25: #{mha_forward.1} parent=1 // pred_fallthru
      _
    // Predicated region
    $region26: #{mha_forward.1} parent=1 // pred_check
      _
    $region27: #{mha_forward.1} parent=1 // pred_check_branch
      %94 = sbr.rel (0) target = $region29
    $region28: #{mha_forward.1} parent=1 // pred_region
      _
    $region29: #{mha_forward.1} parent=1 // pred_fallthru
      _
    // Predicated region
    $region30: #{mha_forward.1} parent=1 // pred_check
      _
    $region31: #{mha_forward.1} parent=1 // pred_check_branch
      %96 = sbr.rel (0) target = $region33
    $region32: #{mha_forward.1} parent=1 // pred_region
      _
    $region33: #{mha_forward.1} parent=1 // pred_fallthru
      _
    // Predicated region
    $region34: #{mha_forward.1} parent=1 // pred_check
      _
    $region35: #{mha_forward.1} parent=1 // pred_check_branch
      %98 = sbr.rel (0) target = $region37
    $region36: #{mha_forward.1} parent=1 // pred_region
      %99 = dma.done [#allocation3], 256
    $region37: #{mha_forward.1} parent=1 // pred_fallthru
      _
    // Predicated region
    $region38: #{mha_forward.1} parent=1 // pred_check
      _
    $region39: #{mha_forward.1} parent=1 // pred_check_branch
      %101 = sbr.rel (0) target = $region41
    $region40: #{mha_forward.1} parent=1 // pred_region
      %102 = dma.done [#allocation6], 256
    $region41: #{mha_forward.1} parent=1 // pred_fallthru
      _
    // Predicated region
    $region42: #{mha_forward.1} parent=1 // pred_check
      _
    $region43: #{mha_forward.1} parent=1 // pred_check_branch
      %104 = sbr.rel (0) target = $region45
    $region44: #{mha_forward.1} parent=1 // pred_region
      %105 = dma.done [#allocation6], 256
    $region45: #{mha_forward.1} parent=1 // pred_fallthru
      _
    // Predicated region
    $region46: #{mha_forward.1} parent=1 // pred_check
      _
    $region47: #{mha_forward.1} parent=1 // pred_check_branch
      %107 = sbr.rel (0) target = $region49
    $region48: #{mha_forward.1} parent=1 // pred_region
      %108 = dma.done [#allocation9], 512
    $region49: #{mha_forward.1} parent=1 // pred_fallthru
      _
    // Predicated region
    $region50: #{mha_forward.1} parent=1 // pred_check
      _
    $region51: #{mha_forward.1} parent=1 // pred_check_branch
      %110 = sbr.rel (0) target = $region53
    $region52: #{mha_forward.1} parent=1 // pred_region
      %111 = dma.done [#allocation9], 512
    $region53: #{mha_forward.1} parent=1 // pred_fallthru
      _
    // Predicated region
    $region54: #{mha_forward.1} parent=1 // pred_check
      _
    $region55: #{mha_forward.1} parent=1 // pred_check_branch
      %113 = sbr.rel (0) target = $region57
    $region56: #{mha_forward.1} parent=1 // pred_region
      %114 = dma.done [#allocation12], 512
    $region57: #{mha_forward.1} parent=1 // pred_fallthru
      _
    %v115 = vld [vmem:[#allocation2] sm:$0xff]
    %v116 = vld [vmem:[#allocation2 + $0x8] sm:$0xff]
    %v117 = vld [vmem:[#allocation8] sm:$0xff]
    %v118 = vld [vmem:[#allocation8 + $0x8] sm:$0xff]
    %v119 = vld [vmem:[#allocation8 + $0x10] sm:$0xff]
    %v120 = vld [vmem:[#allocation8 + $0x18] sm:$0xff]
    %v121 = vld [vmem:[%s6] sm:$0x1]
    %v122 = vlaneseq
    %v123 = vshrl.u32 %v122, 7
    %v124 = vsub.s32 0, %v123
    %v125 = vrot.slane %v121, %v124
    %vm126 = vcmask 261120
    %v128 = vsel %vm126, %v115, 0
    %v131 = vsel %vm126, %v116, 0
    %133 = vmatprep.subr.mxu0 0.0
    %v134 = vand.u32 %v117, 4294901760
    %135 = vmatpush1.msra.mxu0 %v134
    %136 = vmatprep.subr.mxu0 0.0
    %v137 = vand.u32 %v118, 4294901760
    %138 = vmatpush1.msra.mxu0 %v137
    %139 = vmatprep.subr.mxu0 0.0
    %v140 = vand.u32 %v119, 4294901760
    %141 = vmatpush1.msra.mxu0 %v140
    %142 = vmatprep.subr.mxu0 0.0
    %v143 = vand.u32 %v120, 4294901760
    %144 = vmatpush1.msra.mxu0 %v143
    %145 = vmatprep.subr.mxu0 0.0
    %146 = vmatpush1.msra.mxu0 0.0
    %147 = vmatprep.subr.mxu0 0.0
    %148 = vmatpush1.msra.mxu0 0.0
    %149 = vmatprep.subr.mxu0 0.0
    %150 = vmatpush1.msra.mxu0 0.0
    %151 = vmatprep.subr.mxu0 0.0
    %152 = vmatpush1.msra.mxu0 0.0
    %153 = vmatprep.subr.mxu0 0.0
    %154 = vmatpush1.msra.mxu0 0.0
    %155 = vmatprep.subr.mxu0 0.0
    %156 = vmatpush1.msra.mxu0 0.0
    %157 = vmatprep.subr.mxu0 0.0
    %158 = vmatpush1.msra.mxu0 0.0
    %159 = vmatprep.subr.mxu0 0.0
    %160 = vmatpush1.msra.mxu0 0.0
    %161 = vmatprep.subr.mxu0 0.0
    %162 = vmatpush1.msra.mxu0 0.0
    %163 = vmatprep.subr.mxu0 0.0
    %164 = vmatpush1.msra.mxu0 0.0
    %165 = vmatprep.subr.mxu0 0.0
    %166 = vmatpush1.msra.mxu0 0.0
    %167 = vmatprep.subr.mxu0 0.0
    %168 = vmatpush1.msra.mxu0 0.0
    %169 = vmatprep.subr.mxu0 0.0
    %170 = vmatpush1.msra.mxu0 0.0
    %171 = vmatprep.subr.mxu0 0.0
    %172 = vmatpush1.msra.mxu0 0.0
    %173 = vmatprep.subr.mxu0 0.0
    %174 = vmatpush1.msra.mxu0 0.0
    %175 = vmatprep.subr.mxu0 0.0
    %176 = vmatpush1.msra.mxu0 0.0
    %177 = vmatprep.subr.mxu0 0.0
    %178 = vmatpush1.msra.mxu0 0.0
    %179 = vmatprep.subr.mxu0 0.0
    %180 = vmatpush1.msra.mxu0 0.0
    %181 = vmatprep.subr.mxu0 0.0
    %182 = vmatpush1.msra.mxu0 0.0
    %183 = vmatprep.subr.mxu0 0.0
    %184 = vmatpush1.msra.mxu0 0.0
    %185 = vmatprep.subr.mxu0 0.0
    %186 = vmatpush1.msra.mxu0 0.0
    %187 = vmatprep.subr.mxu0 0.0
    %188 = vmatpush1.msra.mxu0 0.0
    %189 = vmatprep.subr.mxu0 0.0
    %190 = vmatpush1.msra.mxu0 0.0
    %191 = vmatprep.subr.mxu0 0.0
    %192 = vmatpush1.msra.mxu0 0.0
    %193 = vmatprep.subr.mxu0 0.0
    %194 = vmatpush1.msra.mxu0 0.0
    %195 = vmatprep.subr.mxu0 0.0
    %196 = vmatpush1.msra.mxu0 0.0
    %197 = vmatprep.subr.mxu0 0.0
    %198 = vmatpush1.msra.mxu0 0.0
    %199 = vmatprep.subr.mxu0 0.0
    %200 = vmatpush1.msra.mxu0 0.0
    %201 = vmatprep.mubr.f32.mxu0 0.0
    %v202 = vand.u32 %v128, 4294901760
    %v203 = vsub.f32 %v128, %v202
    %v204 = vand.u32 %v203, 4294901760
    %v205 = vsub.f32 %v203, %v204
    %v206 = vand.u32 %v205, 4294901760
    %207 = vmatmul.mubr.f32.gmra.mrb[0].mxu0 %v206
    %v208 = vpop.f32.mrb[0].mxu0
    %v209 = vadd.f32 %v125, %v208
    %v210 = vpop.f32.mrb[0].mxu0
    %211 = vmatprep.mubr.f32.mxu0 0.0
    %v212 = vand.u32 %v131, 4294901760
    %v213 = vsub.f32 %v131, %v212
    %v214 = vand.u32 %v213, 4294901760
    %v215 = vsub.f32 %v213, %v214
    %v216 = vand.u32 %v215, 4294901760
    %217 = vmatmul.mubr.f32.gmra.mrb[0].mxu0 %v216
    %v218 = vpop.f32.mrb[0].mxu0
    %v219 = vadd.f32 %v125, %v218
    %v220 = vpop.f32.mrb[0].mxu0
    %221 = vdwg.mxu0
    %222 = vmatprep.subr.mxu0 0.0
    %v223 = vand.u32 %v117, 4294901760
    %v224 = vsub.f32 %v117, %v223
    %v225 = vand.u32 %v224, 4294901760
    %v226 = vsub.f32 %v224, %v225
    %v227 = vand.u32 %v226, 4294901760
    %228 = vmatpush1.msra.mxu0 %v227
    %229 = vmatprep.subr.mxu0 0.0
    %v230 = vand.u32 %v118, 4294901760
    %v231 = vsub.f32 %v118, %v230
    %v232 = vand.u32 %v231, 4294901760
    %v233 = vsub.f32 %v231, %v232
    %v234 = vand.u32 %v233, 4294901760
    %235 = vmatpush1.msra.mxu0 %v234
    %236 = vmatprep.subr.mxu0 0.0
    %v237 = vand.u32 %v119, 4294901760
    %v238 = vsub.f32 %v119, %v237
    %v239 = vand.u32 %v238, 4294901760
    %v240 = vsub.f32 %v238, %v239
    %v241 = vand.u32 %v240, 4294901760
    %242 = vmatpush1.msra.mxu0 %v241
    %243 = vmatprep.subr.mxu0 0.0
    %v244 = vand.u32 %v120, 4294901760
    %v245 = vsub.f32 %v120, %v244
    %v246 = vand.u32 %v245, 4294901760
    %v247 = vsub.f32 %v245, %v246
    %v248 = vand.u32 %v247, 4294901760
    %249 = vmatpush1.msra.mxu0 %v248
    %250 = vmatprep.subr.mxu0 0.0
    %251 = vmatpush1.msra.mxu0 0.0
    %252 = vmatprep.subr.mxu0 0.0
    %253 = vmatpush1.msra.mxu0 0.0
    %254 = vmatprep.subr.mxu0 0.0
    %255 = vmatpush1.msra.mxu0 0.0
    %256 = vmatprep.subr.mxu0 0.0
    %257 = vmatpush1.msra.mxu0 0.0
    %258 = vmatprep.subr.mxu0 0.0
    %259 = vmatpush1.msra.mxu0 0.0
    %260 = vmatprep.subr.mxu0 0.0
    %261 = vmatpush1.msra.mxu0 0.0
    %262 = vmatprep.subr.mxu0 0.0
    %263 = vmatpush1.msra.mxu0 0.0
    %264 = vmatprep.subr.mxu0 0.0
    %265 = vmatpush1.msra.mxu0 0.0
    %266 = vmatprep.subr.mxu0 0.0
    %267 = vmatpush1.msra.mxu0 0.0
    %268 = vmatprep.subr.mxu0 0.0
    %269 = vmatpush1.msra.mxu0 0.0
    %270 = vmatprep.subr.mxu0 0.0
    %271 = vmatpush1.msra.mxu0 0.0
    %272 = vmatprep.subr.mxu0 0.0
    %273 = vmatpush1.msra.mxu0 0.0
    %274 = vmatprep.subr.mxu0 0.0
    %275 = vmatpush1.msra.mxu0 0.0
    %276 = vmatprep.subr.mxu0 0.0
    %277 = vmatpush1.msra.mxu0 0.0
    %278 = vmatprep.subr.mxu0 0.0
    %279 = vmatpush1.msra.mxu0 0.0
    %280 = vmatprep.subr.mxu0 0.0
    %281 = vmatpush1.msra.mxu0 0.0
    %282 = vmatprep.subr.mxu0 0.0
    %283 = vmatpush1.msra.mxu0 0.0
    %284 = vmatprep.subr.mxu0 0.0
    %285 = vmatpush1.msra.mxu0 0.0
    %286 = vmatprep.subr.mxu0 0.0
    %287 = vmatpush1.msra.mxu0 0.0
    %288 = vmatprep.subr.mxu0 0.0
    %289 = vmatpush1.msra.mxu0 0.0
    %290 = vmatprep.subr.mxu0 0.0
    %291 = vmatpush1.msra.mxu0 0.0
    %292 = vmatprep.subr.mxu0 0.0
    %293 = vmatpush1.msra.mxu0 0.0
    %294 = vmatprep.subr.mxu0 0.0
    %295 = vmatpush1.msra.mxu0 0.0
    %296 = vmatprep.subr.mxu0 0.0
    %297 = vmatpush1.msra.mxu0 0.0
    %298 = vmatprep.subr.mxu0 0.0
    %299 = vmatpush1.msra.mxu0 0.0
    %300 = vmatprep.subr.mxu0 0.0
    %301 = vmatpush1.msra.mxu0 0.0
    %302 = vmatprep.subr.mxu0 0.0
    %303 = vmatpush1.msra.mxu0 0.0
    %304 = vmatprep.subr.mxu0 0.0
    %305 = vmatpush1.msra.mxu0 0.0
    %306 = vmatprep.mubr.f32.mxu0 0.0
    %v307 = vand.u32 %v128, 4294901760
    %308 = vmatmul.mubr.f32.gmra.mrb[0].mxu0 %v307
    %v309 = vpop.f32.mrb[0].mxu0
    %v310 = vadd.f32 %v209, %v309
    %v311 = vpop.f32.mrb[0].mxu0
    %312 = vmatprep.mubr.f32.mxu0 0.0
    %v313 = vand.u32 %v131, 4294901760
    %314 = vmatmul.mubr.f32.gmra.mrb[0].mxu0 %v313
    %v315 = vpop.f32.mrb[0].mxu0
    %v316 = vadd.f32 %v219, %v315
    %v317 = vpop.f32.mrb[0].mxu0
    %318 = vdwg.mxu0
    %319 = vmatprep.subr.mxu0 0.0
    %v320 = vand.u32 %v117, 4294901760
    %v321 = vsub.f32 %v117, %v320
    %322 = vmatpush1.msra.mxu0 %v321
    %323 = vmatprep.subr.mxu0 0.0
    %v324 = vand.u32 %v118, 4294901760
    %v325 = vsub.f32 %v118, %v324
    %326 = vmatpush1.msra.mxu0 %v325
    %327 = vmatprep.subr.mxu0 0.0
    %v328 = vand.u32 %v119, 4294901760
    %v329 = vsub.f32 %v119, %v328
    %330 = vmatpush1.msra.mxu0 %v329
    %331 = vmatprep.subr.mxu0 0.0
    %v332 = vand.u32 %v120, 4294901760
    %v333 = vsub.f32 %v120, %v332
    %334 = vmatpush1.msra.mxu0 %v333
    %335 = vmatprep.subr.mxu0 0.0
    %336 = vmatpush1.msra.mxu0 0.0
    %337 = vmatprep.subr.mxu0 0.0
    %338 = vmatpush1.msra.mxu0 0.0
    %339 = vmatprep.subr.mxu0 0.0
    %340 = vmatpush1.msra.mxu0 0.0
    %341 = vmatprep.subr.mxu0 0.0
    %342 = vmatpush1.msra.mxu0 0.0
    %343 = vmatprep.subr.mxu0 0.0
    %344 = vmatpush1.msra.mxu0 0.0
    %345 = vmatprep.subr.mxu0 0.0
    %346 = vmatpush1.msra.mxu0 0.0
    %347 = vmatprep.subr.mxu0 0.0
    %348 = vmatpush1.msra.mxu0 0.0
    %349 = vmatprep.subr.mxu0 0.0
    %350 = vmatpush1.msra.mxu0 0.0
    %351 = vmatprep.subr.mxu0 0.0
    %352 = vmatpush1.msra.mxu0 0.0
    %353 = vmatprep.subr.mxu0 0.0
    %354 = vmatpush1.msra.mxu0 0.0
    %355 = vmatprep.subr.mxu0 0.0
    %356 = vmatpush1.msra.mxu0 0.0
    %357 = vmatprep.subr.mxu0 0.0
    %358 = vmatpush1.msra.mxu0 0.0
    %359 = vmatprep.subr.mxu0 0.0
    %360 = vmatpush1.msra.mxu0 0.0
    %361 = vmatprep.subr.mxu0 0.0
    %362 = vmatpush1.msra.mxu0 0.0
    %363 = vmatprep.subr.mxu0 0.0
    %364 = vmatpush1.msra.mxu0 0.0
    %365 = vmatprep.subr.mxu0 0.0
    %366 = vmatpush1.msra.mxu0 0.0
    %367 = vmatprep.subr.mxu0 0.0
    %368 = vmatpush1.msra.mxu0 0.0
    %369 = vmatprep.subr.mxu0 0.0
    %370 = vmatpush1.msra.mxu0 0.0
    %371 = vmatprep.subr.mxu0 0.0
    %372 = vmatpush1.msra.mxu0 0.0
    %373 = vmatprep.subr.mxu0 0.0
    %374 = vmatpush1.msra.mxu0 0.0
    %375 = vmatprep.subr.mxu0 0.0
    %376 = vmatpush1.msra.mxu0 0.0
    %377 = vmatprep.subr.mxu0 0.0
    %378 = vmatpush1.msra.mxu0 0.0
    %379 = vmatprep.subr.mxu0 0.0
    %380 = vmatpush1.msra.mxu0 0.0
    %381 = vmatprep.subr.mxu0 0.0
    %382 = vmatpush1.msra.mxu0 0.0
    %383 = vmatprep.subr.mxu0 0.0
    %384 = vmatpush1.msra.mxu0 0.0
    %385 = vmatprep.subr.mxu0 0.0
    %386 = vmatpush1.msra.mxu0 0.0
    %387 = vmatprep.subr.mxu0 0.0
    %388 = vmatpush1.msra.mxu0 0.0
    %389 = vmatprep.subr.mxu0 0.0
    %390 = vmatpush1.msra.mxu0 0.0
    %391 = vmatprep.mubr.f32.mxu0 0.0
    %v392 = vand.u32 %v128, 4294901760
    %v393 = vsub.f32 %v128, %v392
    %394 = vmatmul.mubr.f32.gmra.mrb[0].mxu0 %v393
    %v395 = vpop.f32.mrb[0].mxu0
    %v396 = vadd.f32 %v310, %v395
    %v397 = vpop.f32.mrb[0].mxu0
    %398 = vmatprep.mubr.f32.mxu0 0.0
    %v399 = vand.u32 %v131, 4294901760
    %v400 = vsub.f32 %v131, %v399
    %401 = vmatmul.mubr.f32.gmra.mrb[0].mxu0 %v400
    %v402 = vpop.f32.mrb[0].mxu0
    %v403 = vadd.f32 %v316, %v402
    %v404 = vpop.f32.mrb[0].mxu0
    %405 = vdwg.mxu0
    %406 = vmatprep.subr.mxu0 0.0
    %v407 = vand.u32 %v117, 4294901760
    %408 = vmatpush1.msra.mxu0 %v407
    %409 = vmatprep.subr.mxu0 0.0
    %v410 = vand.u32 %v118, 4294901760
    %411 = vmatpush1.msra.mxu0 %v410
    %412 = vmatprep.subr.mxu0 0.0
    %v413 = vand.u32 %v119, 4294901760
    %414 = vmatpush1.msra.mxu0 %v413
    %415 = vmatprep.subr.mxu0 0.0
    %v416 = vand.u32 %v120, 4294901760
    %417 = vmatpush1.msra.mxu0 %v416
    %418 = vmatprep.subr.mxu0 0.0
    %419 = vmatpush1.msra.mxu0 0.0
    %420 = vmatprep.subr.mxu0 0.0
    %421 = vmatpush1.msra.mxu0 0.0
    %422 = vmatprep.subr.mxu0 0.0
    %423 = vmatpush1.msra.mxu0 0.0
    %424 = vmatprep.subr.mxu0 0.0
    %425 = vmatpush1.msra.mxu0 0.0
    %426 = vmatprep.subr.mxu0 0.0
    %427 = vmatpush1.msra.mxu0 0.0
    %428 = vmatprep.subr.mxu0 0.0
    %429 = vmatpush1.msra.mxu0 0.0
    %430 = vmatprep.subr.mxu0 0.0
    %431 = vmatpush1.msra.mxu0 0.0
    %432 = vmatprep.subr.mxu0 0.0
    %433 = vmatpush1.msra.mxu0 0.0
    %434 = vmatprep.subr.mxu0 0.0
    %435 = vmatpush1.msra.mxu0 0.0
    %436 = vmatprep.subr.mxu0 0.0
    %437 = vmatpush1.msra.mxu0 0.0
    %438 = vmatprep.subr.mxu0 0.0
    %439 = vmatpush1.msra.mxu0 0.0
    %440 = vmatprep.subr.mxu0 0.0
    %441 = vmatpush1.msra.mxu0 0.0
    %442 = vmatprep.subr.mxu0 0.0
    %443 = vmatpush1.msra.mxu0 0.0
    %444 = vmatprep.subr.mxu0 0.0
    %445 = vmatpush1.msra.mxu0 0.0
    %446 = vmatprep.subr.mxu0 0.0
    %447 = vmatpush1.msra.mxu0 0.0
    %448 = vmatprep.subr.mxu0 0.0
    %449 = vmatpush1.msra.mxu0 0.0
    %450 = vmatprep.subr.mxu0 0.0
    %451 = vmatpush1.msra.mxu0 0.0
    %452 = vmatprep.subr.mxu0 0.0
    %453 = vmatpush1.msra.mxu0 0.0
    %454 = vmatprep.subr.mxu0 0.0
    %455 = vmatpush1.msra.mxu0 0.0
    %456 = vmatprep.subr.mxu0 0.0
    %457 = vmatpush1.msra.mxu0 0.0
    %458 = vmatprep.subr.mxu0 0.0
    %459 = vmatpush1.msra.mxu0 0.0
    %460 = vmatprep.subr.mxu0 0.0
    %461 = vmatpush1.msra.mxu0 0.0
    %462 = vmatprep.subr.mxu0 0.0
    %463 = vmatpush1.msra.mxu0 0.0
    %464 = vmatprep.subr.mxu0 0.0
    %465 = vmatpush1.msra.mxu0 0.0
    %466 = vmatprep.subr.mxu0 0.0
    %467 = vmatpush1.msra.mxu0 0.0
    %468 = vmatprep.subr.mxu0 0.0
    %469 = vmatpush1.msra.mxu0 0.0
    %470 = vmatprep.subr.mxu0 0.0
    %471 = vmatpush1.msra.mxu0 0.0
    %472 = vmatprep.subr.mxu0 0.0
    %473 = vmatpush1.msra.mxu0 0.0
    %474 = vmatprep.mubr.f32.mxu0 0.0
    %v475 = vand.u32 %v128, 4294901760
    %v476 = vsub.f32 %v128, %v475
    %v477 = vand.u32 %v476, 4294901760
    %478 = vmatmul.mubr.f32.gmra.mrb[0].mxu0 %v477
    %v479 = vpop.f32.mrb[0].mxu0
    %v480 = vadd.f32 %v396, %v479
    %v481 = vpop.f32.mrb[0].mxu0
    %482 = vmatprep.mubr.f32.mxu0 0.0
    %v483 = vand.u32 %v131, 4294901760
    %v484 = vsub.f32 %v131, %v483
    %v485 = vand.u32 %v484, 4294901760
    %486 = vmatmul.mubr.f32.gmra.mrb[0].mxu0 %v485
    %v487 = vpop.f32.mrb[0].mxu0
    %v488 = vadd.f32 %v403, %v487
    %v489 = vpop.f32.mrb[0].mxu0
    %490 = vdwg.mxu0
    %491 = vmatprep.subr.mxu0 0.0
    %v492 = vand.u32 %v117, 4294901760
    %v493 = vsub.f32 %v117, %v492
    %v494 = vand.u32 %v493, 4294901760
    %495 = vmatpush1.msra.mxu0 %v494
    %496 = vmatprep.subr.mxu0 0.0
    %v497 = vand.u32 %v118, 4294901760
    %v498 = vsub.f32 %v118, %v497
    %v499 = vand.u32 %v498, 4294901760
    %500 = vmatpush1.msra.mxu0 %v499
    %501 = vmatprep.subr.mxu0 0.0
    %v502 = vand.u32 %v119, 4294901760
    %v503 = vsub.f32 %v119, %v502
    %v504 = vand.u32 %v503, 4294901760
    %505 = vmatpush1.msra.mxu0 %v504
    %506 = vmatprep.subr.mxu0 0.0
    %v507 = vand.u32 %v120, 4294901760
    %v508 = vsub.f32 %v120, %v507
    %v509 = vand.u32 %v508, 4294901760
    %510 = vmatpush1.msra.mxu0 %v509
    %511 = vmatprep.subr.mxu0 0.0
    %512 = vmatpush1.msra.mxu0 0.0
    %513 = vmatprep.subr.mxu0 0.0
    %514 = vmatpush1.msra.mxu0 0.0
    %515 = vmatprep.subr.mxu0 0.0
    %516 = vmatpush1.msra.mxu0 0.0
    %517 = vmatprep.subr.mxu0 0.0
    %518 = vmatpush1.msra.mxu0 0.0
    %519 = vmatprep.subr.mxu0 0.0
    %520 = vmatpush1.msra.mxu0 0.0
    %521 = vmatprep.subr.mxu0 0.0
    %522 = vmatpush1.msra.mxu0 0.0
    %523 = vmatprep.subr.mxu0 0.0
    %524 = vmatpush1.msra.mxu0 0.0
    %525 = vmatprep.subr.mxu0 0.0
    %526 = vmatpush1.msra.mxu0 0.0
    %527 = vmatprep.subr.mxu0 0.0
    %528 = vmatpush1.msra.mxu0 0.0
    %529 = vmatprep.subr.mxu0 0.0
    %530 = vmatpush1.msra.mxu0 0.0
    %531 = vmatprep.subr.mxu0 0.0
    %532 = vmatpush1.msra.mxu0 0.0
    %533 = vmatprep.subr.mxu0 0.0
    %534 = vmatpush1.msra.mxu0 0.0
    %535 = vmatprep.subr.mxu0 0.0
    %536 = vmatpush1.msra.mxu0 0.0
    %537 = vmatprep.subr.mxu0 0.0
    %538 = vmatpush1.msra.mxu0 0.0
    %539 = vmatprep.subr.mxu0 0.0
    %540 = vmatpush1.msra.mxu0 0.0
    %541 = vmatprep.subr.mxu0 0.0
    %542 = vmatpush1.msra.mxu0 0.0
    %543 = vmatprep.subr.mxu0 0.0
    %544 = vmatpush1.msra.mxu0 0.0
    %545 = vmatprep.subr.mxu0 0.0
    %546 = vmatpush1.msra.mxu0 0.0
    %547 = vmatprep.subr.mxu0 0.0
    %548 = vmatpush1.msra.mxu0 0.0
    %549 = vmatprep.subr.mxu0 0.0
    %550 = vmatpush1.msra.mxu0 0.0
    %551 = vmatprep.subr.mxu0 0.0
    %552 = vmatpush1.msra.mxu0 0.0
    %553 = vmatprep.subr.mxu0 0.0
    %554 = vmatpush1.msra.mxu0 0.0
    %555 = vmatprep.subr.mxu0 0.0
    %556 = vmatpush1.msra.mxu0 0.0
    %557 = vmatprep.subr.mxu0 0.0
    %558 = vmatpush1.msra.mxu0 0.0
    %559 = vmatprep.subr.mxu0 0.0
    %560 = vmatpush1.msra.mxu0 0.0
    %561 = vmatprep.subr.mxu0 0.0
    %562 = vmatpush1.msra.mxu0 0.0
    %563 = vmatprep.subr.mxu0 0.0
    %564 = vmatpush1.msra.mxu0 0.0
    %565 = vmatprep.subr.mxu0 0.0
    %566 = vmatpush1.msra.mxu0 0.0
    %567 = vmatprep.mubr.f32.mxu0 0.0
    %v568 = vand.u32 %v128, 4294901760
    %569 = vmatmul.mubr.f32.gmra.mrb[0].mxu0 %v568
    %v570 = vpop.f32.mrb[0].mxu0
    %v571 = vadd.f32 %v480, %v570
    %v572 = vpop.f32.mrb[0].mxu0
    %573 = vmatprep.mubr.f32.mxu0 0.0
    %v574 = vand.u32 %v131, 4294901760
    %575 = vmatmul.mubr.f32.gmra.mrb[0].mxu0 %v574
    %v576 = vpop.f32.mrb[0].mxu0
    %v577 = vadd.f32 %v488, %v576
    %v578 = vpop.f32.mrb[0].mxu0
    %579 = vdwg.mxu0
    %580 = vmatprep.subr.mxu0 0.0
    %v581 = vand.u32 %v117, 4294901760
    %582 = vmatpush1.msra.mxu0 %v581
    %583 = vmatprep.subr.mxu0 0.0
    %v584 = vand.u32 %v118, 4294901760
    %585 = vmatpush1.msra.mxu0 %v584
    %586 = vmatprep.subr.mxu0 0.0
    %v587 = vand.u32 %v119, 4294901760
    %588 = vmatpush1.msra.mxu0 %v587
    %589 = vmatprep.subr.mxu0 0.0
    %v590 = vand.u32 %v120, 4294901760
    %591 = vmatpush1.msra.mxu0 %v590
    %592 = vmatprep.subr.mxu0 0.0
    %593 = vmatpush1.msra.mxu0 0.0
    %594 = vmatprep.subr.mxu0 0.0
    %595 = vmatpush1.msra.mxu0 0.0
    %596 = vmatprep.subr.mxu0 0.0
    %597 = vmatpush1.msra.mxu0 0.0
    %598 = vmatprep.subr.mxu0 0.0
    %599 = vmatpush1.msra.mxu0 0.0
    %600 = vmatprep.subr.mxu0 0.0
    %601 = vmatpush1.msra.mxu0 0.0
    %602 = vmatprep.subr.mxu0 0.0
    %603 = vmatpush1.msra.mxu0 0.0
    %604 = vmatprep.subr.mxu0 0.0
    %605 = vmatpush1.msra.mxu0 0.0
    %606 = vmatprep.subr.mxu0 0.0
    %607 = vmatpush1.msra.mxu0 0.0
    %608 = vmatprep.subr.mxu0 0.0
    %609 = vmatpush1.msra.mxu0 0.0
    %610 = vmatprep.subr.mxu0 0.0
    %611 = vmatpush1.msra.mxu0 0.0
    %612 = vmatprep.subr.mxu0 0.0
    %613 = vmatpush1.msra.mxu0 0.0
    %614 = vmatprep.subr.mxu0 0.0
    %615 = vmatpush1.msra.mxu0 0.0
    %616 = vmatprep.subr.mxu0 0.0
    %617 = vmatpush1.msra.mxu0 0.0
    %618 = vmatprep.subr.mxu0 0.0
    %619 = vmatpush1.msra.mxu0 0.0
    %620 = vmatprep.subr.mxu0 0.0
    %621 = vmatpush1.msra.mxu0 0.0
    %622 = vmatprep.subr.mxu0 0.0
    %623 = vmatpush1.msra.mxu0 0.0
    %624 = vmatprep.subr.mxu0 0.0
    %625 = vmatpush1.msra.mxu0 0.0
    %626 = vmatprep.subr.mxu0 0.0
    %627 = vmatpush1.msra.mxu0 0.0
    %628 = vmatprep.subr.mxu0 0.0
    %629 = vmatpush1.msra.mxu0 0.0
    %630 = vmatprep.subr.mxu0 0.0
    %631 = vmatpush1.msra.mxu0 0.0
    %632 = vmatprep.subr.mxu0 0.0
    %633 = vmatpush1.msra.mxu0 0.0
    %634 = vmatprep.subr.mxu0 0.0
    %635 = vmatpush1.msra.mxu0 0.0
    %636 = vmatprep.subr.mxu0 0.0
    %637 = vmatpush1.msra.mxu0 0.0
    %638 = vmatprep.subr.mxu0 0.0
    %639 = vmatpush1.msra.mxu0 0.0
    %640 = vmatprep.subr.mxu0 0.0
    %641 = vmatpush1.msra.mxu0 0.0
    %642 = vmatprep.subr.mxu0 0.0
    %643 = vmatpush1.msra.mxu0 0.0
    %644 = vmatprep.subr.mxu0 0.0
    %645 = vmatpush1.msra.mxu0 0.0
    %646 = vmatprep.subr.mxu0 0.0
    %647 = vmatpush1.msra.mxu0 0.0
    %648 = vmatprep.mubr.f32.mxu0 0.0
    %v649 = vand.u32 %v128, 4294901760
    %650 = vmatmul.mubr.f32.gmra.mrb[0].mxu0 %v649
    %v651 = vpop.f32.mrb[0].mxu0
    %v652 = vadd.f32 %v571, %v651
    %v653 = vpop.f32.mrb[0].mxu0
    %654 = vmatprep.mubr.f32.mxu0 0.0
    %v655 = vand.u32 %v131, 4294901760
    %656 = vmatmul.mubr.f32.gmra.mrb[0].mxu0 %v655
    %v657 = vpop.f32.mrb[0].mxu0
    %v658 = vadd.f32 %v577, %v657
    %v659 = vpop.f32.mrb[0].mxu0
    %660 = vdwg.mxu0
    %v661 = vld [vmem:[#allocation5] sm:$0xff]
    %v662 = vld [vmem:[#allocation5 + $0x8] sm:$0xff]
    %v663 = vld [vmem:[#allocation10] sm:$0xff]
    %v664 = vld [vmem:[#allocation10 + $0x8] sm:$0xff]
    %v665 = vld [vmem:[#allocation10 + $0x10] sm:$0xff]
    %v666 = vld [vmem:[#allocation10 + $0x18] sm:$0xff]
    %v667 = vld [vmem:[%s6 + $0x1] sm:$0x1]
    %v668 = vlaneseq
    %v669 = vshrl.u32 %v668, 7
    %v670 = vsub.s32 0, %v669
    %v671 = vrot.slane %v667, %v670
    %v673 = vsel %vm126, %v661, 0
    %v676 = vsel %vm126, %v662, 0
    %678 = vmatprep.subr.mxu0 0.0
    %v679 = vand.u32 %v663, 4294901760
    %680 = vmatpush1.msra.mxu0 %v679
    %681 = vmatprep.subr.mxu0 0.0
    %v682 = vand.u32 %v664, 4294901760
    %683 = vmatpush1.msra.mxu0 %v682
    %684 = vmatprep.subr.mxu0 0.0
    %v685 = vand.u32 %v665, 4294901760
    %686 = vmatpush1.msra.mxu0 %v685
    %687 = vmatprep.subr.mxu0 0.0
    %v688 = vand.u32 %v666, 4294901760
    %689 = vmatpush1.msra.mxu0 %v688
    %690 = vmatprep.subr.mxu0 0.0
    %691 = vmatpush1.msra.mxu0 0.0
    %692 = vmatprep.subr.mxu0 0.0
    %693 = vmatpush1.msra.mxu0 0.0
    %694 = vmatprep.subr.mxu0 0.0
    %695 = vmatpush1.msra.mxu0 0.0
    %696 = vmatprep.subr.mxu0 0.0
    %697 = vmatpush1.msra.mxu0 0.0
    %698 = vmatprep.subr.mxu0 0.0
    %699 = vmatpush1.msra.mxu0 0.0
    %700 = vmatprep.subr.mxu0 0.0
    %701 = vmatpush1.msra.mxu0 0.0
    %702 = vmatprep.subr.mxu0 0.0
    %703 = vmatpush1.msra.mxu0 0.0
    %704 = vmatprep.subr.mxu0 0.0
    %705 = vmatpush1.msra.mxu0 0.0
    %706 = vmatprep.subr.mxu0 0.0
    %707 = vmatpush1.msra.mxu0 0.0
    %708 = vmatprep.subr.mxu0 0.0
    %709 = vmatpush1.msra.mxu0 0.0
    %710 = vmatprep.subr.mxu0 0.0
    %711 = vmatpush1.msra.mxu0 0.0
    %712 = vmatprep.subr.mxu0 0.0
    %713 = vmatpush1.msra.mxu0 0.0
    %714 = vmatprep.subr.mxu0 0.0
    %715 = vmatpush1.msra.mxu0 0.0
    %716 = vmatprep.subr.mxu0 0.0
    %717 = vmatpush1.msra.mxu0 0.0
    %718 = vmatprep.subr.mxu0 0.0
    %719 = vmatpush1.msra.mxu0 0.0
    %720 = vmatprep.subr.mxu0 0.0
    %721 = vmatpush1.msra.mxu0 0.0
    %722 = vmatprep.subr.mxu0 0.0
    %723 = vmatpush1.msra.mxu0 0.0
    %724 = vmatprep.subr.mxu0 0.0
    %725 = vmatpush1.msra.mxu0 0.0
    %726 = vmatprep.subr.mxu0 0.0
    %727 = vmatpush1.msra.mxu0 0.0
    %728 = vmatprep.subr.mxu0 0.0
    %729 = vmatpush1.msra.mxu0 0.0
    %730 = vmatprep.subr.mxu0 0.0
    %731 = vmatpush1.msra.mxu0 0.0
    %732 = vmatprep.subr.mxu0 0.0
    %733 = vmatpush1.msra.mxu0 0.0
    %734 = vmatprep.subr.mxu0 0.0
    %735 = vmatpush1.msra.mxu0 0.0
    %736 = vmatprep.subr.mxu0 0.0
    %737 = vmatpush1.msra.mxu0 0.0
    %738 = vmatprep.subr.mxu0 0.0
    %739 = vmatpush1.msra.mxu0 0.0
    %740 = vmatprep.subr.mxu0 0.0
    %741 = vmatpush1.msra.mxu0 0.0
    %742 = vmatprep.subr.mxu0 0.0
    %743 = vmatpush1.msra.mxu0 0.0
    %744 = vmatprep.subr.mxu0 0.0
    %745 = vmatpush1.msra.mxu0 0.0
    %746 = vmatprep.mubr.f32.mxu0 0.0
    %v747 = vand.u32 %v673, 4294901760
    %v748 = vsub.f32 %v673, %v747
    %v749 = vand.u32 %v748, 4294901760
    %v750 = vsub.f32 %v748, %v749
    %v751 = vand.u32 %v750, 4294901760
    %752 = vmatmul.mubr.f32.gmra.mrb[0].mxu0 %v751
    %v753 = vpop.f32.mrb[0].mxu0
    %v754 = vadd.f32 %v671, %v753
    %v755 = vpop.f32.mrb[0].mxu0
    %756 = vmatprep.mubr.f32.mxu0 0.0
    %v757 = vand.u32 %v676, 4294901760
    %v758 = vsub.f32 %v676, %v757
    %v759 = vand.u32 %v758, 4294901760
    %v760 = vsub.f32 %v758, %v759
    %v761 = vand.u32 %v760, 4294901760
    %762 = vmatmul.mubr.f32.gmra.mrb[0].mxu0 %v761
    %v763 = vpop.f32.mrb[0].mxu0
    %v764 = vadd.f32 %v671, %v763
    %v765 = vpop.f32.mrb[0].mxu0
    %766 = vdwg.mxu0
    %767 = vmatprep.subr.mxu0 0.0
    %v768 = vand.u32 %v663, 4294901760
    %v769 = vsub.f32 %v663, %v768
    %v770 = vand.u32 %v769, 4294901760
    %v771 = vsub.f32 %v769, %v770
    %v772 = vand.u32 %v771, 4294901760
    %773 = vmatpush1.msra.mxu0 %v772
    %774 = vmatprep.subr.mxu0 0.0
    %v775 = vand.u32 %v664, 4294901760
    %v776 = vsub.f32 %v664, %v775
    %v777 = vand.u32 %v776, 4294901760
    %v778 = vsub.f32 %v776, %v777
    %v779 = vand.u32 %v778, 4294901760
    %780 = vmatpush1.msra.mxu0 %v779
    %781 = vmatprep.subr.mxu0 0.0
    %v782 = vand.u32 %v665, 4294901760
    %v783 = vsub.f32 %v665, %v782
    %v784 = vand.u32 %v783, 4294901760
    %v785 = vsub.f32 %v783, %v784
    %v786 = vand.u32 %v785, 4294901760
    %787 = vmatpush1.msra.mxu0 %v786
    %788 = vmatprep.subr.mxu0 0.0
    %v789 = vand.u32 %v666, 4294901760
    %v790 = vsub.f32 %v666, %v789
    %v791 = vand.u32 %v790, 4294901760
    %v792 = vsub.f32 %v790, %v791
    %v793 = vand.u32 %v792, 4294901760
    %794 = vmatpush1.msra.mxu0 %v793
    %795 = vmatprep.subr.mxu0 0.0
    %796 = vmatpush1.msra.mxu0 0.0
    %797 = vmatprep.subr.mxu0 0.0
    %798 = vmatpush1.msra.mxu0 0.0
    %799 = vmatprep.subr.mxu0 0.0
    %800 = vmatpush1.msra.mxu0 0.0
    %801 = vmatprep.subr.mxu0 0.0
    %802 = vmatpush1.msra.mxu0 0.0
    %803 = vmatprep.subr.mxu0 0.0
    %804 = vmatpush1.msra.mxu0 0.0
    %805 = vmatprep.subr.mxu0 0.0
    %806 = vmatpush1.msra.mxu0 0.0
    %807 = vmatprep.subr.mxu0 0.0
    %808 = vmatpush1.msra.mxu0 0.0
    %809 = vmatprep.subr.mxu0 0.0
    %810 = vmatpush1.msra.mxu0 0.0
    %811 = vmatprep.subr.mxu0 0.0
    %812 = vmatpush1.msra.mxu0 0.0
    %813 = vmatprep.subr.mxu0 0.0
    %814 = vmatpush1.msra.mxu0 0.0
    %815 = vmatprep.subr.mxu0 0.0
    %816 = vmatpush1.msra.mxu0 0.0
    %817 = vmatprep.subr.mxu0 0.0
    %818 = vmatpush1.msra.mxu0 0.0
    %819 = vmatprep.subr.mxu0 0.0
    %820 = vmatpush1.msra.mxu0 0.0
    %821 = vmatprep.subr.mxu0 0.0
    %822 = vmatpush1.msra.mxu0 0.0
    %823 = vmatprep.subr.mxu0 0.0
    %824 = vmatpush1.msra.mxu0 0.0
    %825 = vmatprep.subr.mxu0 0.0
    %826 = vmatpush1.msra.mxu0 0.0
    %827 = vmatprep.subr.mxu0 0.0
    %828 = vmatpush1.msra.mxu0 0.0
    %829 = vmatprep.subr.mxu0 0.0
    %830 = vmatpush1.msra.mxu0 0.0
    %831 = vmatprep.subr.mxu0 0.0
    %832 = vmatpush1.msra.mxu0 0.0
    %833 = vmatprep.subr.mxu0 0.0
    %834 = vmatpush1.msra.mxu0 0.0
    %835 = vmatprep.subr.mxu0 0.0
    %836 = vmatpush1.msra.mxu0 0.0
    %837 = vmatprep.subr.mxu0 0.0
    %838 = vmatpush1.msra.mxu0 0.0
    %839 = vmatprep.subr.mxu0 0.0
    %840 = vmatpush1.msra.mxu0 0.0
    %841 = vmatprep.subr.mxu0 0.0
    %842 = vmatpush1.msra.mxu0 0.0
    %843 = vmatprep.subr.mxu0 0.0
    %844 = vmatpush1.msra.mxu0 0.0
    %845 = vmatprep.subr.mxu0 0.0
    %846 = vmatpush1.msra.mxu0 0.0
    %847 = vmatprep.subr.mxu0 0.0
    %848 = vmatpush1.msra.mxu0 0.0
    %849 = vmatprep.subr.mxu0 0.0
    %850 = vmatpush1.msra.mxu0 0.0
    %851 = vmatprep.mubr.f32.mxu0 0.0
    %v852 = vand.u32 %v673, 4294901760
    %853 = vmatmul.mubr.f32.gmra.mrb[0].mxu0 %v852
    %v854 = vpop.f32.mrb[0].mxu0
    %v855 = vadd.f32 %v754, %v854
    %v856 = vpop.f32.mrb[0].mxu0
    %857 = vmatprep.mubr.f32.mxu0 0.0
    %v858 = vand.u32 %v676, 4294901760
    %859 = vmatmul.mubr.f32.gmra.mrb[0].mxu0 %v858
    %v860 = vpop.f32.mrb[0].mxu0
    %v861 = vadd.f32 %v764, %v860
    %v862 = vpop.f32.mrb[0].mxu0
    %863 = vdwg.mxu0
    %864 = vmatprep.subr.mxu0 0.0
    %v865 = vand.u32 %v663, 4294901760
    %v866 = vsub.f32 %v663, %v865
    %867 = vmatpush1.msra.mxu0 %v866
    %868 = vmatprep.subr.mxu0 0.0
    %v869 = vand.u32 %v664, 4294901760
    %v870 = vsub.f32 %v664, %v869
    %871 = vmatpush1.msra.mxu0 %v870
    %872 = vmatprep.subr.mxu0 0.0
    %v873 = vand.u32 %v665, 4294901760
    %v874 = vsub.f32 %v665, %v873
    %875 = vmatpush1.msra.mxu0 %v874
    %876 = vmatprep.subr.mxu0 0.0
    %v877 = vand.u32 %v666, 4294901760
    %v878 = vsub.f32 %v666, %v877
    %879 = vmatpush1.msra.mxu0 %v878
    %880 = vmatprep.subr.mxu0 0.0
    %881 = vmatpush1.msra.mxu0 0.0
    %882 = vmatprep.subr.mxu0 0.0
    %883 = vmatpush1.msra.mxu0 0.0
    %884 = vmatprep.subr.mxu0 0.0
    %885 = vmatpush1.msra.mxu0 0.0
    %886 = vmatprep.subr.mxu0 0.0
    %887 = vmatpush1.msra.mxu0 0.0
    %888 = vmatprep.subr.mxu0 0.0
    %889 = vmatpush1.msra.mxu0 0.0
    %890 = vmatprep.subr.mxu0 0.0
    %891 = vmatpush1.msra.mxu0 0.0
    %892 = vmatprep.subr.mxu0 0.0
    %893 = vmatpush1.msra.mxu0 0.0
    %894 = vmatprep.subr.mxu0 0.0
    %895 = vmatpush1.msra.mxu0 0.0
    %896 = vmatprep.subr.mxu0 0.0
    %897 = vmatpush1.msra.mxu0 0.0
    %898 = vmatprep.subr.mxu0 0.0
    %899 = vmatpush1.msra.mxu0 0.0
    %900 = vmatprep.subr.mxu0 0.0
    %901 = vmatpush1.msra.mxu0 0.0
    %902 = vmatprep.subr.mxu0 0.0
    %903 = vmatpush1.msra.mxu0 0.0
    %904 = vmatprep.subr.mxu0 0.0
    %905 = vmatpush1.msra.mxu0 0.0
    %906 = vmatprep.subr.mxu0 0.0
    %907 = vmatpush1.msra.mxu0 0.0
    %908 = vmatprep.subr.mxu0 0.0
    %909 = vmatpush1.msra.mxu0 0.0
    %910 = vmatprep.subr.mxu0 0.0
    %911 = vmatpush1.msra.mxu0 0.0
    %912 = vmatprep.subr.mxu0 0.0
    %913 = vmatpush1.msra.mxu0 0.0
    %914 = vmatprep.subr.mxu0 0.0
    %915 = vmatpush1.msra.mxu0 0.0
    %916 = vmatprep.subr.mxu0 0.0
    %917 = vmatpush1.msra.mxu0 0.0
    %918 = vmatprep.subr.mxu0 0.0
    %919 = vmatpush1.msra.mxu0 0.0
    %920 = vmatprep.subr.mxu0 0.0
    %921 = vmatpush1.msra.mxu0 0.0
    %922 = vmatprep.subr.mxu0 0.0
    %923 = vmatpush1.msra.mxu0 0.0
    %924 = vmatprep.subr.mxu0 0.0
    %925 = vmatpush1.msra.mxu0 0.0
    %926 = vmatprep.subr.mxu0 0.0
    %927 = vmatpush1.msra.mxu0 0.0
    %928 = vmatprep.subr.mxu0 0.0
    %929 = vmatpush1.msra.mxu0 0.0
    %930 = vmatprep.subr.mxu0 0.0
    %931 = vmatpush1.msra.mxu0 0.0
    %932 = vmatprep.subr.mxu0 0.0
    %933 = vmatpush1.msra.mxu0 0.0
    %934 = vmatprep.subr.mxu0 0.0
    %935 = vmatpush1.msra.mxu0 0.0
    %936 = vmatprep.mubr.f32.mxu0 0.0
    %v937 = vand.u32 %v673, 4294901760
    %v938 = vsub.f32 %v673, %v937
    %939 = vmatmul.mubr.f32.gmra.mrb[0].mxu0 %v938
    %v940 = vpop.f32.mrb[0].mxu0
    %v941 = vadd.f32 %v855, %v940
    %v942 = vpop.f32.mrb[0].mxu0
    %943 = vmatprep.mubr.f32.mxu0 0.0
    %v944 = vand.u32 %v676, 4294901760
    %v945 = vsub.f32 %v676, %v944
    %946 = vmatmul.mubr.f32.gmra.mrb[0].mxu0 %v945
    %v947 = vpop.f32.mrb[0].mxu0
    %v948 = vadd.f32 %v861, %v947
    %v949 = vpop.f32.mrb[0].mxu0
    %950 = vdwg.mxu0
    %951 = vmatprep.subr.mxu0 0.0
    %v952 = vand.u32 %v663, 4294901760
    %953 = vmatpush1.msra.mxu0 %v952
    %954 = vmatprep.subr.mxu0 0.0
    %v955 = vand.u32 %v664, 4294901760
    %956 = vmatpush1.msra.mxu0 %v955
    %957 = vmatprep.subr.mxu0 0.0
    %v958 = vand.u32 %v665, 4294901760
    %959 = vmatpush1.msra.mxu0 %v958
    %960 = vmatprep.subr.mxu0 0.0
    %v961 = vand.u32 %v666, 4294901760
    %962 = vmatpush1.msra.mxu0 %v961
    %963 = vmatprep.subr.mxu0 0.0
    %964 = vmatpush1.msra.mxu0 0.0
    %965 = vmatprep.subr.mxu0 0.0
    %966 = vmatpush1.msra.mxu0 0.0
    %967 = vmatprep.subr.mxu0 0.0
    %968 = vmatpush1.msra.mxu0 0.0
    %969 = vmatprep.subr.mxu0 0.0
    %970 = vmatpush1.msra.mxu0 0.0
    %971 = vmatprep.subr.mxu0 0.0
    %972 = vmatpush1.msra.mxu0 0.0
    %973 = vmatprep.subr.mxu0 0.0
    %974 = vmatpush1.msra.mxu0 0.0
    %975 = vmatprep.subr.mxu0 0.0
    %976 = vmatpush1.msra.mxu0 0.0
    %977 = vmatprep.subr.mxu0 0.0
    %978 = vmatpush1.msra.mxu0 0.0
    %979 = vmatprep.subr.mxu0 0.0
    %980 = vmatpush1.msra.mxu0 0.0
    %981 = vmatprep.subr.mxu0 0.0
    %982 = vmatpush1.msra.mxu0 0.0
    %983 = vmatprep.subr.mxu0 0.0
    %984 = vmatpush1.msra.mxu0 0.0
    %985 = vmatprep.subr.mxu0 0.0
    %986 = vmatpush1.msra.mxu0 0.0
    %987 = vmatprep.subr.mxu0 0.0
    %988 = vmatpush1.msra.mxu0 0.0
    %989 = vmatprep.subr.mxu0 0.0
    %990 = vmatpush1.msra.mxu0 0.0
    %991 = vmatprep.subr.mxu0 0.0
    %992 = vmatpush1.msra.mxu0 0.0
    %993 = vmatprep.subr.mxu0 0.0
    %994 = vmatpush1.msra.mxu0 0.0
    %995 = vmatprep.subr.mxu0 0.0
    %996 = vmatpush1.msra.mxu0 0.0
    %997 = vmatprep.subr.mxu0 0.0
    %998 = vmatpush1.msra.mxu0 0.0
    %999 = vmatprep.subr.mxu0 0.0
    %1000 = vmatpush1.msra.mxu0 0.0
    %1001 = vmatprep.subr.mxu0 0.0
    %1002 = vmatpush1.msra.mxu0 0.0
    %1003 = vmatprep.subr.mxu0 0.0
    %1004 = vmatpush1.msra.mxu0 0.0
    %1005 = vmatprep.subr.mxu0 0.0
    %1006 = vmatpush1.msra.mxu0 0.0
    %1007 = vmatprep.subr.mxu0 0.0
    %1008 = vmatpush1.msra.mxu0 0.0
    %1009 = vmatprep.subr.mxu0 0.0
    %1010 = vmatpush1.msra.mxu0 0.0
    %1011 = vmatprep.subr.mxu0 0.0
    %1012 = vmatpush1.msra.mxu0 0.0
    %1013 = vmatprep.subr.mxu0 0.0
    %1014 = vmatpush1.msra.mxu0 0.0
    %1015 = vmatprep.subr.mxu0 0.0
    %1016 = vmatpush1.msra.mxu0 0.0
    %1017 = vmatprep.subr.mxu0 0.0
    %1018 = vmatpush1.msra.mxu0 0.0
    %1019 = vmatprep.mubr.f32.mxu0 0.0
    %v1020 = vand.u32 %v673, 4294901760
    %v1021 = vsub.f32 %v673, %v1020
    %v1022 = vand.u32 %v1021, 4294901760
    %1023 = vmatmul.mubr.f32.gmra.mrb[0].mxu0 %v1022
    %v1024 = vpop.f32.mrb[0].mxu0
    %v1025 = vadd.f32 %v941, %v1024
    %v1026 = vpop.f32.mrb[0].mxu0
    %1027 = vmatprep.mubr.f32.mxu0 0.0
    %v1028 = vand.u32 %v676, 4294901760
    %v1029 = vsub.f32 %v676, %v1028
    %v1030 = vand.u32 %v1029, 4294901760
    %1031 = vmatmul.mubr.f32.gmra.mrb[0].mxu0 %v1030
    %v1032 = vpop.f32.mrb[0].mxu0
    %v1033 = vadd.f32 %v948, %v1032
    %v1034 = vpop.f32.mrb[0].mxu0
    %1035 = vdwg.mxu0
    %1036 = vmatprep.subr.mxu0 0.0
    %v1037 = vand.u32 %v663, 4294901760
    %v1038 = vsub.f32 %v663, %v1037
    %v1039 = vand.u32 %v1038, 4294901760
    %1040 = vmatpush1.msra.mxu0 %v1039
    %1041 = vmatprep.subr.mxu0 0.0
    %v1042 = vand.u32 %v664, 4294901760
    %v1043 = vsub.f32 %v664, %v1042
    %v1044 = vand.u32 %v1043, 4294901760
    %1045 = vmatpush1.msra.mxu0 %v1044
    %1046 = vmatprep.subr.mxu0 0.0
    %v1047 = vand.u32 %v665, 4294901760
    %v1048 = vsub.f32 %v665, %v1047
    %v1049 = vand.u32 %v1048, 4294901760
    %1050 = vmatpush1.msra.mxu0 %v1049
    %1051 = vmatprep.subr.mxu0 0.0
    %v1052 = vand.u32 %v666, 4294901760
    %v1053 = vsub.f32 %v666, %v1052
    %v1054 = vand.u32 %v1053, 4294901760
    %1055 = vmatpush1.msra.mxu0 %v1054
    %1056 = vmatprep.subr.mxu0 0.0
    %1057 = vmatpush1.msra.mxu0 0.0
    %1058 = vmatprep.subr.mxu0 0.0
    %1059 = vmatpush1.msra.mxu0 0.0
    %1060 = vmatprep.subr.mxu0 0.0
    %1061 = vmatpush1.msra.mxu0 0.0
    %1062 = vmatprep.subr.mxu0 0.0
    %1063 = vmatpush1.msra.mxu0 0.0
    %1064 = vmatprep.subr.mxu0 0.0
    %1065 = vmatpush1.msra.mxu0 0.0
    %1066 = vmatprep.subr.mxu0 0.0
    %1067 = vmatpush1.msra.mxu0 0.0
    %1068 = vmatprep.subr.mxu0 0.0
    %1069 = vmatpush1.msra.mxu0 0.0
    %1070 = vmatprep.subr.mxu0 0.0
    %1071 = vmatpush1.msra.mxu0 0.0
    %1072 = vmatprep.subr.mxu0 0.0
    %1073 = vmatpush1.msra.mxu0 0.0
    %1074 = vmatprep.subr.mxu0 0.0
    %1075 = vmatpush1.msra.mxu0 0.0
    %1076 = vmatprep.subr.mxu0 0.0
    %1077 = vmatpush1.msra.mxu0 0.0
    %1078 = vmatprep.subr.mxu0 0.0
    %1079 = vmatpush1.msra.mxu0 0.0
    %1080 = vmatprep.subr.mxu0 0.0
    %1081 = vmatpush1.msra.mxu0 0.0
    %1082 = vmatprep.subr.mxu0 0.0
    %1083 = vmatpush1.msra.mxu0 0.0
    %1084 = vmatprep.subr.mxu0 0.0
    %1085 = vmatpush1.msra.mxu0 0.0
    %1086 = vmatprep.subr.mxu0 0.0
    %1087 = vmatpush1.msra.mxu0 0.0
    %1088 = vmatprep.subr.mxu0 0.0
    %1089 = vmatpush1.msra.mxu0 0.0
    %1090 = vmatprep.subr.mxu0 0.0
    %1091 = vmatpush1.msra.mxu0 0.0
    %1092 = vmatprep.subr.mxu0 0.0
    %1093 = vmatpush1.msra.mxu0 0.0
    %1094 = vmatprep.subr.mxu0 0.0
    %1095 = vmatpush1.msra.mxu0 0.0
    %1096 = vmatprep.subr.mxu0 0.0
    %1097 = vmatpush1.msra.mxu0 0.0
    %1098 = vmatprep.subr.mxu0 0.0
    %1099 = vmatpush1.msra.mxu0 0.0
    %1100 = vmatprep.subr.mxu0 0.0
    %1101 = vmatpush1.msra.mxu0 0.0
    %1102 = vmatprep.subr.mxu0 0.0
    %1103 = vmatpush1.msra.mxu0 0.0
    %1104 = vmatprep.subr.mxu0 0.0
    %1105 = vmatpush1.msra.mxu0 0.0
    %1106 = vmatprep.subr.mxu0 0.0
    %1107 = vmatpush1.msra.mxu0 0.0
    %1108 = vmatprep.subr.mxu0 0.0
    %1109 = vmatpush1.msra.mxu0 0.0
    %1110 = vmatprep.subr.mxu0 0.0
    %1111 = vmatpush1.msra.mxu0 0.0
    %1112 = vmatprep.mubr.f32.mxu0 0.0
    %v1113 = vand.u32 %v673, 4294901760
    %1114 = vmatmul.mubr.f32.gmra.mrb[0].mxu0 %v1113
    %v1115 = vpop.f32.mrb[0].mxu0
    %v1116 = vadd.f32 %v1025, %v1115
    %v1117 = vpop.f32.mrb[0].mxu0
    %1118 = vmatprep.mubr.f32.mxu0 0.0
    %v1119 = vand.u32 %v676, 4294901760
    %1120 = vmatmul.mubr.f32.gmra.mrb[0].mxu0 %v1119
    %v1121 = vpop.f32.mrb[0].mxu0
    %v1122 = vadd.f32 %v1033, %v1121
    %v1123 = vpop.f32.mrb[0].mxu0
    %1124 = vdwg.mxu0
    %1125 = vmatprep.subr.mxu0 0.0
    %v1126 = vand.u32 %v663, 4294901760
    %1127 = vmatpush1.msra.mxu0 %v1126
    %1128 = vmatprep.subr.mxu0 0.0
    %v1129 = vand.u32 %v664, 4294901760
    %1130 = vmatpush1.msra.mxu0 %v1129
    %1131 = vmatprep.subr.mxu0 0.0
    %v1132 = vand.u32 %v665, 4294901760
    %1133 = vmatpush1.msra.mxu0 %v1132
    %1134 = vmatprep.subr.mxu0 0.0
    %v1135 = vand.u32 %v666, 4294901760
    %1136 = vmatpush1.msra.mxu0 %v1135
    %1137 = vmatprep.subr.mxu0 0.0
    %1138 = vmatpush1.msra.mxu0 0.0
    %1139 = vmatprep.subr.mxu0 0.0
    %1140 = vmatpush1.msra.mxu0 0.0
    %1141 = vmatprep.subr.mxu0 0.0
    %1142 = vmatpush1.msra.mxu0 0.0
    %1143 = vmatprep.subr.mxu0 0.0
    %1144 = vmatpush1.msra.mxu0 0.0
    %1145 = vmatprep.subr.mxu0 0.0
    %1146 = vmatpush1.msra.mxu0 0.0
    %1147 = vmatprep.subr.mxu0 0.0
    %1148 = vmatpush1.msra.mxu0 0.0
    %1149 = vmatprep.subr.mxu0 0.0
    %1150 = vmatpush1.msra.mxu0 0.0
    %1151 = vmatprep.subr.mxu0 0.0
    %1152 = vmatpush1.msra.mxu0 0.0
    %1153 = vmatprep.subr.mxu0 0.0
    %1154 = vmatpush1.msra.mxu0 0.0
    %1155 = vmatprep.subr.mxu0 0.0
    %1156 = vmatpush1.msra.mxu0 0.0
    %1157 = vmatprep.subr.mxu0 0.0
    %1158 = vmatpush1.msra.mxu0 0.0
    %1159 = vmatprep.subr.mxu0 0.0
    %1160 = vmatpush1.msra.mxu0 0.0
    %1161 = vmatprep.subr.mxu0 0.0
    %1162 = vmatpush1.msra.mxu0 0.0
    %1163 = vmatprep.subr.mxu0 0.0
    %1164 = vmatpush1.msra.mxu0 0.0
    %1165 = vmatprep.subr.mxu0 0.0
    %1166 = vmatpush1.msra.mxu0 0.0
    %1167 = vmatprep.subr.mxu0 0.0
    %1168 = vmatpush1.msra.mxu0 0.0
    %1169 = vmatprep.subr.mxu0 0.0
    %1170 = vmatpush1.msra.mxu0 0.0
    %1171 = vmatprep.subr.mxu0 0.0
    %1172 = vmatpush1.msra.mxu0 0.0
    %1173 = vmatprep.subr.mxu0 0.0
    %1174 = vmatpush1.msra.mxu0 0.0
    %1175 = vmatprep.subr.mxu0 0.0
    %1176 = vmatpush1.msra.mxu0 0.0
    %1177 = vmatprep.subr.mxu0 0.0
    %1178 = vmatpush1.msra.mxu0 0.0
    %1179 = vmatprep.subr.mxu0 0.0
    %1180 = vmatpush1.msra.mxu0 0.0
    %1181 = vmatprep.subr.mxu0 0.0
    %1182 = vmatpush1.msra.mxu0 0.0
    %1183 = vmatprep.subr.mxu0 0.0
    %1184 = vmatpush1.msra.mxu0 0.0
    %1185 = vmatprep.subr.mxu0 0.0
    %1186 = vmatpush1.msra.mxu0 0.0
    %1187 = vmatprep.subr.mxu0 0.0
    %1188 = vmatpush1.msra.mxu0 0.0
    %1189 = vmatprep.subr.mxu0 0.0
    %1190 = vmatpush1.msra.mxu0 0.0
    %1191 = vmatprep.subr.mxu0 0.0
    %1192 = vmatpush1.msra.mxu0 0.0
    %1193 = vmatprep.mubr.f32.mxu0 0.0
    %v1194 = vand.u32 %v673, 4294901760
    %1195 = vmatmul.mubr.f32.gmra.mrb[0].mxu0 %v1194
    %v1196 = vpop.f32.mrb[0].mxu0
    %v1197 = vadd.f32 %v1116, %v1196
    %v1198 = vpop.f32.mrb[0].mxu0
    %1199 = vmatprep.mubr.f32.mxu0 0.0
    %v1200 = vand.u32 %v676, 4294901760
    %1201 = vmatmul.mubr.f32.gmra.mrb[0].mxu0 %v1200
    %v1202 = vpop.f32.mrb[0].mxu0
    %v1203 = vadd.f32 %v1122, %v1202
    %v1204 = vpop.f32.mrb[0].mxu0
    %1205 = vdwg.mxu0
    %v1206 = vld [vmem:[#allocation7] sm:$0xff]
    %v1207 = vld [vmem:[#allocation7 + $0x8] sm:$0xff]
    %v1208 = vld [vmem:[#allocation11] sm:$0xff]
    %v1209 = vld [vmem:[#allocation11 + $0x8] sm:$0xff]
    %v1210 = vld [vmem:[#allocation11 + $0x10] sm:$0xff]
    %v1211 = vld [vmem:[#allocation11 + $0x18] sm:$0xff]
    %v1212 = vld [vmem:[%s6 + $0x2] sm:$0x1]
    %v1213 = vlaneseq
    %v1214 = vshrl.u32 %v1213, 7
    %v1215 = vsub.s32 0, %v1214
    %v1216 = vrot.slane %v1212, %v1215
    %v1218 = vsel %vm126, %v1206, 0
    %v1221 = vsel %vm126, %v1207, 0
    %1223 = vmatprep.subr.mxu0 0.0
    %v1224 = vand.u32 %v1208, 4294901760
    %1225 = vmatpush1.msra.mxu0 %v1224
    %1226 = vmatprep.subr.mxu0 0.0
    %v1227 = vand.u32 %v1209, 4294901760
    %1228 = vmatpush1.msra.mxu0 %v1227
    %1229 = vmatprep.subr.mxu0 0.0
    %v1230 = vand.u32 %v1210, 4294901760
    %1231 = vmatpush1.msra.mxu0 %v1230
    %1232 = vmatprep.subr.mxu0 0.0
    %v1233 = vand.u32 %v1211, 4294901760
    %1234 = vmatpush1.msra.mxu0 %v1233
    %1235 = vmatprep.subr.mxu0 0.0
    %1236 = vmatpush1.msra.mxu0 0.0
    %1237 = vmatprep.subr.mxu0 0.0
    %1238 = vmatpush1.msra.mxu0 0.0
    %1239 = vmatprep.subr.mxu0 0.0
    %1240 = vmatpush1.msra.mxu0 0.0
    %1241 = vmatprep.subr.mxu0 0.0
    %1242 = vmatpush1.msra.mxu0 0.0
    %1243 = vmatprep.subr.mxu0 0.0
    %1244 = vmatpush1.msra.mxu0 0.0
    %1245 = vmatprep.subr.mxu0 0.0
    %1246 = vmatpush1.msra.mxu0 0.0
    %1247 = vmatprep.subr.mxu0 0.0
    %1248 = vmatpush1.msra.mxu0 0.0
    %1249 = vmatprep.subr.mxu0 0.0
    %1250 = vmatpush1.msra.mxu0 0.0
    %1251 = vmatprep.subr.mxu0 0.0
    %1252 = vmatpush1.msra.mxu0 0.0
    %1253 = vmatprep.subr.mxu0 0.0
    %1254 = vmatpush1.msra.mxu0 0.0
    %1255 = vmatprep.subr.mxu0 0.0
    %1256 = vmatpush1.msra.mxu0 0.0
    %1257 = vmatprep.subr.mxu0 0.0
    %1258 = vmatpush1.msra.mxu0 0.0
    %1259 = vmatprep.subr.mxu0 0.0
    %1260 = vmatpush1.msra.mxu0 0.0
    %1261 = vmatprep.subr.mxu0 0.0
    %1262 = vmatpush1.msra.mxu0 0.0
    %1263 = vmatprep.subr.mxu0 0.0
    %1264 = vmatpush1.msra.mxu0 0.0
    %1265 = vmatprep.subr.mxu0 0.0
    %1266 = vmatpush1.msra.mxu0 0.0
    %1267 = vmatprep.subr.mxu0 0.0
    %1268 = vmatpush1.msra.mxu0 0.0
    %1269 = vmatprep.subr.mxu0 0.0
    %1270 = vmatpush1.msra.mxu0 0.0
    %1271 = vmatprep.subr.mxu0 0.0
    %1272 = vmatpush1.msra.mxu0 0.0
    %1273 = vmatprep.subr.mxu0 0.0
    %1274 = vmatpush1.msra.mxu0 0.0
    %1275 = vmatprep.subr.mxu0 0.0
    %1276 = vmatpush1.msra.mxu0 0.0
    %1277 = vmatprep.subr.mxu0 0.0
    %1278 = vmatpush1.msra.mxu0 0.0
    %1279 = vmatprep.subr.mxu0 0.0
    %1280 = vmatpush1.msra.mxu0 0.0
    %1281 = vmatprep.subr.mxu0 0.0
    %1282 = vmatpush1.msra.mxu0 0.0
    %1283 = vmatprep.subr.mxu0 0.0
    %1284 = vmatpush1.msra.mxu0 0.0
    %1285 = vmatprep.subr.mxu0 0.0
    %1286 = vmatpush1.msra.mxu0 0.0
    %1287 = vmatprep.subr.mxu0 0.0
    %1288 = vmatpush1.msra.mxu0 0.0
    %1289 = vmatprep.subr.mxu0 0.0
    %1290 = vmatpush1.msra.mxu0 0.0
    %1291 = vmatprep.mubr.f32.mxu0 0.0
    %v1292 = vand.u32 %v1218, 4294901760
    %v1293 = vsub.f32 %v1218, %v1292
    %v1294 = vand.u32 %v1293, 4294901760
    %v1295 = vsub.f32 %v1293, %v1294
    %v1296 = vand.u32 %v1295, 4294901760
    %1297 = vmatmul.mubr.f32.gmra.mrb[0].mxu0 %v1296
    %v1298 = vpop.f32.mrb[0].mxu0
    %v1299 = vadd.f32 %v1216, %v1298
    %v1300 = vpop.f32.mrb[0].mxu0
    %1301 = vmatprep.mubr.f32.mxu0 0.0
    %v1302 = vand.u32 %v1221, 4294901760
    %v1303 = vsub.f32 %v1221, %v1302
    %v1304 = vand.u32 %v1303, 4294901760
    %v1305 = vsub.f32 %v1303, %v1304
    %v1306 = vand.u32 %v1305, 4294901760
    %1307 = vmatmul.mubr.f32.gmra.mrb[0].mxu0 %v1306
    %v1308 = vpop.f32.mrb[0].mxu0
    %v1309 = vadd.f32 %v1216, %v1308
    %v1310 = vpop.f32.mrb[0].mxu0
    %1311 = vdwg.mxu0
    %1312 = vmatprep.subr.mxu0 0.0
    %v1313 = vand.u32 %v1208, 4294901760
    %v1314 = vsub.f32 %v1208, %v1313
    %v1315 = vand.u32 %v1314, 4294901760
    %v1316 = vsub.f32 %v1314, %v1315
    %v1317 = vand.u32 %v1316, 4294901760
    %1318 = vmatpush1.msra.mxu0 %v1317
    %1319 = vmatprep.subr.mxu0 0.0
    %v1320 = vand.u32 %v1209, 4294901760
    %v1321 = vsub.f32 %v1209, %v1320
    %v1322 = vand.u32 %v1321, 4294901760
    %v1323 = vsub.f32 %v1321, %v1322
    %v1324 = vand.u32 %v1323, 4294901760
    %1325 = vmatpush1.msra.mxu0 %v1324
    %1326 = vmatprep.subr.mxu0 0.0
    %v1327 = vand.u32 %v1210, 4294901760
    %v1328 = vsub.f32 %v1210, %v1327
    %v1329 = vand.u32 %v1328, 4294901760
    %v1330 = vsub.f32 %v1328, %v1329
    %v1331 = vand.u32 %v1330, 4294901760
    %1332 = vmatpush1.msra.mxu0 %v1331
    %1333 = vmatprep.subr.mxu0 0.0
    %v1334 = vand.u32 %v1211, 4294901760
    %v1335 = vsub.f32 %v1211, %v1334
    %v1336 = vand.u32 %v1335, 4294901760
    %v1337 = vsub.f32 %v1335, %v1336
    %v1338 = vand.u32 %v1337, 4294901760
    %1339 = vmatpush1.msra.mxu0 %v1338
    %1340 = vmatprep.subr.mxu0 0.0
    %1341 = vmatpush1.msra.mxu0 0.0
    %1342 = vmatprep.subr.mxu0 0.0
    %1343 = vmatpush1.msra.mxu0 0.0
    %1344 = vmatprep.subr.mxu0 0.0
    %1345 = vmatpush1.msra.mxu0 0.0
    %1346 = vmatprep.subr.mxu0 0.0
    %1347 = vmatpush1.msra.mxu0 0.0
    %1348 = vmatprep.subr.mxu0 0.0
    %1349 = vmatpush1.msra.mxu0 0.0
    %1350 = vmatprep.subr.mxu0 0.0
    %1351 = vmatpush1.msra.mxu0 0.0
    %1352 = vmatprep.subr.mxu0 0.0
    %1353 = vmatpush1.msra.mxu0 0.0
    %1354 = vmatprep.subr.mxu0 0.0
    %1355 = vmatpush1.msra.mxu0 0.0
    %1356 = vmatprep.subr.mxu0 0.0
    %1357 = vmatpush1.msra.mxu0 0.0
    %1358 = vmatprep.subr.mxu0 0.0
    %1359 = vmatpush1.msra.mxu0 0.0
    %1360 = vmatprep.subr.mxu0 0.0
    %1361 = vmatpush1.msra.mxu0 0.0
    %1362 = vmatprep.subr.mxu0 0.0
    %1363 = vmatpush1.msra.mxu0 0.0
    %1364 = vmatprep.subr.mxu0 0.0
    %1365 = vmatpush1.msra.mxu0 0.0
    %1366 = vmatprep.subr.mxu0 0.0
    %1367 = vmatpush1.msra.mxu0 0.0
    %1368 = vmatprep.subr.mxu0 0.0
    %1369 = vmatpush1.msra.mxu0 0.0
    %1370 = vmatprep.subr.mxu0 0.0
    %1371 = vmatpush1.msra.mxu0 0.0
    %1372 = vmatprep.subr.mxu0 0.0
    %1373 = vmatpush1.msra.mxu0 0.0
    %1374 = vmatprep.subr.mxu0 0.0
    %1375 = vmatpush1.msra.mxu0 0.0
    %1376 = vmatprep.subr.mxu0 0.0
    %1377 = vmatpush1.msra.mxu0 0.0
    %1378 = vmatprep.subr.mxu0 0.0
    %1379 = vmatpush1.msra.mxu0 0.0
    %1380 = vmatprep.subr.mxu0 0.0
    %1381 = vmatpush1.msra.mxu0 0.0
    %1382 = vmatprep.subr.mxu0 0.0
    %1383 = vmatpush1.msra.mxu0 0.0
    %1384 = vmatprep.subr.mxu0 0.0
    %1385 = vmatpush1.msra.mxu0 0.0
    %1386 = vmatprep.subr.mxu0 0.0
    %1387 = vmatpush1.msra.mxu0 0.0
    %1388 = vmatprep.subr.mxu0 0.0
    %1389 = vmatpush1.msra.mxu0 0.0
    %1390 = vmatprep.subr.mxu0 0.0
    %1391 = vmatpush1.msra.mxu0 0.0
    %1392 = vmatprep.subr.mxu0 0.0
    %1393 = vmatpush1.msra.mxu0 0.0
    %1394 = vmatprep.subr.mxu0 0.0
    %1395 = vmatpush1.msra.mxu0 0.0
    %1396 = vmatprep.mubr.f32.mxu0 0.0
    %v1397 = vand.u32 %v1218, 4294901760
    %1398 = vmatmul.mubr.f32.gmra.mrb[0].mxu0 %v1397
    %v1399 = vpop.f32.mrb[0].mxu0
    %v1400 = vadd.f32 %v1299, %v1399
    %v1401 = vpop.f32.mrb[0].mxu0
    %1402 = vmatprep.mubr.f32.mxu0 0.0
    %v1403 = vand.u32 %v1221, 4294901760
    %1404 = vmatmul.mubr.f32.gmra.mrb[0].mxu0 %v1403
    %v1405 = vpop.f32.mrb[0].mxu0
    %v1406 = vadd.f32 %v1309, %v1405
    %v1407 = vpop.f32.mrb[0].mxu0
    %1408 = vdwg.mxu0
    %1409 = vmatprep.subr.mxu0 0.0
    %v1410 = vand.u32 %v1208, 4294901760
    %v1411 = vsub.f32 %v1208, %v1410
    %1412 = vmatpush1.msra.mxu0 %v1411
    %1413 = vmatprep.subr.mxu0 0.0
    %v1414 = vand.u32 %v1209, 4294901760
    %v1415 = vsub.f32 %v1209, %v1414
    %1416 = vmatpush1.msra.mxu0 %v1415
    %1417 = vmatprep.subr.mxu0 0.0
    %v1418 = vand.u32 %v1210, 4294901760
    %v1419 = vsub.f32 %v1210, %v1418
    %1420 = vmatpush1.msra.mxu0 %v1419
    %1421 = vmatprep.subr.mxu0 0.0
    %v1422 = vand.u32 %v1211, 4294901760
    %v1423 = vsub.f32 %v1211, %v1422
    %1424 = vmatpush1.msra.mxu0 %v1423
    %1425 = vmatprep.subr.mxu0 0.0
    %1426 = vmatpush1.msra.mxu0 0.0
    %1427 = vmatprep.subr.mxu0 0.0
    %1428 = vmatpush1.msra.mxu0 0.0
    %1429 = vmatprep.subr.mxu0 0.0
    %1430 = vmatpush1.msra.mxu0 0.0
    %1431 = vmatprep.subr.mxu0 0.0
    %1432 = vmatpush1.msra.mxu0 0.0
    %1433 = vmatprep.subr.mxu0 0.0
    %1434 = vmatpush1.msra.mxu0 0.0
    %1435 = vmatprep.subr.mxu0 0.0
    %1436 = vmatpush1.msra.mxu0 0.0
    %1437 = vmatprep.subr.mxu0 0.0
    %1438 = vmatpush1.msra.mxu0 0.0
    %1439 = vmatprep.subr.mxu0 0.0
    %1440 = vmatpush1.msra.mxu0 0.0
    %1441 = vmatprep.subr.mxu0 0.0
    %1442 = vmatpush1.msra.mxu0 0.0
    %1443 = vmatprep.subr.mxu0 0.0
    %1444 = vmatpush1.msra.mxu0 0.0
    %1445 = vmatprep.subr.mxu0 0.0
    %1446 = vmatpush1.msra.mxu0 0.0
    %1447 = vmatprep.subr.mxu0 0.0
    %1448 = vmatpush1.msra.mxu0 0.0
    %1449 = vmatprep.subr.mxu0 0.0
    %1450 = vmatpush1.msra.mxu0 0.0
    %1451 = vmatprep.subr.mxu0 0.0
    %1452 = vmatpush1.msra.mxu0 0.0
    %1453 = vmatprep.subr.mxu0 0.0
    %1454 = vmatpush1.msra.mxu0 0.0
    %1455 = vmatprep.subr.mxu0 0.0
    %1456 = vmatpush1.msra.mxu0 0.0
    %1457 = vmatprep.subr.mxu0 0.0
    %1458 = vmatpush1.msra.mxu0 0.0
    %1459 = vmatprep.subr.mxu0 0.0
    %1460 = vmatpush1.msra.mxu0 0.0
    %1461 = vmatprep.subr.mxu0 0.0
    %1462 = vmatpush1.msra.mxu0 0.0
    %1463 = vmatprep.subr.mxu0 0.0
    %1464 = vmatpush1.msra.mxu0 0.0
    %1465 = vmatprep.subr.mxu0 0.0
    %1466 = vmatpush1.msra.mxu0 0.0
    %1467 = vmatprep.subr.mxu0 0.0
    %1468 = vmatpush1.msra.mxu0 0.0
    %1469 = vmatprep.subr.mxu0 0.0
    %1470 = vmatpush1.msra.mxu0 0.0
    %1471 = vmatprep.subr.mxu0 0.0
    %1472 = vmatpush1.msra.mxu0 0.0
    %1473 = vmatprep.subr.mxu0 0.0
    %1474 = vmatpush1.msra.mxu0 0.0
    %1475 = vmatprep.subr.mxu0 0.0
    %1476 = vmatpush1.msra.mxu0 0.0
    %1477 = vmatprep.subr.mxu0 0.0
    %1478 = vmatpush1.msra.mxu0 0.0
    %1479 = vmatprep.subr.mxu0 0.0
    %1480 = vmatpush1.msra.mxu0 0.0
    %1481 = vmatprep.mubr.f32.mxu0 0.0
    %v1482 = vand.u32 %v1218, 4294901760
    %v1483 = vsub.f32 %v1218, %v1482
    %1484 = vmatmul.mubr.f32.gmra.mrb[0].mxu0 %v1483
    %v1485 = vpop.f32.mrb[0].mxu0
    %v1486 = vadd.f32 %v1400, %v1485
    %v1487 = vpop.f32.mrb[0].mxu0
    %1488 = vmatprep.mubr.f32.mxu0 0.0
    %v1489 = vand.u32 %v1221, 4294901760
    %v1490 = vsub.f32 %v1221, %v1489
    %1491 = vmatmul.mubr.f32.gmra.mrb[0].mxu0 %v1490
    %v1492 = vpop.f32.mrb[0].mxu0
    %v1493 = vadd.f32 %v1406, %v1492
    %v1494 = vpop.f32.mrb[0].mxu0
    %1495 = vdwg.mxu0
    %1496 = vmatprep.subr.mxu0 0.0
    %v1497 = vand.u32 %v1208, 4294901760
    %1498 = vmatpush1.msra.mxu0 %v1497
    %1499 = vmatprep.subr.mxu0 0.0
    %v1500 = vand.u32 %v1209, 4294901760
    %1501 = vmatpush1.msra.mxu0 %v1500
    %1502 = vmatprep.subr.mxu0 0.0
    %v1503 = vand.u32 %v1210, 4294901760
    %1504 = vmatpush1.msra.mxu0 %v1503
    %1505 = vmatprep.subr.mxu0 0.0
    %v1506 = vand.u32 %v1211, 4294901760
    %1507 = vmatpush1.msra.mxu0 %v1506
    %1508 = vmatprep.subr.mxu0 0.0
    %1509 = vmatpush1.msra.mxu0 0.0
    %1510 = vmatprep.subr.mxu0 0.0
    %1511 = vmatpush1.msra.mxu0 0.0
    %1512 = vmatprep.subr.mxu0 0.0
    %1513 = vmatpush1.msra.mxu0 0.0
    %1514 = vmatprep.subr.mxu0 0.0
    %1515 = vmatpush1.msra.mxu0 0.0
    %1516 = vmatprep.subr.mxu0 0.0
    %1517 = vmatpush1.msra.mxu0 0.0
    %1518 = vmatprep.subr.mxu0 0.0
    %1519 = vmatpush1.msra.mxu0 0.0
    %1520 = vmatprep.subr.mxu0 0.0
    %1521 = vmatpush1.msra.mxu0 0.0
    %1522 = vmatprep.subr.mxu0 0.0
    %1523 = vmatpush1.msra.mxu0 0.0
    %1524 = vmatprep.subr.mxu0 0.0
    %1525 = vmatpush1.msra.mxu0 0.0
    %1526 = vmatprep.subr.mxu0 0.0
    %1527 = vmatpush1.msra.mxu0 0.0
    %1528 = vmatprep.subr.mxu0 0.0
    %1529 = vmatpush1.msra.mxu0 0.0
    %1530 = vmatprep.subr.mxu0 0.0
    %1531 = vmatpush1.msra.mxu0 0.0
    %1532 = vmatprep.subr.mxu0 0.0
    %1533 = vmatpush1.msra.mxu0 0.0
    %1534 = vmatprep.subr.mxu0 0.0
    %1535 = vmatpush1.msra.mxu0 0.0
    %1536 = vmatprep.subr.mxu0 0.0
    %1537 = vmatpush1.msra.mxu0 0.0
    %1538 = vmatprep.subr.mxu0 0.0
    %1539 = vmatpush1.msra.mxu0 0.0
    %1540 = vmatprep.subr.mxu0 0.0
    %1541 = vmatpush1.msra.mxu0 0.0
    %1542 = vmatprep.subr.mxu0 0.0
    %1543 = vmatpush1.msra.mxu0 0.0
    %1544 = vmatprep.subr.mxu0 0.0
    %1545 = vmatpush1.msra.mxu0 0.0
    %1546 = vmatprep.subr.mxu0 0.0
    %1547 = vmatpush1.msra.mxu0 0.0
    %1548 = vmatprep.subr.mxu0 0.0
    %1549 = vmatpush1.msra.mxu0 0.0
    %1550 = vmatprep.subr.mxu0 0.0
    %1551 = vmatpush1.msra.mxu0 0.0
    %1552 = vmatprep.subr.mxu0 0.0
    %1553 = vmatpush1.msra.mxu0 0.0
    %1554 = vmatprep.subr.mxu0 0.0
    %1555 = vmatpush1.msra.mxu0 0.0
    %1556 = vmatprep.subr.mxu0 0.0
    %1557 = vmatpush1.msra.mxu0 0.0
    %1558 = vmatprep.subr.mxu0 0.0
    %1559 = vmatpush1.msra.mxu0 0.0
    %1560 = vmatprep.subr.mxu0 0.0
    %1561 = vmatpush1.msra.mxu0 0.0
    %1562 = vmatprep.subr.mxu0 0.0
    %1563 = vmatpush1.msra.mxu0 0.0
    %1564 = vmatprep.mubr.f32.mxu0 0.0
    %v1565 = vand.u32 %v1218, 4294901760
    %v1566 = vsub.f32 %v1218, %v1565
    %v1567 = vand.u32 %v1566, 4294901760
    %1568 = vmatmul.mubr.f32.gmra.mrb[0].mxu0 %v1567
    %v1569 = vpop.f32.mrb[0].mxu0
    %v1570 = vadd.f32 %v1486, %v1569
    %v1571 = vpop.f32.mrb[0].mxu0
    %1572 = vmatprep.mubr.f32.mxu0 0.0
    %v1573 = vand.u32 %v1221, 4294901760
    %v1574 = vsub.f32 %v1221, %v1573
    %v1575 = vand.u32 %v1574, 4294901760
    %1576 = vmatmul.mubr.f32.gmra.mrb[0].mxu0 %v1575
    %v1577 = vpop.f32.mrb[0].mxu0
    %v1578 = vadd.f32 %v1493, %v1577
    %v1579 = vpop.f32.mrb[0].mxu0
    %1580 = vdwg.mxu0
    %1581 = vmatprep.subr.mxu0 0.0
    %v1582 = vand.u32 %v1208, 4294901760
    %v1583 = vsub.f32 %v1208, %v1582
    %v1584 = vand.u32 %v1583, 4294901760
    %1585 = vmatpush1.msra.mxu0 %v1584
    %1586 = vmatprep.subr.mxu0 0.0
    %v1587 = vand.u32 %v1209, 4294901760
    %v1588 = vsub.f32 %v1209, %v1587
    %v1589 = vand.u32 %v1588, 4294901760
    %1590 = vmatpush1.msra.mxu0 %v1589
    %1591 = vmatprep.subr.mxu0 0.0
    %v1592 = vand.u32 %v1210, 4294901760
    %v1593 = vsub.f32 %v1210, %v1592
    %v1594 = vand.u32 %v1593, 4294901760
    %1595 = vmatpush1.msra.mxu0 %v1594
    %1596 = vmatprep.subr.mxu0 0.0
    %v1597 = vand.u32 %v1211, 4294901760
    %v1598 = vsub.f32 %v1211, %v1597
    %v1599 = vand.u32 %v1598, 4294901760
    %1600 = vmatpush1.msra.mxu0 %v1599
    %1601 = vmatprep.subr.mxu0 0.0
    %1602 = vmatpush1.msra.mxu0 0.0
    %1603 = vmatprep.subr.mxu0 0.0
    %1604 = vmatpush1.msra.mxu0 0.0
    %1605 = vmatprep.subr.mxu0 0.0
    %1606 = vmatpush1.msra.mxu0 0.0
    %1607 = vmatprep.subr.mxu0 0.0
    %1608 = vmatpush1.msra.mxu0 0.0
    %1609 = vmatprep.subr.mxu0 0.0
    %1610 = vmatpush1.msra.mxu0 0.0
    %1611 = vmatprep.subr.mxu0 0.0
    %1612 = vmatpush1.msra.mxu0 0.0
    %1613 = vmatprep.subr.mxu0 0.0
    %1614 = vmatpush1.msra.mxu0 0.0
    %1615 = vmatprep.subr.mxu0 0.0
    %1616 = vmatpush1.msra.mxu0 0.0
    %1617 = vmatprep.subr.mxu0 0.0
    %1618 = vmatpush1.msra.mxu0 0.0
    %1619 = vmatprep.subr.mxu0 0.0
    %1620 = vmatpush1.msra.mxu0 0.0
    %1621 = vmatprep.subr.mxu0 0.0
    %1622 = vmatpush1.msra.mxu0 0.0
    %1623 = vmatprep.subr.mxu0 0.0
    %1624 = vmatpush1.msra.mxu0 0.0
    %1625 = vmatprep.subr.mxu0 0.0
    %1626 = vmatpush1.msra.mxu0 0.0
    %1627 = vmatprep.subr.mxu0 0.0
    %1628 = vmatpush1.msra.mxu0 0.0
    %1629 = vmatprep.subr.mxu0 0.0
    %1630 = vmatpush1.msra.mxu0 0.0
    %1631 = vmatprep.subr.mxu0 0.0
    %1632 = vmatpush1.msra.mxu0 0.0
    %1633 = vmatprep.subr.mxu0 0.0
    %1634 = vmatpush1.msra.mxu0 0.0
    %1635 = vmatprep.subr.mxu0 0.0
    %1636 = vmatpush1.msra.mxu0 0.0
    %1637 = vmatprep.subr.mxu0 0.0
    %1638 = vmatpush1.msra.mxu0 0.0
    %1639 = vmatprep.subr.mxu0 0.0
    %1640 = vmatpush1.msra.mxu0 0.0
    %1641 = vmatprep.subr.mxu0 0.0
    %1642 = vmatpush1.msra.mxu0 0.0
    %1643 = vmatprep.subr.mxu0 0.0
    %1644 = vmatpush1.msra.mxu0 0.0
    %1645 = vmatprep.subr.mxu0 0.0
    %1646 = vmatpush1.msra.mxu0 0.0
    %1647 = vmatprep.subr.mxu0 0.0
    %1648 = vmatpush1.msra.mxu0 0.0
    %1649 = vmatprep.subr.mxu0 0.0
    %1650 = vmatpush1.msra.mxu0 0.0
    %1651 = vmatprep.subr.mxu0 0.0
    %1652 = vmatpush1.msra.mxu0 0.0
    %1653 = vmatprep.subr.mxu0 0.0
    %1654 = vmatpush1.msra.mxu0 0.0
    %1655 = vmatprep.subr.mxu0 0.0
    %1656 = vmatpush1.msra.mxu0 0.0
    %1657 = vmatprep.mubr.f32.mxu0 0.0
    %v1658 = vand.u32 %v1218, 4294901760
    %1659 = vmatmul.mubr.f32.gmra.mrb[0].mxu0 %v1658
    %v1660 = vpop.f32.mrb[0].mxu0
    %v1661 = vadd.f32 %v1570, %v1660
    %v1662 = vpop.f32.mrb[0].mxu0
    %1663 = vmatprep.mubr.f32.mxu0 0.0
    %v1664 = vand.u32 %v1221, 4294901760
    %1665 = vmatmul.mubr.f32.gmra.mrb[0].mxu0 %v1664
    %v1666 = vpop.f32.mrb[0].mxu0
    %v1667 = vadd.f32 %v1578, %v1666
    %v1668 = vpop.f32.mrb[0].mxu0
    %1669 = vdwg.mxu0
    %1670 = vmatprep.subr.mxu0 0.0
    %v1671 = vand.u32 %v1208, 4294901760
    %1672 = vmatpush1.msra.mxu0 %v1671
    %1673 = vmatprep.subr.mxu0 0.0
    %v1674 = vand.u32 %v1209, 4294901760
    %1675 = vmatpush1.msra.mxu0 %v1674
    %1676 = vmatprep.subr.mxu0 0.0
    %v1677 = vand.u32 %v1210, 4294901760
    %1678 = vmatpush1.msra.mxu0 %v1677
    %1679 = vmatprep.subr.mxu0 0.0
    %v1680 = vand.u32 %v1211, 4294901760
    %1681 = vmatpush1.msra.mxu0 %v1680
    %1682 = vmatprep.subr.mxu0 0.0
    %1683 = vmatpush1.msra.mxu0 0.0
    %1684 = vmatprep.subr.mxu0 0.0
    %1685 = vmatpush1.msra.mxu0 0.0
    %1686 = vmatprep.subr.mxu0 0.0
    %1687 = vmatpush1.msra.mxu0 0.0
    %1688 = vmatprep.subr.mxu0 0.0
    %1689 = vmatpush1.msra.mxu0 0.0
    %1690 = vmatprep.subr.mxu0 0.0
    %1691 = vmatpush1.msra.mxu0 0.0
    %1692 = vmatprep.subr.mxu0 0.0
    %1693 = vmatpush1.msra.mxu0 0.0
    %1694 = vmatprep.subr.mxu0 0.0
    %1695 = vmatpush1.msra.mxu0 0.0
    %1696 = vmatprep.subr.mxu0 0.0
    %1697 = vmatpush1.msra.mxu0 0.0
    %1698 = vmatprep.subr.mxu0 0.0
    %1699 = vmatpush1.msra.mxu0 0.0
    %1700 = vmatprep.subr.mxu0 0.0
    %1701 = vmatpush1.msra.mxu0 0.0
    %1702 = vmatprep.subr.mxu0 0.0
    %1703 = vmatpush1.msra.mxu0 0.0
    %1704 = vmatprep.subr.mxu0 0.0
    %1705 = vmatpush1.msra.mxu0 0.0
    %1706 = vmatprep.subr.mxu0 0.0
    %1707 = vmatpush1.msra.mxu0 0.0
    %1708 = vmatprep.subr.mxu0 0.0
    %1709 = vmatpush1.msra.mxu0 0.0
    %1710 = vmatprep.subr.mxu0 0.0
    %1711 = vmatpush1.msra.mxu0 0.0
    %1712 = vmatprep.subr.mxu0 0.0
    %1713 = vmatpush1.msra.mxu0 0.0
    %1714 = vmatprep.subr.mxu0 0.0
    %1715 = vmatpush1.msra.mxu0 0.0
    %1716 = vmatprep.subr.mxu0 0.0
    %1717 = vmatpush1.msra.mxu0 0.0
    %1718 = vmatprep.subr.mxu0 0.0
    %1719 = vmatpush1.msra.mxu0 0.0
    %1720 = vmatprep.subr.mxu0 0.0
    %1721 = vmatpush1.msra.mxu0 0.0
    %1722 = vmatprep.subr.mxu0 0.0
    %1723 = vmatpush1.msra.mxu0 0.0
    %1724 = vmatprep.subr.mxu0 0.0
    %1725 = vmatpush1.msra.mxu0 0.0
    %1726 = vmatprep.subr.mxu0 0.0
    %1727 = vmatpush1.msra.mxu0 0.0
    %1728 = vmatprep.subr.mxu0 0.0
    %1729 = vmatpush1.msra.mxu0 0.0
    %1730 = vmatprep.subr.mxu0 0.0
    %1731 = vmatpush1.msra.mxu0 0.0
    %1732 = vmatprep.subr.mxu0 0.0
    %1733 = vmatpush1.msra.mxu0 0.0
    %1734 = vmatprep.subr.mxu0 0.0
    %1735 = vmatpush1.msra.mxu0 0.0
    %1736 = vmatprep.subr.mxu0 0.0
    %1737 = vmatpush1.msra.mxu0 0.0
    %1738 = vmatprep.mubr.f32.mxu0 0.0
    %v1739 = vand.u32 %v1218, 4294901760
    %1740 = vmatmul.mubr.f32.gmra.mrb[0].mxu0 %v1739
    %v1741 = vpop.f32.mrb[0].mxu0
    %v1742 = vadd.f32 %v1661, %v1741
    %v1743 = vpop.f32.mrb[0].mxu0
    %1744 = vmatprep.mubr.f32.mxu0 0.0
    %v1745 = vand.u32 %v1221, 4294901760
    %1746 = vmatmul.mubr.f32.gmra.mrb[0].mxu0 %v1745
    %v1747 = vpop.f32.mrb[0].mxu0
    %v1748 = vadd.f32 %v1667, %v1747
    %v1749 = vpop.f32.mrb[0].mxu0
    %1750 = vdwg.mxu0
    %vm1751 = vcmask 64512
    %v1753 = vsel %vm1751, %v652, 0
    %v1756 = vsel %vm1751, %v1197, 0
    %1758 = vmatprep.subr.mxu0 0.0
    %v1759 = vand.u32 %v1756, 4294901760
    %1760 = vmatpush1.xpose.msra.mxu0 %v1759
    %1761 = vmatprep.subr.mxu0 0.0
    %1762 = vmatpush1.xpose.msra.mxu0 0.0
    %1763 = vmatprep.subr.mxu0 0.0
    %1764 = vmatpush1.xpose.msra.mxu0 0.0
    %1765 = vmatprep.subr.mxu0 0.0
    %1766 = vmatpush1.xpose.msra.mxu0 0.0
    %1767 = vmatprep.subr.mxu0 0.0
    %1768 = vmatpush1.xpose.msra.mxu0 0.0
    %1769 = vmatprep.subr.mxu0 0.0
    %1770 = vmatpush1.xpose.msra.mxu0 0.0
    %1771 = vmatprep.subr.mxu0 0.0
    %1772 = vmatpush1.xpose.msra.mxu0 0.0
    %1773 = vmatprep.subr.mxu0 0.0
    %1774 = vmatpush1.xpose.msra.mxu0 0.0
    %1775 = vmatprep.subr.mxu0 0.0
    %1776 = vmatpush1.xpose.msra.mxu0 0.0
    %1777 = vmatprep.subr.mxu0 0.0
    %1778 = vmatpush1.xpose.msra.mxu0 0.0
    %1779 = vmatprep.subr.mxu0 0.0
    %1780 = vmatpush1.xpose.msra.mxu0 0.0
    %1781 = vmatprep.subr.mxu0 0.0
    %1782 = vmatpush1.xpose.msra.mxu0 0.0
    %1783 = vmatprep.subr.mxu0 0.0
    %1784 = vmatpush1.xpose.msra.mxu0 0.0
    %1785 = vmatprep.subr.mxu0 0.0
    %1786 = vmatpush1.xpose.msra.mxu0 0.0
    %1787 = vmatprep.subr.mxu0 0.0
    %1788 = vmatpush1.xpose.msra.mxu0 0.0
    %1789 = vmatprep.subr.mxu0 0.0
    %1790 = vmatpush1.xpose.msra.mxu0 0.0
    %1791 = vmatprep.subr.mxu0 0.0
    %1792 = vmatpush1.xpose.msra.mxu0 0.0
    %1793 = vmatprep.subr.mxu0 0.0
    %1794 = vmatpush1.xpose.msra.mxu0 0.0
    %1795 = vmatprep.subr.mxu0 0.0
    %1796 = vmatpush1.xpose.msra.mxu0 0.0
    %1797 = vmatprep.subr.mxu0 0.0
    %1798 = vmatpush1.xpose.msra.mxu0 0.0
    %1799 = vmatprep.subr.mxu0 0.0
    %1800 = vmatpush1.xpose.msra.mxu0 0.0
    %1801 = vmatprep.subr.mxu0 0.0
    %1802 = vmatpush1.xpose.msra.mxu0 0.0
    %1803 = vmatprep.subr.mxu0 0.0
    %1804 = vmatpush1.xpose.msra.mxu0 0.0
    %1805 = vmatprep.subr.mxu0 0.0
    %1806 = vmatpush1.xpose.msra.mxu0 0.0
    %1807 = vmatprep.subr.mxu0 0.0
    %1808 = vmatpush1.xpose.msra.mxu0 0.0
    %1809 = vmatprep.subr.mxu0 0.0
    %1810 = vmatpush1.xpose.msra.mxu0 0.0
    %1811 = vmatprep.subr.mxu0 0.0
    %1812 = vmatpush1.xpose.msra.mxu0 0.0
    %1813 = vmatprep.subr.mxu0 0.0
    %1814 = vmatpush1.xpose.msra.mxu0 0.0
    %1815 = vmatprep.subr.mxu0 0.0
    %1816 = vmatpush1.xpose.msra.mxu0 0.0
    %1817 = vmatprep.subr.mxu0 0.0
    %1818 = vmatpush1.xpose.msra.mxu0 0.0
    %1819 = vmatprep.subr.mxu0 0.0
    %1820 = vmatpush1.xpose.msra.mxu0 0.0
    %1821 = vmatprep.subr.mxu0 0.0
    %1822 = vmatpush1.xpose.msra.mxu0 0.0
    %1823 = vmatprep.mubr.f32.mxu0 0.0
    %v1824 = vand.u32 %v1753, 4294901760
    %v1825 = vsub.f32 %v1753, %v1824
    %v1826 = vand.u32 %v1825, 4294901760
    %v1827 = vsub.f32 %v1825, %v1826
    %v1828 = vand.u32 %v1827, 4294901760
    %1829 = vmatmul.mubr.f32.gmra.mrb[0].mxu0 %v1828
    %v1830 = vpop.f32.mrb[0].mxu0
    %v1831 = vadd.f32 0.0, %v1830
    %v1832 = vpop.f32.mrb[0].mxu0
    %1833 = vdwg.mxu0
    %1834 = vmatprep.subr.mxu0 0.0
    %v1835 = vand.u32 %v1756, 4294901760
    %v1836 = vsub.f32 %v1756, %v1835
    %v1837 = vand.u32 %v1836, 4294901760
    %v1838 = vsub.f32 %v1836, %v1837
    %v1839 = vand.u32 %v1838, 4294901760
    %1840 = vmatpush1.xpose.msra.mxu0 %v1839
    %1841 = vmatprep.subr.mxu0 0.0
    %1842 = vmatpush1.xpose.msra.mxu0 0.0
    %1843 = vmatprep.subr.mxu0 0.0
    %1844 = vmatpush1.xpose.msra.mxu0 0.0
    %1845 = vmatprep.subr.mxu0 0.0
    %1846 = vmatpush1.xpose.msra.mxu0 0.0
    %1847 = vmatprep.subr.mxu0 0.0
    %1848 = vmatpush1.xpose.msra.mxu0 0.0
    %1849 = vmatprep.subr.mxu0 0.0
    %1850 = vmatpush1.xpose.msra.mxu0 0.0
    %1851 = vmatprep.subr.mxu0 0.0
    %1852 = vmatpush1.xpose.msra.mxu0 0.0
    %1853 = vmatprep.subr.mxu0 0.0
    %1854 = vmatpush1.xpose.msra.mxu0 0.0
    %1855 = vmatprep.subr.mxu0 0.0
    %1856 = vmatpush1.xpose.msra.mxu0 0.0
    %1857 = vmatprep.subr.mxu0 0.0
    %1858 = vmatpush1.xpose.msra.mxu0 0.0
    %1859 = vmatprep.subr.mxu0 0.0
    %1860 = vmatpush1.xpose.msra.mxu0 0.0
    %1861 = vmatprep.subr.mxu0 0.0
    %1862 = vmatpush1.xpose.msra.mxu0 0.0
    %1863 = vmatprep.subr.mxu0 0.0
    %1864 = vmatpush1.xpose.msra.mxu0 0.0
    %1865 = vmatprep.subr.mxu0 0.0
    %1866 = vmatpush1.xpose.msra.mxu0 0.0
    %1867 = vmatprep.subr.mxu0 0.0
    %1868 = vmatpush1.xpose.msra.mxu0 0.0
    %1869 = vmatprep.subr.mxu0 0.0
    %1870 = vmatpush1.xpose.msra.mxu0 0.0
    %1871 = vmatprep.subr.mxu0 0.0
    %1872 = vmatpush1.xpose.msra.mxu0 0.0
    %1873 = vmatprep.subr.mxu0 0.0
    %1874 = vmatpush1.xpose.msra.mxu0 0.0
    %1875 = vmatprep.subr.mxu0 0.0
    %1876 = vmatpush1.xpose.msra.mxu0 0.0
    %1877 = vmatprep.subr.mxu0 0.0
    %1878 = vmatpush1.xpose.msra.mxu0 0.0
    %1879 = vmatprep.subr.mxu0 0.0
    %1880 = vmatpush1.xpose.msra.mxu0 0.0
    %1881 = vmatprep.subr.mxu0 0.0
    %1882 = vmatpush1.xpose.msra.mxu0 0.0
    %1883 = vmatprep.subr.mxu0 0.0
    %1884 = vmatpush1.xpose.msra.mxu0 0.0
    %1885 = vmatprep.subr.mxu0 0.0
    %1886 = vmatpush1.xpose.msra.mxu0 0.0
    %1887 = vmatprep.subr.mxu0 0.0
    %1888 = vmatpush1.xpose.msra.mxu0 0.0
    %1889 = vmatprep.subr.mxu0 0.0
    %1890 = vmatpush1.xpose.msra.mxu0 0.0
    %1891 = vmatprep.subr.mxu0 0.0
    %1892 = vmatpush1.xpose.msra.mxu0 0.0
    %1893 = vmatprep.subr.mxu0 0.0
    %1894 = vmatpush1.xpose.msra.mxu0 0.0
    %1895 = vmatprep.subr.mxu0 0.0
    %1896 = vmatpush1.xpose.msra.mxu0 0.0
    %1897 = vmatprep.subr.mxu0 0.0
    %1898 = vmatpush1.xpose.msra.mxu0 0.0
    %1899 = vmatprep.subr.mxu0 0.0
    %1900 = vmatpush1.xpose.msra.mxu0 0.0
    %1901 = vmatprep.subr.mxu0 0.0
    %1902 = vmatpush1.xpose.msra.mxu0 0.0
    %1903 = vmatprep.mubr.f32.mxu0 0.0
    %v1904 = vand.u32 %v1753, 4294901760
    %1905 = vmatmul.mubr.f32.gmra.mrb[0].mxu0 %v1904
    %v1906 = vpop.f32.mrb[0].mxu0
    %v1907 = vadd.f32 %v1831, %v1906
    %v1908 = vpop.f32.mrb[0].mxu0
    %1909 = vdwg.mxu0
    %1910 = vmatprep.subr.mxu0 0.0
    %v1911 = vand.u32 %v1756, 4294901760
    %v1912 = vsub.f32 %v1756, %v1911
    %1913 = vmatpush1.xpose.msra.mxu0 %v1912
    %1914 = vmatprep.subr.mxu0 0.0
    %1915 = vmatpush1.xpose.msra.mxu0 0.0
    %1916 = vmatprep.subr.mxu0 0.0
    %1917 = vmatpush1.xpose.msra.mxu0 0.0
    %1918 = vmatprep.subr.mxu0 0.0
    %1919 = vmatpush1.xpose.msra.mxu0 0.0
    %1920 = vmatprep.subr.mxu0 0.0
    %1921 = vmatpush1.xpose.msra.mxu0 0.0
    %1922 = vmatprep.subr.mxu0 0.0
    %1923 = vmatpush1.xpose.msra.mxu0 0.0
    %1924 = vmatprep.subr.mxu0 0.0
    %1925 = vmatpush1.xpose.msra.mxu0 0.0
    %1926 = vmatprep.subr.mxu0 0.0
    %1927 = vmatpush1.xpose.msra.mxu0 0.0
    %1928 = vmatprep.subr.mxu0 0.0
    %1929 = vmatpush1.xpose.msra.mxu0 0.0
    %1930 = vmatprep.subr.mxu0 0.0
    %1931 = vmatpush1.xpose.msra.mxu0 0.0
    %1932 = vmatprep.subr.mxu0 0.0
    %1933 = vmatpush1.xpose.msra.mxu0 0.0
    %1934 = vmatprep.subr.mxu0 0.0
    %1935 = vmatpush1.xpose.msra.mxu0 0.0
    %1936 = vmatprep.subr.mxu0 0.0
    %1937 = vmatpush1.xpose.msra.mxu0 0.0
    %1938 = vmatprep.subr.mxu0 0.0
    %1939 = vmatpush1.xpose.msra.mxu0 0.0
    %1940 = vmatprep.subr.mxu0 0.0
    %1941 = vmatpush1.xpose.msra.mxu0 0.0
    %1942 = vmatprep.subr.mxu0 0.0
    %1943 = vmatpush1.xpose.msra.mxu0 0.0
    %1944 = vmatprep.subr.mxu0 0.0
    %1945 = vmatpush1.xpose.msra.mxu0 0.0
    %1946 = vmatprep.subr.mxu0 0.0
    %1947 = vmatpush1.xpose.msra.mxu0 0.0
    %1948 = vmatprep.subr.mxu0 0.0
    %1949 = vmatpush1.xpose.msra.mxu0 0.0
    %1950 = vmatprep.subr.mxu0 0.0
    %1951 = vmatpush1.xpose.msra.mxu0 0.0
    %1952 = vmatprep.subr.mxu0 0.0
    %1953 = vmatpush1.xpose.msra.mxu0 0.0
    %1954 = vmatprep.subr.mxu0 0.0
    %1955 = vmatpush1.xpose.msra.mxu0 0.0
    %1956 = vmatprep.subr.mxu0 0.0
    %1957 = vmatpush1.xpose.msra.mxu0 0.0
    %1958 = vmatprep.subr.mxu0 0.0
    %1959 = vmatpush1.xpose.msra.mxu0 0.0
    %1960 = vmatprep.subr.mxu0 0.0
    %1961 = vmatpush1.xpose.msra.mxu0 0.0
    %1962 = vmatprep.subr.mxu0 0.0
    %1963 = vmatpush1.xpose.msra.mxu0 0.0
    %1964 = vmatprep.subr.mxu0 0.0
    %1965 = vmatpush1.xpose.msra.mxu0 0.0
    %1966 = vmatprep.subr.mxu0 0.0
    %1967 = vmatpush1.xpose.msra.mxu0 0.0
    %1968 = vmatprep.subr.mxu0 0.0
    %1969 = vmatpush1.xpose.msra.mxu0 0.0
    %1970 = vmatprep.subr.mxu0 0.0
    %1971 = vmatpush1.xpose.msra.mxu0 0.0
    %1972 = vmatprep.subr.mxu0 0.0
    %1973 = vmatpush1.xpose.msra.mxu0 0.0
    %1974 = vmatprep.subr.mxu0 0.0
    %1975 = vmatpush1.xpose.msra.mxu0 0.0
    %1976 = vmatprep.mubr.f32.mxu0 0.0
    %v1977 = vand.u32 %v1753, 4294901760
    %v1978 = vsub.f32 %v1753, %v1977
    %1979 = vmatmul.mubr.f32.gmra.mrb[0].mxu0 %v1978
    %v1980 = vpop.f32.mrb[0].mxu0
    %v1981 = vadd.f32 %v1907, %v1980
    %v1982 = vpop.f32.mrb[0].mxu0
    %1983 = vdwg.mxu0
    %1984 = vmatprep.subr.mxu0 0.0
    %v1985 = vand.u32 %v1756, 4294901760
    %1986 = vmatpush1.xpose.msra.mxu0 %v1985
    %1987 = vmatprep.subr.mxu0 0.0
    %1988 = vmatpush1.xpose.msra.mxu0 0.0
    %1989 = vmatprep.subr.mxu0 0.0
    %1990 = vmatpush1.xpose.msra.mxu0 0.0
    %1991 = vmatprep.subr.mxu0 0.0
    %1992 = vmatpush1.xpose.msra.mxu0 0.0
    %1993 = vmatprep.subr.mxu0 0.0
    %1994 = vmatpush1.xpose.msra.mxu0 0.0
    %1995 = vmatprep.subr.mxu0 0.0
    %1996 = vmatpush1.xpose.msra.mxu0 0.0
    %1997 = vmatprep.subr.mxu0 0.0
    %1998 = vmatpush1.xpose.msra.mxu0 0.0
    %1999 = vmatprep.subr.mxu0 0.0
    %2000 = vmatpush1.xpose.msra.mxu0 0.0
    %2001 = vmatprep.subr.mxu0 0.0
    %2002 = vmatpush1.xpose.msra.mxu0 0.0
    %2003 = vmatprep.subr.mxu0 0.0
    %2004 = vmatpush1.xpose.msra.mxu0 0.0
    %2005 = vmatprep.subr.mxu0 0.0
    %2006 = vmatpush1.xpose.msra.mxu0 0.0
    %2007 = vmatprep.subr.mxu0 0.0
    %2008 = vmatpush1.xpose.msra.mxu0 0.0
    %2009 = vmatprep.subr.mxu0 0.0
    %2010 = vmatpush1.xpose.msra.mxu0 0.0
    %2011 = vmatprep.subr.mxu0 0.0
    %2012 = vmatpush1.xpose.msra.mxu0 0.0
    %2013 = vmatprep.subr.mxu0 0.0
    %2014 = vmatpush1.xpose.msra.mxu0 0.0
    %2015 = vmatprep.subr.mxu0 0.0
    %2016 = vmatpush1.xpose.msra.mxu0 0.0
    %2017 = vmatprep.subr.mxu0 0.0
    %2018 = vmatpush1.xpose.msra.mxu0 0.0
    %2019 = vmatprep.subr.mxu0 0.0
    %2020 = vmatpush1.xpose.msra.mxu0 0.0
    %2021 = vmatprep.subr.mxu0 0.0
    %2022 = vmatpush1.xpose.msra.mxu0 0.0
    %2023 = vmatprep.subr.mxu0 0.0
    %2024 = vmatpush1.xpose.msra.mxu0 0.0
    %2025 = vmatprep.subr.mxu0 0.0
    %2026 = vmatpush1.xpose.msra.mxu0 0.0
    %2027 = vmatprep.subr.mxu0 0.0
    %2028 = vmatpush1.xpose.msra.mxu0 0.0
    %2029 = vmatprep.subr.mxu0 0.0
    %2030 = vmatpush1.xpose.msra.mxu0 0.0
    %2031 = vmatprep.subr.mxu0 0.0
    %2032 = vmatpush1.xpose.msra.mxu0 0.0
    %2033 = vmatprep.subr.mxu0 0.0
    %2034 = vmatpush1.xpose.msra.mxu0 0.0
    %2035 = vmatprep.subr.mxu0 0.0
    %2036 = vmatpush1.xpose.msra.mxu0 0.0
    %2037 = vmatprep.subr.mxu0 0.0
    %2038 = vmatpush1.xpose.msra.mxu0 0.0
    %2039 = vmatprep.subr.mxu0 0.0
    %2040 = vmatpush1.xpose.msra.mxu0 0.0
    %2041 = vmatprep.subr.mxu0 0.0
    %2042 = vmatpush1.xpose.msra.mxu0 0.0
    %2043 = vmatprep.subr.mxu0 0.0
    %2044 = vmatpush1.xpose.msra.mxu0 0.0
    %2045 = vmatprep.subr.mxu0 0.0
    %2046 = vmatpush1.xpose.msra.mxu0 0.0
    %2047 = vmatprep.subr.mxu0 0.0
    %2048 = vmatpush1.xpose.msra.mxu0 0.0
    %2049 = vmatprep.mubr.f32.mxu0 0.0
    %v2050 = vand.u32 %v1753, 4294901760
    %v2051 = vsub.f32 %v1753, %v2050
    %v2052 = vand.u32 %v2051, 4294901760
    %2053 = vmatmul.mubr.f32.gmra.mrb[0].mxu0 %v2052
    %v2054 = vpop.f32.mrb[0].mxu0
    %v2055 = vadd.f32 %v1981, %v2054
    %v2056 = vpop.f32.mrb[0].mxu0
    %2057 = vdwg.mxu0
    %2058 = vmatprep.subr.mxu0 0.0
    %v2059 = vand.u32 %v1756, 4294901760
    %v2060 = vsub.f32 %v1756, %v2059
    %v2061 = vand.u32 %v2060, 4294901760
    %2062 = vmatpush1.xpose.msra.mxu0 %v2061
    %2063 = vmatprep.subr.mxu0 0.0
    %2064 = vmatpush1.xpose.msra.mxu0 0.0
    %2065 = vmatprep.subr.mxu0 0.0
    %2066 = vmatpush1.xpose.msra.mxu0 0.0
    %2067 = vmatprep.subr.mxu0 0.0
    %2068 = vmatpush1.xpose.msra.mxu0 0.0
    %2069 = vmatprep.subr.mxu0 0.0
    %2070 = vmatpush1.xpose.msra.mxu0 0.0
    %2071 = vmatprep.subr.mxu0 0.0
    %2072 = vmatpush1.xpose.msra.mxu0 0.0
    %2073 = vmatprep.subr.mxu0 0.0
    %2074 = vmatpush1.xpose.msra.mxu0 0.0
    %2075 = vmatprep.subr.mxu0 0.0
    %2076 = vmatpush1.xpose.msra.mxu0 0.0
    %2077 = vmatprep.subr.mxu0 0.0
    %2078 = vmatpush1.xpose.msra.mxu0 0.0
    %2079 = vmatprep.subr.mxu0 0.0
    %2080 = vmatpush1.xpose.msra.mxu0 0.0
    %2081 = vmatprep.subr.mxu0 0.0
    %2082 = vmatpush1.xpose.msra.mxu0 0.0
    %2083 = vmatprep.subr.mxu0 0.0
    %2084 = vmatpush1.xpose.msra.mxu0 0.0
    %2085 = vmatprep.subr.mxu0 0.0
    %2086 = vmatpush1.xpose.msra.mxu0 0.0
    %2087 = vmatprep.subr.mxu0 0.0
    %2088 = vmatpush1.xpose.msra.mxu0 0.0
    %2089 = vmatprep.subr.mxu0 0.0
    %2090 = vmatpush1.xpose.msra.mxu0 0.0
    %2091 = vmatprep.subr.mxu0 0.0
    %2092 = vmatpush1.xpose.msra.mxu0 0.0
    %2093 = vmatprep.subr.mxu0 0.0
    %2094 = vmatpush1.xpose.msra.mxu0 0.0
    %2095 = vmatprep.subr.mxu0 0.0
    %2096 = vmatpush1.xpose.msra.mxu0 0.0
    %2097 = vmatprep.subr.mxu0 0.0
    %2098 = vmatpush1.xpose.msra.mxu0 0.0
    %2099 = vmatprep.subr.mxu0 0.0
    %2100 = vmatpush1.xpose.msra.mxu0 0.0
    %2101 = vmatprep.subr.mxu0 0.0
    %2102 = vmatpush1.xpose.msra.mxu0 0.0
    %2103 = vmatprep.subr.mxu0 0.0
    %2104 = vmatpush1.xpose.msra.mxu0 0.0
    %2105 = vmatprep.subr.mxu0 0.0
    %2106 = vmatpush1.xpose.msra.mxu0 0.0
    %2107 = vmatprep.subr.mxu0 0.0
    %2108 = vmatpush1.xpose.msra.mxu0 0.0
    %2109 = vmatprep.subr.mxu0 0.0
    %2110 = vmatpush1.xpose.msra.mxu0 0.0
    %2111 = vmatprep.subr.mxu0 0.0
    %2112 = vmatpush1.xpose.msra.mxu0 0.0
    %2113 = vmatprep.subr.mxu0 0.0
    %2114 = vmatpush1.xpose.msra.mxu0 0.0
    %2115 = vmatprep.subr.mxu0 0.0
    %2116 = vmatpush1.xpose.msra.mxu0 0.0
    %2117 = vmatprep.subr.mxu0 0.0
    %2118 = vmatpush1.xpose.msra.mxu0 0.0
    %2119 = vmatprep.subr.mxu0 0.0
    %2120 = vmatpush1.xpose.msra.mxu0 0.0
    %2121 = vmatprep.subr.mxu0 0.0
    %2122 = vmatpush1.xpose.msra.mxu0 0.0
    %2123 = vmatprep.subr.mxu0 0.0
    %2124 = vmatpush1.xpose.msra.mxu0 0.0
    %2125 = vmatprep.mubr.f32.mxu0 0.0
    %v2126 = vand.u32 %v1753, 4294901760
    %2127 = vmatmul.mubr.f32.gmra.mrb[0].mxu0 %v2126
    %v2128 = vpop.f32.mrb[0].mxu0
    %v2129 = vadd.f32 %v2055, %v2128
    %v2130 = vpop.f32.mrb[0].mxu0
    %2131 = vdwg.mxu0
    %2132 = vmatprep.subr.mxu0 0.0
    %v2133 = vand.u32 %v1756, 4294901760
    %2134 = vmatpush1.xpose.msra.mxu0 %v2133
    %2135 = vmatprep.subr.mxu0 0.0
    %2136 = vmatpush1.xpose.msra.mxu0 0.0
    %2137 = vmatprep.subr.mxu0 0.0
    %2138 = vmatpush1.xpose.msra.mxu0 0.0
    %2139 = vmatprep.subr.mxu0 0.0
    %2140 = vmatpush1.xpose.msra.mxu0 0.0
    %2141 = vmatprep.subr.mxu0 0.0
    %2142 = vmatpush1.xpose.msra.mxu0 0.0
    %2143 = vmatprep.subr.mxu0 0.0
    %2144 = vmatpush1.xpose.msra.mxu0 0.0
    %2145 = vmatprep.subr.mxu0 0.0
    %2146 = vmatpush1.xpose.msra.mxu0 0.0
    %2147 = vmatprep.subr.mxu0 0.0
    %2148 = vmatpush1.xpose.msra.mxu0 0.0
    %2149 = vmatprep.subr.mxu0 0.0
    %2150 = vmatpush1.xpose.msra.mxu0 0.0
    %2151 = vmatprep.subr.mxu0 0.0
    %2152 = vmatpush1.xpose.msra.mxu0 0.0
    %2153 = vmatprep.subr.mxu0 0.0
    %2154 = vmatpush1.xpose.msra.mxu0 0.0
    %2155 = vmatprep.subr.mxu0 0.0
    %2156 = vmatpush1.xpose.msra.mxu0 0.0
    %2157 = vmatprep.subr.mxu0 0.0
    %2158 = vmatpush1.xpose.msra.mxu0 0.0
    %2159 = vmatprep.subr.mxu0 0.0
    %2160 = vmatpush1.xpose.msra.mxu0 0.0
    %2161 = vmatprep.subr.mxu0 0.0
    %2162 = vmatpush1.xpose.msra.mxu0 0.0
    %2163 = vmatprep.subr.mxu0 0.0
    %2164 = vmatpush1.xpose.msra.mxu0 0.0
    %2165 = vmatprep.subr.mxu0 0.0
    %2166 = vmatpush1.xpose.msra.mxu0 0.0
    %2167 = vmatprep.subr.mxu0 0.0
    %2168 = vmatpush1.xpose.msra.mxu0 0.0
    %2169 = vmatprep.subr.mxu0 0.0
    %2170 = vmatpush1.xpose.msra.mxu0 0.0
    %2171 = vmatprep.subr.mxu0 0.0
    %2172 = vmatpush1.xpose.msra.mxu0 0.0
    %2173 = vmatprep.subr.mxu0 0.0
    %2174 = vmatpush1.xpose.msra.mxu0 0.0
    %2175 = vmatprep.subr.mxu0 0.0
    %2176 = vmatpush1.xpose.msra.mxu0 0.0
    %2177 = vmatprep.subr.mxu0 0.0
    %2178 = vmatpush1.xpose.msra.mxu0 0.0
    %2179 = vmatprep.subr.mxu0 0.0
    %2180 = vmatpush1.xpose.msra.mxu0 0.0
    %2181 = vmatprep.subr.mxu0 0.0
    %2182 = vmatpush1.xpose.msra.mxu0 0.0
    %2183 = vmatprep.subr.mxu0 0.0
    %2184 = vmatpush1.xpose.msra.mxu0 0.0
    %2185 = vmatprep.subr.mxu0 0.0
    %2186 = vmatpush1.xpose.msra.mxu0 0.0
    %2187 = vmatprep.subr.mxu0 0.0
    %2188 = vmatpush1.xpose.msra.mxu0 0.0
    %2189 = vmatprep.subr.mxu0 0.0
    %2190 = vmatpush1.xpose.msra.mxu0 0.0
    %2191 = vmatprep.subr.mxu0 0.0
    %2192 = vmatpush1.xpose.msra.mxu0 0.0
    %2193 = vmatprep.subr.mxu0 0.0
    %2194 = vmatpush1.xpose.msra.mxu0 0.0
    %2195 = vmatprep.subr.mxu0 0.0
    %2196 = vmatpush1.xpose.msra.mxu0 0.0
    %2197 = vmatprep.mubr.f32.mxu0 0.0
    %v2198 = vand.u32 %v1753, 4294901760
    %2199 = vmatmul.mubr.f32.gmra.mrb[0].mxu0 %v2198
    %v2200 = vpop.f32.mrb[0].mxu0
    %v2201 = vadd.f32 %v2129, %v2200
    %v2202 = vpop.f32.mrb[0].mxu0
    %2203 = vdwg.mxu0
    %v2205 = vsel %vm1751, %v658, 0
    %v2208 = vsel %vm1751, %v1203, 0
    %2210 = vmatprep.subr.mxu0 0.0
    %v2211 = vand.u32 %v2208, 4294901760
    %2212 = vmatpush1.xpose.msra.mxu0 %v2211
    %2213 = vmatprep.subr.mxu0 0.0
    %2214 = vmatpush1.xpose.msra.mxu0 0.0
    %2215 = vmatprep.subr.mxu0 0.0
    %2216 = vmatpush1.xpose.msra.mxu0 0.0
    %2217 = vmatprep.subr.mxu0 0.0
    %2218 = vmatpush1.xpose.msra.mxu0 0.0
    %2219 = vmatprep.subr.mxu0 0.0
    %2220 = vmatpush1.xpose.msra.mxu0 0.0
    %2221 = vmatprep.subr.mxu0 0.0
    %2222 = vmatpush1.xpose.msra.mxu0 0.0
    %2223 = vmatprep.subr.mxu0 0.0
    %2224 = vmatpush1.xpose.msra.mxu0 0.0
    %2225 = vmatprep.subr.mxu0 0.0
    %2226 = vmatpush1.xpose.msra.mxu0 0.0
    %2227 = vmatprep.subr.mxu0 0.0
    %2228 = vmatpush1.xpose.msra.mxu0 0.0
    %2229 = vmatprep.subr.mxu0 0.0
    %2230 = vmatpush1.xpose.msra.mxu0 0.0
    %2231 = vmatprep.subr.mxu0 0.0
    %2232 = vmatpush1.xpose.msra.mxu0 0.0
    %2233 = vmatprep.subr.mxu0 0.0
    %2234 = vmatpush1.xpose.msra.mxu0 0.0
    %2235 = vmatprep.subr.mxu0 0.0
    %2236 = vmatpush1.xpose.msra.mxu0 0.0
    %2237 = vmatprep.subr.mxu0 0.0
    %2238 = vmatpush1.xpose.msra.mxu0 0.0
    %2239 = vmatprep.subr.mxu0 0.0
    %2240 = vmatpush1.xpose.msra.mxu0 0.0
    %2241 = vmatprep.subr.mxu0 0.0
    %2242 = vmatpush1.xpose.msra.mxu0 0.0
    %2243 = vmatprep.subr.mxu0 0.0
    %2244 = vmatpush1.xpose.msra.mxu0 0.0
    %2245 = vmatprep.subr.mxu0 0.0
    %2246 = vmatpush1.xpose.msra.mxu0 0.0
    %2247 = vmatprep.subr.mxu0 0.0
    %2248 = vmatpush1.xpose.msra.mxu0 0.0
    %2249 = vmatprep.subr.mxu0 0.0
    %2250 = vmatpush1.xpose.msra.mxu0 0.0
    %2251 = vmatprep.subr.mxu0 0.0
    %2252 = vmatpush1.xpose.msra.mxu0 0.0
    %2253 = vmatprep.subr.mxu0 0.0
    %2254 = vmatpush1.xpose.msra.mxu0 0.0
    %2255 = vmatprep.subr.mxu0 0.0
    %2256 = vmatpush1.xpose.msra.mxu0 0.0
    %2257 = vmatprep.subr.mxu0 0.0
    %2258 = vmatpush1.xpose.msra.mxu0 0.0
    %2259 = vmatprep.subr.mxu0 0.0
    %2260 = vmatpush1.xpose.msra.mxu0 0.0
    %2261 = vmatprep.subr.mxu0 0.0
    %2262 = vmatpush1.xpose.msra.mxu0 0.0
    %2263 = vmatprep.subr.mxu0 0.0
    %2264 = vmatpush1.xpose.msra.mxu0 0.0
    %2265 = vmatprep.subr.mxu0 0.0
    %2266 = vmatpush1.xpose.msra.mxu0 0.0
    %2267 = vmatprep.subr.mxu0 0.0
    %2268 = vmatpush1.xpose.msra.mxu0 0.0
    %2269 = vmatprep.subr.mxu0 0.0
    %2270 = vmatpush1.xpose.msra.mxu0 0.0
    %2271 = vmatprep.subr.mxu0 0.0
    %2272 = vmatpush1.xpose.msra.mxu0 0.0
    %2273 = vmatprep.subr.mxu0 0.0
    %2274 = vmatpush1.xpose.msra.mxu0 0.0
    %2275 = vmatprep.mubr.f32.mxu0 0.0
    %v2276 = vand.u32 %v2205, 4294901760
    %v2277 = vsub.f32 %v2205, %v2276
    %v2278 = vand.u32 %v2277, 4294901760
    %v2279 = vsub.f32 %v2277, %v2278
    %v2280 = vand.u32 %v2279, 4294901760
    %2281 = vmatmul.mubr.f32.gmra.mrb[0].mxu0 %v2280
    %v2282 = vpop.f32.mrb[0].mxu0
    %v2283 = vadd.f32 0.0, %v2282
    %v2284 = vpop.f32.mrb[0].mxu0
    %2285 = vdwg.mxu0
    %2286 = vmatprep.subr.mxu0 0.0
    %v2287 = vand.u32 %v2208, 4294901760
    %v2288 = vsub.f32 %v2208, %v2287
    %v2289 = vand.u32 %v2288, 4294901760
    %v2290 = vsub.f32 %v2288, %v2289
    %v2291 = vand.u32 %v2290, 4294901760
    %2292 = vmatpush1.xpose.msra.mxu0 %v2291
    %2293 = vmatprep.subr.mxu0 0.0
    %2294 = vmatpush1.xpose.msra.mxu0 0.0
    %2295 = vmatprep.subr.mxu0 0.0
    %2296 = vmatpush1.xpose.msra.mxu0 0.0
    %2297 = vmatprep.subr.mxu0 0.0
    %2298 = vmatpush1.xpose.msra.mxu0 0.0
    %2299 = vmatprep.subr.mxu0 0.0
    %2300 = vmatpush1.xpose.msra.mxu0 0.0
    %2301 = vmatprep.subr.mxu0 0.0
    %2302 = vmatpush1.xpose.msra.mxu0 0.0
    %2303 = vmatprep.subr.mxu0 0.0
    %2304 = vmatpush1.xpose.msra.mxu0 0.0
    %2305 = vmatprep.subr.mxu0 0.0
    %2306 = vmatpush1.xpose.msra.mxu0 0.0
    %2307 = vmatprep.subr.mxu0 0.0
    %2308 = vmatpush1.xpose.msra.mxu0 0.0
    %2309 = vmatprep.subr.mxu0 0.0
    %2310 = vmatpush1.xpose.msra.mxu0 0.0
    %2311 = vmatprep.subr.mxu0 0.0
    %2312 = vmatpush1.xpose.msra.mxu0 0.0
    %2313 = vmatprep.subr.mxu0 0.0
    %2314 = vmatpush1.xpose.msra.mxu0 0.0
    %2315 = vmatprep.subr.mxu0 0.0
    %2316 = vmatpush1.xpose.msra.mxu0 0.0
    %2317 = vmatprep.subr.mxu0 0.0
    %2318 = vmatpush1.xpose.msra.mxu0 0.0
    %2319 = vmatprep.subr.mxu0 0.0
    %2320 = vmatpush1.xpose.msra.mxu0 0.0
    %2321 = vmatprep.subr.mxu0 0.0
    %2322 = vmatpush1.xpose.msra.mxu0 0.0
    %2323 = vmatprep.subr.mxu0 0.0
    %2324 = vmatpush1.xpose.msra.mxu0 0.0
    %2325 = vmatprep.subr.mxu0 0.0
    %2326 = vmatpush1.xpose.msra.mxu0 0.0
    %2327 = vmatprep.subr.mxu0 0.0
    %2328 = vmatpush1.xpose.msra.mxu0 0.0
    %2329 = vmatprep.subr.mxu0 0.0
    %2330 = vmatpush1.xpose.msra.mxu0 0.0
    %2331 = vmatprep.subr.mxu0 0.0
    %2332 = vmatpush1.xpose.msra.mxu0 0.0
    %2333 = vmatprep.subr.mxu0 0.0
    %2334 = vmatpush1.xpose.msra.mxu0 0.0
    %2335 = vmatprep.subr.mxu0 0.0
    %2336 = vmatpush1.xpose.msra.mxu0 0.0
    %2337 = vmatprep.subr.mxu0 0.0
    %2338 = vmatpush1.xpose.msra.mxu0 0.0
    %2339 = vmatprep.subr.mxu0 0.0
    %2340 = vmatpush1.xpose.msra.mxu0 0.0
    %2341 = vmatprep.subr.mxu0 0.0
    %2342 = vmatpush1.xpose.msra.mxu0 0.0
    %2343 = vmatprep.subr.mxu0 0.0
    %2344 = vmatpush1.xpose.msra.mxu0 0.0
    %2345 = vmatprep.subr.mxu0 0.0
    %2346 = vmatpush1.xpose.msra.mxu0 0.0
    %2347 = vmatprep.subr.mxu0 0.0
    %2348 = vmatpush1.xpose.msra.mxu0 0.0
    %2349 = vmatprep.subr.mxu0 0.0
    %2350 = vmatpush1.xpose.msra.mxu0 0.0
    %2351 = vmatprep.subr.mxu0 0.0
    %2352 = vmatpush1.xpose.msra.mxu0 0.0
    %2353 = vmatprep.subr.mxu0 0.0
    %2354 = vmatpush1.xpose.msra.mxu0 0.0
    %2355 = vmatprep.mubr.f32.mxu0 0.0
    %v2356 = vand.u32 %v2205, 4294901760
    %2357 = vmatmul.mubr.f32.gmra.mrb[0].mxu0 %v2356
    %v2358 = vpop.f32.mrb[0].mxu0
    %v2359 = vadd.f32 %v2283, %v2358
    %v2360 = vpop.f32.mrb[0].mxu0
    %2361 = vdwg.mxu0
    %2362 = vmatprep.subr.mxu0 0.0
    %v2363 = vand.u32 %v2208, 4294901760
    %v2364 = vsub.f32 %v2208, %v2363
    %2365 = vmatpush1.xpose.msra.mxu0 %v2364
    %2366 = vmatprep.subr.mxu0 0.0
    %2367 = vmatpush1.xpose.msra.mxu0 0.0
    %2368 = vmatprep.subr.mxu0 0.0
    %2369 = vmatpush1.xpose.msra.mxu0 0.0
    %2370 = vmatprep.subr.mxu0 0.0
    %2371 = vmatpush1.xpose.msra.mxu0 0.0
    %2372 = vmatprep.subr.mxu0 0.0
    %2373 = vmatpush1.xpose.msra.mxu0 0.0
    %2374 = vmatprep.subr.mxu0 0.0
    %2375 = vmatpush1.xpose.msra.mxu0 0.0
    %2376 = vmatprep.subr.mxu0 0.0
    %2377 = vmatpush1.xpose.msra.mxu0 0.0
    %2378 = vmatprep.subr.mxu0 0.0
    %2379 = vmatpush1.xpose.msra.mxu0 0.0
    %2380 = vmatprep.subr.mxu0 0.0
    %2381 = vmatpush1.xpose.msra.mxu0 0.0
    %2382 = vmatprep.subr.mxu0 0.0
    %2383 = vmatpush1.xpose.msra.mxu0 0.0
    %2384 = vmatprep.subr.mxu0 0.0
    %2385 = vmatpush1.xpose.msra.mxu0 0.0
    %2386 = vmatprep.subr.mxu0 0.0
    %2387 = vmatpush1.xpose.msra.mxu0 0.0
    %2388 = vmatprep.subr.mxu0 0.0
    %2389 = vmatpush1.xpose.msra.mxu0 0.0
    %2390 = vmatprep.subr.mxu0 0.0
    %2391 = vmatpush1.xpose.msra.mxu0 0.0
    %2392 = vmatprep.subr.mxu0 0.0
    %2393 = vmatpush1.xpose.msra.mxu0 0.0
    %2394 = vmatprep.subr.mxu0 0.0
    %2395 = vmatpush1.xpose.msra.mxu0 0.0
    %2396 = vmatprep.subr.mxu0 0.0
    %2397 = vmatpush1.xpose.msra.mxu0 0.0
    %2398 = vmatprep.subr.mxu0 0.0
    %2399 = vmatpush1.xpose.msra.mxu0 0.0
    %2400 = vmatprep.subr.mxu0 0.0
    %2401 = vmatpush1.xpose.msra.mxu0 0.0
    %2402 = vmatprep.subr.mxu0 0.0
    %2403 = vmatpush1.xpose.msra.mxu0 0.0
    %2404 = vmatprep.subr.mxu0 0.0
    %2405 = vmatpush1.xpose.msra.mxu0 0.0
    %2406 = vmatprep.subr.mxu0 0.0
    %2407 = vmatpush1.xpose.msra.mxu0 0.0
    %2408 = vmatprep.subr.mxu0 0.0
    %2409 = vmatpush1.xpose.msra.mxu0 0.0
    %2410 = vmatprep.subr.mxu0 0.0
    %2411 = vmatpush1.xpose.msra.mxu0 0.0
    %2412 = vmatprep.subr.mxu0 0.0
    %2413 = vmatpush1.xpose.msra.mxu0 0.0
    %2414 = vmatprep.subr.mxu0 0.0
    %2415 = vmatpush1.xpose.msra.mxu0 0.0
    %2416 = vmatprep.subr.mxu0 0.0
    %2417 = vmatpush1.xpose.msra.mxu0 0.0
    %2418 = vmatprep.subr.mxu0 0.0
    %2419 = vmatpush1.xpose.msra.mxu0 0.0
    %2420 = vmatprep.subr.mxu0 0.0
    %2421 = vmatpush1.xpose.msra.mxu0 0.0
    %2422 = vmatprep.subr.mxu0 0.0
    %2423 = vmatpush1.xpose.msra.mxu0 0.0
    %2424 = vmatprep.subr.mxu0 0.0
    %2425 = vmatpush1.xpose.msra.mxu0 0.0
    %2426 = vmatprep.subr.mxu0 0.0
    %2427 = vmatpush1.xpose.msra.mxu0 0.0
    %2428 = vmatprep.mubr.f32.mxu0 0.0
    %v2429 = vand.u32 %v2205, 4294901760
    %v2430 = vsub.f32 %v2205, %v2429
    %2431 = vmatmul.mubr.f32.gmra.mrb[0].mxu0 %v2430
    %v2432 = vpop.f32.mrb[0].mxu0
    %v2433 = vadd.f32 %v2359, %v2432
    %v2434 = vpop.f32.mrb[0].mxu0
    %2435 = vdwg.mxu0
    %2436 = vmatprep.subr.mxu0 0.0
    %v2437 = vand.u32 %v2208, 4294901760
    %2438 = vmatpush1.xpose.msra.mxu0 %v2437
    %2439 = vmatprep.subr.mxu0 0.0
    %2440 = vmatpush1.xpose.msra.mxu0 0.0
    %2441 = vmatprep.subr.mxu0 0.0
    %2442 = vmatpush1.xpose.msra.mxu0 0.0
    %2443 = vmatprep.subr.mxu0 0.0
    %2444 = vmatpush1.xpose.msra.mxu0 0.0
    %2445 = vmatprep.subr.mxu0 0.0
    %2446 = vmatpush1.xpose.msra.mxu0 0.0
    %2447 = vmatprep.subr.mxu0 0.0
    %2448 = vmatpush1.xpose.msra.mxu0 0.0
    %2449 = vmatprep.subr.mxu0 0.0
    %2450 = vmatpush1.xpose.msra.mxu0 0.0
    %2451 = vmatprep.subr.mxu0 0.0
    %2452 = vmatpush1.xpose.msra.mxu0 0.0
    %2453 = vmatprep.subr.mxu0 0.0
    %2454 = vmatpush1.xpose.msra.mxu0 0.0
    %2455 = vmatprep.subr.mxu0 0.0
    %2456 = vmatpush1.xpose.msra.mxu0 0.0
    %2457 = vmatprep.subr.mxu0 0.0
    %2458 = vmatpush1.xpose.msra.mxu0 0.0
    %2459 = vmatprep.subr.mxu0 0.0
    %2460 = vmatpush1.xpose.msra.mxu0 0.0
    %2461 = vmatprep.subr.mxu0 0.0
    %2462 = vmatpush1.xpose.msra.mxu0 0.0
    %2463 = vmatprep.subr.mxu0 0.0
    %2464 = vmatpush1.xpose.msra.mxu0 0.0
    %2465 = vmatprep.subr.mxu0 0.0
    %2466 = vmatpush1.xpose.msra.mxu0 0.0
    %2467 = vmatprep.subr.mxu0 0.0
    %2468 = vmatpush1.xpose.msra.mxu0 0.0
    %2469 = vmatprep.subr.mxu0 0.0
    %2470 = vmatpush1.xpose.msra.mxu0 0.0
    %2471 = vmatprep.subr.mxu0 0.0
    %2472 = vmatpush1.xpose.msra.mxu0 0.0
    %2473 = vmatprep.subr.mxu0 0.0
    %2474 = vmatpush1.xpose.msra.mxu0 0.0
    %2475 = vmatprep.subr.mxu0 0.0
    %2476 = vmatpush1.xpose.msra.mxu0 0.0
    %2477 = vmatprep.subr.mxu0 0.0
    %2478 = vmatpush1.xpose.msra.mxu0 0.0
    %2479 = vmatprep.subr.mxu0 0.0
    %2480 = vmatpush1.xpose.msra.mxu0 0.0
    %2481 = vmatprep.subr.mxu0 0.0
    %2482 = vmatpush1.xpose.msra.mxu0 0.0
    %2483 = vmatprep.subr.mxu0 0.0
    %2484 = vmatpush1.xpose.msra.mxu0 0.0
    %2485 = vmatprep.subr.mxu0 0.0
    %2486 = vmatpush1.xpose.msra.mxu0 0.0
    %2487 = vmatprep.subr.mxu0 0.0
    %2488 = vmatpush1.xpose.msra.mxu0 0.0
    %2489 = vmatprep.subr.mxu0 0.0
    %2490 = vmatpush1.xpose.msra.mxu0 0.0
    %2491 = vmatprep.subr.mxu0 0.0
    %2492 = vmatpush1.xpose.msra.mxu0 0.0
    %2493 = vmatprep.subr.mxu0 0.0
    %2494 = vmatpush1.xpose.msra.mxu0 0.0
    %2495 = vmatprep.subr.mxu0 0.0
    %2496 = vmatpush1.xpose.msra.mxu0 0.0
    %2497 = vmatprep.subr.mxu0 0.0
    %2498 = vmatpush1.xpose.msra.mxu0 0.0
    %2499 = vmatprep.subr.mxu0 0.0
    %2500 = vmatpush1.xpose.msra.mxu0 0.0
    %2501 = vmatprep.mubr.f32.mxu0 0.0
    %v2502 = vand.u32 %v2205, 4294901760
    %v2503 = vsub.f32 %v2205, %v2502
    %v2504 = vand.u32 %v2503, 4294901760
    %2505 = vmatmul.mubr.f32.gmra.mrb[0].mxu0 %v2504
    %v2506 = vpop.f32.mrb[0].mxu0
    %v2507 = vadd.f32 %v2433, %v2506
    %v2508 = vpop.f32.mrb[0].mxu0
    %2509 = vdwg.mxu0
    %2510 = vmatprep.subr.mxu0 0.0
    %v2511 = vand.u32 %v2208, 4294901760
    %v2512 = vsub.f32 %v2208, %v2511
    %v2513 = vand.u32 %v2512, 4294901760
    %2514 = vmatpush1.xpose.msra.mxu0 %v2513
    %2515 = vmatprep.subr.mxu0 0.0
    %2516 = vmatpush1.xpose.msra.mxu0 0.0
    %2517 = vmatprep.subr.mxu0 0.0
    %2518 = vmatpush1.xpose.msra.mxu0 0.0
    %2519 = vmatprep.subr.mxu0 0.0
    %2520 = vmatpush1.xpose.msra.mxu0 0.0
    %2521 = vmatprep.subr.mxu0 0.0
    %2522 = vmatpush1.xpose.msra.mxu0 0.0
    %2523 = vmatprep.subr.mxu0 0.0
    %2524 = vmatpush1.xpose.msra.mxu0 0.0
    %2525 = vmatprep.subr.mxu0 0.0
    %2526 = vmatpush1.xpose.msra.mxu0 0.0
    %2527 = vmatprep.subr.mxu0 0.0
    %2528 = vmatpush1.xpose.msra.mxu0 0.0
    %2529 = vmatprep.subr.mxu0 0.0
    %2530 = vmatpush1.xpose.msra.mxu0 0.0
    %2531 = vmatprep.subr.mxu0 0.0
    %2532 = vmatpush1.xpose.msra.mxu0 0.0
    %2533 = vmatprep.subr.mxu0 0.0
    %2534 = vmatpush1.xpose.msra.mxu0 0.0
    %2535 = vmatprep.subr.mxu0 0.0
    %2536 = vmatpush1.xpose.msra.mxu0 0.0
    %2537 = vmatprep.subr.mxu0 0.0
    %2538 = vmatpush1.xpose.msra.mxu0 0.0
    %2539 = vmatprep.subr.mxu0 0.0
    %2540 = vmatpush1.xpose.msra.mxu0 0.0
    %2541 = vmatprep.subr.mxu0 0.0
    %2542 = vmatpush1.xpose.msra.mxu0 0.0
    %2543 = vmatprep.subr.mxu0 0.0
    %2544 = vmatpush1.xpose.msra.mxu0 0.0
    %2545 = vmatprep.subr.mxu0 0.0
    %2546 = vmatpush1.xpose.msra.mxu0 0.0
    %2547 = vmatprep.subr.mxu0 0.0
    %2548 = vmatpush1.xpose.msra.mxu0 0.0
    %2549 = vmatprep.subr.mxu0 0.0
    %2550 = vmatpush1.xpose.msra.mxu0 0.0
    %2551 = vmatprep.subr.mxu0 0.0
    %2552 = vmatpush1.xpose.msra.mxu0 0.0
    %2553 = vmatprep.subr.mxu0 0.0
    %2554 = vmatpush1.xpose.msra.mxu0 0.0
    %2555 = vmatprep.subr.mxu0 0.0
    %2556 = vmatpush1.xpose.msra.mxu0 0.0
    %2557 = vmatprep.subr.mxu0 0.0
    %2558 = vmatpush1.xpose.msra.mxu0 0.0
    %2559 = vmatprep.subr.mxu0 0.0
    %2560 = vmatpush1.xpose.msra.mxu0 0.0
    %2561 = vmatprep.subr.mxu0 0.0
    %2562 = vmatpush1.xpose.msra.mxu0 0.0
    %2563 = vmatprep.subr.mxu0 0.0
    %2564 = vmatpush1.xpose.msra.mxu0 0.0
    %2565 = vmatprep.subr.mxu0 0.0
    %2566 = vmatpush1.xpose.msra.mxu0 0.0
    %2567 = vmatprep.subr.mxu0 0.0
    %2568 = vmatpush1.xpose.msra.mxu0 0.0
    %2569 = vmatprep.subr.mxu0 0.0
    %2570 = vmatpush1.xpose.msra.mxu0 0.0
    %2571 = vmatprep.subr.mxu0 0.0
    %2572 = vmatpush1.xpose.msra.mxu0 0.0
    %2573 = vmatprep.subr.mxu0 0.0
    %2574 = vmatpush1.xpose.msra.mxu0 0.0
    %2575 = vmatprep.subr.mxu0 0.0
    %2576 = vmatpush1.xpose.msra.mxu0 0.0
    %2577 = vmatprep.mubr.f32.mxu0 0.0
    %v2578 = vand.u32 %v2205, 4294901760
    %2579 = vmatmul.mubr.f32.gmra.mrb[0].mxu0 %v2578
    %v2580 = vpop.f32.mrb[0].mxu0
    %v2581 = vadd.f32 %v2507, %v2580
    %v2582 = vpop.f32.mrb[0].mxu0
    %2583 = vdwg.mxu0
    %2584 = vmatprep.subr.mxu0 0.0
    %v2585 = vand.u32 %v2208, 4294901760
    %2586 = vmatpush1.xpose.msra.mxu0 %v2585
    %2587 = vmatprep.subr.mxu0 0.0
    %2588 = vmatpush1.xpose.msra.mxu0 0.0
    %2589 = vmatprep.subr.mxu0 0.0
    %2590 = vmatpush1.xpose.msra.mxu0 0.0
    %2591 = vmatprep.subr.mxu0 0.0
    %2592 = vmatpush1.xpose.msra.mxu0 0.0
    %2593 = vmatprep.subr.mxu0 0.0
    %2594 = vmatpush1.xpose.msra.mxu0 0.0
    %2595 = vmatprep.subr.mxu0 0.0
    %2596 = vmatpush1.xpose.msra.mxu0 0.0
    %2597 = vmatprep.subr.mxu0 0.0
    %2598 = vmatpush1.xpose.msra.mxu0 0.0
    %2599 = vmatprep.subr.mxu0 0.0
    %2600 = vmatpush1.xpose.msra.mxu0 0.0
    %2601 = vmatprep.subr.mxu0 0.0
    %2602 = vmatpush1.xpose.msra.mxu0 0.0
    %2603 = vmatprep.subr.mxu0 0.0
    %2604 = vmatpush1.xpose.msra.mxu0 0.0
    %2605 = vmatprep.subr.mxu0 0.0
    %2606 = vmatpush1.xpose.msra.mxu0 0.0
    %2607 = vmatprep.subr.mxu0 0.0
    %2608 = vmatpush1.xpose.msra.mxu0 0.0
    %2609 = vmatprep.subr.mxu0 0.0
    %2610 = vmatpush1.xpose.msra.mxu0 0.0
    %2611 = vmatprep.subr.mxu0 0.0
    %2612 = vmatpush1.xpose.msra.mxu0 0.0
    %2613 = vmatprep.subr.mxu0 0.0
    %2614 = vmatpush1.xpose.msra.mxu0 0.0
    %2615 = vmatprep.subr.mxu0 0.0
    %2616 = vmatpush1.xpose.msra.mxu0 0.0
    %2617 = vmatprep.subr.mxu0 0.0
    %2618 = vmatpush1.xpose.msra.mxu0 0.0
    %2619 = vmatprep.subr.mxu0 0.0
    %2620 = vmatpush1.xpose.msra.mxu0 0.0
    %2621 = vmatprep.subr.mxu0 0.0
    %2622 = vmatpush1.xpose.msra.mxu0 0.0
    %2623 = vmatprep.subr.mxu0 0.0
    %2624 = vmatpush1.xpose.msra.mxu0 0.0
    %2625 = vmatprep.subr.mxu0 0.0
    %2626 = vmatpush1.xpose.msra.mxu0 0.0
    %2627 = vmatprep.subr.mxu0 0.0
    %2628 = vmatpush1.xpose.msra.mxu0 0.0
    %2629 = vmatprep.subr.mxu0 0.0
    %2630 = vmatpush1.xpose.msra.mxu0 0.0
    %2631 = vmatprep.subr.mxu0 0.0
    %2632 = vmatpush1.xpose.msra.mxu0 0.0
    %2633 = vmatprep.subr.mxu0 0.0
    %2634 = vmatpush1.xpose.msra.mxu0 0.0
    %2635 = vmatprep.subr.mxu0 0.0
    %2636 = vmatpush1.xpose.msra.mxu0 0.0
    %2637 = vmatprep.subr.mxu0 0.0
    %2638 = vmatpush1.xpose.msra.mxu0 0.0
    %2639 = vmatprep.subr.mxu0 0.0
    %2640 = vmatpush1.xpose.msra.mxu0 0.0
    %2641 = vmatprep.subr.mxu0 0.0
    %2642 = vmatpush1.xpose.msra.mxu0 0.0
    %2643 = vmatprep.subr.mxu0 0.0
    %2644 = vmatpush1.xpose.msra.mxu0 0.0
    %2645 = vmatprep.subr.mxu0 0.0
    %2646 = vmatpush1.xpose.msra.mxu0 0.0
    %2647 = vmatprep.subr.mxu0 0.0
    %2648 = vmatpush1.xpose.msra.mxu0 0.0
    %2649 = vmatprep.mubr.f32.mxu0 0.0
    %v2650 = vand.u32 %v2205, 4294901760
    %2651 = vmatmul.mubr.f32.gmra.mrb[0].mxu0 %v2650
    %v2652 = vpop.f32.mrb[0].mxu0
    %v2653 = vadd.f32 %v2581, %v2652
    %v2654 = vpop.f32.mrb[0].mxu0
    %2655 = vdwg.mxu0
    %v2656 = vsel %vm1751, %v2201, -inf
    %2657 = vmax.xlane.f32.xlu0 %v2656
    %v2658 = vpop.xlane.xlu0 %2657
    %v2659 = vsel %vm1751, %v2653, -inf
    %2660 = vmax.xlane.f32.xlu0 %v2659
    %v2661 = vpop.xlane.xlu0 %2660
    %v2662 = vsub.f32 %v2201, %v2658
    %v2663 = vsub.f32 %v2653, %v2661
    %v2664 = vmul.f32 %v2662, 1.442695
    %v2665 = vpow.pop %v2664
    %v2666 = vmul.f32 %v2663, 1.442695
    %v2667 = vpow.pop %v2666
    %v2668 = vsel %vm1751, %v2665, 0.0
    %2669 = vadd.xlane.f32.xlu0 %v2668
    %v2670 = vpop.xlane.xlu0 %2669
    %v2671 = vsel %vm1751, %v2667, 0.0
    %2672 = vadd.xlane.f32.xlu0 %v2671
    %v2673 = vpop.xlane.xlu0 %2672
    %v2674 = vrcp.pop %v2670
    %v2675 = vrcp.pop %v2673
    %v2676 = vmul.f32 %v2665, %v2674
    %v2677 = vmul.f32 %v2667, %v2675
    %2678 = vst.msk [vmem:[#allocation14] sm:$0xff] %vm1751, %v2676
    %2679 = vst.msk [vmem:[#allocation14 + $0x20] sm:$0xff] %vm1751, %v2677
    %v2681 = vsel %vm1751, %v2676, 0
    %2683 = vmatprep.subr.mxu0 0.0
    %v2684 = vand.u32 %v1742, 4294901760
    %2685 = vmatpush1.msra.mxu0 %v2684
    %2686 = vmatprep.subr.mxu0 0.0
    %2687 = vmatpush1.msra.mxu0 0.0
    %2688 = vmatprep.subr.mxu0 0.0
    %2689 = vmatpush1.msra.mxu0 0.0
    %2690 = vmatprep.subr.mxu0 0.0
    %2691 = vmatpush1.msra.mxu0 0.0
    %2692 = vmatprep.subr.mxu0 0.0
    %2693 = vmatpush1.msra.mxu0 0.0
    %2694 = vmatprep.subr.mxu0 0.0
    %2695 = vmatpush1.msra.mxu0 0.0
    %2696 = vmatprep.subr.mxu0 0.0
    %2697 = vmatpush1.msra.mxu0 0.0
    %2698 = vmatprep.subr.mxu0 0.0
    %2699 = vmatpush1.msra.mxu0 0.0
    %2700 = vmatprep.subr.mxu0 0.0
    %2701 = vmatpush1.msra.mxu0 0.0
    %2702 = vmatprep.subr.mxu0 0.0
    %2703 = vmatpush1.msra.mxu0 0.0
    %2704 = vmatprep.subr.mxu0 0.0
    %2705 = vmatpush1.msra.mxu0 0.0
    %2706 = vmatprep.subr.mxu0 0.0
    %2707 = vmatpush1.msra.mxu0 0.0
    %2708 = vmatprep.subr.mxu0 0.0
    %2709 = vmatpush1.msra.mxu0 0.0
    %2710 = vmatprep.subr.mxu0 0.0
    %2711 = vmatpush1.msra.mxu0 0.0
    %2712 = vmatprep.subr.mxu0 0.0
    %2713 = vmatpush1.msra.mxu0 0.0
    %2714 = vmatprep.subr.mxu0 0.0
    %2715 = vmatpush1.msra.mxu0 0.0
    %2716 = vmatprep.subr.mxu0 0.0
    %2717 = vmatpush1.msra.mxu0 0.0
    %2718 = vmatprep.subr.mxu0 0.0
    %2719 = vmatpush1.msra.mxu0 0.0
    %2720 = vmatprep.subr.mxu0 0.0
    %2721 = vmatpush1.msra.mxu0 0.0
    %2722 = vmatprep.subr.mxu0 0.0
    %2723 = vmatpush1.msra.mxu0 0.0
    %2724 = vmatprep.subr.mxu0 0.0
    %2725 = vmatpush1.msra.mxu0 0.0
    %2726 = vmatprep.subr.mxu0 0.0
    %2727 = vmatpush1.msra.mxu0 0.0
    %2728 = vmatprep.subr.mxu0 0.0
    %2729 = vmatpush1.msra.mxu0 0.0
    %2730 = vmatprep.subr.mxu0 0.0
    %2731 = vmatpush1.msra.mxu0 0.0
    %2732 = vmatprep.subr.mxu0 0.0
    %2733 = vmatpush1.msra.mxu0 0.0
    %2734 = vmatprep.subr.mxu0 0.0
    %2735 = vmatpush1.msra.mxu0 0.0
    %2736 = vmatprep.subr.mxu0 0.0
    %2737 = vmatpush1.msra.mxu0 0.0
    %2738 = vmatprep.subr.mxu0 0.0
    %2739 = vmatpush1.msra.mxu0 0.0
    %2740 = vmatprep.subr.mxu0 0.0
    %2741 = vmatpush1.msra.mxu0 0.0
    %2742 = vmatprep.subr.mxu0 0.0
    %2743 = vmatpush1.msra.mxu0 0.0
    %2744 = vmatprep.subr.mxu0 0.0
    %2745 = vmatpush1.msra.mxu0 0.0
    %2746 = vmatprep.subr.mxu0 0.0
    %2747 = vmatpush1.msra.mxu0 0.0
    %2748 = vmatprep.mubr.f32.mxu0 0.0
    %v2749 = vand.u32 %v2681, 4294901760
    %v2750 = vsub.f32 %v2681, %v2749
    %v2751 = vand.u32 %v2750, 4294901760
    %v2752 = vsub.f32 %v2750, %v2751
    %v2753 = vand.u32 %v2752, 4294901760
    %2754 = vmatmul.mubr.f32.gmra.mrb[0].mxu0 %v2753
    %v2755 = vpop.f32.mrb[0].mxu0
    %v2756 = vadd.f32 0.0, %v2755
    %v2757 = vpop.f32.mrb[0].mxu0
    %2758 = vdwg.mxu0
    %2759 = vmatprep.subr.mxu0 0.0
    %v2760 = vand.u32 %v1742, 4294901760
    %v2761 = vsub.f32 %v1742, %v2760
    %v2762 = vand.u32 %v2761, 4294901760
    %v2763 = vsub.f32 %v2761, %v2762
    %v2764 = vand.u32 %v2763, 4294901760
    %2765 = vmatpush1.msra.mxu0 %v2764
    %2766 = vmatprep.subr.mxu0 0.0
    %2767 = vmatpush1.msra.mxu0 0.0
    %2768 = vmatprep.subr.mxu0 0.0
    %2769 = vmatpush1.msra.mxu0 0.0
    %2770 = vmatprep.subr.mxu0 0.0
    %2771 = vmatpush1.msra.mxu0 0.0
    %2772 = vmatprep.subr.mxu0 0.0
    %2773 = vmatpush1.msra.mxu0 0.0
    %2774 = vmatprep.subr.mxu0 0.0
    %2775 = vmatpush1.msra.mxu0 0.0
    %2776 = vmatprep.subr.mxu0 0.0
    %2777 = vmatpush1.msra.mxu0 0.0
    %2778 = vmatprep.subr.mxu0 0.0
    %2779 = vmatpush1.msra.mxu0 0.0
    %2780 = vmatprep.subr.mxu0 0.0
    %2781 = vmatpush1.msra.mxu0 0.0
    %2782 = vmatprep.subr.mxu0 0.0
    %2783 = vmatpush1.msra.mxu0 0.0
    %2784 = vmatprep.subr.mxu0 0.0
    %2785 = vmatpush1.msra.mxu0 0.0
    %2786 = vmatprep.subr.mxu0 0.0
    %2787 = vmatpush1.msra.mxu0 0.0
    %2788 = vmatprep.subr.mxu0 0.0
    %2789 = vmatpush1.msra.mxu0 0.0
    %2790 = vmatprep.subr.mxu0 0.0
    %2791 = vmatpush1.msra.mxu0 0.0
    %2792 = vmatprep.subr.mxu0 0.0
    %2793 = vmatpush1.msra.mxu0 0.0
    %2794 = vmatprep.subr.mxu0 0.0
    %2795 = vmatpush1.msra.mxu0 0.0
    %2796 = vmatprep.subr.mxu0 0.0
    %2797 = vmatpush1.msra.mxu0 0.0
    %2798 = vmatprep.subr.mxu0 0.0
    %2799 = vmatpush1.msra.mxu0 0.0
    %2800 = vmatprep.subr.mxu0 0.0
    %2801 = vmatpush1.msra.mxu0 0.0
    %2802 = vmatprep.subr.mxu0 0.0
    %2803 = vmatpush1.msra.mxu0 0.0
    %2804 = vmatprep.subr.mxu0 0.0
    %2805 = vmatpush1.msra.mxu0 0.0
    %2806 = vmatprep.subr.mxu0 0.0
    %2807 = vmatpush1.msra.mxu0 0.0
    %2808 = vmatprep.subr.mxu0 0.0
    %2809 = vmatpush1.msra.mxu0 0.0
    %2810 = vmatprep.subr.mxu0 0.0
    %2811 = vmatpush1.msra.mxu0 0.0
    %2812 = vmatprep.subr.mxu0 0.0
    %2813 = vmatpush1.msra.mxu0 0.0
    %2814 = vmatprep.subr.mxu0 0.0
    %2815 = vmatpush1.msra.mxu0 0.0
    %2816 = vmatprep.subr.mxu0 0.0
    %2817 = vmatpush1.msra.mxu0 0.0
    %2818 = vmatprep.subr.mxu0 0.0
    %2819 = vmatpush1.msra.mxu0 0.0
    %2820 = vmatprep.subr.mxu0 0.0
    %2821 = vmatpush1.msra.mxu0 0.0
    %2822 = vmatprep.subr.mxu0 0.0
    %2823 = vmatpush1.msra.mxu0 0.0
    %2824 = vmatprep.subr.mxu0 0.0
    %2825 = vmatpush1.msra.mxu0 0.0
    %2826 = vmatprep.subr.mxu0 0.0
    %2827 = vmatpush1.msra.mxu0 0.0
    %2828 = vmatprep.mubr.f32.mxu0 0.0
    %v2829 = vand.u32 %v2681, 4294901760
    %2830 = vmatmul.mubr.f32.gmra.mrb[0].mxu0 %v2829
    %v2831 = vpop.f32.mrb[0].mxu0
    %v2832 = vadd.f32 %v2756, %v2831
    %v2833 = vpop.f32.mrb[0].mxu0
    %2834 = vdwg.mxu0
    %2835 = vmatprep.subr.mxu0 0.0
    %v2836 = vand.u32 %v1742, 4294901760
    %v2837 = vsub.f32 %v1742, %v2836
    %2838 = vmatpush1.msra.mxu0 %v2837
    %2839 = vmatprep.subr.mxu0 0.0
    %2840 = vmatpush1.msra.mxu0 0.0
    %2841 = vmatprep.subr.mxu0 0.0
    %2842 = vmatpush1.msra.mxu0 0.0
    %2843 = vmatprep.subr.mxu0 0.0
    %2844 = vmatpush1.msra.mxu0 0.0
    %2845 = vmatprep.subr.mxu0 0.0
    %2846 = vmatpush1.msra.mxu0 0.0
    %2847 = vmatprep.subr.mxu0 0.0
    %2848 = vmatpush1.msra.mxu0 0.0
    %2849 = vmatprep.subr.mxu0 0.0
    %2850 = vmatpush1.msra.mxu0 0.0
    %2851 = vmatprep.subr.mxu0 0.0
    %2852 = vmatpush1.msra.mxu0 0.0
    %2853 = vmatprep.subr.mxu0 0.0
    %2854 = vmatpush1.msra.mxu0 0.0
    %2855 = vmatprep.subr.mxu0 0.0
    %2856 = vmatpush1.msra.mxu0 0.0
    %2857 = vmatprep.subr.mxu0 0.0
    %2858 = vmatpush1.msra.mxu0 0.0
    %2859 = vmatprep.subr.mxu0 0.0
    %2860 = vmatpush1.msra.mxu0 0.0
    %2861 = vmatprep.subr.mxu0 0.0
    %2862 = vmatpush1.msra.mxu0 0.0
    %2863 = vmatprep.subr.mxu0 0.0
    %2864 = vmatpush1.msra.mxu0 0.0
    %2865 = vmatprep.subr.mxu0 0.0
    %2866 = vmatpush1.msra.mxu0 0.0
    %2867 = vmatprep.subr.mxu0 0.0
    %2868 = vmatpush1.msra.mxu0 0.0
    %2869 = vmatprep.subr.mxu0 0.0
    %2870 = vmatpush1.msra.mxu0 0.0
    %2871 = vmatprep.subr.mxu0 0.0
    %2872 = vmatpush1.msra.mxu0 0.0
    %2873 = vmatprep.subr.mxu0 0.0
    %2874 = vmatpush1.msra.mxu0 0.0
    %2875 = vmatprep.subr.mxu0 0.0
    %2876 = vmatpush1.msra.mxu0 0.0
    %2877 = vmatprep.subr.mxu0 0.0
    %2878 = vmatpush1.msra.mxu0 0.0
    %2879 = vmatprep.subr.mxu0 0.0
    %2880 = vmatpush1.msra.mxu0 0.0
    %2881 = vmatprep.subr.mxu0 0.0
    %2882 = vmatpush1.msra.mxu0 0.0
    %2883 = vmatprep.subr.mxu0 0.0
    %2884 = vmatpush1.msra.mxu0 0.0
    %2885 = vmatprep.subr.mxu0 0.0
    %2886 = vmatpush1.msra.mxu0 0.0
    %2887 = vmatprep.subr.mxu0 0.0
    %2888 = vmatpush1.msra.mxu0 0.0
    %2889 = vmatprep.subr.mxu0 0.0
    %2890 = vmatpush1.msra.mxu0 0.0
    %2891 = vmatprep.subr.mxu0 0.0
    %2892 = vmatpush1.msra.mxu0 0.0
    %2893 = vmatprep.subr.mxu0 0.0
    %2894 = vmatpush1.msra.mxu0 0.0
    %2895 = vmatprep.subr.mxu0 0.0
    %2896 = vmatpush1.msra.mxu0 0.0
    %2897 = vmatprep.subr.mxu0 0.0
    %2898 = vmatpush1.msra.mxu0 0.0
    %2899 = vmatprep.subr.mxu0 0.0
    %2900 = vmatpush1.msra.mxu0 0.0
    %2901 = vmatprep.mubr.f32.mxu0 0.0
    %v2902 = vand.u32 %v2681, 4294901760
    %v2903 = vsub.f32 %v2681, %v2902
    %2904 = vmatmul.mubr.f32.gmra.mrb[0].mxu0 %v2903
    %v2905 = vpop.f32.mrb[0].mxu0
    %v2906 = vadd.f32 %v2832, %v2905
    %v2907 = vpop.f32.mrb[0].mxu0
    %2908 = vdwg.mxu0
    %2909 = vmatprep.subr.mxu0 0.0
    %v2910 = vand.u32 %v1742, 4294901760
    %2911 = vmatpush1.msra.mxu0 %v2910
    %2912 = vmatprep.subr.mxu0 0.0
    %2913 = vmatpush1.msra.mxu0 0.0
    %2914 = vmatprep.subr.mxu0 0.0
    %2915 = vmatpush1.msra.mxu0 0.0
    %2916 = vmatprep.subr.mxu0 0.0
    %2917 = vmatpush1.msra.mxu0 0.0
    %2918 = vmatprep.subr.mxu0 0.0
    %2919 = vmatpush1.msra.mxu0 0.0
    %2920 = vmatprep.subr.mxu0 0.0
    %2921 = vmatpush1.msra.mxu0 0.0
    %2922 = vmatprep.subr.mxu0 0.0
    %2923 = vmatpush1.msra.mxu0 0.0
    %2924 = vmatprep.subr.mxu0 0.0
    %2925 = vmatpush1.msra.mxu0 0.0
    %2926 = vmatprep.subr.mxu0 0.0
    %2927 = vmatpush1.msra.mxu0 0.0
    %2928 = vmatprep.subr.mxu0 0.0
    %2929 = vmatpush1.msra.mxu0 0.0
    %2930 = vmatprep.subr.mxu0 0.0
    %2931 = vmatpush1.msra.mxu0 0.0
    %2932 = vmatprep.subr.mxu0 0.0
    %2933 = vmatpush1.msra.mxu0 0.0
    %2934 = vmatprep.subr.mxu0 0.0
    %2935 = vmatpush1.msra.mxu0 0.0
    %2936 = vmatprep.subr.mxu0 0.0
    %2937 = vmatpush1.msra.mxu0 0.0
    %2938 = vmatprep.subr.mxu0 0.0
    %2939 = vmatpush1.msra.mxu0 0.0
    %2940 = vmatprep.subr.mxu0 0.0
    %2941 = vmatpush1.msra.mxu0 0.0
    %2942 = vmatprep.subr.mxu0 0.0
    %2943 = vmatpush1.msra.mxu0 0.0
    %2944 = vmatprep.subr.mxu0 0.0
    %2945 = vmatpush1.msra.mxu0 0.0
    %2946 = vmatprep.subr.mxu0 0.0
    %2947 = vmatpush1.msra.mxu0 0.0
    %2948 = vmatprep.subr.mxu0 0.0
    %2949 = vmatpush1.msra.mxu0 0.0
    %2950 = vmatprep.subr.mxu0 0.0
    %2951 = vmatpush1.msra.mxu0 0.0
    %2952 = vmatprep.subr.mxu0 0.0
    %2953 = vmatpush1.msra.mxu0 0.0
    %2954 = vmatprep.subr.mxu0 0.0
    %2955 = vmatpush1.msra.mxu0 0.0
    %2956 = vmatprep.subr.mxu0 0.0
    %2957 = vmatpush1.msra.mxu0 0.0
    %2958 = vmatprep.subr.mxu0 0.0
    %2959 = vmatpush1.msra.mxu0 0.0
    %2960 = vmatprep.subr.mxu0 0.0
    %2961 = vmatpush1.msra.mxu0 0.0
    %2962 = vmatprep.subr.mxu0 0.0
    %2963 = vmatpush1.msra.mxu0 0.0
    %2964 = vmatprep.subr.mxu0 0.0
    %2965 = vmatpush1.msra.mxu0 0.0
    %2966 = vmatprep.subr.mxu0 0.0
    %2967 = vmatpush1.msra.mxu0 0.0
    %2968 = vmatprep.subr.mxu0 0.0
    %2969 = vmatpush1.msra.mxu0 0.0
    %2970 = vmatprep.subr.mxu0 0.0
    %2971 = vmatpush1.msra.mxu0 0.0
    %2972 = vmatprep.subr.mxu0 0.0
    %2973 = vmatpush1.msra.mxu0 0.0
    %2974 = vmatprep.mubr.f32.mxu0 0.0
    %v2975 = vand.u32 %v2681, 4294901760
    %v2976 = vsub.f32 %v2681, %v2975
    %v2977 = vand.u32 %v2976, 4294901760
    %2978 = vmatmul.mubr.f32.gmra.mrb[0].mxu0 %v2977
    %v2979 = vpop.f32.mrb[0].mxu0
    %v2980 = vadd.f32 %v2906, %v2979
    %v2981 = vpop.f32.mrb[0].mxu0
    %2982 = vdwg.mxu0
    %2983 = vmatprep.subr.mxu0 0.0
    %v2984 = vand.u32 %v1742, 4294901760
    %v2985 = vsub.f32 %v1742, %v2984
    %v2986 = vand.u32 %v2985, 4294901760
    %2987 = vmatpush1.msra.mxu0 %v2986
    %2988 = vmatprep.subr.mxu0 0.0
    %2989 = vmatpush1.msra.mxu0 0.0
    %2990 = vmatprep.subr.mxu0 0.0
    %2991 = vmatpush1.msra.mxu0 0.0
    %2992 = vmatprep.subr.mxu0 0.0
    %2993 = vmatpush1.msra.mxu0 0.0
    %2994 = vmatprep.subr.mxu0 0.0
    %2995 = vmatpush1.msra.mxu0 0.0
    %2996 = vmatprep.subr.mxu0 0.0
    %2997 = vmatpush1.msra.mxu0 0.0
    %2998 = vmatprep.subr.mxu0 0.0
    %2999 = vmatpush1.msra.mxu0 0.0
    %3000 = vmatprep.subr.mxu0 0.0
    %3001 = vmatpush1.msra.mxu0 0.0
    %3002 = vmatprep.subr.mxu0 0.0
    %3003 = vmatpush1.msra.mxu0 0.0
    %3004 = vmatprep.subr.mxu0 0.0
    %3005 = vmatpush1.msra.mxu0 0.0
    %3006 = vmatprep.subr.mxu0 0.0
    %3007 = vmatpush1.msra.mxu0 0.0
    %3008 = vmatprep.subr.mxu0 0.0
    %3009 = vmatpush1.msra.mxu0 0.0
    %3010 = vmatprep.subr.mxu0 0.0
    %3011 = vmatpush1.msra.mxu0 0.0
    %3012 = vmatprep.subr.mxu0 0.0
    %3013 = vmatpush1.msra.mxu0 0.0
    %3014 = vmatprep.subr.mxu0 0.0
    %3015 = vmatpush1.msra.mxu0 0.0
    %3016 = vmatprep.subr.mxu0 0.0
    %3017 = vmatpush1.msra.mxu0 0.0
    %3018 = vmatprep.subr.mxu0 0.0
    %3019 = vmatpush1.msra.mxu0 0.0
    %3020 = vmatprep.subr.mxu0 0.0
    %3021 = vmatpush1.msra.mxu0 0.0
    %3022 = vmatprep.subr.mxu0 0.0
    %3023 = vmatpush1.msra.mxu0 0.0
    %3024 = vmatprep.subr.mxu0 0.0
    %3025 = vmatpush1.msra.mxu0 0.0
    %3026 = vmatprep.subr.mxu0 0.0
    %3027 = vmatpush1.msra.mxu0 0.0
    %3028 = vmatprep.subr.mxu0 0.0
    %3029 = vmatpush1.msra.mxu0 0.0
    %3030 = vmatprep.subr.mxu0 0.0
    %3031 = vmatpush1.msra.mxu0 0.0
    %3032 = vmatprep.subr.mxu0 0.0
    %3033 = vmatpush1.msra.mxu0 0.0
    %3034 = vmatprep.subr.mxu0 0.0
    %3035 = vmatpush1.msra.mxu0 0.0
    %3036 = vmatprep.subr.mxu0 0.0
    %3037 = vmatpush1.msra.mxu0 0.0
    %3038 = vmatprep.subr.mxu0 0.0
    %3039 = vmatpush1.msra.mxu0 0.0
    %3040 = vmatprep.subr.mxu0 0.0
    %3041 = vmatpush1.msra.mxu0 0.0
    %3042 = vmatprep.subr.mxu0 0.0
    %3043 = vmatpush1.msra.mxu0 0.0
    %3044 = vmatprep.subr.mxu0 0.0
    %3045 = vmatpush1.msra.mxu0 0.0
    %3046 = vmatprep.subr.mxu0 0.0
    %3047 = vmatpush1.msra.mxu0 0.0
    %3048 = vmatprep.subr.mxu0 0.0
    %3049 = vmatpush1.msra.mxu0 0.0
    %3050 = vmatprep.mubr.f32.mxu0 0.0
    %v3051 = vand.u32 %v2681, 4294901760
    %3052 = vmatmul.mubr.f32.gmra.mrb[0].mxu0 %v3051
    %v3053 = vpop.f32.mrb[0].mxu0
    %v3054 = vadd.f32 %v2980, %v3053
    %v3055 = vpop.f32.mrb[0].mxu0
    %3056 = vdwg.mxu0
    %3057 = vmatprep.subr.mxu0 0.0
    %v3058 = vand.u32 %v1742, 4294901760
    %3059 = vmatpush1.msra.mxu0 %v3058
    %3060 = vmatprep.subr.mxu0 0.0
    %3061 = vmatpush1.msra.mxu0 0.0
    %3062 = vmatprep.subr.mxu0 0.0
    %3063 = vmatpush1.msra.mxu0 0.0
    %3064 = vmatprep.subr.mxu0 0.0
    %3065 = vmatpush1.msra.mxu0 0.0
    %3066 = vmatprep.subr.mxu0 0.0
    %3067 = vmatpush1.msra.mxu0 0.0
    %3068 = vmatprep.subr.mxu0 0.0
    %3069 = vmatpush1.msra.mxu0 0.0
    %3070 = vmatprep.subr.mxu0 0.0
    %3071 = vmatpush1.msra.mxu0 0.0
    %3072 = vmatprep.subr.mxu0 0.0
    %3073 = vmatpush1.msra.mxu0 0.0
    %3074 = vmatprep.subr.mxu0 0.0
    %3075 = vmatpush1.msra.mxu0 0.0
    %3076 = vmatprep.subr.mxu0 0.0
    %3077 = vmatpush1.msra.mxu0 0.0
    %3078 = vmatprep.subr.mxu0 0.0
    %3079 = vmatpush1.msra.mxu0 0.0
    %3080 = vmatprep.subr.mxu0 0.0
    %3081 = vmatpush1.msra.mxu0 0.0
    %3082 = vmatprep.subr.mxu0 0.0
    %3083 = vmatpush1.msra.mxu0 0.0
    %3084 = vmatprep.subr.mxu0 0.0
    %3085 = vmatpush1.msra.mxu0 0.0
    %3086 = vmatprep.subr.mxu0 0.0
    %3087 = vmatpush1.msra.mxu0 0.0
    %3088 = vmatprep.subr.mxu0 0.0
    %3089 = vmatpush1.msra.mxu0 0.0
    %3090 = vmatprep.subr.mxu0 0.0
    %3091 = vmatpush1.msra.mxu0 0.0
    %3092 = vmatprep.subr.mxu0 0.0
    %3093 = vmatpush1.msra.mxu0 0.0
    %3094 = vmatprep.subr.mxu0 0.0
    %3095 = vmatpush1.msra.mxu0 0.0
    %3096 = vmatprep.subr.mxu0 0.0
    %3097 = vmatpush1.msra.mxu0 0.0
    %3098 = vmatprep.subr.mxu0 0.0
    %3099 = vmatpush1.msra.mxu0 0.0
    %3100 = vmatprep.subr.mxu0 0.0
    %3101 = vmatpush1.msra.mxu0 0.0
    %3102 = vmatprep.subr.mxu0 0.0
    %3103 = vmatpush1.msra.mxu0 0.0
    %3104 = vmatprep.subr.mxu0 0.0
    %3105 = vmatpush1.msra.mxu0 0.0
    %3106 = vmatprep.subr.mxu0 0.0
    %3107 = vmatpush1.msra.mxu0 0.0
    %3108 = vmatprep.subr.mxu0 0.0
    %3109 = vmatpush1.msra.mxu0 0.0
    %3110 = vmatprep.subr.mxu0 0.0
    %3111 = vmatpush1.msra.mxu0 0.0
    %3112 = vmatprep.subr.mxu0 0.0
    %3113 = vmatpush1.msra.mxu0 0.0
    %3114 = vmatprep.subr.mxu0 0.0
    %3115 = vmatpush1.msra.mxu0 0.0
    %3116 = vmatprep.subr.mxu0 0.0
    %3117 = vmatpush1.msra.mxu0 0.0
    %3118 = vmatprep.subr.mxu0 0.0
    %3119 = vmatpush1.msra.mxu0 0.0
    %3120 = vmatprep.subr.mxu0 0.0
    %3121 = vmatpush1.msra.mxu0 0.0
    %3122 = vmatprep.mubr.f32.mxu0 0.0
    %v3123 = vand.u32 %v2681, 4294901760
    %3124 = vmatmul.mubr.f32.gmra.mrb[0].mxu0 %v3123
    %v3125 = vpop.f32.mrb[0].mxu0
    %v3126 = vadd.f32 %v3054, %v3125
    %v3127 = vpop.f32.mrb[0].mxu0
    %3128 = vdwg.mxu0
    %v3130 = vsel %vm1751, %v2677, 0
    %3132 = vmatprep.subr.mxu0 0.0
    %v3133 = vand.u32 %v1748, 4294901760
    %3134 = vmatpush1.msra.mxu0 %v3133
    %3135 = vmatprep.subr.mxu0 0.0
    %3136 = vmatpush1.msra.mxu0 0.0
    %3137 = vmatprep.subr.mxu0 0.0
    %3138 = vmatpush1.msra.mxu0 0.0
    %3139 = vmatprep.subr.mxu0 0.0
    %3140 = vmatpush1.msra.mxu0 0.0
    %3141 = vmatprep.subr.mxu0 0.0
    %3142 = vmatpush1.msra.mxu0 0.0
    %3143 = vmatprep.subr.mxu0 0.0
    %3144 = vmatpush1.msra.mxu0 0.0
    %3145 = vmatprep.subr.mxu0 0.0
    %3146 = vmatpush1.msra.mxu0 0.0
    %3147 = vmatprep.subr.mxu0 0.0
    %3148 = vmatpush1.msra.mxu0 0.0
    %3149 = vmatprep.subr.mxu0 0.0
    %3150 = vmatpush1.msra.mxu0 0.0
    %3151 = vmatprep.subr.mxu0 0.0
    %3152 = vmatpush1.msra.mxu0 0.0
    %3153 = vmatprep.subr.mxu0 0.0
    %3154 = vmatpush1.msra.mxu0 0.0
    %3155 = vmatprep.subr.mxu0 0.0
    %3156 = vmatpush1.msra.mxu0 0.0
    %3157 = vmatprep.subr.mxu0 0.0
    %3158 = vmatpush1.msra.mxu0 0.0
    %3159 = vmatprep.subr.mxu0 0.0
    %3160 = vmatpush1.msra.mxu0 0.0
    %3161 = vmatprep.subr.mxu0 0.0
    %3162 = vmatpush1.msra.mxu0 0.0
    %3163 = vmatprep.subr.mxu0 0.0
    %3164 = vmatpush1.msra.mxu0 0.0
    %3165 = vmatprep.subr.mxu0 0.0
    %3166 = vmatpush1.msra.mxu0 0.0
    %3167 = vmatprep.subr.mxu0 0.0
    %3168 = vmatpush1.msra.mxu0 0.0
    %3169 = vmatprep.subr.mxu0 0.0
    %3170 = vmatpush1.msra.mxu0 0.0
    %3171 = vmatprep.subr.mxu0 0.0
    %3172 = vmatpush1.msra.mxu0 0.0
    %3173 = vmatprep.subr.mxu0 0.0
    %3174 = vmatpush1.msra.mxu0 0.0
    %3175 = vmatprep.subr.mxu0 0.0
    %3176 = vmatpush1.msra.mxu0 0.0
    %3177 = vmatprep.subr.mxu0 0.0
    %3178 = vmatpush1.msra.mxu0 0.0
    %3179 = vmatprep.subr.mxu0 0.0
    %3180 = vmatpush1.msra.mxu0 0.0
    %3181 = vmatprep.subr.mxu0 0.0
    %3182 = vmatpush1.msra.mxu0 0.0
    %3183 = vmatprep.subr.mxu0 0.0
    %3184 = vmatpush1.msra.mxu0 0.0
    %3185 = vmatprep.subr.mxu0 0.0
    %3186 = vmatpush1.msra.mxu0 0.0
    %3187 = vmatprep.subr.mxu0 0.0
    %3188 = vmatpush1.msra.mxu0 0.0
    %3189 = vmatprep.subr.mxu0 0.0
    %3190 = vmatpush1.msra.mxu0 0.0
    %3191 = vmatprep.subr.mxu0 0.0
    %3192 = vmatpush1.msra.mxu0 0.0
    %3193 = vmatprep.subr.mxu0 0.0
    %3194 = vmatpush1.msra.mxu0 0.0
    %3195 = vmatprep.subr.mxu0 0.0
    %3196 = vmatpush1.msra.mxu0 0.0
    %3197 = vmatprep.mubr.f32.mxu0 0.0
    %v3198 = vand.u32 %v3130, 4294901760
    %v3199 = vsub.f32 %v3130, %v3198
    %v3200 = vand.u32 %v3199, 4294901760
    %v3201 = vsub.f32 %v3199, %v3200
    %v3202 = vand.u32 %v3201, 4294901760
    %3203 = vmatmul.mubr.f32.gmra.mrb[0].mxu0 %v3202
    %v3204 = vpop.f32.mrb[0].mxu0
    %v3205 = vadd.f32 0.0, %v3204
    %v3206 = vpop.f32.mrb[0].mxu0
    %3207 = vdwg.mxu0
    %3208 = vmatprep.subr.mxu0 0.0
    %v3209 = vand.u32 %v1748, 4294901760
    %v3210 = vsub.f32 %v1748, %v3209
    %v3211 = vand.u32 %v3210, 4294901760
    %v3212 = vsub.f32 %v3210, %v3211
    %v3213 = vand.u32 %v3212, 4294901760
    %3214 = vmatpush1.msra.mxu0 %v3213
    %3215 = vmatprep.subr.mxu0 0.0
    %3216 = vmatpush1.msra.mxu0 0.0
    %3217 = vmatprep.subr.mxu0 0.0
    %3218 = vmatpush1.msra.mxu0 0.0
    %3219 = vmatprep.subr.mxu0 0.0
    %3220 = vmatpush1.msra.mxu0 0.0
    %3221 = vmatprep.subr.mxu0 0.0
    %3222 = vmatpush1.msra.mxu0 0.0
    %3223 = vmatprep.subr.mxu0 0.0
    %3224 = vmatpush1.msra.mxu0 0.0
    %3225 = vmatprep.subr.mxu0 0.0
    %3226 = vmatpush1.msra.mxu0 0.0
    %3227 = vmatprep.subr.mxu0 0.0
    %3228 = vmatpush1.msra.mxu0 0.0
    %3229 = vmatprep.subr.mxu0 0.0
    %3230 = vmatpush1.msra.mxu0 0.0
    %3231 = vmatprep.subr.mxu0 0.0
    %3232 = vmatpush1.msra.mxu0 0.0
    %3233 = vmatprep.subr.mxu0 0.0
    %3234 = vmatpush1.msra.mxu0 0.0
    %3235 = vmatprep.subr.mxu0 0.0
    %3236 = vmatpush1.msra.mxu0 0.0
    %3237 = vmatprep.subr.mxu0 0.0
    %3238 = vmatpush1.msra.mxu0 0.0
    %3239 = vmatprep.subr.mxu0 0.0
    %3240 = vmatpush1.msra.mxu0 0.0
    %3241 = vmatprep.subr.mxu0 0.0
    %3242 = vmatpush1.msra.mxu0 0.0
    %3243 = vmatprep.subr.mxu0 0.0
    %3244 = vmatpush1.msra.mxu0 0.0
    %3245 = vmatprep.subr.mxu0 0.0
    %3246 = vmatpush1.msra.mxu0 0.0
    %3247 = vmatprep.subr.mxu0 0.0
    %3248 = vmatpush1.msra.mxu0 0.0
    %3249 = vmatprep.subr.mxu0 0.0
    %3250 = vmatpush1.msra.mxu0 0.0
    %3251 = vmatprep.subr.mxu0 0.0
    %3252 = vmatpush1.msra.mxu0 0.0
    %3253 = vmatprep.subr.mxu0 0.0
    %3254 = vmatpush1.msra.mxu0 0.0
    %3255 = vmatprep.subr.mxu0 0.0
    %3256 = vmatpush1.msra.mxu0 0.0
    %3257 = vmatprep.subr.mxu0 0.0
    %3258 = vmatpush1.msra.mxu0 0.0
    %3259 = vmatprep.subr.mxu0 0.0
    %3260 = vmatpush1.msra.mxu0 0.0
    %3261 = vmatprep.subr.mxu0 0.0
    %3262 = vmatpush1.msra.mxu0 0.0
    %3263 = vmatprep.subr.mxu0 0.0
    %3264 = vmatpush1.msra.mxu0 0.0
    %3265 = vmatprep.subr.mxu0 0.0
    %3266 = vmatpush1.msra.mxu0 0.0
    %3267 = vmatprep.subr.mxu0 0.0
    %3268 = vmatpush1.msra.mxu0 0.0
    %3269 = vmatprep.subr.mxu0 0.0
    %3270 = vmatpush1.msra.mxu0 0.0
    %3271 = vmatprep.subr.mxu0 0.0
    %3272 = vmatpush1.msra.mxu0 0.0
    %3273 = vmatprep.subr.mxu0 0.0
    %3274 = vmatpush1.msra.mxu0 0.0
    %3275 = vmatprep.subr.mxu0 0.0
    %3276 = vmatpush1.msra.mxu0 0.0
    %3277 = vmatprep.mubr.f32.mxu0 0.0
    %v3278 = vand.u32 %v3130, 4294901760
    %3279 = vmatmul.mubr.f32.gmra.mrb[0].mxu0 %v3278
    %v3280 = vpop.f32.mrb[0].mxu0
    %v3281 = vadd.f32 %v3205, %v3280
    %v3282 = vpop.f32.mrb[0].mxu0
    %3283 = vdwg.mxu0
    %3284 = vmatprep.subr.mxu0 0.0
    %v3285 = vand.u32 %v1748, 4294901760
    %v3286 = vsub.f32 %v1748, %v3285
    %3287 = vmatpush1.msra.mxu0 %v3286
    %3288 = vmatprep.subr.mxu0 0.0
    %3289 = vmatpush1.msra.mxu0 0.0
    %3290 = vmatprep.subr.mxu0 0.0
    %3291 = vmatpush1.msra.mxu0 0.0
    %3292 = vmatprep.subr.mxu0 0.0
    %3293 = vmatpush1.msra.mxu0 0.0
    %3294 = vmatprep.subr.mxu0 0.0
    %3295 = vmatpush1.msra.mxu0 0.0
    %3296 = vmatprep.subr.mxu0 0.0
    %3297 = vmatpush1.msra.mxu0 0.0
    %3298 = vmatprep.subr.mxu0 0.0
    %3299 = vmatpush1.msra.mxu0 0.0
    %3300 = vmatprep.subr.mxu0 0.0
    %3301 = vmatpush1.msra.mxu0 0.0
    %3302 = vmatprep.subr.mxu0 0.0
    %3303 = vmatpush1.msra.mxu0 0.0
    %3304 = vmatprep.subr.mxu0 0.0
    %3305 = vmatpush1.msra.mxu0 0.0
    %3306 = vmatprep.subr.mxu0 0.0
    %3307 = vmatpush1.msra.mxu0 0.0
    %3308 = vmatprep.subr.mxu0 0.0
    %3309 = vmatpush1.msra.mxu0 0.0
    %3310 = vmatprep.subr.mxu0 0.0
    %3311 = vmatpush1.msra.mxu0 0.0
    %3312 = vmatprep.subr.mxu0 0.0
    %3313 = vmatpush1.msra.mxu0 0.0
    %3314 = vmatprep.subr.mxu0 0.0
    %3315 = vmatpush1.msra.mxu0 0.0
    %3316 = vmatprep.subr.mxu0 0.0
    %3317 = vmatpush1.msra.mxu0 0.0
    %3318 = vmatprep.subr.mxu0 0.0
    %3319 = vmatpush1.msra.mxu0 0.0
    %3320 = vmatprep.subr.mxu0 0.0
    %3321 = vmatpush1.msra.mxu0 0.0
    %3322 = vmatprep.subr.mxu0 0.0
    %3323 = vmatpush1.msra.mxu0 0.0
    %3324 = vmatprep.subr.mxu0 0.0
    %3325 = vmatpush1.msra.mxu0 0.0
    %3326 = vmatprep.subr.mxu0 0.0
    %3327 = vmatpush1.msra.mxu0 0.0
    %3328 = vmatprep.subr.mxu0 0.0
    %3329 = vmatpush1.msra.mxu0 0.0
    %3330 = vmatprep.subr.mxu0 0.0
    %3331 = vmatpush1.msra.mxu0 0.0
    %3332 = vmatprep.subr.mxu0 0.0
    %3333 = vmatpush1.msra.mxu0 0.0
    %3334 = vmatprep.subr.mxu0 0.0
    %3335 = vmatpush1.msra.mxu0 0.0
    %3336 = vmatprep.subr.mxu0 0.0
    %3337 = vmatpush1.msra.mxu0 0.0
    %3338 = vmatprep.subr.mxu0 0.0
    %3339 = vmatpush1.msra.mxu0 0.0
    %3340 = vmatprep.subr.mxu0 0.0
    %3341 = vmatpush1.msra.mxu0 0.0
    %3342 = vmatprep.subr.mxu0 0.0
    %3343 = vmatpush1.msra.mxu0 0.0
    %3344 = vmatprep.subr.mxu0 0.0
    %3345 = vmatpush1.msra.mxu0 0.0
    %3346 = vmatprep.subr.mxu0 0.0
    %3347 = vmatpush1.msra.mxu0 0.0
    %3348 = vmatprep.subr.mxu0 0.0
    %3349 = vmatpush1.msra.mxu0 0.0
    %3350 = vmatprep.mubr.f32.mxu0 0.0
    %v3351 = vand.u32 %v3130, 4294901760
    %v3352 = vsub.f32 %v3130, %v3351
    %3353 = vmatmul.mubr.f32.gmra.mrb[0].mxu0 %v3352
    %v3354 = vpop.f32.mrb[0].mxu0
    %v3355 = vadd.f32 %v3281, %v3354
    %v3356 = vpop.f32.mrb[0].mxu0
    %3357 = vdwg.mxu0
    %3358 = vmatprep.subr.mxu0 0.0
    %v3359 = vand.u32 %v1748, 4294901760
    %3360 = vmatpush1.msra.mxu0 %v3359
    %3361 = vmatprep.subr.mxu0 0.0
    %3362 = vmatpush1.msra.mxu0 0.0
    %3363 = vmatprep.subr.mxu0 0.0
    %3364 = vmatpush1.msra.mxu0 0.0
    %3365 = vmatprep.subr.mxu0 0.0
    %3366 = vmatpush1.msra.mxu0 0.0
    %3367 = vmatprep.subr.mxu0 0.0
    %3368 = vmatpush1.msra.mxu0 0.0
    %3369 = vmatprep.subr.mxu0 0.0
    %3370 = vmatpush1.msra.mxu0 0.0
    %3371 = vmatprep.subr.mxu0 0.0
    %3372 = vmatpush1.msra.mxu0 0.0
    %3373 = vmatprep.subr.mxu0 0.0
    %3374 = vmatpush1.msra.mxu0 0.0
    %3375 = vmatprep.subr.mxu0 0.0
    %3376 = vmatpush1.msra.mxu0 0.0
    %3377 = vmatprep.subr.mxu0 0.0
    %3378 = vmatpush1.msra.mxu0 0.0
    %3379 = vmatprep.subr.mxu0 0.0
    %3380 = vmatpush1.msra.mxu0 0.0
    %3381 = vmatprep.subr.mxu0 0.0
    %3382 = vmatpush1.msra.mxu0 0.0
    %3383 = vmatprep.subr.mxu0 0.0
    %3384 = vmatpush1.msra.mxu0 0.0
    %3385 = vmatprep.subr.mxu0 0.0
    %3386 = vmatpush1.msra.mxu0 0.0
    %3387 = vmatprep.subr.mxu0 0.0
    %3388 = vmatpush1.msra.mxu0 0.0
    %3389 = vmatprep.subr.mxu0 0.0
    %3390 = vmatpush1.msra.mxu0 0.0
    %3391 = vmatprep.subr.mxu0 0.0
    %3392 = vmatpush1.msra.mxu0 0.0
    %3393 = vmatprep.subr.mxu0 0.0
    %3394 = vmatpush1.msra.mxu0 0.0
    %3395 = vmatprep.subr.mxu0 0.0
    %3396 = vmatpush1.msra.mxu0 0.0
    %3397 = vmatprep.subr.mxu0 0.0
    %3398 = vmatpush1.msra.mxu0 0.0
    %3399 = vmatprep.subr.mxu0 0.0
    %3400 = vmatpush1.msra.mxu0 0.0
    %3401 = vmatprep.subr.mxu0 0.0
    %3402 = vmatpush1.msra.mxu0 0.0
    %3403 = vmatprep.subr.mxu0 0.0
    %3404 = vmatpush1.msra.mxu0 0.0
    %3405 = vmatprep.subr.mxu0 0.0
    %3406 = vmatpush1.msra.mxu0 0.0
    %3407 = vmatprep.subr.mxu0 0.0
    %3408 = vmatpush1.msra.mxu0 0.0
    %3409 = vmatprep.subr.mxu0 0.0
    %3410 = vmatpush1.msra.mxu0 0.0
    %3411 = vmatprep.subr.mxu0 0.0
    %3412 = vmatpush1.msra.mxu0 0.0
    %3413 = vmatprep.subr.mxu0 0.0
    %3414 = vmatpush1.msra.mxu0 0.0
    %3415 = vmatprep.subr.mxu0 0.0
    %3416 = vmatpush1.msra.mxu0 0.0
    %3417 = vmatprep.subr.mxu0 0.0
    %3418 = vmatpush1.msra.mxu0 0.0
    %3419 = vmatprep.subr.mxu0 0.0
    %3420 = vmatpush1.msra.mxu0 0.0
    %3421 = vmatprep.subr.mxu0 0.0
    %3422 = vmatpush1.msra.mxu0 0.0
    %3423 = vmatprep.mubr.f32.mxu0 0.0
    %v3424 = vand.u32 %v3130, 4294901760
    %v3425 = vsub.f32 %v3130, %v3424
    %v3426 = vand.u32 %v3425, 4294901760
    %3427 = vmatmul.mubr.f32.gmra.mrb[0].mxu0 %v3426
    %v3428 = vpop.f32.mrb[0].mxu0
    %v3429 = vadd.f32 %v3355, %v3428
    %v3430 = vpop.f32.mrb[0].mxu0
    %3431 = vdwg.mxu0
    %3432 = vmatprep.subr.mxu0 0.0
    %v3433 = vand.u32 %v1748, 4294901760
    %v3434 = vsub.f32 %v1748, %v3433
    %v3435 = vand.u32 %v3434, 4294901760
    %3436 = vmatpush1.msra.mxu0 %v3435
    %3437 = vmatprep.subr.mxu0 0.0
    %3438 = vmatpush1.msra.mxu0 0.0
    %3439 = vmatprep.subr.mxu0 0.0
    %3440 = vmatpush1.msra.mxu0 0.0
    %3441 = vmatprep.subr.mxu0 0.0
    %3442 = vmatpush1.msra.mxu0 0.0
    %3443 = vmatprep.subr.mxu0 0.0
    %3444 = vmatpush1.msra.mxu0 0.0
    %3445 = vmatprep.subr.mxu0 0.0
    %3446 = vmatpush1.msra.mxu0 0.0
    %3447 = vmatprep.subr.mxu0 0.0
    %3448 = vmatpush1.msra.mxu0 0.0
    %3449 = vmatprep.subr.mxu0 0.0
    %3450 = vmatpush1.msra.mxu0 0.0
    %3451 = vmatprep.subr.mxu0 0.0
    %3452 = vmatpush1.msra.mxu0 0.0
    %3453 = vmatprep.subr.mxu0 0.0
    %3454 = vmatpush1.msra.mxu0 0.0
    %3455 = vmatprep.subr.mxu0 0.0
    %3456 = vmatpush1.msra.mxu0 0.0
    %3457 = vmatprep.subr.mxu0 0.0
    %3458 = vmatpush1.msra.mxu0 0.0
    %3459 = vmatprep.subr.mxu0 0.0
    %3460 = vmatpush1.msra.mxu0 0.0
    %3461 = vmatprep.subr.mxu0 0.0
    %3462 = vmatpush1.msra.mxu0 0.0
    %3463 = vmatprep.subr.mxu0 0.0
    %3464 = vmatpush1.msra.mxu0 0.0
    %3465 = vmatprep.subr.mxu0 0.0
    %3466 = vmatpush1.msra.mxu0 0.0
    %3467 = vmatprep.subr.mxu0 0.0
    %3468 = vmatpush1.msra.mxu0 0.0
    %3469 = vmatprep.subr.mxu0 0.0
    %3470 = vmatpush1.msra.mxu0 0.0
    %3471 = vmatprep.subr.mxu0 0.0
    %3472 = vmatpush1.msra.mxu0 0.0
    %3473 = vmatprep.subr.mxu0 0.0
    %3474 = vmatpush1.msra.mxu0 0.0
    %3475 = vmatprep.subr.mxu0 0.0
    %3476 = vmatpush1.msra.mxu0 0.0
    %3477 = vmatprep.subr.mxu0 0.0
    %3478 = vmatpush1.msra.mxu0 0.0
    %3479 = vmatprep.subr.mxu0 0.0
    %3480 = vmatpush1.msra.mxu0 0.0
    %3481 = vmatprep.subr.mxu0 0.0
    %3482 = vmatpush1.msra.mxu0 0.0
    %3483 = vmatprep.subr.mxu0 0.0
    %3484 = vmatpush1.msra.mxu0 0.0
    %3485 = vmatprep.subr.mxu0 0.0
    %3486 = vmatpush1.msra.mxu0 0.0
    %3487 = vmatprep.subr.mxu0 0.0
    %3488 = vmatpush1.msra.mxu0 0.0
    %3489 = vmatprep.subr.mxu0 0.0
    %3490 = vmatpush1.msra.mxu0 0.0
    %3491 = vmatprep.subr.mxu0 0.0
    %3492 = vmatpush1.msra.mxu0 0.0
    %3493 = vmatprep.subr.mxu0 0.0
    %3494 = vmatpush1.msra.mxu0 0.0
    %3495 = vmatprep.subr.mxu0 0.0
    %3496 = vmatpush1.msra.mxu0 0.0
    %3497 = vmatprep.subr.mxu0 0.0
    %3498 = vmatpush1.msra.mxu0 0.0
    %3499 = vmatprep.mubr.f32.mxu0 0.0
    %v3500 = vand.u32 %v3130, 4294901760
    %3501 = vmatmul.mubr.f32.gmra.mrb[0].mxu0 %v3500
    %v3502 = vpop.f32.mrb[0].mxu0
    %v3503 = vadd.f32 %v3429, %v3502
    %v3504 = vpop.f32.mrb[0].mxu0
    %3505 = vdwg.mxu0
    %3506 = vmatprep.subr.mxu0 0.0
    %v3507 = vand.u32 %v1748, 4294901760
    %3508 = vmatpush1.msra.mxu0 %v3507
    %3509 = vmatprep.subr.mxu0 0.0
    %3510 = vmatpush1.msra.mxu0 0.0
    %3511 = vmatprep.subr.mxu0 0.0
    %3512 = vmatpush1.msra.mxu0 0.0
    %3513 = vmatprep.subr.mxu0 0.0
    %3514 = vmatpush1.msra.mxu0 0.0
    %3515 = vmatprep.subr.mxu0 0.0
    %3516 = vmatpush1.msra.mxu0 0.0
    %3517 = vmatprep.subr.mxu0 0.0
    %3518 = vmatpush1.msra.mxu0 0.0
    %3519 = vmatprep.subr.mxu0 0.0
    %3520 = vmatpush1.msra.mxu0 0.0
    %3521 = vmatprep.subr.mxu0 0.0
    %3522 = vmatpush1.msra.mxu0 0.0
    %3523 = vmatprep.subr.mxu0 0.0
    %3524 = vmatpush1.msra.mxu0 0.0
    %3525 = vmatprep.subr.mxu0 0.0
    %3526 = vmatpush1.msra.mxu0 0.0
    %3527 = vmatprep.subr.mxu0 0.0
    %3528 = vmatpush1.msra.mxu0 0.0
    %3529 = vmatprep.subr.mxu0 0.0
    %3530 = vmatpush1.msra.mxu0 0.0
    %3531 = vmatprep.subr.mxu0 0.0
    %3532 = vmatpush1.msra.mxu0 0.0
    %3533 = vmatprep.subr.mxu0 0.0
    %3534 = vmatpush1.msra.mxu0 0.0
    %3535 = vmatprep.subr.mxu0 0.0
    %3536 = vmatpush1.msra.mxu0 0.0
    %3537 = vmatprep.subr.mxu0 0.0
    %3538 = vmatpush1.msra.mxu0 0.0
    %3539 = vmatprep.subr.mxu0 0.0
    %3540 = vmatpush1.msra.mxu0 0.0
    %3541 = vmatprep.subr.mxu0 0.0
    %3542 = vmatpush1.msra.mxu0 0.0
    %3543 = vmatprep.subr.mxu0 0.0
    %3544 = vmatpush1.msra.mxu0 0.0
    %3545 = vmatprep.subr.mxu0 0.0
    %3546 = vmatpush1.msra.mxu0 0.0
    %3547 = vmatprep.subr.mxu0 0.0
    %3548 = vmatpush1.msra.mxu0 0.0
    %3549 = vmatprep.subr.mxu0 0.0
    %3550 = vmatpush1.msra.mxu0 0.0
    %3551 = vmatprep.subr.mxu0 0.0
    %3552 = vmatpush1.msra.mxu0 0.0
    %3553 = vmatprep.subr.mxu0 0.0
    %3554 = vmatpush1.msra.mxu0 0.0
    %3555 = vmatprep.subr.mxu0 0.0
    %3556 = vmatpush1.msra.mxu0 0.0
    %3557 = vmatprep.subr.mxu0 0.0
    %3558 = vmatpush1.msra.mxu0 0.0
    %3559 = vmatprep.subr.mxu0 0.0
    %3560 = vmatpush1.msra.mxu0 0.0
    %3561 = vmatprep.subr.mxu0 0.0
    %3562 = vmatpush1.msra.mxu0 0.0
    %3563 = vmatprep.subr.mxu0 0.0
    %3564 = vmatpush1.msra.mxu0 0.0
    %3565 = vmatprep.subr.mxu0 0.0
    %3566 = vmatpush1.msra.mxu0 0.0
    %3567 = vmatprep.subr.mxu0 0.0
    %3568 = vmatpush1.msra.mxu0 0.0
    %3569 = vmatprep.subr.mxu0 0.0
    %3570 = vmatpush1.msra.mxu0 0.0
    %3571 = vmatprep.mubr.f32.mxu0 0.0
    %v3572 = vand.u32 %v3130, 4294901760
    %3573 = vmatmul.mubr.f32.gmra.mrb[0].mxu0 %v3572
    %v3574 = vpop.f32.mrb[0].mxu0
    %v3575 = vadd.f32 %v3503, %v3574
    %v3576 = vpop.f32.mrb[0].mxu0
    %3577 = vdwg.mxu0
    %3578 = vrot.lane.b32.xlu0 %v652, 120
    %v3579 = vpop.permute.xlu0 %3578
    %3580 = vrot.lane.b32.xlu0 %v1197, 120
    %v3581 = vpop.permute.xlu0 %3580
    %v3582 = vsel %vm1751, %v3579, 0
    %v3584 = vsel %vm1751, %v3581, 0
    %3586 = vmatprep.subr.mxu0 0.0
    %v3587 = vand.u32 %v3584, 4294901760
    %3588 = vmatpush1.xpose.msra.mxu0 %v3587
    %3589 = vmatprep.subr.mxu0 0.0
    %3590 = vmatpush1.xpose.msra.mxu0 0.0
    %3591 = vmatprep.subr.mxu0 0.0
    %3592 = vmatpush1.xpose.msra.mxu0 0.0
    %3593 = vmatprep.subr.mxu0 0.0
    %3594 = vmatpush1.xpose.msra.mxu0 0.0
    %3595 = vmatprep.subr.mxu0 0.0
    %3596 = vmatpush1.xpose.msra.mxu0 0.0
    %3597 = vmatprep.subr.mxu0 0.0
    %3598 = vmatpush1.xpose.msra.mxu0 0.0
    %3599 = vmatprep.subr.mxu0 0.0
    %3600 = vmatpush1.xpose.msra.mxu0 0.0
    %3601 = vmatprep.subr.mxu0 0.0
    %3602 = vmatpush1.xpose.msra.mxu0 0.0
    %3603 = vmatprep.subr.mxu0 0.0
    %3604 = vmatpush1.xpose.msra.mxu0 0.0
    %3605 = vmatprep.subr.mxu0 0.0
    %3606 = vmatpush1.xpose.msra.mxu0 0.0
    %3607 = vmatprep.subr.mxu0 0.0
    %3608 = vmatpush1.xpose.msra.mxu0 0.0
    %3609 = vmatprep.subr.mxu0 0.0
    %3610 = vmatpush1.xpose.msra.mxu0 0.0
    %3611 = vmatprep.subr.mxu0 0.0
    %3612 = vmatpush1.xpose.msra.mxu0 0.0
    %3613 = vmatprep.subr.mxu0 0.0
    %3614 = vmatpush1.xpose.msra.mxu0 0.0
    %3615 = vmatprep.subr.mxu0 0.0
    %3616 = vmatpush1.xpose.msra.mxu0 0.0
    %3617 = vmatprep.subr.mxu0 0.0
    %3618 = vmatpush1.xpose.msra.mxu0 0.0
    %3619 = vmatprep.subr.mxu0 0.0
    %3620 = vmatpush1.xpose.msra.mxu0 0.0
    %3621 = vmatprep.subr.mxu0 0.0
    %3622 = vmatpush1.xpose.msra.mxu0 0.0
    %3623 = vmatprep.subr.mxu0 0.0
    %3624 = vmatpush1.xpose.msra.mxu0 0.0
    %3625 = vmatprep.subr.mxu0 0.0
    %3626 = vmatpush1.xpose.msra.mxu0 0.0
    %3627 = vmatprep.subr.mxu0 0.0
    %3628 = vmatpush1.xpose.msra.mxu0 0.0
    %3629 = vmatprep.subr.mxu0 0.0
    %3630 = vmatpush1.xpose.msra.mxu0 0.0
    %3631 = vmatprep.subr.mxu0 0.0
    %3632 = vmatpush1.xpose.msra.mxu0 0.0
    %3633 = vmatprep.subr.mxu0 0.0
    %3634 = vmatpush1.xpose.msra.mxu0 0.0
    %3635 = vmatprep.subr.mxu0 0.0
    %3636 = vmatpush1.xpose.msra.mxu0 0.0
    %3637 = vmatprep.subr.mxu0 0.0
    %3638 = vmatpush1.xpose.msra.mxu0 0.0
    %3639 = vmatprep.subr.mxu0 0.0
    %3640 = vmatpush1.xpose.msra.mxu0 0.0
    %3641 = vmatprep.subr.mxu0 0.0
    %3642 = vmatpush1.xpose.msra.mxu0 0.0
    %3643 = vmatprep.subr.mxu0 0.0
    %3644 = vmatpush1.xpose.msra.mxu0 0.0
    %3645 = vmatprep.subr.mxu0 0.0
    %3646 = vmatpush1.xpose.msra.mxu0 0.0
    %3647 = vmatprep.subr.mxu0 0.0
    %3648 = vmatpush1.xpose.msra.mxu0 0.0
    %3649 = vmatprep.subr.mxu0 0.0
    %3650 = vmatpush1.xpose.msra.mxu0 0.0
    %3651 = vmatprep.mubr.f32.mxu0 0.0
    %v3652 = vand.u32 %v3582, 4294901760
    %v3653 = vsub.f32 %v3582, %v3652
    %v3654 = vand.u32 %v3653, 4294901760
    %v3655 = vsub.f32 %v3653, %v3654
    %v3656 = vand.u32 %v3655, 4294901760
    %3657 = vmatmul.mubr.f32.gmra.mrb[0].mxu0 %v3656
    %v3658 = vpop.f32.mrb[0].mxu0
    %v3659 = vadd.f32 0.0, %v3658
    %v3660 = vpop.f32.mrb[0].mxu0
    %3661 = vdwg.mxu0
    %3662 = vmatprep.subr.mxu0 0.0
    %v3663 = vand.u32 %v3584, 4294901760
    %v3664 = vsub.f32 %v3584, %v3663
    %v3665 = vand.u32 %v3664, 4294901760
    %v3666 = vsub.f32 %v3664, %v3665
    %v3667 = vand.u32 %v3666, 4294901760
    %3668 = vmatpush1.xpose.msra.mxu0 %v3667
    %3669 = vmatprep.subr.mxu0 0.0
    %3670 = vmatpush1.xpose.msra.mxu0 0.0
    %3671 = vmatprep.subr.mxu0 0.0
    %3672 = vmatpush1.xpose.msra.mxu0 0.0
    %3673 = vmatprep.subr.mxu0 0.0
    %3674 = vmatpush1.xpose.msra.mxu0 0.0
    %3675 = vmatprep.subr.mxu0 0.0
    %3676 = vmatpush1.xpose.msra.mxu0 0.0
    %3677 = vmatprep.subr.mxu0 0.0
    %3678 = vmatpush1.xpose.msra.mxu0 0.0
    %3679 = vmatprep.subr.mxu0 0.0
    %3680 = vmatpush1.xpose.msra.mxu0 0.0
    %3681 = vmatprep.subr.mxu0 0.0
    %3682 = vmatpush1.xpose.msra.mxu0 0.0
    %3683 = vmatprep.subr.mxu0 0.0
    %3684 = vmatpush1.xpose.msra.mxu0 0.0
    %3685 = vmatprep.subr.mxu0 0.0
    %3686 = vmatpush1.xpose.msra.mxu0 0.0
    %3687 = vmatprep.subr.mxu0 0.0
    %3688 = vmatpush1.xpose.msra.mxu0 0.0
    %3689 = vmatprep.subr.mxu0 0.0
    %3690 = vmatpush1.xpose.msra.mxu0 0.0
    %3691 = vmatprep.subr.mxu0 0.0
    %3692 = vmatpush1.xpose.msra.mxu0 0.0
    %3693 = vmatprep.subr.mxu0 0.0
    %3694 = vmatpush1.xpose.msra.mxu0 0.0
    %3695 = vmatprep.subr.mxu0 0.0
    %3696 = vmatpush1.xpose.msra.mxu0 0.0
    %3697 = vmatprep.subr.mxu0 0.0
    %3698 = vmatpush1.xpose.msra.mxu0 0.0
    %3699 = vmatprep.subr.mxu0 0.0
    %3700 = vmatpush1.xpose.msra.mxu0 0.0
    %3701 = vmatprep.subr.mxu0 0.0
    %3702 = vmatpush1.xpose.msra.mxu0 0.0
    %3703 = vmatprep.subr.mxu0 0.0
    %3704 = vmatpush1.xpose.msra.mxu0 0.0
    %3705 = vmatprep.subr.mxu0 0.0
    %3706 = vmatpush1.xpose.msra.mxu0 0.0
    %3707 = vmatprep.subr.mxu0 0.0
    %3708 = vmatpush1.xpose.msra.mxu0 0.0
    %3709 = vmatprep.subr.mxu0 0.0
    %3710 = vmatpush1.xpose.msra.mxu0 0.0
    %3711 = vmatprep.subr.mxu0 0.0
    %3712 = vmatpush1.xpose.msra.mxu0 0.0
    %3713 = vmatprep.subr.mxu0 0.0
    %3714 = vmatpush1.xpose.msra.mxu0 0.0
    %3715 = vmatprep.subr.mxu0 0.0
    %3716 = vmatpush1.xpose.msra.mxu0 0.0
    %3717 = vmatprep.subr.mxu0 0.0
    %3718 = vmatpush1.xpose.msra.mxu0 0.0
    %3719 = vmatprep.subr.mxu0 0.0
    %3720 = vmatpush1.xpose.msra.mxu0 0.0
    %3721 = vmatprep.subr.mxu0 0.0
    %3722 = vmatpush1.xpose.msra.mxu0 0.0
    %3723 = vmatprep.subr.mxu0 0.0
    %3724 = vmatpush1.xpose.msra.mxu0 0.0
    %3725 = vmatprep.subr.mxu0 0.0
    %3726 = vmatpush1.xpose.msra.mxu0 0.0
    %3727 = vmatprep.subr.mxu0 0.0
    %3728 = vmatpush1.xpose.msra.mxu0 0.0
    %3729 = vmatprep.subr.mxu0 0.0
    %3730 = vmatpush1.xpose.msra.mxu0 0.0
    %3731 = vmatprep.mubr.f32.mxu0 0.0
    %v3732 = vand.u32 %v3582, 4294901760
    %3733 = vmatmul.mubr.f32.gmra.mrb[0].mxu0 %v3732
    %v3734 = vpop.f32.mrb[0].mxu0
    %v3735 = vadd.f32 %v3659, %v3734
    %v3736 = vpop.f32.mrb[0].mxu0
    %3737 = vdwg.mxu0
    %3738 = vmatprep.subr.mxu0 0.0
    %v3739 = vand.u32 %v3584, 4294901760
    %v3740 = vsub.f32 %v3584, %v3739
    %3741 = vmatpush1.xpose.msra.mxu0 %v3740
    %3742 = vmatprep.subr.mxu0 0.0
    %3743 = vmatpush1.xpose.msra.mxu0 0.0
    %3744 = vmatprep.subr.mxu0 0.0
    %3745 = vmatpush1.xpose.msra.mxu0 0.0
    %3746 = vmatprep.subr.mxu0 0.0
    %3747 = vmatpush1.xpose.msra.mxu0 0.0
    %3748 = vmatprep.subr.mxu0 0.0
    %3749 = vmatpush1.xpose.msra.mxu0 0.0
    %3750 = vmatprep.subr.mxu0 0.0
    %3751 = vmatpush1.xpose.msra.mxu0 0.0
    %3752 = vmatprep.subr.mxu0 0.0
    %3753 = vmatpush1.xpose.msra.mxu0 0.0
    %3754 = vmatprep.subr.mxu0 0.0
    %3755 = vmatpush1.xpose.msra.mxu0 0.0
    %3756 = vmatprep.subr.mxu0 0.0
    %3757 = vmatpush1.xpose.msra.mxu0 0.0
    %3758 = vmatprep.subr.mxu0 0.0
    %3759 = vmatpush1.xpose.msra.mxu0 0.0
    %3760 = vmatprep.subr.mxu0 0.0
    %3761 = vmatpush1.xpose.msra.mxu0 0.0
    %3762 = vmatprep.subr.mxu0 0.0
    %3763 = vmatpush1.xpose.msra.mxu0 0.0
    %3764 = vmatprep.subr.mxu0 0.0
    %3765 = vmatpush1.xpose.msra.mxu0 0.0
    %3766 = vmatprep.subr.mxu0 0.0
    %3767 = vmatpush1.xpose.msra.mxu0 0.0
    %3768 = vmatprep.subr.mxu0 0.0
    %3769 = vmatpush1.xpose.msra.mxu0 0.0
    %3770 = vmatprep.subr.mxu0 0.0
    %3771 = vmatpush1.xpose.msra.mxu0 0.0
    %3772 = vmatprep.subr.mxu0 0.0
    %3773 = vmatpush1.xpose.msra.mxu0 0.0
    %3774 = vmatprep.subr.mxu0 0.0
    %3775 = vmatpush1.xpose.msra.mxu0 0.0
    %3776 = vmatprep.subr.mxu0 0.0
    %3777 = vmatpush1.xpose.msra.mxu0 0.0
    %3778 = vmatprep.subr.mxu0 0.0
    %3779 = vmatpush1.xpose.msra.mxu0 0.0
    %3780 = vmatprep.subr.mxu0 0.0
    %3781 = vmatpush1.xpose.msra.mxu0 0.0
    %3782 = vmatprep.subr.mxu0 0.0
    %3783 = vmatpush1.xpose.msra.mxu0 0.0
    %3784 = vmatprep.subr.mxu0 0.0
    %3785 = vmatpush1.xpose.msra.mxu0 0.0
    %3786 = vmatprep.subr.mxu0 0.0
    %3787 = vmatpush1.xpose.msra.mxu0 0.0
    %3788 = vmatprep.subr.mxu0 0.0
    %3789 = vmatpush1.xpose.msra.mxu0 0.0
    %3790 = vmatprep.subr.mxu0 0.0
    %3791 = vmatpush1.xpose.msra.mxu0 0.0
    %3792 = vmatprep.subr.mxu0 0.0
    %3793 = vmatpush1.xpose.msra.mxu0 0.0
    %3794 = vmatprep.subr.mxu0 0.0
    %3795 = vmatpush1.xpose.msra.mxu0 0.0
    %3796 = vmatprep.subr.mxu0 0.0
    %3797 = vmatpush1.xpose.msra.mxu0 0.0
    %3798 = vmatprep.subr.mxu0 0.0
    %3799 = vmatpush1.xpose.msra.mxu0 0.0
    %3800 = vmatprep.subr.mxu0 0.0
    %3801 = vmatpush1.xpose.msra.mxu0 0.0
    %3802 = vmatprep.subr.mxu0 0.0
    %3803 = vmatpush1.xpose.msra.mxu0 0.0
    %3804 = vmatprep.mubr.f32.mxu0 0.0
    %v3805 = vand.u32 %v3582, 4294901760
    %v3806 = vsub.f32 %v3582, %v3805
    %3807 = vmatmul.mubr.f32.gmra.mrb[0].mxu0 %v3806
    %v3808 = vpop.f32.mrb[0].mxu0
    %v3809 = vadd.f32 %v3735, %v3808
    %v3810 = vpop.f32.mrb[0].mxu0
    %3811 = vdwg.mxu0
    %3812 = vmatprep.subr.mxu0 0.0
    %v3813 = vand.u32 %v3584, 4294901760
    %3814 = vmatpush1.xpose.msra.mxu0 %v3813
    %3815 = vmatprep.subr.mxu0 0.0
    %3816 = vmatpush1.xpose.msra.mxu0 0.0
    %3817 = vmatprep.subr.mxu0 0.0
    %3818 = vmatpush1.xpose.msra.mxu0 0.0
    %3819 = vmatprep.subr.mxu0 0.0
    %3820 = vmatpush1.xpose.msra.mxu0 0.0
    %3821 = vmatprep.subr.mxu0 0.0
    %3822 = vmatpush1.xpose.msra.mxu0 0.0
    %3823 = vmatprep.subr.mxu0 0.0
    %3824 = vmatpush1.xpose.msra.mxu0 0.0
    %3825 = vmatprep.subr.mxu0 0.0
    %3826 = vmatpush1.xpose.msra.mxu0 0.0
    %3827 = vmatprep.subr.mxu0 0.0
    %3828 = vmatpush1.xpose.msra.mxu0 0.0
    %3829 = vmatprep.subr.mxu0 0.0
    %3830 = vmatpush1.xpose.msra.mxu0 0.0
    %3831 = vmatprep.subr.mxu0 0.0
    %3832 = vmatpush1.xpose.msra.mxu0 0.0
    %3833 = vmatprep.subr.mxu0 0.0
    %3834 = vmatpush1.xpose.msra.mxu0 0.0
    %3835 = vmatprep.subr.mxu0 0.0
    %3836 = vmatpush1.xpose.msra.mxu0 0.0
    %3837 = vmatprep.subr.mxu0 0.0
    %3838 = vmatpush1.xpose.msra.mxu0 0.0
    %3839 = vmatprep.subr.mxu0 0.0
    %3840 = vmatpush1.xpose.msra.mxu0 0.0
    %3841 = vmatprep.subr.mxu0 0.0
    %3842 = vmatpush1.xpose.msra.mxu0 0.0
    %3843 = vmatprep.subr.mxu0 0.0
    %3844 = vmatpush1.xpose.msra.mxu0 0.0
    %3845 = vmatprep.subr.mxu0 0.0
    %3846 = vmatpush1.xpose.msra.mxu0 0.0
    %3847 = vmatprep.subr.mxu0 0.0
    %3848 = vmatpush1.xpose.msra.mxu0 0.0
    %3849 = vmatprep.subr.mxu0 0.0
    %3850 = vmatpush1.xpose.msra.mxu0 0.0
    %3851 = vmatprep.subr.mxu0 0.0
    %3852 = vmatpush1.xpose.msra.mxu0 0.0
    %3853 = vmatprep.subr.mxu0 0.0
    %3854 = vmatpush1.xpose.msra.mxu0 0.0
    %3855 = vmatprep.subr.mxu0 0.0
    %3856 = vmatpush1.xpose.msra.mxu0 0.0
    %3857 = vmatprep.subr.mxu0 0.0
    %3858 = vmatpush1.xpose.msra.mxu0 0.0
    %3859 = vmatprep.subr.mxu0 0.0
    %3860 = vmatpush1.xpose.msra.mxu0 0.0
    %3861 = vmatprep.subr.mxu0 0.0
    %3862 = vmatpush1.xpose.msra.mxu0 0.0
    %3863 = vmatprep.subr.mxu0 0.0
    %3864 = vmatpush1.xpose.msra.mxu0 0.0
    %3865 = vmatprep.subr.mxu0 0.0
    %3866 = vmatpush1.xpose.msra.mxu0 0.0
    %3867 = vmatprep.subr.mxu0 0.0
    %3868 = vmatpush1.xpose.msra.mxu0 0.0
    %3869 = vmatprep.subr.mxu0 0.0
    %3870 = vmatpush1.xpose.msra.mxu0 0.0
    %3871 = vmatprep.subr.mxu0 0.0
    %3872 = vmatpush1.xpose.msra.mxu0 0.0
    %3873 = vmatprep.subr.mxu0 0.0
    %3874 = vmatpush1.xpose.msra.mxu0 0.0
    %3875 = vmatprep.subr.mxu0 0.0
    %3876 = vmatpush1.xpose.msra.mxu0 0.0
    %3877 = vmatprep.mubr.f32.mxu0 0.0
    %v3878 = vand.u32 %v3582, 4294901760
    %v3879 = vsub.f32 %v3582, %v3878
    %v3880 = vand.u32 %v3879, 4294901760
    %3881 = vmatmul.mubr.f32.gmra.mrb[0].mxu0 %v3880
    %v3882 = vpop.f32.mrb[0].mxu0
    %v3883 = vadd.f32 %v3809, %v3882
    %v3884 = vpop.f32.mrb[0].mxu0
    %3885 = vdwg.mxu0
    %3886 = vmatprep.subr.mxu0 0.0
    %v3887 = vand.u32 %v3584, 4294901760
    %v3888 = vsub.f32 %v3584, %v3887
    %v3889 = vand.u32 %v3888, 4294901760
    %3890 = vmatpush1.xpose.msra.mxu0 %v3889
    %3891 = vmatprep.subr.mxu0 0.0
    %3892 = vmatpush1.xpose.msra.mxu0 0.0
    %3893 = vmatprep.subr.mxu0 0.0
    %3894 = vmatpush1.xpose.msra.mxu0 0.0
    %3895 = vmatprep.subr.mxu0 0.0
    %3896 = vmatpush1.xpose.msra.mxu0 0.0
    %3897 = vmatprep.subr.mxu0 0.0
    %3898 = vmatpush1.xpose.msra.mxu0 0.0
    %3899 = vmatprep.subr.mxu0 0.0
    %3900 = vmatpush1.xpose.msra.mxu0 0.0
    %3901 = vmatprep.subr.mxu0 0.0
    %3902 = vmatpush1.xpose.msra.mxu0 0.0
    %3903 = vmatprep.subr.mxu0 0.0
    %3904 = vmatpush1.xpose.msra.mxu0 0.0
    %3905 = vmatprep.subr.mxu0 0.0
    %3906 = vmatpush1.xpose.msra.mxu0 0.0
    %3907 = vmatprep.subr.mxu0 0.0
    %3908 = vmatpush1.xpose.msra.mxu0 0.0
    %3909 = vmatprep.subr.mxu0 0.0
    %3910 = vmatpush1.xpose.msra.mxu0 0.0
    %3911 = vmatprep.subr.mxu0 0.0
    %3912 = vmatpush1.xpose.msra.mxu0 0.0
    %3913 = vmatprep.subr.mxu0 0.0
    %3914 = vmatpush1.xpose.msra.mxu0 0.0
    %3915 = vmatprep.subr.mxu0 0.0
    %3916 = vmatpush1.xpose.msra.mxu0 0.0
    %3917 = vmatprep.subr.mxu0 0.0
    %3918 = vmatpush1.xpose.msra.mxu0 0.0
    %3919 = vmatprep.subr.mxu0 0.0
    %3920 = vmatpush1.xpose.msra.mxu0 0.0
    %3921 = vmatprep.subr.mxu0 0.0
    %3922 = vmatpush1.xpose.msra.mxu0 0.0
    %3923 = vmatprep.subr.mxu0 0.0
    %3924 = vmatpush1.xpose.msra.mxu0 0.0
    %3925 = vmatprep.subr.mxu0 0.0
    %3926 = vmatpush1.xpose.msra.mxu0 0.0
    %3927 = vmatprep.subr.mxu0 0.0
    %3928 = vmatpush1.xpose.msra.mxu0 0.0
    %3929 = vmatprep.subr.mxu0 0.0
    %3930 = vmatpush1.xpose.msra.mxu0 0.0
    %3931 = vmatprep.subr.mxu0 0.0
    %3932 = vmatpush1.xpose.msra.mxu0 0.0
    %3933 = vmatprep.subr.mxu0 0.0
    %3934 = vmatpush1.xpose.msra.mxu0 0.0
    %3935 = vmatprep.subr.mxu0 0.0
    %3936 = vmatpush1.xpose.msra.mxu0 0.0
    %3937 = vmatprep.subr.mxu0 0.0
    %3938 = vmatpush1.xpose.msra.mxu0 0.0
    %3939 = vmatprep.subr.mxu0 0.0
    %3940 = vmatpush1.xpose.msra.mxu0 0.0
    %3941 = vmatprep.subr.mxu0 0.0
    %3942 = vmatpush1.xpose.msra.mxu0 0.0
    %3943 = vmatprep.subr.mxu0 0.0
    %3944 = vmatpush1.xpose.msra.mxu0 0.0
    %3945 = vmatprep.subr.mxu0 0.0
    %3946 = vmatpush1.xpose.msra.mxu0 0.0
    %3947 = vmatprep.subr.mxu0 0.0
    %3948 = vmatpush1.xpose.msra.mxu0 0.0
    %3949 = vmatprep.subr.mxu0 0.0
    %3950 = vmatpush1.xpose.msra.mxu0 0.0
    %3951 = vmatprep.subr.mxu0 0.0
    %3952 = vmatpush1.xpose.msra.mxu0 0.0
    %3953 = vmatprep.mubr.f32.mxu0 0.0
    %v3954 = vand.u32 %v3582, 4294901760
    %3955 = vmatmul.mubr.f32.gmra.mrb[0].mxu0 %v3954
    %v3956 = vpop.f32.mrb[0].mxu0
    %v3957 = vadd.f32 %v3883, %v3956
    %v3958 = vpop.f32.mrb[0].mxu0
    %3959 = vdwg.mxu0
    %3960 = vmatprep.subr.mxu0 0.0
    %v3961 = vand.u32 %v3584, 4294901760
    %3962 = vmatpush1.xpose.msra.mxu0 %v3961
    %3963 = vmatprep.subr.mxu0 0.0
    %3964 = vmatpush1.xpose.msra.mxu0 0.0
    %3965 = vmatprep.subr.mxu0 0.0
    %3966 = vmatpush1.xpose.msra.mxu0 0.0
    %3967 = vmatprep.subr.mxu0 0.0
    %3968 = vmatpush1.xpose.msra.mxu0 0.0
    %3969 = vmatprep.subr.mxu0 0.0
    %3970 = vmatpush1.xpose.msra.mxu0 0.0
    %3971 = vmatprep.subr.mxu0 0.0
    %3972 = vmatpush1.xpose.msra.mxu0 0.0
    %3973 = vmatprep.subr.mxu0 0.0
    %3974 = vmatpush1.xpose.msra.mxu0 0.0
    %3975 = vmatprep.subr.mxu0 0.0
    %3976 = vmatpush1.xpose.msra.mxu0 0.0
    %3977 = vmatprep.subr.mxu0 0.0
    %3978 = vmatpush1.xpose.msra.mxu0 0.0
    %3979 = vmatprep.subr.mxu0 0.0
    %3980 = vmatpush1.xpose.msra.mxu0 0.0
    %3981 = vmatprep.subr.mxu0 0.0
    %3982 = vmatpush1.xpose.msra.mxu0 0.0
    %3983 = vmatprep.subr.mxu0 0.0
    %3984 = vmatpush1.xpose.msra.mxu0 0.0
    %3985 = vmatprep.subr.mxu0 0.0
    %3986 = vmatpush1.xpose.msra.mxu0 0.0
    %3987 = vmatprep.subr.mxu0 0.0
    %3988 = vmatpush1.xpose.msra.mxu0 0.0
    %3989 = vmatprep.subr.mxu0 0.0
    %3990 = vmatpush1.xpose.msra.mxu0 0.0
    %3991 = vmatprep.subr.mxu0 0.0
    %3992 = vmatpush1.xpose.msra.mxu0 0.0
    %3993 = vmatprep.subr.mxu0 0.0
    %3994 = vmatpush1.xpose.msra.mxu0 0.0
    %3995 = vmatprep.subr.mxu0 0.0
    %3996 = vmatpush1.xpose.msra.mxu0 0.0
    %3997 = vmatprep.subr.mxu0 0.0
    %3998 = vmatpush1.xpose.msra.mxu0 0.0
    %3999 = vmatprep.subr.mxu0 0.0
    %4000 = vmatpush1.xpose.msra.mxu0 0.0
    %4001 = vmatprep.subr.mxu0 0.0
    %4002 = vmatpush1.xpose.msra.mxu0 0.0
    %4003 = vmatprep.subr.mxu0 0.0
    %4004 = vmatpush1.xpose.msra.mxu0 0.0
    %4005 = vmatprep.subr.mxu0 0.0
    %4006 = vmatpush1.xpose.msra.mxu0 0.0
    %4007 = vmatprep.subr.mxu0 0.0
    %4008 = vmatpush1.xpose.msra.mxu0 0.0
    %4009 = vmatprep.subr.mxu0 0.0
    %4010 = vmatpush1.xpose.msra.mxu0 0.0
    %4011 = vmatprep.subr.mxu0 0.0
    %4012 = vmatpush1.xpose.msra.mxu0 0.0
    %4013 = vmatprep.subr.mxu0 0.0
    %4014 = vmatpush1.xpose.msra.mxu0 0.0
    %4015 = vmatprep.subr.mxu0 0.0
    %4016 = vmatpush1.xpose.msra.mxu0 0.0
    %4017 = vmatprep.subr.mxu0 0.0
    %4018 = vmatpush1.xpose.msra.mxu0 0.0
    %4019 = vmatprep.subr.mxu0 0.0
    %4020 = vmatpush1.xpose.msra.mxu0 0.0
    %4021 = vmatprep.subr.mxu0 0.0
    %4022 = vmatpush1.xpose.msra.mxu0 0.0
    %4023 = vmatprep.subr.mxu0 0.0
    %4024 = vmatpush1.xpose.msra.mxu0 0.0
    %4025 = vmatprep.mubr.f32.mxu0 0.0
    %v4026 = vand.u32 %v3582, 4294901760
    %4027 = vmatmul.mubr.f32.gmra.mrb[0].mxu0 %v4026
    %v4028 = vpop.f32.mrb[0].mxu0
    %v4029 = vadd.f32 %v3957, %v4028
    %v4030 = vpop.f32.mrb[0].mxu0
    %4031 = vdwg.mxu0
    %4032 = vrot.lane.b32.xlu0 %v658, 120
    %v4033 = vpop.permute.xlu0 %4032
    %4034 = vrot.lane.b32.xlu0 %v1203, 120
    %v4035 = vpop.permute.xlu0 %4034
    %v4036 = vsel %vm1751, %v4033, 0
    %v4038 = vsel %vm1751, %v4035, 0
    %4040 = vmatprep.subr.mxu0 0.0
    %v4041 = vand.u32 %v4038, 4294901760
    %4042 = vmatpush1.xpose.msra.mxu0 %v4041
    %4043 = vmatprep.subr.mxu0 0.0
    %4044 = vmatpush1.xpose.msra.mxu0 0.0
    %4045 = vmatprep.subr.mxu0 0.0
    %4046 = vmatpush1.xpose.msra.mxu0 0.0
    %4047 = vmatprep.subr.mxu0 0.0
    %4048 = vmatpush1.xpose.msra.mxu0 0.0
    %4049 = vmatprep.subr.mxu0 0.0
    %4050 = vmatpush1.xpose.msra.mxu0 0.0
    %4051 = vmatprep.subr.mxu0 0.0
    %4052 = vmatpush1.xpose.msra.mxu0 0.0
    %4053 = vmatprep.subr.mxu0 0.0
    %4054 = vmatpush1.xpose.msra.mxu0 0.0
    %4055 = vmatprep.subr.mxu0 0.0
    %4056 = vmatpush1.xpose.msra.mxu0 0.0
    %4057 = vmatprep.subr.mxu0 0.0
    %4058 = vmatpush1.xpose.msra.mxu0 0.0
    %4059 = vmatprep.subr.mxu0 0.0
    %4060 = vmatpush1.xpose.msra.mxu0 0.0
    %4061 = vmatprep.subr.mxu0 0.0
    %4062 = vmatpush1.xpose.msra.mxu0 0.0
    %4063 = vmatprep.subr.mxu0 0.0
    %4064 = vmatpush1.xpose.msra.mxu0 0.0
    %4065 = vmatprep.subr.mxu0 0.0
    %4066 = vmatpush1.xpose.msra.mxu0 0.0
    %4067 = vmatprep.subr.mxu0 0.0
    %4068 = vmatpush1.xpose.msra.mxu0 0.0
    %4069 = vmatprep.subr.mxu0 0.0
    %4070 = vmatpush1.xpose.msra.mxu0 0.0
    %4071 = vmatprep.subr.mxu0 0.0
    %4072 = vmatpush1.xpose.msra.mxu0 0.0
    %4073 = vmatprep.subr.mxu0 0.0
    %4074 = vmatpush1.xpose.msra.mxu0 0.0
    %4075 = vmatprep.subr.mxu0 0.0
    %4076 = vmatpush1.xpose.msra.mxu0 0.0
    %4077 = vmatprep.subr.mxu0 0.0
    %4078 = vmatpush1.xpose.msra.mxu0 0.0
    %4079 = vmatprep.subr.mxu0 0.0
    %4080 = vmatpush1.xpose.msra.mxu0 0.0
    %4081 = vmatprep.subr.mxu0 0.0
    %4082 = vmatpush1.xpose.msra.mxu0 0.0
    %4083 = vmatprep.subr.mxu0 0.0
    %4084 = vmatpush1.xpose.msra.mxu0 0.0
    %4085 = vmatprep.subr.mxu0 0.0
    %4086 = vmatpush1.xpose.msra.mxu0 0.0
    %4087 = vmatprep.subr.mxu0 0.0
    %4088 = vmatpush1.xpose.msra.mxu0 0.0
    %4089 = vmatprep.subr.mxu0 0.0
    %4090 = vmatpush1.xpose.msra.mxu0 0.0
    %4091 = vmatprep.subr.mxu0 0.0
    %4092 = vmatpush1.xpose.msra.mxu0 0.0
    %4093 = vmatprep.subr.mxu0 0.0
    %4094 = vmatpush1.xpose.msra.mxu0 0.0
    %4095 = vmatprep.subr.mxu0 0.0
    %4096 = vmatpush1.xpose.msra.mxu0 0.0
    %4097 = vmatprep.subr.mxu0 0.0
    %4098 = vmatpush1.xpose.msra.mxu0 0.0
    %4099 = vmatprep.subr.mxu0 0.0
    %4100 = vmatpush1.xpose.msra.mxu0 0.0
    %4101 = vmatprep.subr.mxu0 0.0
    %4102 = vmatpush1.xpose.msra.mxu0 0.0
    %4103 = vmatprep.subr.mxu0 0.0
    %4104 = vmatpush1.xpose.msra.mxu0 0.0
    %4105 = vmatprep.mubr.f32.mxu0 0.0
    %v4106 = vand.u32 %v4036, 4294901760
    %v4107 = vsub.f32 %v4036, %v4106
    %v4108 = vand.u32 %v4107, 4294901760
    %v4109 = vsub.f32 %v4107, %v4108
    %v4110 = vand.u32 %v4109, 4294901760
    %4111 = vmatmul.mubr.f32.gmra.mrb[0].mxu0 %v4110
    %v4112 = vpop.f32.mrb[0].mxu0
    %v4113 = vadd.f32 0.0, %v4112
    %v4114 = vpop.f32.mrb[0].mxu0
    %4115 = vdwg.mxu0
    %4116 = vmatprep.subr.mxu0 0.0
    %v4117 = vand.u32 %v4038, 4294901760
    %v4118 = vsub.f32 %v4038, %v4117
    %v4119 = vand.u32 %v4118, 4294901760
    %v4120 = vsub.f32 %v4118, %v4119
    %v4121 = vand.u32 %v4120, 4294901760
    %4122 = vmatpush1.xpose.msra.mxu0 %v4121
    %4123 = vmatprep.subr.mxu0 0.0
    %4124 = vmatpush1.xpose.msra.mxu0 0.0
    %4125 = vmatprep.subr.mxu0 0.0
    %4126 = vmatpush1.xpose.msra.mxu0 0.0
    %4127 = vmatprep.subr.mxu0 0.0
    %4128 = vmatpush1.xpose.msra.mxu0 0.0
    %4129 = vmatprep.subr.mxu0 0.0
    %4130 = vmatpush1.xpose.msra.mxu0 0.0
    %4131 = vmatprep.subr.mxu0 0.0
    %4132 = vmatpush1.xpose.msra.mxu0 0.0
    %4133 = vmatprep.subr.mxu0 0.0
    %4134 = vmatpush1.xpose.msra.mxu0 0.0
    %4135 = vmatprep.subr.mxu0 0.0
    %4136 = vmatpush1.xpose.msra.mxu0 0.0
    %4137 = vmatprep.subr.mxu0 0.0
    %4138 = vmatpush1.xpose.msra.mxu0 0.0
    %4139 = vmatprep.subr.mxu0 0.0
    %4140 = vmatpush1.xpose.msra.mxu0 0.0
    %4141 = vmatprep.subr.mxu0 0.0
    %4142 = vmatpush1.xpose.msra.mxu0 0.0
    %4143 = vmatprep.subr.mxu0 0.0
    %4144 = vmatpush1.xpose.msra.mxu0 0.0
    %4145 = vmatprep.subr.mxu0 0.0
    %4146 = vmatpush1.xpose.msra.mxu0 0.0
    %4147 = vmatprep.subr.mxu0 0.0
    %4148 = vmatpush1.xpose.msra.mxu0 0.0
    %4149 = vmatprep.subr.mxu0 0.0
    %4150 = vmatpush1.xpose.msra.mxu0 0.0
    %4151 = vmatprep.subr.mxu0 0.0
    %4152 = vmatpush1.xpose.msra.mxu0 0.0
    %4153 = vmatprep.subr.mxu0 0.0
    %4154 = vmatpush1.xpose.msra.mxu0 0.0
    %4155 = vmatprep.subr.mxu0 0.0
    %4156 = vmatpush1.xpose.msra.mxu0 0.0
    %4157 = vmatprep.subr.mxu0 0.0
    %4158 = vmatpush1.xpose.msra.mxu0 0.0
    %4159 = vmatprep.subr.mxu0 0.0
    %4160 = vmatpush1.xpose.msra.mxu0 0.0
    %4161 = vmatprep.subr.mxu0 0.0
    %4162 = vmatpush1.xpose.msra.mxu0 0.0
    %4163 = vmatprep.subr.mxu0 0.0
    %4164 = vmatpush1.xpose.msra.mxu0 0.0
    %4165 = vmatprep.subr.mxu0 0.0
    %4166 = vmatpush1.xpose.msra.mxu0 0.0
    %4167 = vmatprep.subr.mxu0 0.0
    %4168 = vmatpush1.xpose.msra.mxu0 0.0
    %4169 = vmatprep.subr.mxu0 0.0
    %4170 = vmatpush1.xpose.msra.mxu0 0.0
    %4171 = vmatprep.subr.mxu0 0.0
    %4172 = vmatpush1.xpose.msra.mxu0 0.0
    %4173 = vmatprep.subr.mxu0 0.0
    %4174 = vmatpush1.xpose.msra.mxu0 0.0
    %4175 = vmatprep.subr.mxu0 0.0
    %4176 = vmatpush1.xpose.msra.mxu0 0.0
    %4177 = vmatprep.subr.mxu0 0.0
    %4178 = vmatpush1.xpose.msra.mxu0 0.0
    %4179 = vmatprep.subr.mxu0 0.0
    %4180 = vmatpush1.xpose.msra.mxu0 0.0
    %4181 = vmatprep.subr.mxu0 0.0
    %4182 = vmatpush1.xpose.msra.mxu0 0.0
    %4183 = vmatprep.subr.mxu0 0.0
    %4184 = vmatpush1.xpose.msra.mxu0 0.0
    %4185 = vmatprep.mubr.f32.mxu0 0.0
    %v4186 = vand.u32 %v4036, 4294901760
    %4187 = vmatmul.mubr.f32.gmra.mrb[0].mxu0 %v4186
    %v4188 = vpop.f32.mrb[0].mxu0
    %v4189 = vadd.f32 %v4113, %v4188
    %v4190 = vpop.f32.mrb[0].mxu0
    %4191 = vdwg.mxu0
    %4192 = vmatprep.subr.mxu0 0.0
    %v4193 = vand.u32 %v4038, 4294901760
    %v4194 = vsub.f32 %v4038, %v4193
    %4195 = vmatpush1.xpose.msra.mxu0 %v4194
    %4196 = vmatprep.subr.mxu0 0.0
    %4197 = vmatpush1.xpose.msra.mxu0 0.0
    %4198 = vmatprep.subr.mxu0 0.0
    %4199 = vmatpush1.xpose.msra.mxu0 0.0
    %4200 = vmatprep.subr.mxu0 0.0
    %4201 = vmatpush1.xpose.msra.mxu0 0.0
    %4202 = vmatprep.subr.mxu0 0.0
    %4203 = vmatpush1.xpose.msra.mxu0 0.0
    %4204 = vmatprep.subr.mxu0 0.0
    %4205 = vmatpush1.xpose.msra.mxu0 0.0
    %4206 = vmatprep.subr.mxu0 0.0
    %4207 = vmatpush1.xpose.msra.mxu0 0.0
    %4208 = vmatprep.subr.mxu0 0.0
    %4209 = vmatpush1.xpose.msra.mxu0 0.0
    %4210 = vmatprep.subr.mxu0 0.0
    %4211 = vmatpush1.xpose.msra.mxu0 0.0
    %4212 = vmatprep.subr.mxu0 0.0
    %4213 = vmatpush1.xpose.msra.mxu0 0.0
    %4214 = vmatprep.subr.mxu0 0.0
    %4215 = vmatpush1.xpose.msra.mxu0 0.0
    %4216 = vmatprep.subr.mxu0 0.0
    %4217 = vmatpush1.xpose.msra.mxu0 0.0
    %4218 = vmatprep.subr.mxu0 0.0
    %4219 = vmatpush1.xpose.msra.mxu0 0.0
    %4220 = vmatprep.subr.mxu0 0.0
    %4221 = vmatpush1.xpose.msra.mxu0 0.0
    %4222 = vmatprep.subr.mxu0 0.0
    %4223 = vmatpush1.xpose.msra.mxu0 0.0
    %4224 = vmatprep.subr.mxu0 0.0
    %4225 = vmatpush1.xpose.msra.mxu0 0.0
    %4226 = vmatprep.subr.mxu0 0.0
    %4227 = vmatpush1.xpose.msra.mxu0 0.0
    %4228 = vmatprep.subr.mxu0 0.0
    %4229 = vmatpush1.xpose.msra.mxu0 0.0
    %4230 = vmatprep.subr.mxu0 0.0
    %4231 = vmatpush1.xpose.msra.mxu0 0.0
    %4232 = vmatprep.subr.mxu0 0.0
    %4233 = vmatpush1.xpose.msra.mxu0 0.0
    %4234 = vmatprep.subr.mxu0 0.0
    %4235 = vmatpush1.xpose.msra.mxu0 0.0
    %4236 = vmatprep.subr.mxu0 0.0
    %4237 = vmatpush1.xpose.msra.mxu0 0.0
    %4238 = vmatprep.subr.mxu0 0.0
    %4239 = vmatpush1.xpose.msra.mxu0 0.0
    %4240 = vmatprep.subr.mxu0 0.0
    %4241 = vmatpush1.xpose.msra.mxu0 0.0
    %4242 = vmatprep.subr.mxu0 0.0
    %4243 = vmatpush1.xpose.msra.mxu0 0.0
    %4244 = vmatprep.subr.mxu0 0.0
    %4245 = vmatpush1.xpose.msra.mxu0 0.0
    %4246 = vmatprep.subr.mxu0 0.0
    %4247 = vmatpush1.xpose.msra.mxu0 0.0
    %4248 = vmatprep.subr.mxu0 0.0
    %4249 = vmatpush1.xpose.msra.mxu0 0.0
    %4250 = vmatprep.subr.mxu0 0.0
    %4251 = vmatpush1.xpose.msra.mxu0 0.0
    %4252 = vmatprep.subr.mxu0 0.0
    %4253 = vmatpush1.xpose.msra.mxu0 0.0
    %4254 = vmatprep.subr.mxu0 0.0
    %4255 = vmatpush1.xpose.msra.mxu0 0.0
    %4256 = vmatprep.subr.mxu0 0.0
    %4257 = vmatpush1.xpose.msra.mxu0 0.0
    %4258 = vmatprep.mubr.f32.mxu0 0.0
    %v4259 = vand.u32 %v4036, 4294901760
    %v4260 = vsub.f32 %v4036, %v4259
    %4261 = vmatmul.mubr.f32.gmra.mrb[0].mxu0 %v4260
    %v4262 = vpop.f32.mrb[0].mxu0
    %v4263 = vadd.f32 %v4189, %v4262
    %v4264 = vpop.f32.mrb[0].mxu0
    %4265 = vdwg.mxu0
    %4266 = vmatprep.subr.mxu0 0.0
    %v4267 = vand.u32 %v4038, 4294901760
    %4268 = vmatpush1.xpose.msra.mxu0 %v4267
    %4269 = vmatprep.subr.mxu0 0.0
    %4270 = vmatpush1.xpose.msra.mxu0 0.0
    %4271 = vmatprep.subr.mxu0 0.0
    %4272 = vmatpush1.xpose.msra.mxu0 0.0
    %4273 = vmatprep.subr.mxu0 0.0
    %4274 = vmatpush1.xpose.msra.mxu0 0.0
    %4275 = vmatprep.subr.mxu0 0.0
    %4276 = vmatpush1.xpose.msra.mxu0 0.0
    %4277 = vmatprep.subr.mxu0 0.0
    %4278 = vmatpush1.xpose.msra.mxu0 0.0
    %4279 = vmatprep.subr.mxu0 0.0
    %4280 = vmatpush1.xpose.msra.mxu0 0.0
    %4281 = vmatprep.subr.mxu0 0.0
    %4282 = vmatpush1.xpose.msra.mxu0 0.0
    %4283 = vmatprep.subr.mxu0 0.0
    %4284 = vmatpush1.xpose.msra.mxu0 0.0
    %4285 = vmatprep.subr.mxu0 0.0
    %4286 = vmatpush1.xpose.msra.mxu0 0.0
    %4287 = vmatprep.subr.mxu0 0.0
    %4288 = vmatpush1.xpose.msra.mxu0 0.0
    %4289 = vmatprep.subr.mxu0 0.0
    %4290 = vmatpush1.xpose.msra.mxu0 0.0
    %4291 = vmatprep.subr.mxu0 0.0
    %4292 = vmatpush1.xpose.msra.mxu0 0.0
    %4293 = vmatprep.subr.mxu0 0.0
    %4294 = vmatpush1.xpose.msra.mxu0 0.0
    %4295 = vmatprep.subr.mxu0 0.0
    %4296 = vmatpush1.xpose.msra.mxu0 0.0
    %4297 = vmatprep.subr.mxu0 0.0
    %4298 = vmatpush1.xpose.msra.mxu0 0.0
    %4299 = vmatprep.subr.mxu0 0.0
    %4300 = vmatpush1.xpose.msra.mxu0 0.0
    %4301 = vmatprep.subr.mxu0 0.0
    %4302 = vmatpush1.xpose.msra.mxu0 0.0
    %4303 = vmatprep.subr.mxu0 0.0
    %4304 = vmatpush1.xpose.msra.mxu0 0.0
    %4305 = vmatprep.subr.mxu0 0.0
    %4306 = vmatpush1.xpose.msra.mxu0 0.0
    %4307 = vmatprep.subr.mxu0 0.0
    %4308 = vmatpush1.xpose.msra.mxu0 0.0
    %4309 = vmatprep.subr.mxu0 0.0
    %4310 = vmatpush1.xpose.msra.mxu0 0.0
    %4311 = vmatprep.subr.mxu0 0.0
    %4312 = vmatpush1.xpose.msra.mxu0 0.0
    %4313 = vmatprep.subr.mxu0 0.0
    %4314 = vmatpush1.xpose.msra.mxu0 0.0
    %4315 = vmatprep.subr.mxu0 0.0
    %4316 = vmatpush1.xpose.msra.mxu0 0.0
    %4317 = vmatprep.subr.mxu0 0.0
    %4318 = vmatpush1.xpose.msra.mxu0 0.0
    %4319 = vmatprep.subr.mxu0 0.0
    %4320 = vmatpush1.xpose.msra.mxu0 0.0
    %4321 = vmatprep.subr.mxu0 0.0
    %4322 = vmatpush1.xpose.msra.mxu0 0.0
    %4323 = vmatprep.subr.mxu0 0.0
    %4324 = vmatpush1.xpose.msra.mxu0 0.0
    %4325 = vmatprep.subr.mxu0 0.0
    %4326 = vmatpush1.xpose.msra.mxu0 0.0
    %4327 = vmatprep.subr.mxu0 0.0
    %4328 = vmatpush1.xpose.msra.mxu0 0.0
    %4329 = vmatprep.subr.mxu0 0.0
    %4330 = vmatpush1.xpose.msra.mxu0 0.0
    %4331 = vmatprep.mubr.f32.mxu0 0.0
    %v4332 = vand.u32 %v4036, 4294901760
    %v4333 = vsub.f32 %v4036, %v4332
    %v4334 = vand.u32 %v4333, 4294901760
    %4335 = vmatmul.mubr.f32.gmra.mrb[0].mxu0 %v4334
    %v4336 = vpop.f32.mrb[0].mxu0
    %v4337 = vadd.f32 %v4263, %v4336
    %v4338 = vpop.f32.mrb[0].mxu0
    %4339 = vdwg.mxu0
    %4340 = vmatprep.subr.mxu0 0.0
    %v4341 = vand.u32 %v4038, 4294901760
    %v4342 = vsub.f32 %v4038, %v4341
    %v4343 = vand.u32 %v4342, 4294901760
    %4344 = vmatpush1.xpose.msra.mxu0 %v4343
    %4345 = vmatprep.subr.mxu0 0.0
    %4346 = vmatpush1.xpose.msra.mxu0 0.0
    %4347 = vmatprep.subr.mxu0 0.0
    %4348 = vmatpush1.xpose.msra.mxu0 0.0
    %4349 = vmatprep.subr.mxu0 0.0
    %4350 = vmatpush1.xpose.msra.mxu0 0.0
    %4351 = vmatprep.subr.mxu0 0.0
    %4352 = vmatpush1.xpose.msra.mxu0 0.0
    %4353 = vmatprep.subr.mxu0 0.0
    %4354 = vmatpush1.xpose.msra.mxu0 0.0
    %4355 = vmatprep.subr.mxu0 0.0
    %4356 = vmatpush1.xpose.msra.mxu0 0.0
    %4357 = vmatprep.subr.mxu0 0.0
    %4358 = vmatpush1.xpose.msra.mxu0 0.0
    %4359 = vmatprep.subr.mxu0 0.0
    %4360 = vmatpush1.xpose.msra.mxu0 0.0
    %4361 = vmatprep.subr.mxu0 0.0
    %4362 = vmatpush1.xpose.msra.mxu0 0.0
    %4363 = vmatprep.subr.mxu0 0.0
    %4364 = vmatpush1.xpose.msra.mxu0 0.0
    %4365 = vmatprep.subr.mxu0 0.0
    %4366 = vmatpush1.xpose.msra.mxu0 0.0
    %4367 = vmatprep.subr.mxu0 0.0
    %4368 = vmatpush1.xpose.msra.mxu0 0.0
    %4369 = vmatprep.subr.mxu0 0.0
    %4370 = vmatpush1.xpose.msra.mxu0 0.0
    %4371 = vmatprep.subr.mxu0 0.0
    %4372 = vmatpush1.xpose.msra.mxu0 0.0
    %4373 = vmatprep.subr.mxu0 0.0
    %4374 = vmatpush1.xpose.msra.mxu0 0.0
    %4375 = vmatprep.subr.mxu0 0.0
    %4376 = vmatpush1.xpose.msra.mxu0 0.0
    %4377 = vmatprep.subr.mxu0 0.0
    %4378 = vmatpush1.xpose.msra.mxu0 0.0
    %4379 = vmatprep.subr.mxu0 0.0
    %4380 = vmatpush1.xpose.msra.mxu0 0.0
    %4381 = vmatprep.subr.mxu0 0.0
    %4382 = vmatpush1.xpose.msra.mxu0 0.0
    %4383 = vmatprep.subr.mxu0 0.0
    %4384 = vmatpush1.xpose.msra.mxu0 0.0
    %4385 = vmatprep.subr.mxu0 0.0
    %4386 = vmatpush1.xpose.msra.mxu0 0.0
    %4387 = vmatprep.subr.mxu0 0.0
    %4388 = vmatpush1.xpose.msra.mxu0 0.0
    %4389 = vmatprep.subr.mxu0 0.0
    %4390 = vmatpush1.xpose.msra.mxu0 0.0
    %4391 = vmatprep.subr.mxu0 0.0
    %4392 = vmatpush1.xpose.msra.mxu0 0.0
    %4393 = vmatprep.subr.mxu0 0.0
    %4394 = vmatpush1.xpose.msra.mxu0 0.0
    %4395 = vmatprep.subr.mxu0 0.0
    %4396 = vmatpush1.xpose.msra.mxu0 0.0
    %4397 = vmatprep.subr.mxu0 0.0
    %4398 = vmatpush1.xpose.msra.mxu0 0.0
    %4399 = vmatprep.subr.mxu0 0.0
    %4400 = vmatpush1.xpose.msra.mxu0 0.0
    %4401 = vmatprep.subr.mxu0 0.0
    %4402 = vmatpush1.xpose.msra.mxu0 0.0
    %4403 = vmatprep.subr.mxu0 0.0
    %4404 = vmatpush1.xpose.msra.mxu0 0.0
    %4405 = vmatprep.subr.mxu0 0.0
    %4406 = vmatpush1.xpose.msra.mxu0 0.0
    %4407 = vmatprep.mubr.f32.mxu0 0.0
    %v4408 = vand.u32 %v4036, 4294901760
    %4409 = vmatmul.mubr.f32.gmra.mrb[0].mxu0 %v4408
    %v4410 = vpop.f32.mrb[0].mxu0
    %v4411 = vadd.f32 %v4337, %v4410
    %v4412 = vpop.f32.mrb[0].mxu0
    %4413 = vdwg.mxu0
    %4414 = vmatprep.subr.mxu0 0.0
    %v4415 = vand.u32 %v4038, 4294901760
    %4416 = vmatpush1.xpose.msra.mxu0 %v4415
    %4417 = vmatprep.subr.mxu0 0.0
    %4418 = vmatpush1.xpose.msra.mxu0 0.0
    %4419 = vmatprep.subr.mxu0 0.0
    %4420 = vmatpush1.xpose.msra.mxu0 0.0
    %4421 = vmatprep.subr.mxu0 0.0
    %4422 = vmatpush1.xpose.msra.mxu0 0.0
    %4423 = vmatprep.subr.mxu0 0.0
    %4424 = vmatpush1.xpose.msra.mxu0 0.0
    %4425 = vmatprep.subr.mxu0 0.0
    %4426 = vmatpush1.xpose.msra.mxu0 0.0
    %4427 = vmatprep.subr.mxu0 0.0
    %4428 = vmatpush1.xpose.msra.mxu0 0.0
    %4429 = vmatprep.subr.mxu0 0.0
    %4430 = vmatpush1.xpose.msra.mxu0 0.0
    %4431 = vmatprep.subr.mxu0 0.0
    %4432 = vmatpush1.xpose.msra.mxu0 0.0
    %4433 = vmatprep.subr.mxu0 0.0
    %4434 = vmatpush1.xpose.msra.mxu0 0.0
    %4435 = vmatprep.subr.mxu0 0.0
    %4436 = vmatpush1.xpose.msra.mxu0 0.0
    %4437 = vmatprep.subr.mxu0 0.0
    %4438 = vmatpush1.xpose.msra.mxu0 0.0
    %4439 = vmatprep.subr.mxu0 0.0
    %4440 = vmatpush1.xpose.msra.mxu0 0.0
    %4441 = vmatprep.subr.mxu0 0.0
    %4442 = vmatpush1.xpose.msra.mxu0 0.0
    %4443 = vmatprep.subr.mxu0 0.0
    %4444 = vmatpush1.xpose.msra.mxu0 0.0
    %4445 = vmatprep.subr.mxu0 0.0
    %4446 = vmatpush1.xpose.msra.mxu0 0.0
    %4447 = vmatprep.subr.mxu0 0.0
    %4448 = vmatpush1.xpose.msra.mxu0 0.0
    %4449 = vmatprep.subr.mxu0 0.0
    %4450 = vmatpush1.xpose.msra.mxu0 0.0
    %4451 = vmatprep.subr.mxu0 0.0
    %4452 = vmatpush1.xpose.msra.mxu0 0.0
    %4453 = vmatprep.subr.mxu0 0.0
    %4454 = vmatpush1.xpose.msra.mxu0 0.0
    %4455 = vmatprep.subr.mxu0 0.0
    %4456 = vmatpush1.xpose.msra.mxu0 0.0
    %4457 = vmatprep.subr.mxu0 0.0
    %4458 = vmatpush1.xpose.msra.mxu0 0.0
    %4459 = vmatprep.subr.mxu0 0.0
    %4460 = vmatpush1.xpose.msra.mxu0 0.0
    %4461 = vmatprep.subr.mxu0 0.0
    %4462 = vmatpush1.xpose.msra.mxu0 0.0
    %4463 = vmatprep.subr.mxu0 0.0
    %4464 = vmatpush1.xpose.msra.mxu0 0.0
    %4465 = vmatprep.subr.mxu0 0.0
    %4466 = vmatpush1.xpose.msra.mxu0 0.0
    %4467 = vmatprep.subr.mxu0 0.0
    %4468 = vmatpush1.xpose.msra.mxu0 0.0
    %4469 = vmatprep.subr.mxu0 0.0
    %4470 = vmatpush1.xpose.msra.mxu0 0.0
    %4471 = vmatprep.subr.mxu0 0.0
    %4472 = vmatpush1.xpose.msra.mxu0 0.0
    %4473 = vmatprep.subr.mxu0 0.0
    %4474 = vmatpush1.xpose.msra.mxu0 0.0
    %4475 = vmatprep.subr.mxu0 0.0
    %4476 = vmatpush1.xpose.msra.mxu0 0.0
    %4477 = vmatprep.subr.mxu0 0.0
    %4478 = vmatpush1.xpose.msra.mxu0 0.0
    %4479 = vmatprep.mubr.f32.mxu0 0.0
    %v4480 = vand.u32 %v4036, 4294901760
    %4481 = vmatmul.mubr.f32.gmra.mrb[0].mxu0 %v4480
    %v4482 = vpop.f32.mrb[0].mxu0
    %v4483 = vadd.f32 %v4411, %v4482
    %v4484 = vpop.f32.mrb[0].mxu0
    %4485 = vdwg.mxu0
    %v4486 = vsel %vm1751, %v4029, -inf
    %4487 = vmax.xlane.f32.xlu0 %v4486
    %v4488 = vpop.xlane.xlu0 %4487
    %v4489 = vsel %vm1751, %v4483, -inf
    %4490 = vmax.xlane.f32.xlu0 %v4489
    %v4491 = vpop.xlane.xlu0 %4490
    %v4492 = vsub.f32 %v4029, %v4488
    %v4493 = vsub.f32 %v4483, %v4491
    %v4494 = vmul.f32 %v4492, 1.442695
    %v4495 = vpow.pop %v4494
    %v4496 = vmul.f32 %v4493, 1.442695
    %v4497 = vpow.pop %v4496
    %v4498 = vsel %vm1751, %v4495, 0.0
    %4499 = vadd.xlane.f32.xlu0 %v4498
    %v4500 = vpop.xlane.xlu0 %4499
    %v4501 = vsel %vm1751, %v4497, 0.0
    %4502 = vadd.xlane.f32.xlu0 %v4501
    %v4503 = vpop.xlane.xlu0 %4502
    %v4504 = vrcp.pop %v4500
    %v4505 = vrcp.pop %v4503
    %v4506 = vmul.f32 %v4495, %v4504
    %v4507 = vmul.f32 %v4497, %v4505
    %s4508 = scalar_lea.vmem [#allocation14], 8
    %4509 = vst.msk [vmem:[%s4508] sm:$0xff] %vm1751, %v4506
    %4510 = vst.msk [vmem:[%s4508 + $0x20] sm:$0xff] %vm1751, %v4507
    %4512 = vrot.lane.b32.xlu0 %v1742, 120
    %v4513 = vpop.permute.xlu0 %4512
    %v4516 = vsel %vm1751, %v4506, 0
    %4518 = vmatprep.subr.mxu0 0.0
    %v4519 = vand.u32 %v4513, 4294901760
    %4520 = vmatpush1.msra.mxu0 %v4519
    %4521 = vmatprep.subr.mxu0 0.0
    %4522 = vmatpush1.msra.mxu0 0.0
    %4523 = vmatprep.subr.mxu0 0.0
    %4524 = vmatpush1.msra.mxu0 0.0
    %4525 = vmatprep.subr.mxu0 0.0
    %4526 = vmatpush1.msra.mxu0 0.0
    %4527 = vmatprep.subr.mxu0 0.0
    %4528 = vmatpush1.msra.mxu0 0.0
    %4529 = vmatprep.subr.mxu0 0.0
    %4530 = vmatpush1.msra.mxu0 0.0
    %4531 = vmatprep.subr.mxu0 0.0
    %4532 = vmatpush1.msra.mxu0 0.0
    %4533 = vmatprep.subr.mxu0 0.0
    %4534 = vmatpush1.msra.mxu0 0.0
    %4535 = vmatprep.subr.mxu0 0.0
    %4536 = vmatpush1.msra.mxu0 0.0
    %4537 = vmatprep.subr.mxu0 0.0
    %4538 = vmatpush1.msra.mxu0 0.0
    %4539 = vmatprep.subr.mxu0 0.0
    %4540 = vmatpush1.msra.mxu0 0.0
    %4541 = vmatprep.subr.mxu0 0.0
    %4542 = vmatpush1.msra.mxu0 0.0
    %4543 = vmatprep.subr.mxu0 0.0
    %4544 = vmatpush1.msra.mxu0 0.0
    %4545 = vmatprep.subr.mxu0 0.0
    %4546 = vmatpush1.msra.mxu0 0.0
    %4547 = vmatprep.subr.mxu0 0.0
    %4548 = vmatpush1.msra.mxu0 0.0
    %4549 = vmatprep.subr.mxu0 0.0
    %4550 = vmatpush1.msra.mxu0 0.0
    %4551 = vmatprep.subr.mxu0 0.0
    %4552 = vmatpush1.msra.mxu0 0.0
    %4553 = vmatprep.subr.mxu0 0.0
    %4554 = vmatpush1.msra.mxu0 0.0
    %4555 = vmatprep.subr.mxu0 0.0
    %4556 = vmatpush1.msra.mxu0 0.0
    %4557 = vmatprep.subr.mxu0 0.0
    %4558 = vmatpush1.msra.mxu0 0.0
    %4559 = vmatprep.subr.mxu0 0.0
    %4560 = vmatpush1.msra.mxu0 0.0
    %4561 = vmatprep.subr.mxu0 0.0
    %4562 = vmatpush1.msra.mxu0 0.0
    %4563 = vmatprep.subr.mxu0 0.0
    %4564 = vmatpush1.msra.mxu0 0.0
    %4565 = vmatprep.subr.mxu0 0.0
    %4566 = vmatpush1.msra.mxu0 0.0
    %4567 = vmatprep.subr.mxu0 0.0
    %4568 = vmatpush1.msra.mxu0 0.0
    %4569 = vmatprep.subr.mxu0 0.0
    %4570 = vmatpush1.msra.mxu0 0.0
    %4571 = vmatprep.subr.mxu0 0.0
    %4572 = vmatpush1.msra.mxu0 0.0
    %4573 = vmatprep.subr.mxu0 0.0
    %4574 = vmatpush1.msra.mxu0 0.0
    %4575 = vmatprep.subr.mxu0 0.0
    %4576 = vmatpush1.msra.mxu0 0.0
    %4577 = vmatprep.subr.mxu0 0.0
    %4578 = vmatpush1.msra.mxu0 0.0
    %4579 = vmatprep.subr.mxu0 0.0
    %4580 = vmatpush1.msra.mxu0 0.0
    %4581 = vmatprep.subr.mxu0 0.0
    %4582 = vmatpush1.msra.mxu0 0.0
    %4583 = vmatprep.mubr.f32.mxu0 0.0
    %v4584 = vand.u32 %v4516, 4294901760
    %v4585 = vsub.f32 %v4516, %v4584
    %v4586 = vand.u32 %v4585, 4294901760
    %v4587 = vsub.f32 %v4585, %v4586
    %v4588 = vand.u32 %v4587, 4294901760
    %4589 = vmatmul.mubr.f32.gmra.mrb[0].mxu0 %v4588
    %v4590 = vpop.f32.mrb[0].mxu0
    %v4591 = vadd.f32 0.0, %v4590
    %v4592 = vpop.f32.mrb[0].mxu0
    %4593 = vdwg.mxu0
    %4594 = vmatprep.subr.mxu0 0.0
    %v4595 = vand.u32 %v4513, 4294901760
    %v4596 = vsub.f32 %v4513, %v4595
    %v4597 = vand.u32 %v4596, 4294901760
    %v4598 = vsub.f32 %v4596, %v4597
    %v4599 = vand.u32 %v4598, 4294901760
    %4600 = vmatpush1.msra.mxu0 %v4599
    %4601 = vmatprep.subr.mxu0 0.0
    %4602 = vmatpush1.msra.mxu0 0.0
    %4603 = vmatprep.subr.mxu0 0.0
    %4604 = vmatpush1.msra.mxu0 0.0
    %4605 = vmatprep.subr.mxu0 0.0
    %4606 = vmatpush1.msra.mxu0 0.0
    %4607 = vmatprep.subr.mxu0 0.0
    %4608 = vmatpush1.msra.mxu0 0.0
    %4609 = vmatprep.subr.mxu0 0.0
    %4610 = vmatpush1.msra.mxu0 0.0
    %4611 = vmatprep.subr.mxu0 0.0
    %4612 = vmatpush1.msra.mxu0 0.0
    %4613 = vmatprep.subr.mxu0 0.0
    %4614 = vmatpush1.msra.mxu0 0.0
    %4615 = vmatprep.subr.mxu0 0.0
    %4616 = vmatpush1.msra.mxu0 0.0
    %4617 = vmatprep.subr.mxu0 0.0
    %4618 = vmatpush1.msra.mxu0 0.0
    %4619 = vmatprep.subr.mxu0 0.0
    %4620 = vmatpush1.msra.mxu0 0.0
    %4621 = vmatprep.subr.mxu0 0.0
    %4622 = vmatpush1.msra.mxu0 0.0
    %4623 = vmatprep.subr.mxu0 0.0
    %4624 = vmatpush1.msra.mxu0 0.0
    %4625 = vmatprep.subr.mxu0 0.0
    %4626 = vmatpush1.msra.mxu0 0.0
    %4627 = vmatprep.subr.mxu0 0.0
    %4628 = vmatpush1.msra.mxu0 0.0
    %4629 = vmatprep.subr.mxu0 0.0
    %4630 = vmatpush1.msra.mxu0 0.0
    %4631 = vmatprep.subr.mxu0 0.0
    %4632 = vmatpush1.msra.mxu0 0.0
    %4633 = vmatprep.subr.mxu0 0.0
    %4634 = vmatpush1.msra.mxu0 0.0
    %4635 = vmatprep.subr.mxu0 0.0
    %4636 = vmatpush1.msra.mxu0 0.0
    %4637 = vmatprep.subr.mxu0 0.0
    %4638 = vmatpush1.msra.mxu0 0.0
    %4639 = vmatprep.subr.mxu0 0.0
    %4640 = vmatpush1.msra.mxu0 0.0
    %4641 = vmatprep.subr.mxu0 0.0
    %4642 = vmatpush1.msra.mxu0 0.0
    %4643 = vmatprep.subr.mxu0 0.0
    %4644 = vmatpush1.msra.mxu0 0.0
    %4645 = vmatprep.subr.mxu0 0.0
    %4646 = vmatpush1.msra.mxu0 0.0
    %4647 = vmatprep.subr.mxu0 0.0
    %4648 = vmatpush1.msra.mxu0 0.0
    %4649 = vmatprep.subr.mxu0 0.0
    %4650 = vmatpush1.msra.mxu0 0.0
    %4651 = vmatprep.subr.mxu0 0.0
    %4652 = vmatpush1.msra.mxu0 0.0
    %4653 = vmatprep.subr.mxu0 0.0
    %4654 = vmatpush1.msra.mxu0 0.0
    %4655 = vmatprep.subr.mxu0 0.0
    %4656 = vmatpush1.msra.mxu0 0.0
    %4657 = vmatprep.subr.mxu0 0.0
    %4658 = vmatpush1.msra.mxu0 0.0
    %4659 = vmatprep.subr.mxu0 0.0
    %4660 = vmatpush1.msra.mxu0 0.0
    %4661 = vmatprep.subr.mxu0 0.0
    %4662 = vmatpush1.msra.mxu0 0.0
    %4663 = vmatprep.mubr.f32.mxu0 0.0
    %v4664 = vand.u32 %v4516, 4294901760
    %4665 = vmatmul.mubr.f32.gmra.mrb[0].mxu0 %v4664
    %v4666 = vpop.f32.mrb[0].mxu0
    %v4667 = vadd.f32 %v4591, %v4666
    %v4668 = vpop.f32.mrb[0].mxu0
    %4669 = vdwg.mxu0
    %4670 = vmatprep.subr.mxu0 0.0
    %v4671 = vand.u32 %v4513, 4294901760
    %v4672 = vsub.f32 %v4513, %v4671
    %4673 = vmatpush1.msra.mxu0 %v4672
    %4674 = vmatprep.subr.mxu0 0.0
    %4675 = vmatpush1.msra.mxu0 0.0
    %4676 = vmatprep.subr.mxu0 0.0
    %4677 = vmatpush1.msra.mxu0 0.0
    %4678 = vmatprep.subr.mxu0 0.0
    %4679 = vmatpush1.msra.mxu0 0.0
    %4680 = vmatprep.subr.mxu0 0.0
    %4681 = vmatpush1.msra.mxu0 0.0
    %4682 = vmatprep.subr.mxu0 0.0
    %4683 = vmatpush1.msra.mxu0 0.0
    %4684 = vmatprep.subr.mxu0 0.0
    %4685 = vmatpush1.msra.mxu0 0.0
    %4686 = vmatprep.subr.mxu0 0.0
    %4687 = vmatpush1.msra.mxu0 0.0
    %4688 = vmatprep.subr.mxu0 0.0
    %4689 = vmatpush1.msra.mxu0 0.0
    %4690 = vmatprep.subr.mxu0 0.0
    %4691 = vmatpush1.msra.mxu0 0.0
    %4692 = vmatprep.subr.mxu0 0.0
    %4693 = vmatpush1.msra.mxu0 0.0
    %4694 = vmatprep.subr.mxu0 0.0
    %4695 = vmatpush1.msra.mxu0 0.0
    %4696 = vmatprep.subr.mxu0 0.0
    %4697 = vmatpush1.msra.mxu0 0.0
    %4698 = vmatprep.subr.mxu0 0.0
    %4699 = vmatpush1.msra.mxu0 0.0
    %4700 = vmatprep.subr.mxu0 0.0
    %4701 = vmatpush1.msra.mxu0 0.0
    %4702 = vmatprep.subr.mxu0 0.0
    %4703 = vmatpush1.msra.mxu0 0.0
    %4704 = vmatprep.subr.mxu0 0.0
    %4705 = vmatpush1.msra.mxu0 0.0
    %4706 = vmatprep.subr.mxu0 0.0
    %4707 = vmatpush1.msra.mxu0 0.0
    %4708 = vmatprep.subr.mxu0 0.0
    %4709 = vmatpush1.msra.mxu0 0.0
    %4710 = vmatprep.subr.mxu0 0.0
    %4711 = vmatpush1.msra.mxu0 0.0
    %4712 = vmatprep.subr.mxu0 0.0
    %4713 = vmatpush1.msra.mxu0 0.0
    %4714 = vmatprep.subr.mxu0 0.0
    %4715 = vmatpush1.msra.mxu0 0.0
    %4716 = vmatprep.subr.mxu0 0.0
    %4717 = vmatpush1.msra.mxu0 0.0
    %4718 = vmatprep.subr.mxu0 0.0
    %4719 = vmatpush1.msra.mxu0 0.0
    %4720 = vmatprep.subr.mxu0 0.0
    %4721 = vmatpush1.msra.mxu0 0.0
    %4722 = vmatprep.subr.mxu0 0.0
    %4723 = vmatpush1.msra.mxu0 0.0
    %4724 = vmatprep.subr.mxu0 0.0
    %4725 = vmatpush1.msra.mxu0 0.0
    %4726 = vmatprep.subr.mxu0 0.0
    %4727 = vmatpush1.msra.mxu0 0.0
    %4728 = vmatprep.subr.mxu0 0.0
    %4729 = vmatpush1.msra.mxu0 0.0
    %4730 = vmatprep.subr.mxu0 0.0
    %4731 = vmatpush1.msra.mxu0 0.0
    %4732 = vmatprep.subr.mxu0 0.0
    %4733 = vmatpush1.msra.mxu0 0.0
    %4734 = vmatprep.subr.mxu0 0.0
    %4735 = vmatpush1.msra.mxu0 0.0
    %4736 = vmatprep.mubr.f32.mxu0 0.0
    %v4737 = vand.u32 %v4516, 4294901760
    %v4738 = vsub.f32 %v4516, %v4737
    %4739 = vmatmul.mubr.f32.gmra.mrb[0].mxu0 %v4738
    %v4740 = vpop.f32.mrb[0].mxu0
    %v4741 = vadd.f32 %v4667, %v4740
    %v4742 = vpop.f32.mrb[0].mxu0
    %4743 = vdwg.mxu0
    %4744 = vmatprep.subr.mxu0 0.0
    %v4745 = vand.u32 %v4513, 4294901760
    %4746 = vmatpush1.msra.mxu0 %v4745
    %4747 = vmatprep.subr.mxu0 0.0
    %4748 = vmatpush1.msra.mxu0 0.0
    %4749 = vmatprep.subr.mxu0 0.0
    %4750 = vmatpush1.msra.mxu0 0.0
    %4751 = vmatprep.subr.mxu0 0.0
    %4752 = vmatpush1.msra.mxu0 0.0
    %4753 = vmatprep.subr.mxu0 0.0
    %4754 = vmatpush1.msra.mxu0 0.0
    %4755 = vmatprep.subr.mxu0 0.0
    %4756 = vmatpush1.msra.mxu0 0.0
    %4757 = vmatprep.subr.mxu0 0.0
    %4758 = vmatpush1.msra.mxu0 0.0
    %4759 = vmatprep.subr.mxu0 0.0
    %4760 = vmatpush1.msra.mxu0 0.0
    %4761 = vmatprep.subr.mxu0 0.0
    %4762 = vmatpush1.msra.mxu0 0.0
    %4763 = vmatprep.subr.mxu0 0.0
    %4764 = vmatpush1.msra.mxu0 0.0
    %4765 = vmatprep.subr.mxu0 0.0
    %4766 = vmatpush1.msra.mxu0 0.0
    %4767 = vmatprep.subr.mxu0 0.0
    %4768 = vmatpush1.msra.mxu0 0.0
    %4769 = vmatprep.subr.mxu0 0.0
    %4770 = vmatpush1.msra.mxu0 0.0
    %4771 = vmatprep.subr.mxu0 0.0
    %4772 = vmatpush1.msra.mxu0 0.0
    %4773 = vmatprep.subr.mxu0 0.0
    %4774 = vmatpush1.msra.mxu0 0.0
    %4775 = vmatprep.subr.mxu0 0.0
    %4776 = vmatpush1.msra.mxu0 0.0
    %4777 = vmatprep.subr.mxu0 0.0
    %4778 = vmatpush1.msra.mxu0 0.0
    %4779 = vmatprep.subr.mxu0 0.0
    %4780 = vmatpush1.msra.mxu0 0.0
    %4781 = vmatprep.subr.mxu0 0.0
    %4782 = vmatpush1.msra.mxu0 0.0
    %4783 = vmatprep.subr.mxu0 0.0
    %4784 = vmatpush1.msra.mxu0 0.0
    %4785 = vmatprep.subr.mxu0 0.0
    %4786 = vmatpush1.msra.mxu0 0.0
    %4787 = vmatprep.subr.mxu0 0.0
    %4788 = vmatpush1.msra.mxu0 0.0
    %4789 = vmatprep.subr.mxu0 0.0
    %4790 = vmatpush1.msra.mxu0 0.0
    %4791 = vmatprep.subr.mxu0 0.0
    %4792 = vmatpush1.msra.mxu0 0.0
    %4793 = vmatprep.subr.mxu0 0.0
    %4794 = vmatpush1.msra.mxu0 0.0
    %4795 = vmatprep.subr.mxu0 0.0
    %4796 = vmatpush1.msra.mxu0 0.0
    %4797 = vmatprep.subr.mxu0 0.0
    %4798 = vmatpush1.msra.mxu0 0.0
    %4799 = vmatprep.subr.mxu0 0.0
    %4800 = vmatpush1.msra.mxu0 0.0
    %4801 = vmatprep.subr.mxu0 0.0
    %4802 = vmatpush1.msra.mxu0 0.0
    %4803 = vmatprep.subr.mxu0 0.0
    %4804 = vmatpush1.msra.mxu0 0.0
    %4805 = vmatprep.subr.mxu0 0.0
    %4806 = vmatpush1.msra.mxu0 0.0
    %4807 = vmatprep.subr.mxu0 0.0
    %4808 = vmatpush1.msra.mxu0 0.0
    %4809 = vmatprep.mubr.f32.mxu0 0.0
    %v4810 = vand.u32 %v4516, 4294901760
    %v4811 = vsub.f32 %v4516, %v4810
    %v4812 = vand.u32 %v4811, 4294901760
    %4813 = vmatmul.mubr.f32.gmra.mrb[0].mxu0 %v4812
    %v4814 = vpop.f32.mrb[0].mxu0
    %v4815 = vadd.f32 %v4741, %v4814
    %v4816 = vpop.f32.mrb[0].mxu0
    %4817 = vdwg.mxu0
    %4818 = vmatprep.subr.mxu0 0.0
    %v4819 = vand.u32 %v4513, 4294901760
    %v4820 = vsub.f32 %v4513, %v4819
    %v4821 = vand.u32 %v4820, 4294901760
    %4822 = vmatpush1.msra.mxu0 %v4821
    %4823 = vmatprep.subr.mxu0 0.0
    %4824 = vmatpush1.msra.mxu0 0.0
    %4825 = vmatprep.subr.mxu0 0.0
    %4826 = vmatpush1.msra.mxu0 0.0
    %4827 = vmatprep.subr.mxu0 0.0
    %4828 = vmatpush1.msra.mxu0 0.0
    %4829 = vmatprep.subr.mxu0 0.0
    %4830 = vmatpush1.msra.mxu0 0.0
    %4831 = vmatprep.subr.mxu0 0.0
    %4832 = vmatpush1.msra.mxu0 0.0
    %4833 = vmatprep.subr.mxu0 0.0
    %4834 = vmatpush1.msra.mxu0 0.0
    %4835 = vmatprep.subr.mxu0 0.0
    %4836 = vmatpush1.msra.mxu0 0.0
    %4837 = vmatprep.subr.mxu0 0.0
    %4838 = vmatpush1.msra.mxu0 0.0
    %4839 = vmatprep.subr.mxu0 0.0
    %4840 = vmatpush1.msra.mxu0 0.0
    %4841 = vmatprep.subr.mxu0 0.0
    %4842 = vmatpush1.msra.mxu0 0.0
    %4843 = vmatprep.subr.mxu0 0.0
    %4844 = vmatpush1.msra.mxu0 0.0
    %4845 = vmatprep.subr.mxu0 0.0
    %4846 = vmatpush1.msra.mxu0 0.0
    %4847 = vmatprep.subr.mxu0 0.0
    %4848 = vmatpush1.msra.mxu0 0.0
    %4849 = vmatprep.subr.mxu0 0.0
    %4850 = vmatpush1.msra.mxu0 0.0
    %4851 = vmatprep.subr.mxu0 0.0
    %4852 = vmatpush1.msra.mxu0 0.0
    %4853 = vmatprep.subr.mxu0 0.0
    %4854 = vmatpush1.msra.mxu0 0.0
    %4855 = vmatprep.subr.mxu0 0.0
    %4856 = vmatpush1.msra.mxu0 0.0
    %4857 = vmatprep.subr.mxu0 0.0
    %4858 = vmatpush1.msra.mxu0 0.0
    %4859 = vmatprep.subr.mxu0 0.0
    %4860 = vmatpush1.msra.mxu0 0.0
    %4861 = vmatprep.subr.mxu0 0.0
    %4862 = vmatpush1.msra.mxu0 0.0
    %4863 = vmatprep.subr.mxu0 0.0
    %4864 = vmatpush1.msra.mxu0 0.0
    %4865 = vmatprep.subr.mxu0 0.0
    %4866 = vmatpush1.msra.mxu0 0.0
    %4867 = vmatprep.subr.mxu0 0.0
    %4868 = vmatpush1.msra.mxu0 0.0
    %4869 = vmatprep.subr.mxu0 0.0
    %4870 = vmatpush1.msra.mxu0 0.0
    %4871 = vmatprep.subr.mxu0 0.0
    %4872 = vmatpush1.msra.mxu0 0.0
    %4873 = vmatprep.subr.mxu0 0.0
    %4874 = vmatpush1.msra.mxu0 0.0
    %4875 = vmatprep.subr.mxu0 0.0
    %4876 = vmatpush1.msra.mxu0 0.0
    %4877 = vmatprep.subr.mxu0 0.0
    %4878 = vmatpush1.msra.mxu0 0.0
    %4879 = vmatprep.subr.mxu0 0.0
    %4880 = vmatpush1.msra.mxu0 0.0
    %4881 = vmatprep.subr.mxu0 0.0
    %4882 = vmatpush1.msra.mxu0 0.0
    %4883 = vmatprep.subr.mxu0 0.0
    %4884 = vmatpush1.msra.mxu0 0.0
    %4885 = vmatprep.mubr.f32.mxu0 0.0
    %v4886 = vand.u32 %v4516, 4294901760
    %4887 = vmatmul.mubr.f32.gmra.mrb[0].mxu0 %v4886
    %v4888 = vpop.f32.mrb[0].mxu0
    %v4889 = vadd.f32 %v4815, %v4888
    %v4890 = vpop.f32.mrb[0].mxu0
    %4891 = vdwg.mxu0
    %4892 = vmatprep.subr.mxu0 0.0
    %v4893 = vand.u32 %v4513, 4294901760
    %4894 = vmatpush1.msra.mxu0 %v4893
    %4895 = vmatprep.subr.mxu0 0.0
    %4896 = vmatpush1.msra.mxu0 0.0
    %4897 = vmatprep.subr.mxu0 0.0
    %4898 = vmatpush1.msra.mxu0 0.0
    %4899 = vmatprep.subr.mxu0 0.0
    %4900 = vmatpush1.msra.mxu0 0.0
    %4901 = vmatprep.subr.mxu0 0.0
    %4902 = vmatpush1.msra.mxu0 0.0
    %4903 = vmatprep.subr.mxu0 0.0
    %4904 = vmatpush1.msra.mxu0 0.0
    %4905 = vmatprep.subr.mxu0 0.0
    %4906 = vmatpush1.msra.mxu0 0.0
    %4907 = vmatprep.subr.mxu0 0.0
    %4908 = vmatpush1.msra.mxu0 0.0
    %4909 = vmatprep.subr.mxu0 0.0
    %4910 = vmatpush1.msra.mxu0 0.0
    %4911 = vmatprep.subr.mxu0 0.0
    %4912 = vmatpush1.msra.mxu0 0.0
    %4913 = vmatprep.subr.mxu0 0.0
    %4914 = vmatpush1.msra.mxu0 0.0
    %4915 = vmatprep.subr.mxu0 0.0
    %4916 = vmatpush1.msra.mxu0 0.0
    %4917 = vmatprep.subr.mxu0 0.0
    %4918 = vmatpush1.msra.mxu0 0.0
    %4919 = vmatprep.subr.mxu0 0.0
    %4920 = vmatpush1.msra.mxu0 0.0
    %4921 = vmatprep.subr.mxu0 0.0
    %4922 = vmatpush1.msra.mxu0 0.0
    %4923 = vmatprep.subr.mxu0 0.0
    %4924 = vmatpush1.msra.mxu0 0.0
    %4925 = vmatprep.subr.mxu0 0.0
    %4926 = vmatpush1.msra.mxu0 0.0
    %4927 = vmatprep.subr.mxu0 0.0
    %4928 = vmatpush1.msra.mxu0 0.0
    %4929 = vmatprep.subr.mxu0 0.0
    %4930 = vmatpush1.msra.mxu0 0.0
    %4931 = vmatprep.subr.mxu0 0.0
    %4932 = vmatpush1.msra.mxu0 0.0
    %4933 = vmatprep.subr.mxu0 0.0
    %4934 = vmatpush1.msra.mxu0 0.0
    %4935 = vmatprep.subr.mxu0 0.0
    %4936 = vmatpush1.msra.mxu0 0.0
    %4937 = vmatprep.subr.mxu0 0.0
    %4938 = vmatpush1.msra.mxu0 0.0
    %4939 = vmatprep.subr.mxu0 0.0
    %4940 = vmatpush1.msra.mxu0 0.0
    %4941 = vmatprep.subr.mxu0 0.0
    %4942 = vmatpush1.msra.mxu0 0.0
    %4943 = vmatprep.subr.mxu0 0.0
    %4944 = vmatpush1.msra.mxu0 0.0
    %4945 = vmatprep.subr.mxu0 0.0
    %4946 = vmatpush1.msra.mxu0 0.0
    %4947 = vmatprep.subr.mxu0 0.0
    %4948 = vmatpush1.msra.mxu0 0.0
    %4949 = vmatprep.subr.mxu0 0.0
    %4950 = vmatpush1.msra.mxu0 0.0
    %4951 = vmatprep.subr.mxu0 0.0
    %4952 = vmatpush1.msra.mxu0 0.0
    %4953 = vmatprep.subr.mxu0 0.0
    %4954 = vmatpush1.msra.mxu0 0.0
    %4955 = vmatprep.subr.mxu0 0.0
    %4956 = vmatpush1.msra.mxu0 0.0
    %4957 = vmatprep.mubr.f32.mxu0 0.0
    %v4958 = vand.u32 %v4516, 4294901760
    %4959 = vmatmul.mubr.f32.gmra.mrb[0].mxu0 %v4958
    %v4960 = vpop.f32.mrb[0].mxu0
    %v4961 = vadd.f32 %v4889, %v4960
    %v4962 = vpop.f32.mrb[0].mxu0
    %4963 = vdwg.mxu0
    %4965 = vrot.lane.b32.xlu0 %v1748, 120
    %v4966 = vpop.permute.xlu0 %4965
    %v4969 = vsel %vm1751, %v4507, 0
    %4971 = vmatprep.subr.mxu0 0.0
    %v4972 = vand.u32 %v4966, 4294901760
    %4973 = vmatpush1.msra.mxu0 %v4972
    %4974 = vmatprep.subr.mxu0 0.0
    %4975 = vmatpush1.msra.mxu0 0.0
    %4976 = vmatprep.subr.mxu0 0.0
    %4977 = vmatpush1.msra.mxu0 0.0
    %4978 = vmatprep.subr.mxu0 0.0
    %4979 = vmatpush1.msra.mxu0 0.0
    %4980 = vmatprep.subr.mxu0 0.0
    %4981 = vmatpush1.msra.mxu0 0.0
    %4982 = vmatprep.subr.mxu0 0.0
    %4983 = vmatpush1.msra.mxu0 0.0
    %4984 = vmatprep.subr.mxu0 0.0
    %4985 = vmatpush1.msra.mxu0 0.0
    %4986 = vmatprep.subr.mxu0 0.0
    %4987 = vmatpush1.msra.mxu0 0.0
    %4988 = vmatprep.subr.mxu0 0.0
    %4989 = vmatpush1.msra.mxu0 0.0
    %4990 = vmatprep.subr.mxu0 0.0
    %4991 = vmatpush1.msra.mxu0 0.0
    %4992 = vmatprep.subr.mxu0 0.0
    %4993 = vmatpush1.msra.mxu0 0.0
    %4994 = vmatprep.subr.mxu0 0.0
    %4995 = vmatpush1.msra.mxu0 0.0
    %4996 = vmatprep.subr.mxu0 0.0
    %4997 = vmatpush1.msra.mxu0 0.0
    %4998 = vmatprep.subr.mxu0 0.0
    %4999 = vmatpush1.msra.mxu0 0.0
    %5000 = vmatprep.subr.mxu0 0.0
    %5001 = vmatpush1.msra.mxu0 0.0
    %5002 = vmatprep.subr.mxu0 0.0
    %5003 = vmatpush1.msra.mxu0 0.0
    %5004 = vmatprep.subr.mxu0 0.0
    %5005 = vmatpush1.msra.mxu0 0.0
    %5006 = vmatprep.subr.mxu0 0.0
    %5007 = vmatpush1.msra.mxu0 0.0
    %5008 = vmatprep.subr.mxu0 0.0
    %5009 = vmatpush1.msra.mxu0 0.0
    %5010 = vmatprep.subr.mxu0 0.0
    %5011 = vmatpush1.msra.mxu0 0.0
    %5012 = vmatprep.subr.mxu0 0.0
    %5013 = vmatpush1.msra.mxu0 0.0
    %5014 = vmatprep.subr.mxu0 0.0
    %5015 = vmatpush1.msra.mxu0 0.0
    %5016 = vmatprep.subr.mxu0 0.0
    %5017 = vmatpush1.msra.mxu0 0.0
    %5018 = vmatprep.subr.mxu0 0.0
    %5019 = vmatpush1.msra.mxu0 0.0
    %5020 = vmatprep.subr.mxu0 0.0
    %5021 = vmatpush1.msra.mxu0 0.0
    %5022 = vmatprep.subr.mxu0 0.0
    %5023 = vmatpush1.msra.mxu0 0.0
    %5024 = vmatprep.subr.mxu0 0.0
    %5025 = vmatpush1.msra.mxu0 0.0
    %5026 = vmatprep.subr.mxu0 0.0
    %5027 = vmatpush1.msra.mxu0 0.0
    %5028 = vmatprep.subr.mxu0 0.0
    %5029 = vmatpush1.msra.mxu0 0.0
    %5030 = vmatprep.subr.mxu0 0.0
    %5031 = vmatpush1.msra.mxu0 0.0
    %5032 = vmatprep.subr.mxu0 0.0
    %5033 = vmatpush1.msra.mxu0 0.0
    %5034 = vmatprep.subr.mxu0 0.0
    %5035 = vmatpush1.msra.mxu0 0.0
    %5036 = vmatprep.mubr.f32.mxu0 0.0
    %v5037 = vand.u32 %v4969, 4294901760
    %v5038 = vsub.f32 %v4969, %v5037
    %v5039 = vand.u32 %v5038, 4294901760
    %v5040 = vsub.f32 %v5038, %v5039
    %v5041 = vand.u32 %v5040, 4294901760
    %5042 = vmatmul.mubr.f32.gmra.mrb[0].mxu0 %v5041
    %v5043 = vpop.f32.mrb[0].mxu0
    %v5044 = vadd.f32 0.0, %v5043
    %v5045 = vpop.f32.mrb[0].mxu0
    %5046 = vdwg.mxu0
    %5047 = vmatprep.subr.mxu0 0.0
    %v5048 = vand.u32 %v4966, 4294901760
    %v5049 = vsub.f32 %v4966, %v5048
    %v5050 = vand.u32 %v5049, 4294901760
    %v5051 = vsub.f32 %v5049, %v5050
    %v5052 = vand.u32 %v5051, 4294901760
    %5053 = vmatpush1.msra.mxu0 %v5052
    %5054 = vmatprep.subr.mxu0 0.0
    %5055 = vmatpush1.msra.mxu0 0.0
    %5056 = vmatprep.subr.mxu0 0.0
    %5057 = vmatpush1.msra.mxu0 0.0
    %5058 = vmatprep.subr.mxu0 0.0
    %5059 = vmatpush1.msra.mxu0 0.0
    %5060 = vmatprep.subr.mxu0 0.0
    %5061 = vmatpush1.msra.mxu0 0.0
    %5062 = vmatprep.subr.mxu0 0.0
    %5063 = vmatpush1.msra.mxu0 0.0
    %5064 = vmatprep.subr.mxu0 0.0
    %5065 = vmatpush1.msra.mxu0 0.0
    %5066 = vmatprep.subr.mxu0 0.0
    %5067 = vmatpush1.msra.mxu0 0.0
    %5068 = vmatprep.subr.mxu0 0.0
    %5069 = vmatpush1.msra.mxu0 0.0
    %5070 = vmatprep.subr.mxu0 0.0
    %5071 = vmatpush1.msra.mxu0 0.0
    %5072 = vmatprep.subr.mxu0 0.0
    %5073 = vmatpush1.msra.mxu0 0.0
    %5074 = vmatprep.subr.mxu0 0.0
    %5075 = vmatpush1.msra.mxu0 0.0
    %5076 = vmatprep.subr.mxu0 0.0
    %5077 = vmatpush1.msra.mxu0 0.0
    %5078 = vmatprep.subr.mxu0 0.0
    %5079 = vmatpush1.msra.mxu0 0.0
    %5080 = vmatprep.subr.mxu0 0.0
    %5081 = vmatpush1.msra.mxu0 0.0
    %5082 = vmatprep.subr.mxu0 0.0
    %5083 = vmatpush1.msra.mxu0 0.0
    %5084 = vmatprep.subr.mxu0 0.0
    %5085 = vmatpush1.msra.mxu0 0.0
    %5086 = vmatprep.subr.mxu0 0.0
    %5087 = vmatpush1.msra.mxu0 0.0
    %5088 = vmatprep.subr.mxu0 0.0
    %5089 = vmatpush1.msra.mxu0 0.0
    %5090 = vmatprep.subr.mxu0 0.0
    %5091 = vmatpush1.msra.mxu0 0.0
    %5092 = vmatprep.subr.mxu0 0.0
    %5093 = vmatpush1.msra.mxu0 0.0
    %5094 = vmatprep.subr.mxu0 0.0
    %5095 = vmatpush1.msra.mxu0 0.0
    %5096 = vmatprep.subr.mxu0 0.0
    %5097 = vmatpush1.msra.mxu0 0.0
    %5098 = vmatprep.subr.mxu0 0.0
    %5099 = vmatpush1.msra.mxu0 0.0
    %5100 = vmatprep.subr.mxu0 0.0
    %5101 = vmatpush1.msra.mxu0 0.0
    %5102 = vmatprep.subr.mxu0 0.0
    %5103 = vmatpush1.msra.mxu0 0.0
    %5104 = vmatprep.subr.mxu0 0.0
    %5105 = vmatpush1.msra.mxu0 0.0
    %5106 = vmatprep.subr.mxu0 0.0
    %5107 = vmatpush1.msra.mxu0 0.0
    %5108 = vmatprep.subr.mxu0 0.0
    %5109 = vmatpush1.msra.mxu0 0.0
    %5110 = vmatprep.subr.mxu0 0.0
    %5111 = vmatpush1.msra.mxu0 0.0
    %5112 = vmatprep.subr.mxu0 0.0
    %5113 = vmatpush1.msra.mxu0 0.0
    %5114 = vmatprep.subr.mxu0 0.0
    %5115 = vmatpush1.msra.mxu0 0.0
    %5116 = vmatprep.mubr.f32.mxu0 0.0
    %v5117 = vand.u32 %v4969, 4294901760
    %5118 = vmatmul.mubr.f32.gmra.mrb[0].mxu0 %v5117
    %v5119 = vpop.f32.mrb[0].mxu0
    %v5120 = vadd.f32 %v5044, %v5119
    %v5121 = vpop.f32.mrb[0].mxu0
    %5122 = vdwg.mxu0
    %5123 = vmatprep.subr.mxu0 0.0
    %v5124 = vand.u32 %v4966, 4294901760
    %v5125 = vsub.f32 %v4966, %v5124
    %5126 = vmatpush1.msra.mxu0 %v5125
    %5127 = vmatprep.subr.mxu0 0.0
    %5128 = vmatpush1.msra.mxu0 0.0
    %5129 = vmatprep.subr.mxu0 0.0
    %5130 = vmatpush1.msra.mxu0 0.0
    %5131 = vmatprep.subr.mxu0 0.0
    %5132 = vmatpush1.msra.mxu0 0.0
    %5133 = vmatprep.subr.mxu0 0.0
    %5134 = vmatpush1.msra.mxu0 0.0
    %5135 = vmatprep.subr.mxu0 0.0
    %5136 = vmatpush1.msra.mxu0 0.0
    %5137 = vmatprep.subr.mxu0 0.0
    %5138 = vmatpush1.msra.mxu0 0.0
    %5139 = vmatprep.subr.mxu0 0.0
    %5140 = vmatpush1.msra.mxu0 0.0
    %5141 = vmatprep.subr.mxu0 0.0
    %5142 = vmatpush1.msra.mxu0 0.0
    %5143 = vmatprep.subr.mxu0 0.0
    %5144 = vmatpush1.msra.mxu0 0.0
    %5145 = vmatprep.subr.mxu0 0.0
    %5146 = vmatpush1.msra.mxu0 0.0
    %5147 = vmatprep.subr.mxu0 0.0
    %5148 = vmatpush1.msra.mxu0 0.0
    %5149 = vmatprep.subr.mxu0 0.0
    %5150 = vmatpush1.msra.mxu0 0.0
    %5151 = vmatprep.subr.mxu0 0.0
    %5152 = vmatpush1.msra.mxu0 0.0
    %5153 = vmatprep.subr.mxu0 0.0
    %5154 = vmatpush1.msra.mxu0 0.0
    %5155 = vmatprep.subr.mxu0 0.0
    %5156 = vmatpush1.msra.mxu0 0.0
    %5157 = vmatprep.subr.mxu0 0.0
    %5158 = vmatpush1.msra.mxu0 0.0
    %5159 = vmatprep.subr.mxu0 0.0
    %5160 = vmatpush1.msra.mxu0 0.0
    %5161 = vmatprep.subr.mxu0 0.0
    %5162 = vmatpush1.msra.mxu0 0.0
    %5163 = vmatprep.subr.mxu0 0.0
    %5164 = vmatpush1.msra.mxu0 0.0
    %5165 = vmatprep.subr.mxu0 0.0
    %5166 = vmatpush1.msra.mxu0 0.0
    %5167 = vmatprep.subr.mxu0 0.0
    %5168 = vmatpush1.msra.mxu0 0.0
    %5169 = vmatprep.subr.mxu0 0.0
    %5170 = vmatpush1.msra.mxu0 0.0
    %5171 = vmatprep.subr.mxu0 0.0
    %5172 = vmatpush1.msra.mxu0 0.0
    %5173 = vmatprep.subr.mxu0 0.0
    %5174 = vmatpush1.msra.mxu0 0.0
    %5175 = vmatprep.subr.mxu0 0.0
    %5176 = vmatpush1.msra.mxu0 0.0
    %5177 = vmatprep.subr.mxu0 0.0
    %5178 = vmatpush1.msra.mxu0 0.0
    %5179 = vmatprep.subr.mxu0 0.0
    %5180 = vmatpush1.msra.mxu0 0.0
    %5181 = vmatprep.subr.mxu0 0.0
    %5182 = vmatpush1.msra.mxu0 0.0
    %5183 = vmatprep.subr.mxu0 0.0
    %5184 = vmatpush1.msra.mxu0 0.0
    %5185 = vmatprep.subr.mxu0 0.0
    %5186 = vmatpush1.msra.mxu0 0.0
    %5187 = vmatprep.subr.mxu0 0.0
    %5188 = vmatpush1.msra.mxu0 0.0
    %5189 = vmatprep.mubr.f32.mxu0 0.0
    %v5190 = vand.u32 %v4969, 4294901760
    %v5191 = vsub.f32 %v4969, %v5190
    %5192 = vmatmul.mubr.f32.gmra.mrb[0].mxu0 %v5191
    %v5193 = vpop.f32.mrb[0].mxu0
    %v5194 = vadd.f32 %v5120, %v5193
    %v5195 = vpop.f32.mrb[0].mxu0
    %5196 = vdwg.mxu0
    %5197 = vmatprep.subr.mxu0 0.0
    %v5198 = vand.u32 %v4966, 4294901760
    %5199 = vmatpush1.msra.mxu0 %v5198
    %5200 = vmatprep.subr.mxu0 0.0
    %5201 = vmatpush1.msra.mxu0 0.0
    %5202 = vmatprep.subr.mxu0 0.0
    %5203 = vmatpush1.msra.mxu0 0.0
    %5204 = vmatprep.subr.mxu0 0.0
    %5205 = vmatpush1.msra.mxu0 0.0
    %5206 = vmatprep.subr.mxu0 0.0
    %5207 = vmatpush1.msra.mxu0 0.0
    %5208 = vmatprep.subr.mxu0 0.0
    %5209 = vmatpush1.msra.mxu0 0.0
    %5210 = vmatprep.subr.mxu0 0.0
    %5211 = vmatpush1.msra.mxu0 0.0
    %5212 = vmatprep.subr.mxu0 0.0
    %5213 = vmatpush1.msra.mxu0 0.0
    %5214 = vmatprep.subr.mxu0 0.0
    %5215 = vmatpush1.msra.mxu0 0.0
    %5216 = vmatprep.subr.mxu0 0.0
    %5217 = vmatpush1.msra.mxu0 0.0
    %5218 = vmatprep.subr.mxu0 0.0
    %5219 = vmatpush1.msra.mxu0 0.0
    %5220 = vmatprep.subr.mxu0 0.0
    %5221 = vmatpush1.msra.mxu0 0.0
    %5222 = vmatprep.subr.mxu0 0.0
    %5223 = vmatpush1.msra.mxu0 0.0
    %5224 = vmatprep.subr.mxu0 0.0
    %5225 = vmatpush1.msra.mxu0 0.0
    %5226 = vmatprep.subr.mxu0 0.0
    %5227 = vmatpush1.msra.mxu0 0.0
    %5228 = vmatprep.subr.mxu0 0.0
    %5229 = vmatpush1.msra.mxu0 0.0
    %5230 = vmatprep.subr.mxu0 0.0
    %5231 = vmatpush1.msra.mxu0 0.0
    %5232 = vmatprep.subr.mxu0 0.0
    %5233 = vmatpush1.msra.mxu0 0.0
    %5234 = vmatprep.subr.mxu0 0.0
    %5235 = vmatpush1.msra.mxu0 0.0
    %5236 = vmatprep.subr.mxu0 0.0
    %5237 = vmatpush1.msra.mxu0 0.0
    %5238 = vmatprep.subr.mxu0 0.0
    %5239 = vmatpush1.msra.mxu0 0.0
    %5240 = vmatprep.subr.mxu0 0.0
    %5241 = vmatpush1.msra.mxu0 0.0
    %5242 = vmatprep.subr.mxu0 0.0
    %5243 = vmatpush1.msra.mxu0 0.0
    %5244 = vmatprep.subr.mxu0 0.0
    %5245 = vmatpush1.msra.mxu0 0.0
    %5246 = vmatprep.subr.mxu0 0.0
    %5247 = vmatpush1.msra.mxu0 0.0
    %5248 = vmatprep.subr.mxu0 0.0
    %5249 = vmatpush1.msra.mxu0 0.0
    %5250 = vmatprep.subr.mxu0 0.0
    %5251 = vmatpush1.msra.mxu0 0.0
    %5252 = vmatprep.subr.mxu0 0.0
    %5253 = vmatpush1.msra.mxu0 0.0
    %5254 = vmatprep.subr.mxu0 0.0
    %5255 = vmatpush1.msra.mxu0 0.0
    %5256 = vmatprep.subr.mxu0 0.0
    %5257 = vmatpush1.msra.mxu0 0.0
    %5258 = vmatprep.subr.mxu0 0.0
    %5259 = vmatpush1.msra.mxu0 0.0
    %5260 = vmatprep.subr.mxu0 0.0
    %5261 = vmatpush1.msra.mxu0 0.0
    %5262 = vmatprep.mubr.f32.mxu0 0.0
    %v5263 = vand.u32 %v4969, 4294901760
    %v5264 = vsub.f32 %v4969, %v5263
    %v5265 = vand.u32 %v5264, 4294901760
    %5266 = vmatmul.mubr.f32.gmra.mrb[0].mxu0 %v5265
    %v5267 = vpop.f32.mrb[0].mxu0
    %v5268 = vadd.f32 %v5194, %v5267
    %v5269 = vpop.f32.mrb[0].mxu0
    %5270 = vdwg.mxu0
    %5271 = vmatprep.subr.mxu0 0.0
    %v5272 = vand.u32 %v4966, 4294901760
    %v5273 = vsub.f32 %v4966, %v5272
    %v5274 = vand.u32 %v5273, 4294901760
    %5275 = vmatpush1.msra.mxu0 %v5274
    %5276 = vmatprep.subr.mxu0 0.0
    %5277 = vmatpush1.msra.mxu0 0.0
    %5278 = vmatprep.subr.mxu0 0.0
    %5279 = vmatpush1.msra.mxu0 0.0
    %5280 = vmatprep.subr.mxu0 0.0
    %5281 = vmatpush1.msra.mxu0 0.0
    %5282 = vmatprep.subr.mxu0 0.0
    %5283 = vmatpush1.msra.mxu0 0.0
    %5284 = vmatprep.subr.mxu0 0.0
    %5285 = vmatpush1.msra.mxu0 0.0
    %5286 = vmatprep.subr.mxu0 0.0
    %5287 = vmatpush1.msra.mxu0 0.0
    %5288 = vmatprep.subr.mxu0 0.0
    %5289 = vmatpush1.msra.mxu0 0.0
    %5290 = vmatprep.subr.mxu0 0.0
    %5291 = vmatpush1.msra.mxu0 0.0
    %5292 = vmatprep.subr.mxu0 0.0
    %5293 = vmatpush1.msra.mxu0 0.0
    %5294 = vmatprep.subr.mxu0 0.0
    %5295 = vmatpush1.msra.mxu0 0.0
    %5296 = vmatprep.subr.mxu0 0.0
    %5297 = vmatpush1.msra.mxu0 0.0
    %5298 = vmatprep.subr.mxu0 0.0
    %5299 = vmatpush1.msra.mxu0 0.0
    %5300 = vmatprep.subr.mxu0 0.0
    %5301 = vmatpush1.msra.mxu0 0.0
    %5302 = vmatprep.subr.mxu0 0.0
    %5303 = vmatpush1.msra.mxu0 0.0
    %5304 = vmatprep.subr.mxu0 0.0
    %5305 = vmatpush1.msra.mxu0 0.0
    %5306 = vmatprep.subr.mxu0 0.0
    %5307 = vmatpush1.msra.mxu0 0.0
    %5308 = vmatprep.subr.mxu0 0.0
    %5309 = vmatpush1.msra.mxu0 0.0
    %5310 = vmatprep.subr.mxu0 0.0
    %5311 = vmatpush1.msra.mxu0 0.0
    %5312 = vmatprep.subr.mxu0 0.0
    %5313 = vmatpush1.msra.mxu0 0.0
    %5314 = vmatprep.subr.mxu0 0.0
    %5315 = vmatpush1.msra.mxu0 0.0
    %5316 = vmatprep.subr.mxu0 0.0
    %5317 = vmatpush1.msra.mxu0 0.0
    %5318 = vmatprep.subr.mxu0 0.0
    %5319 = vmatpush1.msra.mxu0 0.0
    %5320 = vmatprep.subr.mxu0 0.0
    %5321 = vmatpush1.msra.mxu0 0.0
    %5322 = vmatprep.subr.mxu0 0.0
    %5323 = vmatpush1.msra.mxu0 0.0
    %5324 = vmatprep.subr.mxu0 0.0
    %5325 = vmatpush1.msra.mxu0 0.0
    %5326 = vmatprep.subr.mxu0 0.0
    %5327 = vmatpush1.msra.mxu0 0.0
    %5328 = vmatprep.subr.mxu0 0.0
    %5329 = vmatpush1.msra.mxu0 0.0
    %5330 = vmatprep.subr.mxu0 0.0
    %5331 = vmatpush1.msra.mxu0 0.0
    %5332 = vmatprep.subr.mxu0 0.0
    %5333 = vmatpush1.msra.mxu0 0.0
    %5334 = vmatprep.subr.mxu0 0.0
    %5335 = vmatpush1.msra.mxu0 0.0
    %5336 = vmatprep.subr.mxu0 0.0
    %5337 = vmatpush1.msra.mxu0 0.0
    %5338 = vmatprep.mubr.f32.mxu0 0.0
    %v5339 = vand.u32 %v4969, 4294901760
    %5340 = vmatmul.mubr.f32.gmra.mrb[0].mxu0 %v5339
    %v5341 = vpop.f32.mrb[0].mxu0
    %v5342 = vadd.f32 %v5268, %v5341
    %v5343 = vpop.f32.mrb[0].mxu0
    %5344 = vdwg.mxu0
    %5345 = vmatprep.subr.mxu0 0.0
    %v5346 = vand.u32 %v4966, 4294901760
    %5347 = vmatpush1.msra.mxu0 %v5346
    %5348 = vmatprep.subr.mxu0 0.0
    %5349 = vmatpush1.msra.mxu0 0.0
    %5350 = vmatprep.subr.mxu0 0.0
    %5351 = vmatpush1.msra.mxu0 0.0
    %5352 = vmatprep.subr.mxu0 0.0
    %5353 = vmatpush1.msra.mxu0 0.0
    %5354 = vmatprep.subr.mxu0 0.0
    %5355 = vmatpush1.msra.mxu0 0.0
    %5356 = vmatprep.subr.mxu0 0.0
    %5357 = vmatpush1.msra.mxu0 0.0
    %5358 = vmatprep.subr.mxu0 0.0
    %5359 = vmatpush1.msra.mxu0 0.0
    %5360 = vmatprep.subr.mxu0 0.0
    %5361 = vmatpush1.msra.mxu0 0.0
    %5362 = vmatprep.subr.mxu0 0.0
    %5363 = vmatpush1.msra.mxu0 0.0
    %5364 = vmatprep.subr.mxu0 0.0
    %5365 = vmatpush1.msra.mxu0 0.0
    %5366 = vmatprep.subr.mxu0 0.0
    %5367 = vmatpush1.msra.mxu0 0.0
    %5368 = vmatprep.subr.mxu0 0.0
    %5369 = vmatpush1.msra.mxu0 0.0
    %5370 = vmatprep.subr.mxu0 0.0
    %5371 = vmatpush1.msra.mxu0 0.0
    %5372 = vmatprep.subr.mxu0 0.0
    %5373 = vmatpush1.msra.mxu0 0.0
    %5374 = vmatprep.subr.mxu0 0.0
    %5375 = vmatpush1.msra.mxu0 0.0
    %5376 = vmatprep.subr.mxu0 0.0
    %5377 = vmatpush1.msra.mxu0 0.0
    %5378 = vmatprep.subr.mxu0 0.0
    %5379 = vmatpush1.msra.mxu0 0.0
    %5380 = vmatprep.subr.mxu0 0.0
    %5381 = vmatpush1.msra.mxu0 0.0
    %5382 = vmatprep.subr.mxu0 0.0
    %5383 = vmatpush1.msra.mxu0 0.0
    %5384 = vmatprep.subr.mxu0 0.0
    %5385 = vmatpush1.msra.mxu0 0.0
    %5386 = vmatprep.subr.mxu0 0.0
    %5387 = vmatpush1.msra.mxu0 0.0
    %5388 = vmatprep.subr.mxu0 0.0
    %5389 = vmatpush1.msra.mxu0 0.0
    %5390 = vmatprep.subr.mxu0 0.0
    %5391 = vmatpush1.msra.mxu0 0.0
    %5392 = vmatprep.subr.mxu0 0.0
    %5393 = vmatpush1.msra.mxu0 0.0
    %5394 = vmatprep.subr.mxu0 0.0
    %5395 = vmatpush1.msra.mxu0 0.0
    %5396 = vmatprep.subr.mxu0 0.0
    %5397 = vmatpush1.msra.mxu0 0.0
    %5398 = vmatprep.subr.mxu0 0.0
    %5399 = vmatpush1.msra.mxu0 0.0
    %5400 = vmatprep.subr.mxu0 0.0
    %5401 = vmatpush1.msra.mxu0 0.0
    %5402 = vmatprep.subr.mxu0 0.0
    %5403 = vmatpush1.msra.mxu0 0.0
    %5404 = vmatprep.subr.mxu0 0.0
    %5405 = vmatpush1.msra.mxu0 0.0
    %5406 = vmatprep.subr.mxu0 0.0
    %5407 = vmatpush1.msra.mxu0 0.0
    %5408 = vmatprep.subr.mxu0 0.0
    %5409 = vmatpush1.msra.mxu0 0.0
    %5410 = vmatprep.mubr.f32.mxu0 0.0
    %v5411 = vand.u32 %v4969, 4294901760
    %5412 = vmatmul.mubr.f32.gmra.mrb[0].mxu0 %v5411
    %v5413 = vpop.f32.mrb[0].mxu0
    %v5414 = vadd.f32 %v5342, %v5413
    %v5415 = vpop.f32.mrb[0].mxu0
    %5416 = vdwg.mxu0
    %5417 = vrot.lane.b32.xlu0 %v652, 112
    %v5418 = vpop.permute.xlu0 %5417
    %5419 = vrot.lane.b32.xlu0 %v1197, 112
    %v5420 = vpop.permute.xlu0 %5419
    %v5421 = vsel %vm1751, %v5418, 0
    %v5423 = vsel %vm1751, %v5420, 0
    %5425 = vmatprep.subr.mxu0 0.0
    %v5426 = vand.u32 %v5423, 4294901760
    %5427 = vmatpush1.xpose.msra.mxu0 %v5426
    %5428 = vmatprep.subr.mxu0 0.0
    %5429 = vmatpush1.xpose.msra.mxu0 0.0
    %5430 = vmatprep.subr.mxu0 0.0
    %5431 = vmatpush1.xpose.msra.mxu0 0.0
    %5432 = vmatprep.subr.mxu0 0.0
    %5433 = vmatpush1.xpose.msra.mxu0 0.0
    %5434 = vmatprep.subr.mxu0 0.0
    %5435 = vmatpush1.xpose.msra.mxu0 0.0
    %5436 = vmatprep.subr.mxu0 0.0
    %5437 = vmatpush1.xpose.msra.mxu0 0.0
    %5438 = vmatprep.subr.mxu0 0.0
    %5439 = vmatpush1.xpose.msra.mxu0 0.0
    %5440 = vmatprep.subr.mxu0 0.0
    %5441 = vmatpush1.xpose.msra.mxu0 0.0
    %5442 = vmatprep.subr.mxu0 0.0
    %5443 = vmatpush1.xpose.msra.mxu0 0.0
    %5444 = vmatprep.subr.mxu0 0.0
    %5445 = vmatpush1.xpose.msra.mxu0 0.0
    %5446 = vmatprep.subr.mxu0 0.0
    %5447 = vmatpush1.xpose.msra.mxu0 0.0
    %5448 = vmatprep.subr.mxu0 0.0
    %5449 = vmatpush1.xpose.msra.mxu0 0.0
    %5450 = vmatprep.subr.mxu0 0.0
    %5451 = vmatpush1.xpose.msra.mxu0 0.0
    %5452 = vmatprep.subr.mxu0 0.0
    %5453 = vmatpush1.xpose.msra.mxu0 0.0
    %5454 = vmatprep.subr.mxu0 0.0
    %5455 = vmatpush1.xpose.msra.mxu0 0.0
    %5456 = vmatprep.subr.mxu0 0.0
    %5457 = vmatpush1.xpose.msra.mxu0 0.0
    %5458 = vmatprep.subr.mxu0 0.0
    %5459 = vmatpush1.xpose.msra.mxu0 0.0
    %5460 = vmatprep.subr.mxu0 0.0
    %5461 = vmatpush1.xpose.msra.mxu0 0.0
    %5462 = vmatprep.subr.mxu0 0.0
    %5463 = vmatpush1.xpose.msra.mxu0 0.0
    %5464 = vmatprep.subr.mxu0 0.0
    %5465 = vmatpush1.xpose.msra.mxu0 0.0
    %5466 = vmatprep.subr.mxu0 0.0
    %5467 = vmatpush1.xpose.msra.mxu0 0.0
    %5468 = vmatprep.subr.mxu0 0.0
    %5469 = vmatpush1.xpose.msra.mxu0 0.0
    %5470 = vmatprep.subr.mxu0 0.0
    %5471 = vmatpush1.xpose.msra.mxu0 0.0
    %5472 = vmatprep.subr.mxu0 0.0
    %5473 = vmatpush1.xpose.msra.mxu0 0.0
    %5474 = vmatprep.subr.mxu0 0.0
    %5475 = vmatpush1.xpose.msra.mxu0 0.0
    %5476 = vmatprep.subr.mxu0 0.0
    %5477 = vmatpush1.xpose.msra.mxu0 0.0
    %5478 = vmatprep.subr.mxu0 0.0
    %5479 = vmatpush1.xpose.msra.mxu0 0.0
    %5480 = vmatprep.subr.mxu0 0.0
    %5481 = vmatpush1.xpose.msra.mxu0 0.0
    %5482 = vmatprep.subr.mxu0 0.0
    %5483 = vmatpush1.xpose.msra.mxu0 0.0
    %5484 = vmatprep.subr.mxu0 0.0
    %5485 = vmatpush1.xpose.msra.mxu0 0.0
    %5486 = vmatprep.subr.mxu0 0.0
    %5487 = vmatpush1.xpose.msra.mxu0 0.0
    %5488 = vmatprep.subr.mxu0 0.0
    %5489 = vmatpush1.xpose.msra.mxu0 0.0
    %5490 = vmatprep.mubr.f32.mxu0 0.0
    %v5491 = vand.u32 %v5421, 4294901760
    %v5492 = vsub.f32 %v5421, %v5491
    %v5493 = vand.u32 %v5492, 4294901760
    %v5494 = vsub.f32 %v5492, %v5493
    %v5495 = vand.u32 %v5494, 4294901760
    %5496 = vmatmul.mubr.f32.gmra.mrb[0].mxu0 %v5495
    %v5497 = vpop.f32.mrb[0].mxu0
    %v5498 = vadd.f32 0.0, %v5497
    %v5499 = vpop.f32.mrb[0].mxu0
    %5500 = vdwg.mxu0
    %5501 = vmatprep.subr.mxu0 0.0
    %v5502 = vand.u32 %v5423, 4294901760
    %v5503 = vsub.f32 %v5423, %v5502
    %v5504 = vand.u32 %v5503, 4294901760
    %v5505 = vsub.f32 %v5503, %v5504
    %v5506 = vand.u32 %v5505, 4294901760
    %5507 = vmatpush1.xpose.msra.mxu0 %v5506
    %5508 = vmatprep.subr.mxu0 0.0
    %5509 = vmatpush1.xpose.msra.mxu0 0.0
    %5510 = vmatprep.subr.mxu0 0.0
    %5511 = vmatpush1.xpose.msra.mxu0 0.0
    %5512 = vmatprep.subr.mxu0 0.0
    %5513 = vmatpush1.xpose.msra.mxu0 0.0
    %5514 = vmatprep.subr.mxu0 0.0
    %5515 = vmatpush1.xpose.msra.mxu0 0.0
    %5516 = vmatprep.subr.mxu0 0.0
    %5517 = vmatpush1.xpose.msra.mxu0 0.0
    %5518 = vmatprep.subr.mxu0 0.0
    %5519 = vmatpush1.xpose.msra.mxu0 0.0
    %5520 = vmatprep.subr.mxu0 0.0
    %5521 = vmatpush1.xpose.msra.mxu0 0.0
    %5522 = vmatprep.subr.mxu0 0.0
    %5523 = vmatpush1.xpose.msra.mxu0 0.0
    %5524 = vmatprep.subr.mxu0 0.0
    %5525 = vmatpush1.xpose.msra.mxu0 0.0
    %5526 = vmatprep.subr.mxu0 0.0
    %5527 = vmatpush1.xpose.msra.mxu0 0.0
    %5528 = vmatprep.subr.mxu0 0.0
    %5529 = vmatpush1.xpose.msra.mxu0 0.0
    %5530 = vmatprep.subr.mxu0 0.0
    %5531 = vmatpush1.xpose.msra.mxu0 0.0
    %5532 = vmatprep.subr.mxu0 0.0
    %5533 = vmatpush1.xpose.msra.mxu0 0.0
    %5534 = vmatprep.subr.mxu0 0.0
    %5535 = vmatpush1.xpose.msra.mxu0 0.0
    %5536 = vmatprep.subr.mxu0 0.0
    %5537 = vmatpush1.xpose.msra.mxu0 0.0
    %5538 = vmatprep.subr.mxu0 0.0
    %5539 = vmatpush1.xpose.msra.mxu0 0.0
    %5540 = vmatprep.subr.mxu0 0.0
    %5541 = vmatpush1.xpose.msra.mxu0 0.0
    %5542 = vmatprep.subr.mxu0 0.0
    %5543 = vmatpush1.xpose.msra.mxu0 0.0
    %5544 = vmatprep.subr.mxu0 0.0
    %5545 = vmatpush1.xpose.msra.mxu0 0.0
    %5546 = vmatprep.subr.mxu0 0.0
    %5547 = vmatpush1.xpose.msra.mxu0 0.0
    %5548 = vmatprep.subr.mxu0 0.0
    %5549 = vmatpush1.xpose.msra.mxu0 0.0
    %5550 = vmatprep.subr.mxu0 0.0
    %5551 = vmatpush1.xpose.msra.mxu0 0.0
    %5552 = vmatprep.subr.mxu0 0.0
    %5553 = vmatpush1.xpose.msra.mxu0 0.0
    %5554 = vmatprep.subr.mxu0 0.0
    %5555 = vmatpush1.xpose.msra.mxu0 0.0
    %5556 = vmatprep.subr.mxu0 0.0
    %5557 = vmatpush1.xpose.msra.mxu0 0.0
    %5558 = vmatprep.subr.mxu0 0.0
    %5559 = vmatpush1.xpose.msra.mxu0 0.0
    %5560 = vmatprep.subr.mxu0 0.0
    %5561 = vmatpush1.xpose.msra.mxu0 0.0
    %5562 = vmatprep.subr.mxu0 0.0
    %5563 = vmatpush1.xpose.msra.mxu0 0.0
    %5564 = vmatprep.subr.mxu0 0.0
    %5565 = vmatpush1.xpose.msra.mxu0 0.0
    %5566 = vmatprep.subr.mxu0 0.0
    %5567 = vmatpush1.xpose.msra.mxu0 0.0
    %5568 = vmatprep.subr.mxu0 0.0
    %5569 = vmatpush1.xpose.msra.mxu0 0.0
    %5570 = vmatprep.mubr.f32.mxu0 0.0
    %v5571 = vand.u32 %v5421, 4294901760
    %5572 = vmatmul.mubr.f32.gmra.mrb[0].mxu0 %v5571
    %v5573 = vpop.f32.mrb[0].mxu0
    %v5574 = vadd.f32 %v5498, %v5573
    %v5575 = vpop.f32.mrb[0].mxu0
    %5576 = vdwg.mxu0
    %5577 = vmatprep.subr.mxu0 0.0
    %v5578 = vand.u32 %v5423, 4294901760
    %v5579 = vsub.f32 %v5423, %v5578
    %5580 = vmatpush1.xpose.msra.mxu0 %v5579
    %5581 = vmatprep.subr.mxu0 0.0
    %5582 = vmatpush1.xpose.msra.mxu0 0.0
    %5583 = vmatprep.subr.mxu0 0.0
    %5584 = vmatpush1.xpose.msra.mxu0 0.0
    %5585 = vmatprep.subr.mxu0 0.0
    %5586 = vmatpush1.xpose.msra.mxu0 0.0
    %5587 = vmatprep.subr.mxu0 0.0
    %5588 = vmatpush1.xpose.msra.mxu0 0.0
    %5589 = vmatprep.subr.mxu0 0.0
    %5590 = vmatpush1.xpose.msra.mxu0 0.0
    %5591 = vmatprep.subr.mxu0 0.0
    %5592 = vmatpush1.xpose.msra.mxu0 0.0
    %5593 = vmatprep.subr.mxu0 0.0
    %5594 = vmatpush1.xpose.msra.mxu0 0.0
    %5595 = vmatprep.subr.mxu0 0.0
    %5596 = vmatpush1.xpose.msra.mxu0 0.0
    %5597 = vmatprep.subr.mxu0 0.0
    %5598 = vmatpush1.xpose.msra.mxu0 0.0
    %5599 = vmatprep.subr.mxu0 0.0
    %5600 = vmatpush1.xpose.msra.mxu0 0.0
    %5601 = vmatprep.subr.mxu0 0.0
    %5602 = vmatpush1.xpose.msra.mxu0 0.0
    %5603 = vmatprep.subr.mxu0 0.0
    %5604 = vmatpush1.xpose.msra.mxu0 0.0
    %5605 = vmatprep.subr.mxu0 0.0
    %5606 = vmatpush1.xpose.msra.mxu0 0.0
    %5607 = vmatprep.subr.mxu0 0.0
    %5608 = vmatpush1.xpose.msra.mxu0 0.0
    %5609 = vmatprep.subr.mxu0 0.0
    %5610 = vmatpush1.xpose.msra.mxu0 0.0
    %5611 = vmatprep.subr.mxu0 0.0
    %5612 = vmatpush1.xpose.msra.mxu0 0.0
    %5613 = vmatprep.subr.mxu0 0.0
    %5614 = vmatpush1.xpose.msra.mxu0 0.0
    %5615 = vmatprep.subr.mxu0 0.0
    %5616 = vmatpush1.xpose.msra.mxu0 0.0
    %5617 = vmatprep.subr.mxu0 0.0
    %5618 = vmatpush1.xpose.msra.mxu0 0.0
    %5619 = vmatprep.subr.mxu0 0.0
    %5620 = vmatpush1.xpose.msra.mxu0 0.0
    %5621 = vmatprep.subr.mxu0 0.0
    %5622 = vmatpush1.xpose.msra.mxu0 0.0
    %5623 = vmatprep.subr.mxu0 0.0
    %5624 = vmatpush1.xpose.msra.mxu0 0.0
    %5625 = vmatprep.subr.mxu0 0.0
    %5626 = vmatpush1.xpose.msra.mxu0 0.0
    %5627 = vmatprep.subr.mxu0 0.0
    %5628 = vmatpush1.xpose.msra.mxu0 0.0
    %5629 = vmatprep.subr.mxu0 0.0
    %5630 = vmatpush1.xpose.msra.mxu0 0.0
    %5631 = vmatprep.subr.mxu0 0.0
    %5632 = vmatpush1.xpose.msra.mxu0 0.0
    %5633 = vmatprep.subr.mxu0 0.0
    %5634 = vmatpush1.xpose.msra.mxu0 0.0
    %5635 = vmatprep.subr.mxu0 0.0
    %5636 = vmatpush1.xpose.msra.mxu0 0.0
    %5637 = vmatprep.subr.mxu0 0.0
    %5638 = vmatpush1.xpose.msra.mxu0 0.0
    %5639 = vmatprep.subr.mxu0 0.0
    %5640 = vmatpush1.xpose.msra.mxu0 0.0
    %5641 = vmatprep.subr.mxu0 0.0
    %5642 = vmatpush1.xpose.msra.mxu0 0.0
    %5643 = vmatprep.mubr.f32.mxu0 0.0
    %v5644 = vand.u32 %v5421, 4294901760
    %v5645 = vsub.f32 %v5421, %v5644
    %5646 = vmatmul.mubr.f32.gmra.mrb[0].mxu0 %v5645
    %v5647 = vpop.f32.mrb[0].mxu0
    %v5648 = vadd.f32 %v5574, %v5647
    %v5649 = vpop.f32.mrb[0].mxu0
    %5650 = vdwg.mxu0
    %5651 = vmatprep.subr.mxu0 0.0
    %v5652 = vand.u32 %v5423, 4294901760
    %5653 = vmatpush1.xpose.msra.mxu0 %v5652
    %5654 = vmatprep.subr.mxu0 0.0
    %5655 = vmatpush1.xpose.msra.mxu0 0.0
    %5656 = vmatprep.subr.mxu0 0.0
    %5657 = vmatpush1.xpose.msra.mxu0 0.0
    %5658 = vmatprep.subr.mxu0 0.0
    %5659 = vmatpush1.xpose.msra.mxu0 0.0
    %5660 = vmatprep.subr.mxu0 0.0
    %5661 = vmatpush1.xpose.msra.mxu0 0.0
    %5662 = vmatprep.subr.mxu0 0.0
    %5663 = vmatpush1.xpose.msra.mxu0 0.0
    %5664 = vmatprep.subr.mxu0 0.0
    %5665 = vmatpush1.xpose.msra.mxu0 0.0
    %5666 = vmatprep.subr.mxu0 0.0
    %5667 = vmatpush1.xpose.msra.mxu0 0.0
    %5668 = vmatprep.subr.mxu0 0.0
    %5669 = vmatpush1.xpose.msra.mxu0 0.0
    %5670 = vmatprep.subr.mxu0 0.0
    %5671 = vmatpush1.xpose.msra.mxu0 0.0
    %5672 = vmatprep.subr.mxu0 0.0
    %5673 = vmatpush1.xpose.msra.mxu0 0.0
    %5674 = vmatprep.subr.mxu0 0.0
    %5675 = vmatpush1.xpose.msra.mxu0 0.0
    %5676 = vmatprep.subr.mxu0 0.0
    %5677 = vmatpush1.xpose.msra.mxu0 0.0
    %5678 = vmatprep.subr.mxu0 0.0
    %5679 = vmatpush1.xpose.msra.mxu0 0.0
    %5680 = vmatprep.subr.mxu0 0.0
    %5681 = vmatpush1.xpose.msra.mxu0 0.0
    %5682 = vmatprep.subr.mxu0 0.0
    %5683 = vmatpush1.xpose.msra.mxu0 0.0
    %5684 = vmatprep.subr.mxu0 0.0
    %5685 = vmatpush1.xpose.msra.mxu0 0.0
    %5686 = vmatprep.subr.mxu0 0.0
    %5687 = vmatpush1.xpose.msra.mxu0 0.0
    %5688 = vmatprep.subr.mxu0 0.0
    %5689 = vmatpush1.xpose.msra.mxu0 0.0
    %5690 = vmatprep.subr.mxu0 0.0
    %5691 = vmatpush1.xpose.msra.mxu0 0.0
    %5692 = vmatprep.subr.mxu0 0.0
    %5693 = vmatpush1.xpose.msra.mxu0 0.0
    %5694 = vmatprep.subr.mxu0 0.0
    %5695 = vmatpush1.xpose.msra.mxu0 0.0
    %5696 = vmatprep.subr.mxu0 0.0
    %5697 = vmatpush1.xpose.msra.mxu0 0.0
    %5698 = vmatprep.subr.mxu0 0.0
    %5699 = vmatpush1.xpose.msra.mxu0 0.0
    %5700 = vmatprep.subr.mxu0 0.0
    %5701 = vmatpush1.xpose.msra.mxu0 0.0
    %5702 = vmatprep.subr.mxu0 0.0
    %5703 = vmatpush1.xpose.msra.mxu0 0.0
    %5704 = vmatprep.subr.mxu0 0.0
    %5705 = vmatpush1.xpose.msra.mxu0 0.0
    %5706 = vmatprep.subr.mxu0 0.0
    %5707 = vmatpush1.xpose.msra.mxu0 0.0
    %5708 = vmatprep.subr.mxu0 0.0
    %5709 = vmatpush1.xpose.msra.mxu0 0.0
    %5710 = vmatprep.subr.mxu0 0.0
    %5711 = vmatpush1.xpose.msra.mxu0 0.0
    %5712 = vmatprep.subr.mxu0 0.0
    %5713 = vmatpush1.xpose.msra.mxu0 0.0
    %5714 = vmatprep.subr.mxu0 0.0
    %5715 = vmatpush1.xpose.msra.mxu0 0.0
    %5716 = vmatprep.mubr.f32.mxu0 0.0
    %v5717 = vand.u32 %v5421, 4294901760
    %v5718 = vsub.f32 %v5421, %v5717
    %v5719 = vand.u32 %v5718, 4294901760
    %5720 = vmatmul.mubr.f32.gmra.mrb[0].mxu0 %v5719
    %v5721 = vpop.f32.mrb[0].mxu0
    %v5722 = vadd.f32 %v5648, %v5721
    %v5723 = vpop.f32.mrb[0].mxu0
    %5724 = vdwg.mxu0
    %5725 = vmatprep.subr.mxu0 0.0
    %v5726 = vand.u32 %v5423, 4294901760
    %v5727 = vsub.f32 %v5423, %v5726
    %v5728 = vand.u32 %v5727, 4294901760
    %5729 = vmatpush1.xpose.msra.mxu0 %v5728
    %5730 = vmatprep.subr.mxu0 0.0
    %5731 = vmatpush1.xpose.msra.mxu0 0.0
    %5732 = vmatprep.subr.mxu0 0.0
    %5733 = vmatpush1.xpose.msra.mxu0 0.0
    %5734 = vmatprep.subr.mxu0 0.0
    %5735 = vmatpush1.xpose.msra.mxu0 0.0
    %5736 = vmatprep.subr.mxu0 0.0
    %5737 = vmatpush1.xpose.msra.mxu0 0.0
    %5738 = vmatprep.subr.mxu0 0.0
    %5739 = vmatpush1.xpose.msra.mxu0 0.0
    %5740 = vmatprep.subr.mxu0 0.0
    %5741 = vmatpush1.xpose.msra.mxu0 0.0
    %5742 = vmatprep.subr.mxu0 0.0
    %5743 = vmatpush1.xpose.msra.mxu0 0.0
    %5744 = vmatprep.subr.mxu0 0.0
    %5745 = vmatpush1.xpose.msra.mxu0 0.0
    %5746 = vmatprep.subr.mxu0 0.0
    %5747 = vmatpush1.xpose.msra.mxu0 0.0
    %5748 = vmatprep.subr.mxu0 0.0
    %5749 = vmatpush1.xpose.msra.mxu0 0.0
    %5750 = vmatprep.subr.mxu0 0.0
    %5751 = vmatpush1.xpose.msra.mxu0 0.0
    %5752 = vmatprep.subr.mxu0 0.0
    %5753 = vmatpush1.xpose.msra.mxu0 0.0
    %5754 = vmatprep.subr.mxu0 0.0
    %5755 = vmatpush1.xpose.msra.mxu0 0.0
    %5756 = vmatprep.subr.mxu0 0.0
    %5757 = vmatpush1.xpose.msra.mxu0 0.0
    %5758 = vmatprep.subr.mxu0 0.0
    %5759 = vmatpush1.xpose.msra.mxu0 0.0
    %5760 = vmatprep.subr.mxu0 0.0
    %5761 = vmatpush1.xpose.msra.mxu0 0.0
    %5762 = vmatprep.subr.mxu0 0.0
    %5763 = vmatpush1.xpose.msra.mxu0 0.0
    %5764 = vmatprep.subr.mxu0 0.0
    %5765 = vmatpush1.xpose.msra.mxu0 0.0
    %5766 = vmatprep.subr.mxu0 0.0
    %5767 = vmatpush1.xpose.msra.mxu0 0.0
    %5768 = vmatprep.subr.mxu0 0.0
    %5769 = vmatpush1.xpose.msra.mxu0 0.0
    %5770 = vmatprep.subr.mxu0 0.0
    %5771 = vmatpush1.xpose.msra.mxu0 0.0
    %5772 = vmatprep.subr.mxu0 0.0
    %5773 = vmatpush1.xpose.msra.mxu0 0.0
    %5774 = vmatprep.subr.mxu0 0.0
    %5775 = vmatpush1.xpose.msra.mxu0 0.0
    %5776 = vmatprep.subr.mxu0 0.0
    %5777 = vmatpush1.xpose.msra.mxu0 0.0
    %5778 = vmatprep.subr.mxu0 0.0
    %5779 = vmatpush1.xpose.msra.mxu0 0.0
    %5780 = vmatprep.subr.mxu0 0.0
    %5781 = vmatpush1.xpose.msra.mxu0 0.0
    %5782 = vmatprep.subr.mxu0 0.0
    %5783 = vmatpush1.xpose.msra.mxu0 0.0
    %5784 = vmatprep.subr.mxu0 0.0
    %5785 = vmatpush1.xpose.msra.mxu0 0.0
    %5786 = vmatprep.subr.mxu0 0.0
    %5787 = vmatpush1.xpose.msra.mxu0 0.0
    %5788 = vmatprep.subr.mxu0 0.0
    %5789 = vmatpush1.xpose.msra.mxu0 0.0
    %5790 = vmatprep.subr.mxu0 0.0
    %5791 = vmatpush1.xpose.msra.mxu0 0.0
    %5792 = vmatprep.mubr.f32.mxu0 0.0
    %v5793 = vand.u32 %v5421, 4294901760
    %5794 = vmatmul.mubr.f32.gmra.mrb[0].mxu0 %v5793
    %v5795 = vpop.f32.mrb[0].mxu0
    %v5796 = vadd.f32 %v5722, %v5795
    %v5797 = vpop.f32.mrb[0].mxu0
    %5798 = vdwg.mxu0
    %5799 = vmatprep.subr.mxu0 0.0
    %v5800 = vand.u32 %v5423, 4294901760
    %5801 = vmatpush1.xpose.msra.mxu0 %v5800
    %5802 = vmatprep.subr.mxu0 0.0
    %5803 = vmatpush1.xpose.msra.mxu0 0.0
    %5804 = vmatprep.subr.mxu0 0.0
    %5805 = vmatpush1.xpose.msra.mxu0 0.0
    %5806 = vmatprep.subr.mxu0 0.0
    %5807 = vmatpush1.xpose.msra.mxu0 0.0
    %5808 = vmatprep.subr.mxu0 0.0
    %5809 = vmatpush1.xpose.msra.mxu0 0.0
    %5810 = vmatprep.subr.mxu0 0.0
    %5811 = vmatpush1.xpose.msra.mxu0 0.0
    %5812 = vmatprep.subr.mxu0 0.0
    %5813 = vmatpush1.xpose.msra.mxu0 0.0
    %5814 = vmatprep.subr.mxu0 0.0
    %5815 = vmatpush1.xpose.msra.mxu0 0.0
    %5816 = vmatprep.subr.mxu0 0.0
    %5817 = vmatpush1.xpose.msra.mxu0 0.0
    %5818 = vmatprep.subr.mxu0 0.0
    %5819 = vmatpush1.xpose.msra.mxu0 0.0
    %5820 = vmatprep.subr.mxu0 0.0
    %5821 = vmatpush1.xpose.msra.mxu0 0.0
    %5822 = vmatprep.subr.mxu0 0.0
    %5823 = vmatpush1.xpose.msra.mxu0 0.0
    %5824 = vmatprep.subr.mxu0 0.0
    %5825 = vmatpush1.xpose.msra.mxu0 0.0
    %5826 = vmatprep.subr.mxu0 0.0
    %5827 = vmatpush1.xpose.msra.mxu0 0.0
    %5828 = vmatprep.subr.mxu0 0.0
    %5829 = vmatpush1.xpose.msra.mxu0 0.0
    %5830 = vmatprep.subr.mxu0 0.0
    %5831 = vmatpush1.xpose.msra.mxu0 0.0
    %5832 = vmatprep.subr.mxu0 0.0
    %5833 = vmatpush1.xpose.msra.mxu0 0.0
    %5834 = vmatprep.subr.mxu0 0.0
    %5835 = vmatpush1.xpose.msra.mxu0 0.0
    %5836 = vmatprep.subr.mxu0 0.0
    %5837 = vmatpush1.xpose.msra.mxu0 0.0
    %5838 = vmatprep.subr.mxu0 0.0
    %5839 = vmatpush1.xpose.msra.mxu0 0.0
    %5840 = vmatprep.subr.mxu0 0.0
    %5841 = vmatpush1.xpose.msra.mxu0 0.0
    %5842 = vmatprep.subr.mxu0 0.0
    %5843 = vmatpush1.xpose.msra.mxu0 0.0
    %5844 = vmatprep.subr.mxu0 0.0
    %5845 = vmatpush1.xpose.msra.mxu0 0.0
    %5846 = vmatprep.subr.mxu0 0.0
    %5847 = vmatpush1.xpose.msra.mxu0 0.0
    %5848 = vmatprep.subr.mxu0 0.0
    %5849 = vmatpush1.xpose.msra.mxu0 0.0
    %5850 = vmatprep.subr.mxu0 0.0
    %5851 = vmatpush1.xpose.msra.mxu0 0.0
    %5852 = vmatprep.subr.mxu0 0.0
    %5853 = vmatpush1.xpose.msra.mxu0 0.0
    %5854 = vmatprep.subr.mxu0 0.0
    %5855 = vmatpush1.xpose.msra.mxu0 0.0
    %5856 = vmatprep.subr.mxu0 0.0
    %5857 = vmatpush1.xpose.msra.mxu0 0.0
    %5858 = vmatprep.subr.mxu0 0.0
    %5859 = vmatpush1.xpose.msra.mxu0 0.0
    %5860 = vmatprep.subr.mxu0 0.0
    %5861 = vmatpush1.xpose.msra.mxu0 0.0
    %5862 = vmatprep.subr.mxu0 0.0
    %5863 = vmatpush1.xpose.msra.mxu0 0.0
    %5864 = vmatprep.mubr.f32.mxu0 0.0
    %v5865 = vand.u32 %v5421, 4294901760
    %5866 = vmatmul.mubr.f32.gmra.mrb[0].mxu0 %v5865
    %v5867 = vpop.f32.mrb[0].mxu0
    %v5868 = vadd.f32 %v5796, %v5867
    %v5869 = vpop.f32.mrb[0].mxu0
    %5870 = vdwg.mxu0
    %5871 = vrot.lane.b32.xlu0 %v658, 112
    %v5872 = vpop.permute.xlu0 %5871
    %5873 = vrot.lane.b32.xlu0 %v1203, 112
    %v5874 = vpop.permute.xlu0 %5873
    %v5875 = vsel %vm1751, %v5872, 0
    %v5877 = vsel %vm1751, %v5874, 0
    %5879 = vmatprep.subr.mxu0 0.0
    %v5880 = vand.u32 %v5877, 4294901760
    %5881 = vmatpush1.xpose.msra.mxu0 %v5880
    %5882 = vmatprep.subr.mxu0 0.0
    %5883 = vmatpush1.xpose.msra.mxu0 0.0
    %5884 = vmatprep.subr.mxu0 0.0
    %5885 = vmatpush1.xpose.msra.mxu0 0.0
    %5886 = vmatprep.subr.mxu0 0.0
    %5887 = vmatpush1.xpose.msra.mxu0 0.0
    %5888 = vmatprep.subr.mxu0 0.0
    %5889 = vmatpush1.xpose.msra.mxu0 0.0
    %5890 = vmatprep.subr.mxu0 0.0
    %5891 = vmatpush1.xpose.msra.mxu0 0.0
    %5892 = vmatprep.subr.mxu0 0.0
    %5893 = vmatpush1.xpose.msra.mxu0 0.0
    %5894 = vmatprep.subr.mxu0 0.0
    %5895 = vmatpush1.xpose.msra.mxu0 0.0
    %5896 = vmatprep.subr.mxu0 0.0
    %5897 = vmatpush1.xpose.msra.mxu0 0.0
    %5898 = vmatprep.subr.mxu0 0.0
    %5899 = vmatpush1.xpose.msra.mxu0 0.0
    %5900 = vmatprep.subr.mxu0 0.0
    %5901 = vmatpush1.xpose.msra.mxu0 0.0
    %5902 = vmatprep.subr.mxu0 0.0
    %5903 = vmatpush1.xpose.msra.mxu0 0.0
    %5904 = vmatprep.subr.mxu0 0.0
    %5905 = vmatpush1.xpose.msra.mxu0 0.0
    %5906 = vmatprep.subr.mxu0 0.0
    %5907 = vmatpush1.xpose.msra.mxu0 0.0
    %5908 = vmatprep.subr.mxu0 0.0
    %5909 = vmatpush1.xpose.msra.mxu0 0.0
    %5910 = vmatprep.subr.mxu0 0.0
    %5911 = vmatpush1.xpose.msra.mxu0 0.0
    %5912 = vmatprep.subr.mxu0 0.0
    %5913 = vmatpush1.xpose.msra.mxu0 0.0
    %5914 = vmatprep.subr.mxu0 0.0
    %5915 = vmatpush1.xpose.msra.mxu0 0.0
    %5916 = vmatprep.subr.mxu0 0.0
    %5917 = vmatpush1.xpose.msra.mxu0 0.0
    %5918 = vmatprep.subr.mxu0 0.0
    %5919 = vmatpush1.xpose.msra.mxu0 0.0
    %5920 = vmatprep.subr.mxu0 0.0
    %5921 = vmatpush1.xpose.msra.mxu0 0.0
    %5922 = vmatprep.subr.mxu0 0.0
    %5923 = vmatpush1.xpose.msra.mxu0 0.0
    %5924 = vmatprep.subr.mxu0 0.0
    %5925 = vmatpush1.xpose.msra.mxu0 0.0
    %5926 = vmatprep.subr.mxu0 0.0
    %5927 = vmatpush1.xpose.msra.mxu0 0.0
    %5928 = vmatprep.subr.mxu0 0.0
    %5929 = vmatpush1.xpose.msra.mxu0 0.0
    %5930 = vmatprep.subr.mxu0 0.0
    %5931 = vmatpush1.xpose.msra.mxu0 0.0
    %5932 = vmatprep.subr.mxu0 0.0
    %5933 = vmatpush1.xpose.msra.mxu0 0.0
    %5934 = vmatprep.subr.mxu0 0.0
    %5935 = vmatpush1.xpose.msra.mxu0 0.0
    %5936 = vmatprep.subr.mxu0 0.0
    %5937 = vmatpush1.xpose.msra.mxu0 0.0
    %5938 = vmatprep.subr.mxu0 0.0
    %5939 = vmatpush1.xpose.msra.mxu0 0.0
    %5940 = vmatprep.subr.mxu0 0.0
    %5941 = vmatpush1.xpose.msra.mxu0 0.0
    %5942 = vmatprep.subr.mxu0 0.0
    %5943 = vmatpush1.xpose.msra.mxu0 0.0
    %5944 = vmatprep.mubr.f32.mxu0 0.0
    %v5945 = vand.u32 %v5875, 4294901760
    %v5946 = vsub.f32 %v5875, %v5945
    %v5947 = vand.u32 %v5946, 4294901760
    %v5948 = vsub.f32 %v5946, %v5947
    %v5949 = vand.u32 %v5948, 4294901760
    %5950 = vmatmul.mubr.f32.gmra.mrb[0].mxu0 %v5949
    %v5951 = vpop.f32.mrb[0].mxu0
    %v5952 = vadd.f32 0.0, %v5951
    %v5953 = vpop.f32.mrb[0].mxu0
    %5954 = vdwg.mxu0
    %5955 = vmatprep.subr.mxu0 0.0
    %v5956 = vand.u32 %v5877, 4294901760
    %v5957 = vsub.f32 %v5877, %v5956
    %v5958 = vand.u32 %v5957, 4294901760
    %v5959 = vsub.f32 %v5957, %v5958
    %v5960 = vand.u32 %v5959, 4294901760
    %5961 = vmatpush1.xpose.msra.mxu0 %v5960
    %5962 = vmatprep.subr.mxu0 0.0
    %5963 = vmatpush1.xpose.msra.mxu0 0.0
    %5964 = vmatprep.subr.mxu0 0.0
    %5965 = vmatpush1.xpose.msra.mxu0 0.0
    %5966 = vmatprep.subr.mxu0 0.0
    %5967 = vmatpush1.xpose.msra.mxu0 0.0
    %5968 = vmatprep.subr.mxu0 0.0
    %5969 = vmatpush1.xpose.msra.mxu0 0.0
    %5970 = vmatprep.subr.mxu0 0.0
    %5971 = vmatpush1.xpose.msra.mxu0 0.0
    %5972 = vmatprep.subr.mxu0 0.0
    %5973 = vmatpush1.xpose.msra.mxu0 0.0
    %5974 = vmatprep.subr.mxu0 0.0
    %5975 = vmatpush1.xpose.msra.mxu0 0.0
    %5976 = vmatprep.subr.mxu0 0.0
    %5977 = vmatpush1.xpose.msra.mxu0 0.0
    %5978 = vmatprep.subr.mxu0 0.0
    %5979 = vmatpush1.xpose.msra.mxu0 0.0
    %5980 = vmatprep.subr.mxu0 0.0
    %5981 = vmatpush1.xpose.msra.mxu0 0.0
    %5982 = vmatprep.subr.mxu0 0.0
    %5983 = vmatpush1.xpose.msra.mxu0 0.0
    %5984 = vmatprep.subr.mxu0 0.0
    %5985 = vmatpush1.xpose.msra.mxu0 0.0
    %5986 = vmatprep.subr.mxu0 0.0
    %5987 = vmatpush1.xpose.msra.mxu0 0.0
    %5988 = vmatprep.subr.mxu0 0.0
    %5989 = vmatpush1.xpose.msra.mxu0 0.0
    %5990 = vmatprep.subr.mxu0 0.0
    %5991 = vmatpush1.xpose.msra.mxu0 0.0
    %5992 = vmatprep.subr.mxu0 0.0
    %5993 = vmatpush1.xpose.msra.mxu0 0.0
    %5994 = vmatprep.subr.mxu0 0.0
    %5995 = vmatpush1.xpose.msra.mxu0 0.0
    %5996 = vmatprep.subr.mxu0 0.0
    %5997 = vmatpush1.xpose.msra.mxu0 0.0
    %5998 = vmatprep.subr.mxu0 0.0
    %5999 = vmatpush1.xpose.msra.mxu0 0.0
    %6000 = vmatprep.subr.mxu0 0.0
    %6001 = vmatpush1.xpose.msra.mxu0 0.0
    %6002 = vmatprep.subr.mxu0 0.0
    %6003 = vmatpush1.xpose.msra.mxu0 0.0
    %6004 = vmatprep.subr.mxu0 0.0
    %6005 = vmatpush1.xpose.msra.mxu0 0.0
    %6006 = vmatprep.subr.mxu0 0.0
    %6007 = vmatpush1.xpose.msra.mxu0 0.0
    %6008 = vmatprep.subr.mxu0 0.0
    %6009 = vmatpush1.xpose.msra.mxu0 0.0
    %6010 = vmatprep.subr.mxu0 0.0
    %6011 = vmatpush1.xpose.msra.mxu0 0.0
    %6012 = vmatprep.subr.mxu0 0.0
    %6013 = vmatpush1.xpose.msra.mxu0 0.0
    %6014 = vmatprep.subr.mxu0 0.0
    %6015 = vmatpush1.xpose.msra.mxu0 0.0
    %6016 = vmatprep.subr.mxu0 0.0
    %6017 = vmatpush1.xpose.msra.mxu0 0.0
    %6018 = vmatprep.subr.mxu0 0.0
    %6019 = vmatpush1.xpose.msra.mxu0 0.0
    %6020 = vmatprep.subr.mxu0 0.0
    %6021 = vmatpush1.xpose.msra.mxu0 0.0
    %6022 = vmatprep.subr.mxu0 0.0
    %6023 = vmatpush1.xpose.msra.mxu0 0.0
    %6024 = vmatprep.mubr.f32.mxu0 0.0
    %v6025 = vand.u32 %v5875, 4294901760
    %6026 = vmatmul.mubr.f32.gmra.mrb[0].mxu0 %v6025
    %v6027 = vpop.f32.mrb[0].mxu0
    %v6028 = vadd.f32 %v5952, %v6027
    %v6029 = vpop.f32.mrb[0].mxu0
    %6030 = vdwg.mxu0
    %6031 = vmatprep.subr.mxu0 0.0
    %v6032 = vand.u32 %v5877, 4294901760
    %v6033 = vsub.f32 %v5877, %v6032
    %6034 = vmatpush1.xpose.msra.mxu0 %v6033
    %6035 = vmatprep.subr.mxu0 0.0
    %6036 = vmatpush1.xpose.msra.mxu0 0.0
    %6037 = vmatprep.subr.mxu0 0.0
    %6038 = vmatpush1.xpose.msra.mxu0 0.0
    %6039 = vmatprep.subr.mxu0 0.0
    %6040 = vmatpush1.xpose.msra.mxu0 0.0
    %6041 = vmatprep.subr.mxu0 0.0
    %6042 = vmatpush1.xpose.msra.mxu0 0.0
    %6043 = vmatprep.subr.mxu0 0.0
    %6044 = vmatpush1.xpose.msra.mxu0 0.0
    %6045 = vmatprep.subr.mxu0 0.0
    %6046 = vmatpush1.xpose.msra.mxu0 0.0
    %6047 = vmatprep.subr.mxu0 0.0
    %6048 = vmatpush1.xpose.msra.mxu0 0.0
    %6049 = vmatprep.subr.mxu0 0.0
    %6050 = vmatpush1.xpose.msra.mxu0 0.0
    %6051 = vmatprep.subr.mxu0 0.0
    %6052 = vmatpush1.xpose.msra.mxu0 0.0
    %6053 = vmatprep.subr.mxu0 0.0
    %6054 = vmatpush1.xpose.msra.mxu0 0.0
    %6055 = vmatprep.subr.mxu0 0.0
    %6056 = vmatpush1.xpose.msra.mxu0 0.0
    %6057 = vmatprep.subr.mxu0 0.0
    %6058 = vmatpush1.xpose.msra.mxu0 0.0
    %6059 = vmatprep.subr.mxu0 0.0
    %6060 = vmatpush1.xpose.msra.mxu0 0.0
    %6061 = vmatprep.subr.mxu0 0.0
    %6062 = vmatpush1.xpose.msra.mxu0 0.0
    %6063 = vmatprep.subr.mxu0 0.0
    %6064 = vmatpush1.xpose.msra.mxu0 0.0
    %6065 = vmatprep.subr.mxu0 0.0
    %6066 = vmatpush1.xpose.msra.mxu0 0.0
    %6067 = vmatprep.subr.mxu0 0.0
    %6068 = vmatpush1.xpose.msra.mxu0 0.0
    %6069 = vmatprep.subr.mxu0 0.0
    %6070 = vmatpush1.xpose.msra.mxu0 0.0
    %6071 = vmatprep.subr.mxu0 0.0
    %6072 = vmatpush1.xpose.msra.mxu0 0.0
    %6073 = vmatprep.subr.mxu0 0.0
    %6074 = vmatpush1.xpose.msra.mxu0 0.0
    %6075 = vmatprep.subr.mxu0 0.0
    %6076 = vmatpush1.xpose.msra.mxu0 0.0
    %6077 = vmatprep.subr.mxu0 0.0
    %6078 = vmatpush1.xpose.msra.mxu0 0.0
    %6079 = vmatprep.subr.mxu0 0.0
    %6080 = vmatpush1.xpose.msra.mxu0 0.0
    %6081 = vmatprep.subr.mxu0 0.0
    %6082 = vmatpush1.xpose.msra.mxu0 0.0
    %6083 = vmatprep.subr.mxu0 0.0
    %6084 = vmatpush1.xpose.msra.mxu0 0.0
    %6085 = vmatprep.subr.mxu0 0.0
    %6086 = vmatpush1.xpose.msra.mxu0 0.0
    %6087 = vmatprep.subr.mxu0 0.0
    %6088 = vmatpush1.xpose.msra.mxu0 0.0
    %6089 = vmatprep.subr.mxu0 0.0
    %6090 = vmatpush1.xpose.msra.mxu0 0.0
    %6091 = vmatprep.subr.mxu0 0.0
    %6092 = vmatpush1.xpose.msra.mxu0 0.0
    %6093 = vmatprep.subr.mxu0 0.0
    %6094 = vmatpush1.xpose.msra.mxu0 0.0
    %6095 = vmatprep.subr.mxu0 0.0
    %6096 = vmatpush1.xpose.msra.mxu0 0.0
    %6097 = vmatprep.mubr.f32.mxu0 0.0
    %v6098 = vand.u32 %v5875, 4294901760
    %v6099 = vsub.f32 %v5875, %v6098
    %6100 = vmatmul.mubr.f32.gmra.mrb[0].mxu0 %v6099
    %v6101 = vpop.f32.mrb[0].mxu0
    %v6102 = vadd.f32 %v6028, %v6101
    %v6103 = vpop.f32.mrb[0].mxu0
    %6104 = vdwg.mxu0
    %6105 = vmatprep.subr.mxu0 0.0
    %v6106 = vand.u32 %v5877, 4294901760
    %6107 = vmatpush1.xpose.msra.mxu0 %v6106
    %6108 = vmatprep.subr.mxu0 0.0
    %6109 = vmatpush1.xpose.msra.mxu0 0.0
    %6110 = vmatprep.subr.mxu0 0.0
    %6111 = vmatpush1.xpose.msra.mxu0 0.0
    %6112 = vmatprep.subr.mxu0 0.0
    %6113 = vmatpush1.xpose.msra.mxu0 0.0
    %6114 = vmatprep.subr.mxu0 0.0
    %6115 = vmatpush1.xpose.msra.mxu0 0.0
    %6116 = vmatprep.subr.mxu0 0.0
    %6117 = vmatpush1.xpose.msra.mxu0 0.0
    %6118 = vmatprep.subr.mxu0 0.0
    %6119 = vmatpush1.xpose.msra.mxu0 0.0
    %6120 = vmatprep.subr.mxu0 0.0
    %6121 = vmatpush1.xpose.msra.mxu0 0.0
    %6122 = vmatprep.subr.mxu0 0.0
    %6123 = vmatpush1.xpose.msra.mxu0 0.0
    %6124 = vmatprep.subr.mxu0 0.0
    %6125 = vmatpush1.xpose.msra.mxu0 0.0
    %6126 = vmatprep.subr.mxu0 0.0
    %6127 = vmatpush1.xpose.msra.mxu0 0.0
    %6128 = vmatprep.subr.mxu0 0.0
    %6129 = vmatpush1.xpose.msra.mxu0 0.0
    %6130 = vmatprep.subr.mxu0 0.0
    %6131 = vmatpush1.xpose.msra.mxu0 0.0
    %6132 = vmatprep.subr.mxu0 0.0
    %6133 = vmatpush1.xpose.msra.mxu0 0.0
    %6134 = vmatprep.subr.mxu0 0.0
    %6135 = vmatpush1.xpose.msra.mxu0 0.0
    %6136 = vmatprep.subr.mxu0 0.0
    %6137 = vmatpush1.xpose.msra.mxu0 0.0
    %6138 = vmatprep.subr.mxu0 0.0
    %6139 = vmatpush1.xpose.msra.mxu0 0.0
    %6140 = vmatprep.subr.mxu0 0.0
    %6141 = vmatpush1.xpose.msra.mxu0 0.0
    %6142 = vmatprep.subr.mxu0 0.0
    %6143 = vmatpush1.xpose.msra.mxu0 0.0
    %6144 = vmatprep.subr.mxu0 0.0
    %6145 = vmatpush1.xpose.msra.mxu0 0.0
    %6146 = vmatprep.subr.mxu0 0.0
    %6147 = vmatpush1.xpose.msra.mxu0 0.0
    %6148 = vmatprep.subr.mxu0 0.0
    %6149 = vmatpush1.xpose.msra.mxu0 0.0
    %6150 = vmatprep.subr.mxu0 0.0
    %6151 = vmatpush1.xpose.msra.mxu0 0.0
    %6152 = vmatprep.subr.mxu0 0.0
    %6153 = vmatpush1.xpose.msra.mxu0 0.0
    %6154 = vmatprep.subr.mxu0 0.0
    %6155 = vmatpush1.xpose.msra.mxu0 0.0
    %6156 = vmatprep.subr.mxu0 0.0
    %6157 = vmatpush1.xpose.msra.mxu0 0.0
    %6158 = vmatprep.subr.mxu0 0.0
    %6159 = vmatpush1.xpose.msra.mxu0 0.0
    %6160 = vmatprep.subr.mxu0 0.0
    %6161 = vmatpush1.xpose.msra.mxu0 0.0
    %6162 = vmatprep.subr.mxu0 0.0
    %6163 = vmatpush1.xpose.msra.mxu0 0.0
    %6164 = vmatprep.subr.mxu0 0.0
    %6165 = vmatpush1.xpose.msra.mxu0 0.0
    %6166 = vmatprep.subr.mxu0 0.0
    %6167 = vmatpush1.xpose.msra.mxu0 0.0
    %6168 = vmatprep.subr.mxu0 0.0
    %6169 = vmatpush1.xpose.msra.mxu0 0.0
    %6170 = vmatprep.mubr.f32.mxu0 0.0
    %v6171 = vand.u32 %v5875, 4294901760
    %v6172 = vsub.f32 %v5875, %v6171
    %v6173 = vand.u32 %v6172, 4294901760
    %6174 = vmatmul.mubr.f32.gmra.mrb[0].mxu0 %v6173
    %v6175 = vpop.f32.mrb[0].mxu0
    %v6176 = vadd.f32 %v6102, %v6175
    %v6177 = vpop.f32.mrb[0].mxu0
    %6178 = vdwg.mxu0
    %6179 = vmatprep.subr.mxu0 0.0
    %v6180 = vand.u32 %v5877, 4294901760
    %v6181 = vsub.f32 %v5877, %v6180
    %v6182 = vand.u32 %v6181, 4294901760
    %6183 = vmatpush1.xpose.msra.mxu0 %v6182
    %6184 = vmatprep.subr.mxu0 0.0
    %6185 = vmatpush1.xpose.msra.mxu0 0.0
    %6186 = vmatprep.subr.mxu0 0.0
    %6187 = vmatpush1.xpose.msra.mxu0 0.0
    %6188 = vmatprep.subr.mxu0 0.0
    %6189 = vmatpush1.xpose.msra.mxu0 0.0
    %6190 = vmatprep.subr.mxu0 0.0
    %6191 = vmatpush1.xpose.msra.mxu0 0.0
    %6192 = vmatprep.subr.mxu0 0.0
    %6193 = vmatpush1.xpose.msra.mxu0 0.0
    %6194 = vmatprep.subr.mxu0 0.0
    %6195 = vmatpush1.xpose.msra.mxu0 0.0
    %6196 = vmatprep.subr.mxu0 0.0
    %6197 = vmatpush1.xpose.msra.mxu0 0.0
    %6198 = vmatprep.subr.mxu0 0.0
    %6199 = vmatpush1.xpose.msra.mxu0 0.0
    %6200 = vmatprep.subr.mxu0 0.0
    %6201 = vmatpush1.xpose.msra.mxu0 0.0
    %6202 = vmatprep.subr.mxu0 0.0
    %6203 = vmatpush1.xpose.msra.mxu0 0.0
    %6204 = vmatprep.subr.mxu0 0.0
    %6205 = vmatpush1.xpose.msra.mxu0 0.0
    %6206 = vmatprep.subr.mxu0 0.0
    %6207 = vmatpush1.xpose.msra.mxu0 0.0
    %6208 = vmatprep.subr.mxu0 0.0
    %6209 = vmatpush1.xpose.msra.mxu0 0.0
    %6210 = vmatprep.subr.mxu0 0.0
    %6211 = vmatpush1.xpose.msra.mxu0 0.0
    %6212 = vmatprep.subr.mxu0 0.0
    %6213 = vmatpush1.xpose.msra.mxu0 0.0
    %6214 = vmatprep.subr.mxu0 0.0
    %6215 = vmatpush1.xpose.msra.mxu0 0.0
    %6216 = vmatprep.subr.mxu0 0.0
    %6217 = vmatpush1.xpose.msra.mxu0 0.0
    %6218 = vmatprep.subr.mxu0 0.0
    %6219 = vmatpush1.xpose.msra.mxu0 0.0
    %6220 = vmatprep.subr.mxu0 0.0
    %6221 = vmatpush1.xpose.msra.mxu0 0.0
    %6222 = vmatprep.subr.mxu0 0.0
    %6223 = vmatpush1.xpose.msra.mxu0 0.0
    %6224 = vmatprep.subr.mxu0 0.0
    %6225 = vmatpush1.xpose.msra.mxu0 0.0
    %6226 = vmatprep.subr.mxu0 0.0
    %6227 = vmatpush1.xpose.msra.mxu0 0.0
    %6228 = vmatprep.subr.mxu0 0.0
    %6229 = vmatpush1.xpose.msra.mxu0 0.0
    %6230 = vmatprep.subr.mxu0 0.0
    %6231 = vmatpush1.xpose.msra.mxu0 0.0
    %6232 = vmatprep.subr.mxu0 0.0
    %6233 = vmatpush1.xpose.msra.mxu0 0.0
    %6234 = vmatprep.subr.mxu0 0.0
    %6235 = vmatpush1.xpose.msra.mxu0 0.0
    %6236 = vmatprep.subr.mxu0 0.0
    %6237 = vmatpush1.xpose.msra.mxu0 0.0
    %6238 = vmatprep.subr.mxu0 0.0
    %6239 = vmatpush1.xpose.msra.mxu0 0.0
    %6240 = vmatprep.subr.mxu0 0.0
    %6241 = vmatpush1.xpose.msra.mxu0 0.0
    %6242 = vmatprep.subr.mxu0 0.0
    %6243 = vmatpush1.xpose.msra.mxu0 0.0
    %6244 = vmatprep.subr.mxu0 0.0
    %6245 = vmatpush1.xpose.msra.mxu0 0.0
    %6246 = vmatprep.mubr.f32.mxu0 0.0
    %v6247 = vand.u32 %v5875, 4294901760
    %6248 = vmatmul.mubr.f32.gmra.mrb[0].mxu0 %v6247
    %v6249 = vpop.f32.mrb[0].mxu0
    %v6250 = vadd.f32 %v6176, %v6249
    %v6251 = vpop.f32.mrb[0].mxu0
    %6252 = vdwg.mxu0
    %6253 = vmatprep.subr.mxu0 0.0
    %v6254 = vand.u32 %v5877, 4294901760
    %6255 = vmatpush1.xpose.msra.mxu0 %v6254
    %6256 = vmatprep.subr.mxu0 0.0
    %6257 = vmatpush1.xpose.msra.mxu0 0.0
    %6258 = vmatprep.subr.mxu0 0.0
    %6259 = vmatpush1.xpose.msra.mxu0 0.0
    %6260 = vmatprep.subr.mxu0 0.0
    %6261 = vmatpush1.xpose.msra.mxu0 0.0
    %6262 = vmatprep.subr.mxu0 0.0
    %6263 = vmatpush1.xpose.msra.mxu0 0.0
    %6264 = vmatprep.subr.mxu0 0.0
    %6265 = vmatpush1.xpose.msra.mxu0 0.0
    %6266 = vmatprep.subr.mxu0 0.0
    %6267 = vmatpush1.xpose.msra.mxu0 0.0
    %6268 = vmatprep.subr.mxu0 0.0
    %6269 = vmatpush1.xpose.msra.mxu0 0.0
    %6270 = vmatprep.subr.mxu0 0.0
    %6271 = vmatpush1.xpose.msra.mxu0 0.0
    %6272 = vmatprep.subr.mxu0 0.0
    %6273 = vmatpush1.xpose.msra.mxu0 0.0
    %6274 = vmatprep.subr.mxu0 0.0
    %6275 = vmatpush1.xpose.msra.mxu0 0.0
    %6276 = vmatprep.subr.mxu0 0.0
    %6277 = vmatpush1.xpose.msra.mxu0 0.0
    %6278 = vmatprep.subr.mxu0 0.0
    %6279 = vmatpush1.xpose.msra.mxu0 0.0
    %6280 = vmatprep.subr.mxu0 0.0
    %6281 = vmatpush1.xpose.msra.mxu0 0.0
    %6282 = vmatprep.subr.mxu0 0.0
    %6283 = vmatpush1.xpose.msra.mxu0 0.0
    %6284 = vmatprep.subr.mxu0 0.0
    %6285 = vmatpush1.xpose.msra.mxu0 0.0
    %6286 = vmatprep.subr.mxu0 0.0
    %6287 = vmatpush1.xpose.msra.mxu0 0.0
    %6288 = vmatprep.subr.mxu0 0.0
    %6289 = vmatpush1.xpose.msra.mxu0 0.0
    %6290 = vmatprep.subr.mxu0 0.0
    %6291 = vmatpush1.xpose.msra.mxu0 0.0
    %6292 = vmatprep.subr.mxu0 0.0
    %6293 = vmatpush1.xpose.msra.mxu0 0.0
    %6294 = vmatprep.subr.mxu0 0.0
    %6295 = vmatpush1.xpose.msra.mxu0 0.0
    %6296 = vmatprep.subr.mxu0 0.0
    %6297 = vmatpush1.xpose.msra.mxu0 0.0
    %6298 = vmatprep.subr.mxu0 0.0
    %6299 = vmatpush1.xpose.msra.mxu0 0.0
    %6300 = vmatprep.subr.mxu0 0.0
    %6301 = vmatpush1.xpose.msra.mxu0 0.0
    %6302 = vmatprep.subr.mxu0 0.0
    %6303 = vmatpush1.xpose.msra.mxu0 0.0
    %6304 = vmatprep.subr.mxu0 0.0
    %6305 = vmatpush1.xpose.msra.mxu0 0.0
    %6306 = vmatprep.subr.mxu0 0.0
    %6307 = vmatpush1.xpose.msra.mxu0 0.0
    %6308 = vmatprep.subr.mxu0 0.0
    %6309 = vmatpush1.xpose.msra.mxu0 0.0
    %6310 = vmatprep.subr.mxu0 0.0
    %6311 = vmatpush1.xpose.msra.mxu0 0.0
    %6312 = vmatprep.subr.mxu0 0.0
    %6313 = vmatpush1.xpose.msra.mxu0 0.0
    %6314 = vmatprep.subr.mxu0 0.0
    %6315 = vmatpush1.xpose.msra.mxu0 0.0
    %6316 = vmatprep.subr.mxu0 0.0
    %6317 = vmatpush1.xpose.msra.mxu0 0.0
    %6318 = vmatprep.mubr.f32.mxu0 0.0
    %v6319 = vand.u32 %v5875, 4294901760
    %6320 = vmatmul.mubr.f32.gmra.mrb[0].mxu0 %v6319
    %v6321 = vpop.f32.mrb[0].mxu0
    %v6322 = vadd.f32 %v6250, %v6321
    %v6323 = vpop.f32.mrb[0].mxu0
    %6324 = vdwg.mxu0
    %v6325 = vsel %vm1751, %v5868, -inf
    %6326 = vmax.xlane.f32.xlu0 %v6325
    %v6327 = vpop.xlane.xlu0 %6326
    %v6328 = vsel %vm1751, %v6322, -inf
    %6329 = vmax.xlane.f32.xlu0 %v6328
    %v6330 = vpop.xlane.xlu0 %6329
    %v6331 = vsub.f32 %v5868, %v6327
    %v6332 = vsub.f32 %v6322, %v6330
    %v6333 = vmul.f32 %v6331, 1.442695
    %v6334 = vpow.pop %v6333
    %v6335 = vmul.f32 %v6332, 1.442695
    %v6336 = vpow.pop %v6335
    %v6337 = vsel %vm1751, %v6334, 0.0
    %6338 = vadd.xlane.f32.xlu0 %v6337
    %v6339 = vpop.xlane.xlu0 %6338
    %v6340 = vsel %vm1751, %v6336, 0.0
    %6341 = vadd.xlane.f32.xlu0 %v6340
    %v6342 = vpop.xlane.xlu0 %6341
    %v6343 = vrcp.pop %v6339
    %v6344 = vrcp.pop %v6342
    %v6345 = vmul.f32 %v6334, %v6343
    %v6346 = vmul.f32 %v6336, %v6344
    %s6347 = scalar_lea.vmem [#allocation14], 16
    %6348 = vst.msk [vmem:[%s6347] sm:$0xff] %vm1751, %v6345
    %6349 = vst.msk [vmem:[%s6347 + $0x20] sm:$0xff] %vm1751, %v6346
    %6350 = vrot.lane.b32.xlu0 %v1742, 112
    %v6351 = vpop.permute.xlu0 %6350
    %v6354 = vsel %vm1751, %v6345, 0
    %6356 = vmatprep.subr.mxu0 0.0
    %v6357 = vand.u32 %v6351, 4294901760
    %6358 = vmatpush1.msra.mxu0 %v6357
    %6359 = vmatprep.subr.mxu0 0.0
    %6360 = vmatpush1.msra.mxu0 0.0
    %6361 = vmatprep.subr.mxu0 0.0
    %6362 = vmatpush1.msra.mxu0 0.0
    %6363 = vmatprep.subr.mxu0 0.0
    %6364 = vmatpush1.msra.mxu0 0.0
    %6365 = vmatprep.subr.mxu0 0.0
    %6366 = vmatpush1.msra.mxu0 0.0
    %6367 = vmatprep.subr.mxu0 0.0
    %6368 = vmatpush1.msra.mxu0 0.0
    %6369 = vmatprep.subr.mxu0 0.0
    %6370 = vmatpush1.msra.mxu0 0.0
    %6371 = vmatprep.subr.mxu0 0.0
    %6372 = vmatpush1.msra.mxu0 0.0
    %6373 = vmatprep.subr.mxu0 0.0
    %6374 = vmatpush1.msra.mxu0 0.0
    %6375 = vmatprep.subr.mxu0 0.0
    %6376 = vmatpush1.msra.mxu0 0.0
    %6377 = vmatprep.subr.mxu0 0.0
    %6378 = vmatpush1.msra.mxu0 0.0
    %6379 = vmatprep.subr.mxu0 0.0
    %6380 = vmatpush1.msra.mxu0 0.0
    %6381 = vmatprep.subr.mxu0 0.0
    %6382 = vmatpush1.msra.mxu0 0.0
    %6383 = vmatprep.subr.mxu0 0.0
    %6384 = vmatpush1.msra.mxu0 0.0
    %6385 = vmatprep.subr.mxu0 0.0
    %6386 = vmatpush1.msra.mxu0 0.0
    %6387 = vmatprep.subr.mxu0 0.0
    %6388 = vmatpush1.msra.mxu0 0.0
    %6389 = vmatprep.subr.mxu0 0.0
    %6390 = vmatpush1.msra.mxu0 0.0
    %6391 = vmatprep.subr.mxu0 0.0
    %6392 = vmatpush1.msra.mxu0 0.0
    %6393 = vmatprep.subr.mxu0 0.0
    %6394 = vmatpush1.msra.mxu0 0.0
    %6395 = vmatprep.subr.mxu0 0.0
    %6396 = vmatpush1.msra.mxu0 0.0
    %6397 = vmatprep.subr.mxu0 0.0
    %6398 = vmatpush1.msra.mxu0 0.0
    %6399 = vmatprep.subr.mxu0 0.0
    %6400 = vmatpush1.msra.mxu0 0.0
    %6401 = vmatprep.subr.mxu0 0.0
    %6402 = vmatpush1.msra.mxu0 0.0
    %6403 = vmatprep.subr.mxu0 0.0
    %6404 = vmatpush1.msra.mxu0 0.0
    %6405 = vmatprep.subr.mxu0 0.0
    %6406 = vmatpush1.msra.mxu0 0.0
    %6407 = vmatprep.subr.mxu0 0.0
    %6408 = vmatpush1.msra.mxu0 0.0
    %6409 = vmatprep.subr.mxu0 0.0
    %6410 = vmatpush1.msra.mxu0 0.0
    %6411 = vmatprep.subr.mxu0 0.0
    %6412 = vmatpush1.msra.mxu0 0.0
    %6413 = vmatprep.subr.mxu0 0.0
    %6414 = vmatpush1.msra.mxu0 0.0
    %6415 = vmatprep.subr.mxu0 0.0
    %6416 = vmatpush1.msra.mxu0 0.0
    %6417 = vmatprep.subr.mxu0 0.0
    %6418 = vmatpush1.msra.mxu0 0.0
    %6419 = vmatprep.subr.mxu0 0.0
    %6420 = vmatpush1.msra.mxu0 0.0
    %6421 = vmatprep.mubr.f32.mxu0 0.0
    %v6422 = vand.u32 %v6354, 4294901760
    %v6423 = vsub.f32 %v6354, %v6422
    %v6424 = vand.u32 %v6423, 4294901760
    %v6425 = vsub.f32 %v6423, %v6424
    %v6426 = vand.u32 %v6425, 4294901760
    %6427 = vmatmul.mubr.f32.gmra.mrb[0].mxu0 %v6426
    %v6428 = vpop.f32.mrb[0].mxu0
    %v6429 = vadd.f32 0.0, %v6428
    %v6430 = vpop.f32.mrb[0].mxu0
    %6431 = vdwg.mxu0
    %6432 = vmatprep.subr.mxu0 0.0
    %v6433 = vand.u32 %v6351, 4294901760
    %v6434 = vsub.f32 %v6351, %v6433
    %v6435 = vand.u32 %v6434, 4294901760
    %v6436 = vsub.f32 %v6434, %v6435
    %v6437 = vand.u32 %v6436, 4294901760
    %6438 = vmatpush1.msra.mxu0 %v6437
    %6439 = vmatprep.subr.mxu0 0.0
    %6440 = vmatpush1.msra.mxu0 0.0
    %6441 = vmatprep.subr.mxu0 0.0
    %6442 = vmatpush1.msra.mxu0 0.0
    %6443 = vmatprep.subr.mxu0 0.0
    %6444 = vmatpush1.msra.mxu0 0.0
    %6445 = vmatprep.subr.mxu0 0.0
    %6446 = vmatpush1.msra.mxu0 0.0
    %6447 = vmatprep.subr.mxu0 0.0
    %6448 = vmatpush1.msra.mxu0 0.0
    %6449 = vmatprep.subr.mxu0 0.0
    %6450 = vmatpush1.msra.mxu0 0.0
    %6451 = vmatprep.subr.mxu0 0.0
    %6452 = vmatpush1.msra.mxu0 0.0
    %6453 = vmatprep.subr.mxu0 0.0
    %6454 = vmatpush1.msra.mxu0 0.0
    %6455 = vmatprep.subr.mxu0 0.0
    %6456 = vmatpush1.msra.mxu0 0.0
    %6457 = vmatprep.subr.mxu0 0.0
    %6458 = vmatpush1.msra.mxu0 0.0
    %6459 = vmatprep.subr.mxu0 0.0
    %6460 = vmatpush1.msra.mxu0 0.0
    %6461 = vmatprep.subr.mxu0 0.0
    %6462 = vmatpush1.msra.mxu0 0.0
    %6463 = vmatprep.subr.mxu0 0.0
    %6464 = vmatpush1.msra.mxu0 0.0
    %6465 = vmatprep.subr.mxu0 0.0
    %6466 = vmatpush1.msra.mxu0 0.0
    %6467 = vmatprep.subr.mxu0 0.0
    %6468 = vmatpush1.msra.mxu0 0.0
    %6469 = vmatprep.subr.mxu0 0.0
    %6470 = vmatpush1.msra.mxu0 0.0
    %6471 = vmatprep.subr.mxu0 0.0
    %6472 = vmatpush1.msra.mxu0 0.0
    %6473 = vmatprep.subr.mxu0 0.0
    %6474 = vmatpush1.msra.mxu0 0.0
    %6475 = vmatprep.subr.mxu0 0.0
    %6476 = vmatpush1.msra.mxu0 0.0
    %6477 = vmatprep.subr.mxu0 0.0
    %6478 = vmatpush1.msra.mxu0 0.0
    %6479 = vmatprep.subr.mxu0 0.0
    %6480 = vmatpush1.msra.mxu0 0.0
    %6481 = vmatprep.subr.mxu0 0.0
    %6482 = vmatpush1.msra.mxu0 0.0
    %6483 = vmatprep.subr.mxu0 0.0
    %6484 = vmatpush1.msra.mxu0 0.0
    %6485 = vmatprep.subr.mxu0 0.0
    %6486 = vmatpush1.msra.mxu0 0.0
    %6487 = vmatprep.subr.mxu0 0.0
    %6488 = vmatpush1.msra.mxu0 0.0
    %6489 = vmatprep.subr.mxu0 0.0
    %6490 = vmatpush1.msra.mxu0 0.0
    %6491 = vmatprep.subr.mxu0 0.0
    %6492 = vmatpush1.msra.mxu0 0.0
    %6493 = vmatprep.subr.mxu0 0.0
    %6494 = vmatpush1.msra.mxu0 0.0
    %6495 = vmatprep.subr.mxu0 0.0
    %6496 = vmatpush1.msra.mxu0 0.0
    %6497 = vmatprep.subr.mxu0 0.0
    %6498 = vmatpush1.msra.mxu0 0.0
    %6499 = vmatprep.subr.mxu0 0.0
    %6500 = vmatpush1.msra.mxu0 0.0
    %6501 = vmatprep.mubr.f32.mxu0 0.0
    %v6502 = vand.u32 %v6354, 4294901760
    %6503 = vmatmul.mubr.f32.gmra.mrb[0].mxu0 %v6502
    %v6504 = vpop.f32.mrb[0].mxu0
    %v6505 = vadd.f32 %v6429, %v6504
    %v6506 = vpop.f32.mrb[0].mxu0
    %6507 = vdwg.mxu0
    %6508 = vmatprep.subr.mxu0 0.0
    %v6509 = vand.u32 %v6351, 4294901760
    %v6510 = vsub.f32 %v6351, %v6509
    %6511 = vmatpush1.msra.mxu0 %v6510
    %6512 = vmatprep.subr.mxu0 0.0
    %6513 = vmatpush1.msra.mxu0 0.0
    %6514 = vmatprep.subr.mxu0 0.0
    %6515 = vmatpush1.msra.mxu0 0.0
    %6516 = vmatprep.subr.mxu0 0.0
    %6517 = vmatpush1.msra.mxu0 0.0
    %6518 = vmatprep.subr.mxu0 0.0
    %6519 = vmatpush1.msra.mxu0 0.0
    %6520 = vmatprep.subr.mxu0 0.0
    %6521 = vmatpush1.msra.mxu0 0.0
    %6522 = vmatprep.subr.mxu0 0.0
    %6523 = vmatpush1.msra.mxu0 0.0
    %6524 = vmatprep.subr.mxu0 0.0
    %6525 = vmatpush1.msra.mxu0 0.0
    %6526 = vmatprep.subr.mxu0 0.0
    %6527 = vmatpush1.msra.mxu0 0.0
    %6528 = vmatprep.subr.mxu0 0.0
    %6529 = vmatpush1.msra.mxu0 0.0
    %6530 = vmatprep.subr.mxu0 0.0
    %6531 = vmatpush1.msra.mxu0 0.0
    %6532 = vmatprep.subr.mxu0 0.0
    %6533 = vmatpush1.msra.mxu0 0.0
    %6534 = vmatprep.subr.mxu0 0.0
    %6535 = vmatpush1.msra.mxu0 0.0
    %6536 = vmatprep.subr.mxu0 0.0
    %6537 = vmatpush1.msra.mxu0 0.0
    %6538 = vmatprep.subr.mxu0 0.0
    %6539 = vmatpush1.msra.mxu0 0.0
    %6540 = vmatprep.subr.mxu0 0.0
    %6541 = vmatpush1.msra.mxu0 0.0
    %6542 = vmatprep.subr.mxu0 0.0
    %6543 = vmatpush1.msra.mxu0 0.0
    %6544 = vmatprep.subr.mxu0 0.0
    %6545 = vmatpush1.msra.mxu0 0.0
    %6546 = vmatprep.subr.mxu0 0.0
    %6547 = vmatpush1.msra.mxu0 0.0
    %6548 = vmatprep.subr.mxu0 0.0
    %6549 = vmatpush1.msra.mxu0 0.0
    %6550 = vmatprep.subr.mxu0 0.0
    %6551 = vmatpush1.msra.mxu0 0.0
    %6552 = vmatprep.subr.mxu0 0.0
    %6553 = vmatpush1.msra.mxu0 0.0
    %6554 = vmatprep.subr.mxu0 0.0
    %6555 = vmatpush1.msra.mxu0 0.0
    %6556 = vmatprep.subr.mxu0 0.0
    %6557 = vmatpush1.msra.mxu0 0.0
    %6558 = vmatprep.subr.mxu0 0.0
    %6559 = vmatpush1.msra.mxu0 0.0
    %6560 = vmatprep.subr.mxu0 0.0
    %6561 = vmatpush1.msra.mxu0 0.0
    %6562 = vmatprep.subr.mxu0 0.0
    %6563 = vmatpush1.msra.mxu0 0.0
    %6564 = vmatprep.subr.mxu0 0.0
    %6565 = vmatpush1.msra.mxu0 0.0
    %6566 = vmatprep.subr.mxu0 0.0
    %6567 = vmatpush1.msra.mxu0 0.0
    %6568 = vmatprep.subr.mxu0 0.0
    %6569 = vmatpush1.msra.mxu0 0.0
    %6570 = vmatprep.subr.mxu0 0.0
    %6571 = vmatpush1.msra.mxu0 0.0
    %6572 = vmatprep.subr.mxu0 0.0
    %6573 = vmatpush1.msra.mxu0 0.0
    %6574 = vmatprep.mubr.f32.mxu0 0.0
    %v6575 = vand.u32 %v6354, 4294901760
    %v6576 = vsub.f32 %v6354, %v6575
    %6577 = vmatmul.mubr.f32.gmra.mrb[0].mxu0 %v6576
    %v6578 = vpop.f32.mrb[0].mxu0
    %v6579 = vadd.f32 %v6505, %v6578
    %v6580 = vpop.f32.mrb[0].mxu0
    %6581 = vdwg.mxu0
    %6582 = vmatprep.subr.mxu0 0.0
    %v6583 = vand.u32 %v6351, 4294901760
    %6584 = vmatpush1.msra.mxu0 %v6583
    %6585 = vmatprep.subr.mxu0 0.0
    %6586 = vmatpush1.msra.mxu0 0.0
    %6587 = vmatprep.subr.mxu0 0.0
    %6588 = vmatpush1.msra.mxu0 0.0
    %6589 = vmatprep.subr.mxu0 0.0
    %6590 = vmatpush1.msra.mxu0 0.0
    %6591 = vmatprep.subr.mxu0 0.0
    %6592 = vmatpush1.msra.mxu0 0.0
    %6593 = vmatprep.subr.mxu0 0.0
    %6594 = vmatpush1.msra.mxu0 0.0
    %6595 = vmatprep.subr.mxu0 0.0
    %6596 = vmatpush1.msra.mxu0 0.0
    %6597 = vmatprep.subr.mxu0 0.0
    %6598 = vmatpush1.msra.mxu0 0.0
    %6599 = vmatprep.subr.mxu0 0.0
    %6600 = vmatpush1.msra.mxu0 0.0
    %6601 = vmatprep.subr.mxu0 0.0
    %6602 = vmatpush1.msra.mxu0 0.0
    %6603 = vmatprep.subr.mxu0 0.0
    %6604 = vmatpush1.msra.mxu0 0.0
    %6605 = vmatprep.subr.mxu0 0.0
    %6606 = vmatpush1.msra.mxu0 0.0
    %6607 = vmatprep.subr.mxu0 0.0
    %6608 = vmatpush1.msra.mxu0 0.0
    %6609 = vmatprep.subr.mxu0 0.0
    %6610 = vmatpush1.msra.mxu0 0.0
    %6611 = vmatprep.subr.mxu0 0.0
    %6612 = vmatpush1.msra.mxu0 0.0
    %6613 = vmatprep.subr.mxu0 0.0
    %6614 = vmatpush1.msra.mxu0 0.0
    %6615 = vmatprep.subr.mxu0 0.0
    %6616 = vmatpush1.msra.mxu0 0.0
    %6617 = vmatprep.subr.mxu0 0.0
    %6618 = vmatpush1.msra.mxu0 0.0
    %6619 = vmatprep.subr.mxu0 0.0
    %6620 = vmatpush1.msra.mxu0 0.0
    %6621 = vmatprep.subr.mxu0 0.0
    %6622 = vmatpush1.msra.mxu0 0.0
    %6623 = vmatprep.subr.mxu0 0.0
    %6624 = vmatpush1.msra.mxu0 0.0
    %6625 = vmatprep.subr.mxu0 0.0
    %6626 = vmatpush1.msra.mxu0 0.0
    %6627 = vmatprep.subr.mxu0 0.0
    %6628 = vmatpush1.msra.mxu0 0.0
    %6629 = vmatprep.subr.mxu0 0.0
    %6630 = vmatpush1.msra.mxu0 0.0
    %6631 = vmatprep.subr.mxu0 0.0
    %6632 = vmatpush1.msra.mxu0 0.0
    %6633 = vmatprep.subr.mxu0 0.0
    %6634 = vmatpush1.msra.mxu0 0.0
    %6635 = vmatprep.subr.mxu0 0.0
    %6636 = vmatpush1.msra.mxu0 0.0
    %6637 = vmatprep.subr.mxu0 0.0
    %6638 = vmatpush1.msra.mxu0 0.0
    %6639 = vmatprep.subr.mxu0 0.0
    %6640 = vmatpush1.msra.mxu0 0.0
    %6641 = vmatprep.subr.mxu0 0.0
    %6642 = vmatpush1.msra.mxu0 0.0
    %6643 = vmatprep.subr.mxu0 0.0
    %6644 = vmatpush1.msra.mxu0 0.0
    %6645 = vmatprep.subr.mxu0 0.0
    %6646 = vmatpush1.msra.mxu0 0.0
    %6647 = vmatprep.mubr.f32.mxu0 0.0
    %v6648 = vand.u32 %v6354, 4294901760
    %v6649 = vsub.f32 %v6354, %v6648
    %v6650 = vand.u32 %v6649, 4294901760
    %6651 = vmatmul.mubr.f32.gmra.mrb[0].mxu0 %v6650
    %v6652 = vpop.f32.mrb[0].mxu0
    %v6653 = vadd.f32 %v6579, %v6652
    %v6654 = vpop.f32.mrb[0].mxu0
    %6655 = vdwg.mxu0
    %6656 = vmatprep.subr.mxu0 0.0
    %v6657 = vand.u32 %v6351, 4294901760
    %v6658 = vsub.f32 %v6351, %v6657
    %v6659 = vand.u32 %v6658, 4294901760
    %6660 = vmatpush1.msra.mxu0 %v6659
    %6661 = vmatprep.subr.mxu0 0.0
    %6662 = vmatpush1.msra.mxu0 0.0
    %6663 = vmatprep.subr.mxu0 0.0
    %6664 = vmatpush1.msra.mxu0 0.0
    %6665 = vmatprep.subr.mxu0 0.0
    %6666 = vmatpush1.msra.mxu0 0.0
    %6667 = vmatprep.subr.mxu0 0.0
    %6668 = vmatpush1.msra.mxu0 0.0
    %6669 = vmatprep.subr.mxu0 0.0
    %6670 = vmatpush1.msra.mxu0 0.0
    %6671 = vmatprep.subr.mxu0 0.0
    %6672 = vmatpush1.msra.mxu0 0.0
    %6673 = vmatprep.subr.mxu0 0.0
    %6674 = vmatpush1.msra.mxu0 0.0
    %6675 = vmatprep.subr.mxu0 0.0
    %6676 = vmatpush1.msra.mxu0 0.0
    %6677 = vmatprep.subr.mxu0 0.0
    %6678 = vmatpush1.msra.mxu0 0.0
    %6679 = vmatprep.subr.mxu0 0.0
    %6680 = vmatpush1.msra.mxu0 0.0
    %6681 = vmatprep.subr.mxu0 0.0
    %6682 = vmatpush1.msra.mxu0 0.0
    %6683 = vmatprep.subr.mxu0 0.0
    %6684 = vmatpush1.msra.mxu0 0.0
    %6685 = vmatprep.subr.mxu0 0.0
    %6686 = vmatpush1.msra.mxu0 0.0
    %6687 = vmatprep.subr.mxu0 0.0
    %6688 = vmatpush1.msra.mxu0 0.0
    %6689 = vmatprep.subr.mxu0 0.0
    %6690 = vmatpush1.msra.mxu0 0.0
    %6691 = vmatprep.subr.mxu0 0.0
    %6692 = vmatpush1.msra.mxu0 0.0
    %6693 = vmatprep.subr.mxu0 0.0
    %6694 = vmatpush1.msra.mxu0 0.0
    %6695 = vmatprep.subr.mxu0 0.0
    %6696 = vmatpush1.msra.mxu0 0.0
    %6697 = vmatprep.subr.mxu0 0.0
    %6698 = vmatpush1.msra.mxu0 0.0
    %6699 = vmatprep.subr.mxu0 0.0
    %6700 = vmatpush1.msra.mxu0 0.0
    %6701 = vmatprep.subr.mxu0 0.0
    %6702 = vmatpush1.msra.mxu0 0.0
    %6703 = vmatprep.subr.mxu0 0.0
    %6704 = vmatpush1.msra.mxu0 0.0
    %6705 = vmatprep.subr.mxu0 0.0
    %6706 = vmatpush1.msra.mxu0 0.0
    %6707 = vmatprep.subr.mxu0 0.0
    %6708 = vmatpush1.msra.mxu0 0.0
    %6709 = vmatprep.subr.mxu0 0.0
    %6710 = vmatpush1.msra.mxu0 0.0
    %6711 = vmatprep.subr.mxu0 0.0
    %6712 = vmatpush1.msra.mxu0 0.0
    %6713 = vmatprep.subr.mxu0 0.0
    %6714 = vmatpush1.msra.mxu0 0.0
    %6715 = vmatprep.subr.mxu0 0.0
    %6716 = vmatpush1.msra.mxu0 0.0
    %6717 = vmatprep.subr.mxu0 0.0
    %6718 = vmatpush1.msra.mxu0 0.0
    %6719 = vmatprep.subr.mxu0 0.0
    %6720 = vmatpush1.msra.mxu0 0.0
    %6721 = vmatprep.subr.mxu0 0.0
    %6722 = vmatpush1.msra.mxu0 0.0
    %6723 = vmatprep.mubr.f32.mxu0 0.0
    %v6724 = vand.u32 %v6354, 4294901760
    %6725 = vmatmul.mubr.f32.gmra.mrb[0].mxu0 %v6724
    %v6726 = vpop.f32.mrb[0].mxu0
    %v6727 = vadd.f32 %v6653, %v6726
    %v6728 = vpop.f32.mrb[0].mxu0
    %6729 = vdwg.mxu0
    %6730 = vmatprep.subr.mxu0 0.0
    %v6731 = vand.u32 %v6351, 4294901760
    %6732 = vmatpush1.msra.mxu0 %v6731
    %6733 = vmatprep.subr.mxu0 0.0
    %6734 = vmatpush1.msra.mxu0 0.0
    %6735 = vmatprep.subr.mxu0 0.0
    %6736 = vmatpush1.msra.mxu0 0.0
    %6737 = vmatprep.subr.mxu0 0.0
    %6738 = vmatpush1.msra.mxu0 0.0
    %6739 = vmatprep.subr.mxu0 0.0
    %6740 = vmatpush1.msra.mxu0 0.0
    %6741 = vmatprep.subr.mxu0 0.0
    %6742 = vmatpush1.msra.mxu0 0.0
    %6743 = vmatprep.subr.mxu0 0.0
    %6744 = vmatpush1.msra.mxu0 0.0
    %6745 = vmatprep.subr.mxu0 0.0
    %6746 = vmatpush1.msra.mxu0 0.0
    %6747 = vmatprep.subr.mxu0 0.0
    %6748 = vmatpush1.msra.mxu0 0.0
    %6749 = vmatprep.subr.mxu0 0.0
    %6750 = vmatpush1.msra.mxu0 0.0
    %6751 = vmatprep.subr.mxu0 0.0
    %6752 = vmatpush1.msra.mxu0 0.0
    %6753 = vmatprep.subr.mxu0 0.0
    %6754 = vmatpush1.msra.mxu0 0.0
    %6755 = vmatprep.subr.mxu0 0.0
    %6756 = vmatpush1.msra.mxu0 0.0
    %6757 = vmatprep.subr.mxu0 0.0
    %6758 = vmatpush1.msra.mxu0 0.0
    %6759 = vmatprep.subr.mxu0 0.0
    %6760 = vmatpush1.msra.mxu0 0.0
    %6761 = vmatprep.subr.mxu0 0.0
    %6762 = vmatpush1.msra.mxu0 0.0
    %6763 = vmatprep.subr.mxu0 0.0
    %6764 = vmatpush1.msra.mxu0 0.0
    %6765 = vmatprep.subr.mxu0 0.0
    %6766 = vmatpush1.msra.mxu0 0.0
    %6767 = vmatprep.subr.mxu0 0.0
    %6768 = vmatpush1.msra.mxu0 0.0
    %6769 = vmatprep.subr.mxu0 0.0
    %6770 = vmatpush1.msra.mxu0 0.0
    %6771 = vmatprep.subr.mxu0 0.0
    %6772 = vmatpush1.msra.mxu0 0.0
    %6773 = vmatprep.subr.mxu0 0.0
    %6774 = vmatpush1.msra.mxu0 0.0
    %6775 = vmatprep.subr.mxu0 0.0
    %6776 = vmatpush1.msra.mxu0 0.0
    %6777 = vmatprep.subr.mxu0 0.0
    %6778 = vmatpush1.msra.mxu0 0.0
    %6779 = vmatprep.subr.mxu0 0.0
    %6780 = vmatpush1.msra.mxu0 0.0
    %6781 = vmatprep.subr.mxu0 0.0
    %6782 = vmatpush1.msra.mxu0 0.0
    %6783 = vmatprep.subr.mxu0 0.0
    %6784 = vmatpush1.msra.mxu0 0.0
    %6785 = vmatprep.subr.mxu0 0.0
    %6786 = vmatpush1.msra.mxu0 0.0
    %6787 = vmatprep.subr.mxu0 0.0
    %6788 = vmatpush1.msra.mxu0 0.0
    %6789 = vmatprep.subr.mxu0 0.0
    %6790 = vmatpush1.msra.mxu0 0.0
    %6791 = vmatprep.subr.mxu0 0.0
    %6792 = vmatpush1.msra.mxu0 0.0
    %6793 = vmatprep.subr.mxu0 0.0
    %6794 = vmatpush1.msra.mxu0 0.0
    %6795 = vmatprep.mubr.f32.mxu0 0.0
    %v6796 = vand.u32 %v6354, 4294901760
    %6797 = vmatmul.mubr.f32.gmra.mrb[0].mxu0 %v6796
    %v6798 = vpop.f32.mrb[0].mxu0
    %v6799 = vadd.f32 %v6727, %v6798
    %v6800 = vpop.f32.mrb[0].mxu0
    %6801 = vdwg.mxu0
    %6802 = vrot.lane.b32.xlu0 %v1748, 112
    %v6803 = vpop.permute.xlu0 %6802
    %v6806 = vsel %vm1751, %v6346, 0
    %6808 = vmatprep.subr.mxu0 0.0
    %v6809 = vand.u32 %v6803, 4294901760
    %6810 = vmatpush1.msra.mxu0 %v6809
    %6811 = vmatprep.subr.mxu0 0.0
    %6812 = vmatpush1.msra.mxu0 0.0
    %6813 = vmatprep.subr.mxu0 0.0
    %6814 = vmatpush1.msra.mxu0 0.0
    %6815 = vmatprep.subr.mxu0 0.0
    %6816 = vmatpush1.msra.mxu0 0.0
    %6817 = vmatprep.subr.mxu0 0.0
    %6818 = vmatpush1.msra.mxu0 0.0
    %6819 = vmatprep.subr.mxu0 0.0
    %6820 = vmatpush1.msra.mxu0 0.0
    %6821 = vmatprep.subr.mxu0 0.0
    %6822 = vmatpush1.msra.mxu0 0.0
    %6823 = vmatprep.subr.mxu0 0.0
    %6824 = vmatpush1.msra.mxu0 0.0
    %6825 = vmatprep.subr.mxu0 0.0
    %6826 = vmatpush1.msra.mxu0 0.0
    %6827 = vmatprep.subr.mxu0 0.0
    %6828 = vmatpush1.msra.mxu0 0.0
    %6829 = vmatprep.subr.mxu0 0.0
    %6830 = vmatpush1.msra.mxu0 0.0
    %6831 = vmatprep.subr.mxu0 0.0
    %6832 = vmatpush1.msra.mxu0 0.0
    %6833 = vmatprep.subr.mxu0 0.0
    %6834 = vmatpush1.msra.mxu0 0.0
    %6835 = vmatprep.subr.mxu0 0.0
    %6836 = vmatpush1.msra.mxu0 0.0
    %6837 = vmatprep.subr.mxu0 0.0
    %6838 = vmatpush1.msra.mxu0 0.0
    %6839 = vmatprep.subr.mxu0 0.0
    %6840 = vmatpush1.msra.mxu0 0.0
    %6841 = vmatprep.subr.mxu0 0.0
    %6842 = vmatpush1.msra.mxu0 0.0
    %6843 = vmatprep.subr.mxu0 0.0
    %6844 = vmatpush1.msra.mxu0 0.0
    %6845 = vmatprep.subr.mxu0 0.0
    %6846 = vmatpush1.msra.mxu0 0.0
    %6847 = vmatprep.subr.mxu0 0.0
    %6848 = vmatpush1.msra.mxu0 0.0
    %6849 = vmatprep.subr.mxu0 0.0
    %6850 = vmatpush1.msra.mxu0 0.0
    %6851 = vmatprep.subr.mxu0 0.0
    %6852 = vmatpush1.msra.mxu0 0.0
    %6853 = vmatprep.subr.mxu0 0.0
    %6854 = vmatpush1.msra.mxu0 0.0
    %6855 = vmatprep.subr.mxu0 0.0
    %6856 = vmatpush1.msra.mxu0 0.0
    %6857 = vmatprep.subr.mxu0 0.0
    %6858 = vmatpush1.msra.mxu0 0.0
    %6859 = vmatprep.subr.mxu0 0.0
    %6860 = vmatpush1.msra.mxu0 0.0
    %6861 = vmatprep.subr.mxu0 0.0
    %6862 = vmatpush1.msra.mxu0 0.0
    %6863 = vmatprep.subr.mxu0 0.0
    %6864 = vmatpush1.msra.mxu0 0.0
    %6865 = vmatprep.subr.mxu0 0.0
    %6866 = vmatpush1.msra.mxu0 0.0
    %6867 = vmatprep.subr.mxu0 0.0
    %6868 = vmatpush1.msra.mxu0 0.0
    %6869 = vmatprep.subr.mxu0 0.0
    %6870 = vmatpush1.msra.mxu0 0.0
    %6871 = vmatprep.subr.mxu0 0.0
    %6872 = vmatpush1.msra.mxu0 0.0
    %6873 = vmatprep.mubr.f32.mxu0 0.0
    %v6874 = vand.u32 %v6806, 4294901760
    %v6875 = vsub.f32 %v6806, %v6874
    %v6876 = vand.u32 %v6875, 4294901760
    %v6877 = vsub.f32 %v6875, %v6876
    %v6878 = vand.u32 %v6877, 4294901760
    %6879 = vmatmul.mubr.f32.gmra.mrb[0].mxu0 %v6878
    %v6880 = vpop.f32.mrb[0].mxu0
    %v6881 = vadd.f32 0.0, %v6880
    %v6882 = vpop.f32.mrb[0].mxu0
    %6883 = vdwg.mxu0
    %6884 = vmatprep.subr.mxu0 0.0
    %v6885 = vand.u32 %v6803, 4294901760
    %v6886 = vsub.f32 %v6803, %v6885
    %v6887 = vand.u32 %v6886, 4294901760
    %v6888 = vsub.f32 %v6886, %v6887
    %v6889 = vand.u32 %v6888, 4294901760
    %6890 = vmatpush1.msra.mxu0 %v6889
    %6891 = vmatprep.subr.mxu0 0.0
    %6892 = vmatpush1.msra.mxu0 0.0
    %6893 = vmatprep.subr.mxu0 0.0
    %6894 = vmatpush1.msra.mxu0 0.0
    %6895 = vmatprep.subr.mxu0 0.0
    %6896 = vmatpush1.msra.mxu0 0.0
    %6897 = vmatprep.subr.mxu0 0.0
    %6898 = vmatpush1.msra.mxu0 0.0
    %6899 = vmatprep.subr.mxu0 0.0
    %6900 = vmatpush1.msra.mxu0 0.0
    %6901 = vmatprep.subr.mxu0 0.0
    %6902 = vmatpush1.msra.mxu0 0.0
    %6903 = vmatprep.subr.mxu0 0.0
    %6904 = vmatpush1.msra.mxu0 0.0
    %6905 = vmatprep.subr.mxu0 0.0
    %6906 = vmatpush1.msra.mxu0 0.0
    %6907 = vmatprep.subr.mxu0 0.0
    %6908 = vmatpush1.msra.mxu0 0.0
    %6909 = vmatprep.subr.mxu0 0.0
    %6910 = vmatpush1.msra.mxu0 0.0
    %6911 = vmatprep.subr.mxu0 0.0
    %6912 = vmatpush1.msra.mxu0 0.0
    %6913 = vmatprep.subr.mxu0 0.0
    %6914 = vmatpush1.msra.mxu0 0.0
    %6915 = vmatprep.subr.mxu0 0.0
    %6916 = vmatpush1.msra.mxu0 0.0
    %6917 = vmatprep.subr.mxu0 0.0
    %6918 = vmatpush1.msra.mxu0 0.0
    %6919 = vmatprep.subr.mxu0 0.0
    %6920 = vmatpush1.msra.mxu0 0.0
    %6921 = vmatprep.subr.mxu0 0.0
    %6922 = vmatpush1.msra.mxu0 0.0
    %6923 = vmatprep.subr.mxu0 0.0
    %6924 = vmatpush1.msra.mxu0 0.0
    %6925 = vmatprep.subr.mxu0 0.0
    %6926 = vmatpush1.msra.mxu0 0.0
    %6927 = vmatprep.subr.mxu0 0.0
    %6928 = vmatpush1.msra.mxu0 0.0
    %6929 = vmatprep.subr.mxu0 0.0
    %6930 = vmatpush1.msra.mxu0 0.0
    %6931 = vmatprep.subr.mxu0 0.0
    %6932 = vmatpush1.msra.mxu0 0.0
    %6933 = vmatprep.subr.mxu0 0.0
    %6934 = vmatpush1.msra.mxu0 0.0
    %6935 = vmatprep.subr.mxu0 0.0
    %6936 = vmatpush1.msra.mxu0 0.0
    %6937 = vmatprep.subr.mxu0 0.0
    %6938 = vmatpush1.msra.mxu0 0.0
    %6939 = vmatprep.subr.mxu0 0.0
    %6940 = vmatpush1.msra.mxu0 0.0
    %6941 = vmatprep.subr.mxu0 0.0
    %6942 = vmatpush1.msra.mxu0 0.0
    %6943 = vmatprep.subr.mxu0 0.0
    %6944 = vmatpush1.msra.mxu0 0.0
    %6945 = vmatprep.subr.mxu0 0.0
    %6946 = vmatpush1.msra.mxu0 0.0
    %6947 = vmatprep.subr.mxu0 0.0
    %6948 = vmatpush1.msra.mxu0 0.0
    %6949 = vmatprep.subr.mxu0 0.0
    %6950 = vmatpush1.msra.mxu0 0.0
    %6951 = vmatprep.subr.mxu0 0.0
    %6952 = vmatpush1.msra.mxu0 0.0
    %6953 = vmatprep.mubr.f32.mxu0 0.0
    %v6954 = vand.u32 %v6806, 4294901760
    %6955 = vmatmul.mubr.f32.gmra.mrb[0].mxu0 %v6954
    %v6956 = vpop.f32.mrb[0].mxu0
    %v6957 = vadd.f32 %v6881, %v6956
    %v6958 = vpop.f32.mrb[0].mxu0
    %6959 = vdwg.mxu0
    %6960 = vmatprep.subr.mxu0 0.0
    %v6961 = vand.u32 %v6803, 4294901760
    %v6962 = vsub.f32 %v6803, %v6961
    %6963 = vmatpush1.msra.mxu0 %v6962
    %6964 = vmatprep.subr.mxu0 0.0
    %6965 = vmatpush1.msra.mxu0 0.0
    %6966 = vmatprep.subr.mxu0 0.0
    %6967 = vmatpush1.msra.mxu0 0.0
    %6968 = vmatprep.subr.mxu0 0.0
    %6969 = vmatpush1.msra.mxu0 0.0
    %6970 = vmatprep.subr.mxu0 0.0
    %6971 = vmatpush1.msra.mxu0 0.0
    %6972 = vmatprep.subr.mxu0 0.0
    %6973 = vmatpush1.msra.mxu0 0.0
    %6974 = vmatprep.subr.mxu0 0.0
    %6975 = vmatpush1.msra.mxu0 0.0
    %6976 = vmatprep.subr.mxu0 0.0
    %6977 = vmatpush1.msra.mxu0 0.0
    %6978 = vmatprep.subr.mxu0 0.0
    %6979 = vmatpush1.msra.mxu0 0.0
    %6980 = vmatprep.subr.mxu0 0.0
    %6981 = vmatpush1.msra.mxu0 0.0
    %6982 = vmatprep.subr.mxu0 0.0
    %6983 = vmatpush1.msra.mxu0 0.0
    %6984 = vmatprep.subr.mxu0 0.0
    %6985 = vmatpush1.msra.mxu0 0.0
    %6986 = vmatprep.subr.mxu0 0.0
    %6987 = vmatpush1.msra.mxu0 0.0
    %6988 = vmatprep.subr.mxu0 0.0
    %6989 = vmatpush1.msra.mxu0 0.0
    %6990 = vmatprep.subr.mxu0 0.0
    %6991 = vmatpush1.msra.mxu0 0.0
    %6992 = vmatprep.subr.mxu0 0.0
    %6993 = vmatpush1.msra.mxu0 0.0
    %6994 = vmatprep.subr.mxu0 0.0
    %6995 = vmatpush1.msra.mxu0 0.0
    %6996 = vmatprep.subr.mxu0 0.0
    %6997 = vmatpush1.msra.mxu0 0.0
    %6998 = vmatprep.subr.mxu0 0.0
    %6999 = vmatpush1.msra.mxu0 0.0
    %7000 = vmatprep.subr.mxu0 0.0
    %7001 = vmatpush1.msra.mxu0 0.0
    %7002 = vmatprep.subr.mxu0 0.0
    %7003 = vmatpush1.msra.mxu0 0.0
    %7004 = vmatprep.subr.mxu0 0.0
    %7005 = vmatpush1.msra.mxu0 0.0
    %7006 = vmatprep.subr.mxu0 0.0
    %7007 = vmatpush1.msra.mxu0 0.0
    %7008 = vmatprep.subr.mxu0 0.0
    %7009 = vmatpush1.msra.mxu0 0.0
    %7010 = vmatprep.subr.mxu0 0.0
    %7011 = vmatpush1.msra.mxu0 0.0
    %7012 = vmatprep.subr.mxu0 0.0
    %7013 = vmatpush1.msra.mxu0 0.0
    %7014 = vmatprep.subr.mxu0 0.0
    %7015 = vmatpush1.msra.mxu0 0.0
    %7016 = vmatprep.subr.mxu0 0.0
    %7017 = vmatpush1.msra.mxu0 0.0
    %7018 = vmatprep.subr.mxu0 0.0
    %7019 = vmatpush1.msra.mxu0 0.0
    %7020 = vmatprep.subr.mxu0 0.0
    %7021 = vmatpush1.msra.mxu0 0.0
    %7022 = vmatprep.subr.mxu0 0.0
    %7023 = vmatpush1.msra.mxu0 0.0
    %7024 = vmatprep.subr.mxu0 0.0
    %7025 = vmatpush1.msra.mxu0 0.0
    %7026 = vmatprep.mubr.f32.mxu0 0.0
    %v7027 = vand.u32 %v6806, 4294901760
    %v7028 = vsub.f32 %v6806, %v7027
    %7029 = vmatmul.mubr.f32.gmra.mrb[0].mxu0 %v7028
    %v7030 = vpop.f32.mrb[0].mxu0
    %v7031 = vadd.f32 %v6957, %v7030
    %v7032 = vpop.f32.mrb[0].mxu0
    %7033 = vdwg.mxu0
    %7034 = vmatprep.subr.mxu0 0.0
    %v7035 = vand.u32 %v6803, 4294901760
    %7036 = vmatpush1.msra.mxu0 %v7035
    %7037 = vmatprep.subr.mxu0 0.0
    %7038 = vmatpush1.msra.mxu0 0.0
    %7039 = vmatprep.subr.mxu0 0.0
    %7040 = vmatpush1.msra.mxu0 0.0
    %7041 = vmatprep.subr.mxu0 0.0
    %7042 = vmatpush1.msra.mxu0 0.0
    %7043 = vmatprep.subr.mxu0 0.0
    %7044 = vmatpush1.msra.mxu0 0.0
    %7045 = vmatprep.subr.mxu0 0.0
    %7046 = vmatpush1.msra.mxu0 0.0
    %7047 = vmatprep.subr.mxu0 0.0
    %7048 = vmatpush1.msra.mxu0 0.0
    %7049 = vmatprep.subr.mxu0 0.0
    %7050 = vmatpush1.msra.mxu0 0.0
    %7051 = vmatprep.subr.mxu0 0.0
    %7052 = vmatpush1.msra.mxu0 0.0
    %7053 = vmatprep.subr.mxu0 0.0
    %7054 = vmatpush1.msra.mxu0 0.0
    %7055 = vmatprep.subr.mxu0 0.0
    %7056 = vmatpush1.msra.mxu0 0.0
    %7057 = vmatprep.subr.mxu0 0.0
    %7058 = vmatpush1.msra.mxu0 0.0
    %7059 = vmatprep.subr.mxu0 0.0
    %7060 = vmatpush1.msra.mxu0 0.0
    %7061 = vmatprep.subr.mxu0 0.0
    %7062 = vmatpush1.msra.mxu0 0.0
    %7063 = vmatprep.subr.mxu0 0.0
    %7064 = vmatpush1.msra.mxu0 0.0
    %7065 = vmatprep.subr.mxu0 0.0
    %7066 = vmatpush1.msra.mxu0 0.0
    %7067 = vmatprep.subr.mxu0 0.0
    %7068 = vmatpush1.msra.mxu0 0.0
    %7069 = vmatprep.subr.mxu0 0.0
    %7070 = vmatpush1.msra.mxu0 0.0
    %7071 = vmatprep.subr.mxu0 0.0
    %7072 = vmatpush1.msra.mxu0 0.0
    %7073 = vmatprep.subr.mxu0 0.0
    %7074 = vmatpush1.msra.mxu0 0.0
    %7075 = vmatprep.subr.mxu0 0.0
    %7076 = vmatpush1.msra.mxu0 0.0
    %7077 = vmatprep.subr.mxu0 0.0
    %7078 = vmatpush1.msra.mxu0 0.0
    %7079 = vmatprep.subr.mxu0 0.0
    %7080 = vmatpush1.msra.mxu0 0.0
    %7081 = vmatprep.subr.mxu0 0.0
    %7082 = vmatpush1.msra.mxu0 0.0
    %7083 = vmatprep.subr.mxu0 0.0
    %7084 = vmatpush1.msra.mxu0 0.0
    %7085 = vmatprep.subr.mxu0 0.0
    %7086 = vmatpush1.msra.mxu0 0.0
    %7087 = vmatprep.subr.mxu0 0.0
    %7088 = vmatpush1.msra.mxu0 0.0
    %7089 = vmatprep.subr.mxu0 0.0
    %7090 = vmatpush1.msra.mxu0 0.0
    %7091 = vmatprep.subr.mxu0 0.0
    %7092 = vmatpush1.msra.mxu0 0.0
    %7093 = vmatprep.subr.mxu0 0.0
    %7094 = vmatpush1.msra.mxu0 0.0
    %7095 = vmatprep.subr.mxu0 0.0
    %7096 = vmatpush1.msra.mxu0 0.0
    %7097 = vmatprep.subr.mxu0 0.0
    %7098 = vmatpush1.msra.mxu0 0.0
    %7099 = vmatprep.mubr.f32.mxu0 0.0
    %v7100 = vand.u32 %v6806, 4294901760
    %v7101 = vsub.f32 %v6806, %v7100
    %v7102 = vand.u32 %v7101, 4294901760
    %7103 = vmatmul.mubr.f32.gmra.mrb[0].mxu0 %v7102
    %v7104 = vpop.f32.mrb[0].mxu0
    %v7105 = vadd.f32 %v7031, %v7104
    %v7106 = vpop.f32.mrb[0].mxu0
    %7107 = vdwg.mxu0
    %7108 = vmatprep.subr.mxu0 0.0
    %v7109 = vand.u32 %v6803, 4294901760
    %v7110 = vsub.f32 %v6803, %v7109
    %v7111 = vand.u32 %v7110, 4294901760
    %7112 = vmatpush1.msra.mxu0 %v7111
    %7113 = vmatprep.subr.mxu0 0.0
    %7114 = vmatpush1.msra.mxu0 0.0
    %7115 = vmatprep.subr.mxu0 0.0
    %7116 = vmatpush1.msra.mxu0 0.0
    %7117 = vmatprep.subr.mxu0 0.0
    %7118 = vmatpush1.msra.mxu0 0.0
    %7119 = vmatprep.subr.mxu0 0.0
    %7120 = vmatpush1.msra.mxu0 0.0
    %7121 = vmatprep.subr.mxu0 0.0
    %7122 = vmatpush1.msra.mxu0 0.0
    %7123 = vmatprep.subr.mxu0 0.0
    %7124 = vmatpush1.msra.mxu0 0.0
    %7125 = vmatprep.subr.mxu0 0.0
    %7126 = vmatpush1.msra.mxu0 0.0
    %7127 = vmatprep.subr.mxu0 0.0
    %7128 = vmatpush1.msra.mxu0 0.0
    %7129 = vmatprep.subr.mxu0 0.0
    %7130 = vmatpush1.msra.mxu0 0.0
    %7131 = vmatprep.subr.mxu0 0.0
    %7132 = vmatpush1.msra.mxu0 0.0
    %7133 = vmatprep.subr.mxu0 0.0
    %7134 = vmatpush1.msra.mxu0 0.0
    %7135 = vmatprep.subr.mxu0 0.0
    %7136 = vmatpush1.msra.mxu0 0.0
    %7137 = vmatprep.subr.mxu0 0.0
    %7138 = vmatpush1.msra.mxu0 0.0
    %7139 = vmatprep.subr.mxu0 0.0
    %7140 = vmatpush1.msra.mxu0 0.0
    %7141 = vmatprep.subr.mxu0 0.0
    %7142 = vmatpush1.msra.mxu0 0.0
    %7143 = vmatprep.subr.mxu0 0.0
    %7144 = vmatpush1.msra.mxu0 0.0
    %7145 = vmatprep.subr.mxu0 0.0
    %7146 = vmatpush1.msra.mxu0 0.0
    %7147 = vmatprep.subr.mxu0 0.0
    %7148 = vmatpush1.msra.mxu0 0.0
    %7149 = vmatprep.subr.mxu0 0.0
    %7150 = vmatpush1.msra.mxu0 0.0
    %7151 = vmatprep.subr.mxu0 0.0
    %7152 = vmatpush1.msra.mxu0 0.0
    %7153 = vmatprep.subr.mxu0 0.0
    %7154 = vmatpush1.msra.mxu0 0.0
    %7155 = vmatprep.subr.mxu0 0.0
    %7156 = vmatpush1.msra.mxu0 0.0
    %7157 = vmatprep.subr.mxu0 0.0
    %7158 = vmatpush1.msra.mxu0 0.0
    %7159 = vmatprep.subr.mxu0 0.0
    %7160 = vmatpush1.msra.mxu0 0.0
    %7161 = vmatprep.subr.mxu0 0.0
    %7162 = vmatpush1.msra.mxu0 0.0
    %7163 = vmatprep.subr.mxu0 0.0
    %7164 = vmatpush1.msra.mxu0 0.0
    %7165 = vmatprep.subr.mxu0 0.0
    %7166 = vmatpush1.msra.mxu0 0.0
    %7167 = vmatprep.subr.mxu0 0.0
    %7168 = vmatpush1.msra.mxu0 0.0
    %7169 = vmatprep.subr.mxu0 0.0
    %7170 = vmatpush1.msra.mxu0 0.0
    %7171 = vmatprep.subr.mxu0 0.0
    %7172 = vmatpush1.msra.mxu0 0.0
    %7173 = vmatprep.subr.mxu0 0.0
    %7174 = vmatpush1.msra.mxu0 0.0
    %7175 = vmatprep.mubr.f32.mxu0 0.0
    %v7176 = vand.u32 %v6806, 4294901760
    %7177 = vmatmul.mubr.f32.gmra.mrb[0].mxu0 %v7176
    %v7178 = vpop.f32.mrb[0].mxu0
    %v7179 = vadd.f32 %v7105, %v7178
    %v7180 = vpop.f32.mrb[0].mxu0
    %7181 = vdwg.mxu0
    %7182 = vmatprep.subr.mxu0 0.0
    %v7183 = vand.u32 %v6803, 4294901760
    %7184 = vmatpush1.msra.mxu0 %v7183
    %7185 = vmatprep.subr.mxu0 0.0
    %7186 = vmatpush1.msra.mxu0 0.0
    %7187 = vmatprep.subr.mxu0 0.0
    %7188 = vmatpush1.msra.mxu0 0.0
    %7189 = vmatprep.subr.mxu0 0.0
    %7190 = vmatpush1.msra.mxu0 0.0
    %7191 = vmatprep.subr.mxu0 0.0
    %7192 = vmatpush1.msra.mxu0 0.0
    %7193 = vmatprep.subr.mxu0 0.0
    %7194 = vmatpush1.msra.mxu0 0.0
    %7195 = vmatprep.subr.mxu0 0.0
    %7196 = vmatpush1.msra.mxu0 0.0
    %7197 = vmatprep.subr.mxu0 0.0
    %7198 = vmatpush1.msra.mxu0 0.0
    %7199 = vmatprep.subr.mxu0 0.0
    %7200 = vmatpush1.msra.mxu0 0.0
    %7201 = vmatprep.subr.mxu0 0.0
    %7202 = vmatpush1.msra.mxu0 0.0
    %7203 = vmatprep.subr.mxu0 0.0
    %7204 = vmatpush1.msra.mxu0 0.0
    %7205 = vmatprep.subr.mxu0 0.0
    %7206 = vmatpush1.msra.mxu0 0.0
    %7207 = vmatprep.subr.mxu0 0.0
    %7208 = vmatpush1.msra.mxu0 0.0
    %7209 = vmatprep.subr.mxu0 0.0
    %7210 = vmatpush1.msra.mxu0 0.0
    %7211 = vmatprep.subr.mxu0 0.0
    %7212 = vmatpush1.msra.mxu0 0.0
    %7213 = vmatprep.subr.mxu0 0.0
    %7214 = vmatpush1.msra.mxu0 0.0
    %7215 = vmatprep.subr.mxu0 0.0
    %7216 = vmatpush1.msra.mxu0 0.0
    %7217 = vmatprep.subr.mxu0 0.0
    %7218 = vmatpush1.msra.mxu0 0.0
    %7219 = vmatprep.subr.mxu0 0.0
    %7220 = vmatpush1.msra.mxu0 0.0
    %7221 = vmatprep.subr.mxu0 0.0
    %7222 = vmatpush1.msra.mxu0 0.0
    %7223 = vmatprep.subr.mxu0 0.0
    %7224 = vmatpush1.msra.mxu0 0.0
    %7225 = vmatprep.subr.mxu0 0.0
    %7226 = vmatpush1.msra.mxu0 0.0
    %7227 = vmatprep.subr.mxu0 0.0
    %7228 = vmatpush1.msra.mxu0 0.0
    %7229 = vmatprep.subr.mxu0 0.0
    %7230 = vmatpush1.msra.mxu0 0.0
    %7231 = vmatprep.subr.mxu0 0.0
    %7232 = vmatpush1.msra.mxu0 0.0
    %7233 = vmatprep.subr.mxu0 0.0
    %7234 = vmatpush1.msra.mxu0 0.0
    %7235 = vmatprep.subr.mxu0 0.0
    %7236 = vmatpush1.msra.mxu0 0.0
    %7237 = vmatprep.subr.mxu0 0.0
    %7238 = vmatpush1.msra.mxu0 0.0
    %7239 = vmatprep.subr.mxu0 0.0
    %7240 = vmatpush1.msra.mxu0 0.0
    %7241 = vmatprep.subr.mxu0 0.0
    %7242 = vmatpush1.msra.mxu0 0.0
    %7243 = vmatprep.subr.mxu0 0.0
    %7244 = vmatpush1.msra.mxu0 0.0
    %7245 = vmatprep.subr.mxu0 0.0
    %7246 = vmatpush1.msra.mxu0 0.0
    %7247 = vmatprep.mubr.f32.mxu0 0.0
    %v7248 = vand.u32 %v6806, 4294901760
    %7249 = vmatmul.mubr.f32.gmra.mrb[0].mxu0 %v7248
    %v7250 = vpop.f32.mrb[0].mxu0
    %v7251 = vadd.f32 %v7179, %v7250
    %v7252 = vpop.f32.mrb[0].mxu0
    %7253 = vdwg.mxu0
    %7254 = vrot.lane.b32.xlu0 %v652, 104
    %v7255 = vpop.permute.xlu0 %7254
    %7256 = vrot.lane.b32.xlu0 %v1197, 104
    %v7257 = vpop.permute.xlu0 %7256
    %v7258 = vsel %vm1751, %v7255, 0
    %v7260 = vsel %vm1751, %v7257, 0
    %7262 = vmatprep.subr.mxu0 0.0
    %v7263 = vand.u32 %v7260, 4294901760
    %7264 = vmatpush1.xpose.msra.mxu0 %v7263
    %7265 = vmatprep.subr.mxu0 0.0
    %7266 = vmatpush1.xpose.msra.mxu0 0.0
    %7267 = vmatprep.subr.mxu0 0.0
    %7268 = vmatpush1.xpose.msra.mxu0 0.0
    %7269 = vmatprep.subr.mxu0 0.0
    %7270 = vmatpush1.xpose.msra.mxu0 0.0
    %7271 = vmatprep.subr.mxu0 0.0
    %7272 = vmatpush1.xpose.msra.mxu0 0.0
    %7273 = vmatprep.subr.mxu0 0.0
    %7274 = vmatpush1.xpose.msra.mxu0 0.0
    %7275 = vmatprep.subr.mxu0 0.0
    %7276 = vmatpush1.xpose.msra.mxu0 0.0
    %7277 = vmatprep.subr.mxu0 0.0
    %7278 = vmatpush1.xpose.msra.mxu0 0.0
    %7279 = vmatprep.subr.mxu0 0.0
    %7280 = vmatpush1.xpose.msra.mxu0 0.0
    %7281 = vmatprep.subr.mxu0 0.0
    %7282 = vmatpush1.xpose.msra.mxu0 0.0
    %7283 = vmatprep.subr.mxu0 0.0
    %7284 = vmatpush1.xpose.msra.mxu0 0.0
    %7285 = vmatprep.subr.mxu0 0.0
    %7286 = vmatpush1.xpose.msra.mxu0 0.0
    %7287 = vmatprep.subr.mxu0 0.0
    %7288 = vmatpush1.xpose.msra.mxu0 0.0
    %7289 = vmatprep.subr.mxu0 0.0
    %7290 = vmatpush1.xpose.msra.mxu0 0.0
    %7291 = vmatprep.subr.mxu0 0.0
    %7292 = vmatpush1.xpose.msra.mxu0 0.0
    %7293 = vmatprep.subr.mxu0 0.0
    %7294 = vmatpush1.xpose.msra.mxu0 0.0
    %7295 = vmatprep.subr.mxu0 0.0
    %7296 = vmatpush1.xpose.msra.mxu0 0.0
    %7297 = vmatprep.subr.mxu0 0.0
    %7298 = vmatpush1.xpose.msra.mxu0 0.0
    %7299 = vmatprep.subr.mxu0 0.0
    %7300 = vmatpush1.xpose.msra.mxu0 0.0
    %7301 = vmatprep.subr.mxu0 0.0
    %7302 = vmatpush1.xpose.msra.mxu0 0.0
    %7303 = vmatprep.subr.mxu0 0.0
    %7304 = vmatpush1.xpose.msra.mxu0 0.0
    %7305 = vmatprep.subr.mxu0 0.0
    %7306 = vmatpush1.xpose.msra.mxu0 0.0
    %7307 = vmatprep.subr.mxu0 0.0
    %7308 = vmatpush1.xpose.msra.mxu0 0.0
    %7309 = vmatprep.subr.mxu0 0.0
    %7310 = vmatpush1.xpose.msra.mxu0 0.0
    %7311 = vmatprep.subr.mxu0 0.0
    %7312 = vmatpush1.xpose.msra.mxu0 0.0
    %7313 = vmatprep.subr.mxu0 0.0
    %7314 = vmatpush1.xpose.msra.mxu0 0.0
    %7315 = vmatprep.subr.mxu0 0.0
    %7316 = vmatpush1.xpose.msra.mxu0 0.0
    %7317 = vmatprep.subr.mxu0 0.0
    %7318 = vmatpush1.xpose.msra.mxu0 0.0
    %7319 = vmatprep.subr.mxu0 0.0
    %7320 = vmatpush1.xpose.msra.mxu0 0.0
    %7321 = vmatprep.subr.mxu0 0.0
    %7322 = vmatpush1.xpose.msra.mxu0 0.0
    %7323 = vmatprep.subr.mxu0 0.0
    %7324 = vmatpush1.xpose.msra.mxu0 0.0
    %7325 = vmatprep.subr.mxu0 0.0
    %7326 = vmatpush1.xpose.msra.mxu0 0.0
    %7327 = vmatprep.mubr.f32.mxu0 0.0
    %v7328 = vand.u32 %v7258, 4294901760
    %v7329 = vsub.f32 %v7258, %v7328
    %v7330 = vand.u32 %v7329, 4294901760
    %v7331 = vsub.f32 %v7329, %v7330
    %v7332 = vand.u32 %v7331, 4294901760
    %7333 = vmatmul.mubr.f32.gmra.mrb[0].mxu0 %v7332
    %v7334 = vpop.f32.mrb[0].mxu0
    %v7335 = vadd.f32 0.0, %v7334
    %v7336 = vpop.f32.mrb[0].mxu0
    %7337 = vdwg.mxu0
    %7338 = vmatprep.subr.mxu0 0.0
    %v7339 = vand.u32 %v7260, 4294901760
    %v7340 = vsub.f32 %v7260, %v7339
    %v7341 = vand.u32 %v7340, 4294901760
    %v7342 = vsub.f32 %v7340, %v7341
    %v7343 = vand.u32 %v7342, 4294901760
    %7344 = vmatpush1.xpose.msra.mxu0 %v7343
    %7345 = vmatprep.subr.mxu0 0.0
    %7346 = vmatpush1.xpose.msra.mxu0 0.0
    %7347 = vmatprep.subr.mxu0 0.0
    %7348 = vmatpush1.xpose.msra.mxu0 0.0
    %7349 = vmatprep.subr.mxu0 0.0
    %7350 = vmatpush1.xpose.msra.mxu0 0.0
    %7351 = vmatprep.subr.mxu0 0.0
    %7352 = vmatpush1.xpose.msra.mxu0 0.0
    %7353 = vmatprep.subr.mxu0 0.0
    %7354 = vmatpush1.xpose.msra.mxu0 0.0
    %7355 = vmatprep.subr.mxu0 0.0
    %7356 = vmatpush1.xpose.msra.mxu0 0.0
    %7357 = vmatprep.subr.mxu0 0.0
    %7358 = vmatpush1.xpose.msra.mxu0 0.0
    %7359 = vmatprep.subr.mxu0 0.0
    %7360 = vmatpush1.xpose.msra.mxu0 0.0
    %7361 = vmatprep.subr.mxu0 0.0
    %7362 = vmatpush1.xpose.msra.mxu0 0.0
    %7363 = vmatprep.subr.mxu0 0.0
    %7364 = vmatpush1.xpose.msra.mxu0 0.0
    %7365 = vmatprep.subr.mxu0 0.0
    %7366 = vmatpush1.xpose.msra.mxu0 0.0
    %7367 = vmatprep.subr.mxu0 0.0
    %7368 = vmatpush1.xpose.msra.mxu0 0.0
    %7369 = vmatprep.subr.mxu0 0.0
    %7370 = vmatpush1.xpose.msra.mxu0 0.0
    %7371 = vmatprep.subr.mxu0 0.0
    %7372 = vmatpush1.xpose.msra.mxu0 0.0
    %7373 = vmatprep.subr.mxu0 0.0
    %7374 = vmatpush1.xpose.msra.mxu0 0.0
    %7375 = vmatprep.subr.mxu0 0.0
    %7376 = vmatpush1.xpose.msra.mxu0 0.0
    %7377 = vmatprep.subr.mxu0 0.0
    %7378 = vmatpush1.xpose.msra.mxu0 0.0
    %7379 = vmatprep.subr.mxu0 0.0
    %7380 = vmatpush1.xpose.msra.mxu0 0.0
    %7381 = vmatprep.subr.mxu0 0.0
    %7382 = vmatpush1.xpose.msra.mxu0 0.0
    %7383 = vmatprep.subr.mxu0 0.0
    %7384 = vmatpush1.xpose.msra.mxu0 0.0
    %7385 = vmatprep.subr.mxu0 0.0
    %7386 = vmatpush1.xpose.msra.mxu0 0.0
    %7387 = vmatprep.subr.mxu0 0.0
    %7388 = vmatpush1.xpose.msra.mxu0 0.0
    %7389 = vmatprep.subr.mxu0 0.0
    %7390 = vmatpush1.xpose.msra.mxu0 0.0
    %7391 = vmatprep.subr.mxu0 0.0
    %7392 = vmatpush1.xpose.msra.mxu0 0.0
    %7393 = vmatprep.subr.mxu0 0.0
    %7394 = vmatpush1.xpose.msra.mxu0 0.0
    %7395 = vmatprep.subr.mxu0 0.0
    %7396 = vmatpush1.xpose.msra.mxu0 0.0
    %7397 = vmatprep.subr.mxu0 0.0
    %7398 = vmatpush1.xpose.msra.mxu0 0.0
    %7399 = vmatprep.subr.mxu0 0.0
    %7400 = vmatpush1.xpose.msra.mxu0 0.0
    %7401 = vmatprep.subr.mxu0 0.0
    %7402 = vmatpush1.xpose.msra.mxu0 0.0
    %7403 = vmatprep.subr.mxu0 0.0
    %7404 = vmatpush1.xpose.msra.mxu0 0.0
    %7405 = vmatprep.subr.mxu0 0.0
    %7406 = vmatpush1.xpose.msra.mxu0 0.0
    %7407 = vmatprep.mubr.f32.mxu0 0.0
    %v7408 = vand.u32 %v7258, 4294901760
    %7409 = vmatmul.mubr.f32.gmra.mrb[0].mxu0 %v7408
    %v7410 = vpop.f32.mrb[0].mxu0
    %v7411 = vadd.f32 %v7335, %v7410
    %v7412 = vpop.f32.mrb[0].mxu0
    %7413 = vdwg.mxu0
    %7414 = vmatprep.subr.mxu0 0.0
    %v7415 = vand.u32 %v7260, 4294901760
    %v7416 = vsub.f32 %v7260, %v7415
    %7417 = vmatpush1.xpose.msra.mxu0 %v7416
    %7418 = vmatprep.subr.mxu0 0.0
    %7419 = vmatpush1.xpose.msra.mxu0 0.0
    %7420 = vmatprep.subr.mxu0 0.0
    %7421 = vmatpush1.xpose.msra.mxu0 0.0
    %7422 = vmatprep.subr.mxu0 0.0
    %7423 = vmatpush1.xpose.msra.mxu0 0.0
    %7424 = vmatprep.subr.mxu0 0.0
    %7425 = vmatpush1.xpose.msra.mxu0 0.0
    %7426 = vmatprep.subr.mxu0 0.0
    %7427 = vmatpush1.xpose.msra.mxu0 0.0
    %7428 = vmatprep.subr.mxu0 0.0
    %7429 = vmatpush1.xpose.msra.mxu0 0.0
    %7430 = vmatprep.subr.mxu0 0.0
    %7431 = vmatpush1.xpose.msra.mxu0 0.0
    %7432 = vmatprep.subr.mxu0 0.0
    %7433 = vmatpush1.xpose.msra.mxu0 0.0
    %7434 = vmatprep.subr.mxu0 0.0
    %7435 = vmatpush1.xpose.msra.mxu0 0.0
    %7436 = vmatprep.subr.mxu0 0.0
    %7437 = vmatpush1.xpose.msra.mxu0 0.0
    %7438 = vmatprep.subr.mxu0 0.0
    %7439 = vmatpush1.xpose.msra.mxu0 0.0
    %7440 = vmatprep.subr.mxu0 0.0
    %7441 = vmatpush1.xpose.msra.mxu0 0.0
    %7442 = vmatprep.subr.mxu0 0.0
    %7443 = vmatpush1.xpose.msra.mxu0 0.0
    %7444 = vmatprep.subr.mxu0 0.0
    %7445 = vmatpush1.xpose.msra.mxu0 0.0
    %7446 = vmatprep.subr.mxu0 0.0
    %7447 = vmatpush1.xpose.msra.mxu0 0.0
    %7448 = vmatprep.subr.mxu0 0.0
    %7449 = vmatpush1.xpose.msra.mxu0 0.0
    %7450 = vmatprep.subr.mxu0 0.0
    %7451 = vmatpush1.xpose.msra.mxu0 0.0
    %7452 = vmatprep.subr.mxu0 0.0
    %7453 = vmatpush1.xpose.msra.mxu0 0.0
    %7454 = vmatprep.subr.mxu0 0.0
    %7455 = vmatpush1.xpose.msra.mxu0 0.0
    %7456 = vmatprep.subr.mxu0 0.0
    %7457 = vmatpush1.xpose.msra.mxu0 0.0
    %7458 = vmatprep.subr.mxu0 0.0
    %7459 = vmatpush1.xpose.msra.mxu0 0.0
    %7460 = vmatprep.subr.mxu0 0.0
    %7461 = vmatpush1.xpose.msra.mxu0 0.0
    %7462 = vmatprep.subr.mxu0 0.0
    %7463 = vmatpush1.xpose.msra.mxu0 0.0
    %7464 = vmatprep.subr.mxu0 0.0
    %7465 = vmatpush1.xpose.msra.mxu0 0.0
    %7466 = vmatprep.subr.mxu0 0.0
    %7467 = vmatpush1.xpose.msra.mxu0 0.0
    %7468 = vmatprep.subr.mxu0 0.0
    %7469 = vmatpush1.xpose.msra.mxu0 0.0
    %7470 = vmatprep.subr.mxu0 0.0
    %7471 = vmatpush1.xpose.msra.mxu0 0.0
    %7472 = vmatprep.subr.mxu0 0.0
    %7473 = vmatpush1.xpose.msra.mxu0 0.0
    %7474 = vmatprep.subr.mxu0 0.0
    %7475 = vmatpush1.xpose.msra.mxu0 0.0
    %7476 = vmatprep.subr.mxu0 0.0
    %7477 = vmatpush1.xpose.msra.mxu0 0.0
    %7478 = vmatprep.subr.mxu0 0.0
    %7479 = vmatpush1.xpose.msra.mxu0 0.0
    %7480 = vmatprep.mubr.f32.mxu0 0.0
    %v7481 = vand.u32 %v7258, 4294901760
    %v7482 = vsub.f32 %v7258, %v7481
    %7483 = vmatmul.mubr.f32.gmra.mrb[0].mxu0 %v7482
    %v7484 = vpop.f32.mrb[0].mxu0
    %v7485 = vadd.f32 %v7411, %v7484
    %v7486 = vpop.f32.mrb[0].mxu0
    %7487 = vdwg.mxu0
    %7488 = vmatprep.subr.mxu0 0.0
    %v7489 = vand.u32 %v7260, 4294901760
    %7490 = vmatpush1.xpose.msra.mxu0 %v7489
    %7491 = vmatprep.subr.mxu0 0.0
    %7492 = vmatpush1.xpose.msra.mxu0 0.0
    %7493 = vmatprep.subr.mxu0 0.0
    %7494 = vmatpush1.xpose.msra.mxu0 0.0
    %7495 = vmatprep.subr.mxu0 0.0
    %7496 = vmatpush1.xpose.msra.mxu0 0.0
    %7497 = vmatprep.subr.mxu0 0.0
    %7498 = vmatpush1.xpose.msra.mxu0 0.0
    %7499 = vmatprep.subr.mxu0 0.0
    %7500 = vmatpush1.xpose.msra.mxu0 0.0
    %7501 = vmatprep.subr.mxu0 0.0
    %7502 = vmatpush1.xpose.msra.mxu0 0.0
    %7503 = vmatprep.subr.mxu0 0.0
    %7504 = vmatpush1.xpose.msra.mxu0 0.0
    %7505 = vmatprep.subr.mxu0 0.0
    %7506 = vmatpush1.xpose.msra.mxu0 0.0
    %7507 = vmatprep.subr.mxu0 0.0
    %7508 = vmatpush1.xpose.msra.mxu0 0.0
    %7509 = vmatprep.subr.mxu0 0.0
    %7510 = vmatpush1.xpose.msra.mxu0 0.0
    %7511 = vmatprep.subr.mxu0 0.0
    %7512 = vmatpush1.xpose.msra.mxu0 0.0
    %7513 = vmatprep.subr.mxu0 0.0
    %7514 = vmatpush1.xpose.msra.mxu0 0.0
    %7515 = vmatprep.subr.mxu0 0.0
    %7516 = vmatpush1.xpose.msra.mxu0 0.0
    %7517 = vmatprep.subr.mxu0 0.0
    %7518 = vmatpush1.xpose.msra.mxu0 0.0
    %7519 = vmatprep.subr.mxu0 0.0
    %7520 = vmatpush1.xpose.msra.mxu0 0.0
    %7521 = vmatprep.subr.mxu0 0.0
    %7522 = vmatpush1.xpose.msra.mxu0 0.0
    %7523 = vmatprep.subr.mxu0 0.0
    %7524 = vmatpush1.xpose.msra.mxu0 0.0
    %7525 = vmatprep.subr.mxu0 0.0
    %7526 = vmatpush1.xpose.msra.mxu0 0.0
    %7527 = vmatprep.subr.mxu0 0.0
    %7528 = vmatpush1.xpose.msra.mxu0 0.0
    %7529 = vmatprep.subr.mxu0 0.0
    %7530 = vmatpush1.xpose.msra.mxu0 0.0
    %7531 = vmatprep.subr.mxu0 0.0
    %7532 = vmatpush1.xpose.msra.mxu0 0.0
    %7533 = vmatprep.subr.mxu0 0.0
    %7534 = vmatpush1.xpose.msra.mxu0 0.0
    %7535 = vmatprep.subr.mxu0 0.0
    %7536 = vmatpush1.xpose.msra.mxu0 0.0
    %7537 = vmatprep.subr.mxu0 0.0
    %7538 = vmatpush1.xpose.msra.mxu0 0.0
    %7539 = vmatprep.subr.mxu0 0.0
    %7540 = vmatpush1.xpose.msra.mxu0 0.0
    %7541 = vmatprep.subr.mxu0 0.0
    %7542 = vmatpush1.xpose.msra.mxu0 0.0
    %7543 = vmatprep.subr.mxu0 0.0
    %7544 = vmatpush1.xpose.msra.mxu0 0.0
    %7545 = vmatprep.subr.mxu0 0.0
    %7546 = vmatpush1.xpose.msra.mxu0 0.0
    %7547 = vmatprep.subr.mxu0 0.0
    %7548 = vmatpush1.xpose.msra.mxu0 0.0
    %7549 = vmatprep.subr.mxu0 0.0
    %7550 = vmatpush1.xpose.msra.mxu0 0.0
    %7551 = vmatprep.subr.mxu0 0.0
    %7552 = vmatpush1.xpose.msra.mxu0 0.0
    %7553 = vmatprep.mubr.f32.mxu0 0.0
    %v7554 = vand.u32 %v7258, 4294901760
    %v7555 = vsub.f32 %v7258, %v7554
    %v7556 = vand.u32 %v7555, 4294901760
    %7557 = vmatmul.mubr.f32.gmra.mrb[0].mxu0 %v7556
    %v7558 = vpop.f32.mrb[0].mxu0
    %v7559 = vadd.f32 %v7485, %v7558
    %v7560 = vpop.f32.mrb[0].mxu0
    %7561 = vdwg.mxu0
    %7562 = vmatprep.subr.mxu0 0.0
    %v7563 = vand.u32 %v7260, 4294901760
    %v7564 = vsub.f32 %v7260, %v7563
    %v7565 = vand.u32 %v7564, 4294901760
    %7566 = vmatpush1.xpose.msra.mxu0 %v7565
    %7567 = vmatprep.subr.mxu0 0.0
    %7568 = vmatpush1.xpose.msra.mxu0 0.0
    %7569 = vmatprep.subr.mxu0 0.0
    %7570 = vmatpush1.xpose.msra.mxu0 0.0
    %7571 = vmatprep.subr.mxu0 0.0
    %7572 = vmatpush1.xpose.msra.mxu0 0.0
    %7573 = vmatprep.subr.mxu0 0.0
    %7574 = vmatpush1.xpose.msra.mxu0 0.0
    %7575 = vmatprep.subr.mxu0 0.0
    %7576 = vmatpush1.xpose.msra.mxu0 0.0
    %7577 = vmatprep.subr.mxu0 0.0
    %7578 = vmatpush1.xpose.msra.mxu0 0.0
    %7579 = vmatprep.subr.mxu0 0.0
    %7580 = vmatpush1.xpose.msra.mxu0 0.0
    %7581 = vmatprep.subr.mxu0 0.0
    %7582 = vmatpush1.xpose.msra.mxu0 0.0
    %7583 = vmatprep.subr.mxu0 0.0
    %7584 = vmatpush1.xpose.msra.mxu0 0.0
    %7585 = vmatprep.subr.mxu0 0.0
    %7586 = vmatpush1.xpose.msra.mxu0 0.0
    %7587 = vmatprep.subr.mxu0 0.0
    %7588 = vmatpush1.xpose.msra.mxu0 0.0
    %7589 = vmatprep.subr.mxu0 0.0
    %7590 = vmatpush1.xpose.msra.mxu0 0.0
    %7591 = vmatprep.subr.mxu0 0.0
    %7592 = vmatpush1.xpose.msra.mxu0 0.0
    %7593 = vmatprep.subr.mxu0 0.0
    %7594 = vmatpush1.xpose.msra.mxu0 0.0
    %7595 = vmatprep.subr.mxu0 0.0
    %7596 = vmatpush1.xpose.msra.mxu0 0.0
    %7597 = vmatprep.subr.mxu0 0.0
    %7598 = vmatpush1.xpose.msra.mxu0 0.0
    %7599 = vmatprep.subr.mxu0 0.0
    %7600 = vmatpush1.xpose.msra.mxu0 0.0
    %7601 = vmatprep.subr.mxu0 0.0
    %7602 = vmatpush1.xpose.msra.mxu0 0.0
    %7603 = vmatprep.subr.mxu0 0.0
    %7604 = vmatpush1.xpose.msra.mxu0 0.0
    %7605 = vmatprep.subr.mxu0 0.0
    %7606 = vmatpush1.xpose.msra.mxu0 0.0
    %7607 = vmatprep.subr.mxu0 0.0
    %7608 = vmatpush1.xpose.msra.mxu0 0.0
    %7609 = vmatprep.subr.mxu0 0.0
    %7610 = vmatpush1.xpose.msra.mxu0 0.0
    %7611 = vmatprep.subr.mxu0 0.0
    %7612 = vmatpush1.xpose.msra.mxu0 0.0
    %7613 = vmatprep.subr.mxu0 0.0
    %7614 = vmatpush1.xpose.msra.mxu0 0.0
    %7615 = vmatprep.subr.mxu0 0.0
    %7616 = vmatpush1.xpose.msra.mxu0 0.0
    %7617 = vmatprep.subr.mxu0 0.0
    %7618 = vmatpush1.xpose.msra.mxu0 0.0
    %7619 = vmatprep.subr.mxu0 0.0
    %7620 = vmatpush1.xpose.msra.mxu0 0.0
    %7621 = vmatprep.subr.mxu0 0.0
    %7622 = vmatpush1.xpose.msra.mxu0 0.0
    %7623 = vmatprep.subr.mxu0 0.0
    %7624 = vmatpush1.xpose.msra.mxu0 0.0
    %7625 = vmatprep.subr.mxu0 0.0
    %7626 = vmatpush1.xpose.msra.mxu0 0.0
    %7627 = vmatprep.subr.mxu0 0.0
    %7628 = vmatpush1.xpose.msra.mxu0 0.0
    %7629 = vmatprep.mubr.f32.mxu0 0.0
    %v7630 = vand.u32 %v7258, 4294901760
    %7631 = vmatmul.mubr.f32.gmra.mrb[0].mxu0 %v7630
    %v7632 = vpop.f32.mrb[0].mxu0
    %v7633 = vadd.f32 %v7559, %v7632
    %v7634 = vpop.f32.mrb[0].mxu0
    %7635 = vdwg.mxu0
    %7636 = vmatprep.subr.mxu0 0.0
    %v7637 = vand.u32 %v7260, 4294901760
    %7638 = vmatpush1.xpose.msra.mxu0 %v7637
    %7639 = vmatprep.subr.mxu0 0.0
    %7640 = vmatpush1.xpose.msra.mxu0 0.0
    %7641 = vmatprep.subr.mxu0 0.0
    %7642 = vmatpush1.xpose.msra.mxu0 0.0
    %7643 = vmatprep.subr.mxu0 0.0
    %7644 = vmatpush1.xpose.msra.mxu0 0.0
    %7645 = vmatprep.subr.mxu0 0.0
    %7646 = vmatpush1.xpose.msra.mxu0 0.0
    %7647 = vmatprep.subr.mxu0 0.0
    %7648 = vmatpush1.xpose.msra.mxu0 0.0
    %7649 = vmatprep.subr.mxu0 0.0
    %7650 = vmatpush1.xpose.msra.mxu0 0.0
    %7651 = vmatprep.subr.mxu0 0.0
    %7652 = vmatpush1.xpose.msra.mxu0 0.0
    %7653 = vmatprep.subr.mxu0 0.0
    %7654 = vmatpush1.xpose.msra.mxu0 0.0
    %7655 = vmatprep.subr.mxu0 0.0
    %7656 = vmatpush1.xpose.msra.mxu0 0.0
    %7657 = vmatprep.subr.mxu0 0.0
    %7658 = vmatpush1.xpose.msra.mxu0 0.0
    %7659 = vmatprep.subr.mxu0 0.0
    %7660 = vmatpush1.xpose.msra.mxu0 0.0
    %7661 = vmatprep.subr.mxu0 0.0
    %7662 = vmatpush1.xpose.msra.mxu0 0.0
    %7663 = vmatprep.subr.mxu0 0.0
    %7664 = vmatpush1.xpose.msra.mxu0 0.0
    %7665 = vmatprep.subr.mxu0 0.0
    %7666 = vmatpush1.xpose.msra.mxu0 0.0
    %7667 = vmatprep.subr.mxu0 0.0
    %7668 = vmatpush1.xpose.msra.mxu0 0.0
    %7669 = vmatprep.subr.mxu0 0.0
    %7670 = vmatpush1.xpose.msra.mxu0 0.0
    %7671 = vmatprep.subr.mxu0 0.0
    %7672 = vmatpush1.xpose.msra.mxu0 0.0
    %7673 = vmatprep.subr.mxu0 0.0
    %7674 = vmatpush1.xpose.msra.mxu0 0.0
    %7675 = vmatprep.subr.mxu0 0.0
    %7676 = vmatpush1.xpose.msra.mxu0 0.0
    %7677 = vmatprep.subr.mxu0 0.0
    %7678 = vmatpush1.xpose.msra.mxu0 0.0
    %7679 = vmatprep.subr.mxu0 0.0
    %7680 = vmatpush1.xpose.msra.mxu0 0.0
    %7681 = vmatprep.subr.mxu0 0.0
    %7682 = vmatpush1.xpose.msra.mxu0 0.0
    %7683 = vmatprep.subr.mxu0 0.0
    %7684 = vmatpush1.xpose.msra.mxu0 0.0
    %7685 = vmatprep.subr.mxu0 0.0
    %7686 = vmatpush1.xpose.msra.mxu0 0.0
    %7687 = vmatprep.subr.mxu0 0.0
    %7688 = vmatpush1.xpose.msra.mxu0 0.0
    %7689 = vmatprep.subr.mxu0 0.0
    %7690 = vmatpush1.xpose.msra.mxu0 0.0
    %7691 = vmatprep.subr.mxu0 0.0
    %7692 = vmatpush1.xpose.msra.mxu0 0.0
    %7693 = vmatprep.subr.mxu0 0.0
    %7694 = vmatpush1.xpose.msra.mxu0 0.0
    %7695 = vmatprep.subr.mxu0 0.0
    %7696 = vmatpush1.xpose.msra.mxu0 0.0
    %7697 = vmatprep.subr.mxu0 0.0
    %7698 = vmatpush1.xpose.msra.mxu0 0.0
    %7699 = vmatprep.subr.mxu0 0.0
    %7700 = vmatpush1.xpose.msra.mxu0 0.0
    %7701 = vmatprep.mubr.f32.mxu0 0.0
    %v7702 = vand.u32 %v7258, 4294901760
    %7703 = vmatmul.mubr.f32.gmra.mrb[0].mxu0 %v7702
    %v7704 = vpop.f32.mrb[0].mxu0
    %v7705 = vadd.f32 %v7633, %v7704
    %v7706 = vpop.f32.mrb[0].mxu0
    %7707 = vdwg.mxu0
    %7708 = vrot.lane.b32.xlu0 %v658, 104
    %v7709 = vpop.permute.xlu0 %7708
    %7710 = vrot.lane.b32.xlu0 %v1203, 104
    %v7711 = vpop.permute.xlu0 %7710
    %v7712 = vsel %vm1751, %v7709, 0
    %v7714 = vsel %vm1751, %v7711, 0
    %7716 = vmatprep.subr.mxu0 0.0
    %v7717 = vand.u32 %v7714, 4294901760
    %7718 = vmatpush1.xpose.msra.mxu0 %v7717
    %7719 = vmatprep.subr.mxu0 0.0
    %7720 = vmatpush1.xpose.msra.mxu0 0.0
    %7721 = vmatprep.subr.mxu0 0.0
    %7722 = vmatpush1.xpose.msra.mxu0 0.0
    %7723 = vmatprep.subr.mxu0 0.0
    %7724 = vmatpush1.xpose.msra.mxu0 0.0
    %7725 = vmatprep.subr.mxu0 0.0
    %7726 = vmatpush1.xpose.msra.mxu0 0.0
    %7727 = vmatprep.subr.mxu0 0.0
    %7728 = vmatpush1.xpose.msra.mxu0 0.0
    %7729 = vmatprep.subr.mxu0 0.0
    %7730 = vmatpush1.xpose.msra.mxu0 0.0
    %7731 = vmatprep.subr.mxu0 0.0
    %7732 = vmatpush1.xpose.msra.mxu0 0.0
    %7733 = vmatprep.subr.mxu0 0.0
    %7734 = vmatpush1.xpose.msra.mxu0 0.0
    %7735 = vmatprep.subr.mxu0 0.0
    %7736 = vmatpush1.xpose.msra.mxu0 0.0
    %7737 = vmatprep.subr.mxu0 0.0
    %7738 = vmatpush1.xpose.msra.mxu0 0.0
    %7739 = vmatprep.subr.mxu0 0.0
    %7740 = vmatpush1.xpose.msra.mxu0 0.0
    %7741 = vmatprep.subr.mxu0 0.0
    %7742 = vmatpush1.xpose.msra.mxu0 0.0
    %7743 = vmatprep.subr.mxu0 0.0
    %7744 = vmatpush1.xpose.msra.mxu0 0.0
    %7745 = vmatprep.subr.mxu0 0.0
    %7746 = vmatpush1.xpose.msra.mxu0 0.0
    %7747 = vmatprep.subr.mxu0 0.0
    %7748 = vmatpush1.xpose.msra.mxu0 0.0
    %7749 = vmatprep.subr.mxu0 0.0
    %7750 = vmatpush1.xpose.msra.mxu0 0.0
    %7751 = vmatprep.subr.mxu0 0.0
    %7752 = vmatpush1.xpose.msra.mxu0 0.0
    %7753 = vmatprep.subr.mxu0 0.0
    %7754 = vmatpush1.xpose.msra.mxu0 0.0
    %7755 = vmatprep.subr.mxu0 0.0
    %7756 = vmatpush1.xpose.msra.mxu0 0.0
    %7757 = vmatprep.subr.mxu0 0.0
    %7758 = vmatpush1.xpose.msra.mxu0 0.0
    %7759 = vmatprep.subr.mxu0 0.0
    %7760 = vmatpush1.xpose.msra.mxu0 0.0
    %7761 = vmatprep.subr.mxu0 0.0
    %7762 = vmatpush1.xpose.msra.mxu0 0.0
    %7763 = vmatprep.subr.mxu0 0.0
    %7764 = vmatpush1.xpose.msra.mxu0 0.0
    %7765 = vmatprep.subr.mxu0 0.0
    %7766 = vmatpush1.xpose.msra.mxu0 0.0
    %7767 = vmatprep.subr.mxu0 0.0
    %7768 = vmatpush1.xpose.msra.mxu0 0.0
    %7769 = vmatprep.subr.mxu0 0.0
    %7770 = vmatpush1.xpose.msra.mxu0 0.0
    %7771 = vmatprep.subr.mxu0 0.0
    %7772 = vmatpush1.xpose.msra.mxu0 0.0
    %7773 = vmatprep.subr.mxu0 0.0
    %7774 = vmatpush1.xpose.msra.mxu0 0.0
    %7775 = vmatprep.subr.mxu0 0.0
    %7776 = vmatpush1.xpose.msra.mxu0 0.0
    %7777 = vmatprep.subr.mxu0 0.0
    %7778 = vmatpush1.xpose.msra.mxu0 0.0
    %7779 = vmatprep.subr.mxu0 0.0
    %7780 = vmatpush1.xpose.msra.mxu0 0.0
    %7781 = vmatprep.mubr.f32.mxu0 0.0
    %v7782 = vand.u32 %v7712, 4294901760
    %v7783 = vsub.f32 %v7712, %v7782
    %v7784 = vand.u32 %v7783, 4294901760
    %v7785 = vsub.f32 %v7783, %v7784
    %v7786 = vand.u32 %v7785, 4294901760
    %7787 = vmatmul.mubr.f32.gmra.mrb[0].mxu0 %v7786
    %v7788 = vpop.f32.mrb[0].mxu0
    %v7789 = vadd.f32 0.0, %v7788
    %v7790 = vpop.f32.mrb[0].mxu0
    %7791 = vdwg.mxu0
    %7792 = vmatprep.subr.mxu0 0.0
    %v7793 = vand.u32 %v7714, 4294901760
    %v7794 = vsub.f32 %v7714, %v7793
    %v7795 = vand.u32 %v7794, 4294901760
    %v7796 = vsub.f32 %v7794, %v7795
    %v7797 = vand.u32 %v7796, 4294901760
    %7798 = vmatpush1.xpose.msra.mxu0 %v7797
    %7799 = vmatprep.subr.mxu0 0.0
    %7800 = vmatpush1.xpose.msra.mxu0 0.0
    %7801 = vmatprep.subr.mxu0 0.0
    %7802 = vmatpush1.xpose.msra.mxu0 0.0
    %7803 = vmatprep.subr.mxu0 0.0
    %7804 = vmatpush1.xpose.msra.mxu0 0.0
    %7805 = vmatprep.subr.mxu0 0.0
    %7806 = vmatpush1.xpose.msra.mxu0 0.0
    %7807 = vmatprep.subr.mxu0 0.0
    %7808 = vmatpush1.xpose.msra.mxu0 0.0
    %7809 = vmatprep.subr.mxu0 0.0
    %7810 = vmatpush1.xpose.msra.mxu0 0.0
    %7811 = vmatprep.subr.mxu0 0.0
    %7812 = vmatpush1.xpose.msra.mxu0 0.0
    %7813 = vmatprep.subr.mxu0 0.0
    %7814 = vmatpush1.xpose.msra.mxu0 0.0
    %7815 = vmatprep.subr.mxu0 0.0
    %7816 = vmatpush1.xpose.msra.mxu0 0.0
    %7817 = vmatprep.subr.mxu0 0.0
    %7818 = vmatpush1.xpose.msra.mxu0 0.0
    %7819 = vmatprep.subr.mxu0 0.0
    %7820 = vmatpush1.xpose.msra.mxu0 0.0
    %7821 = vmatprep.subr.mxu0 0.0
    %7822 = vmatpush1.xpose.msra.mxu0 0.0
    %7823 = vmatprep.subr.mxu0 0.0
    %7824 = vmatpush1.xpose.msra.mxu0 0.0
    %7825 = vmatprep.subr.mxu0 0.0
    %7826 = vmatpush1.xpose.msra.mxu0 0.0
    %7827 = vmatprep.subr.mxu0 0.0
    %7828 = vmatpush1.xpose.msra.mxu0 0.0
    %7829 = vmatprep.subr.mxu0 0.0
    %7830 = vmatpush1.xpose.msra.mxu0 0.0
    %7831 = vmatprep.subr.mxu0 0.0
    %7832 = vmatpush1.xpose.msra.mxu0 0.0
    %7833 = vmatprep.subr.mxu0 0.0
    %7834 = vmatpush1.xpose.msra.mxu0 0.0
    %7835 = vmatprep.subr.mxu0 0.0
    %7836 = vmatpush1.xpose.msra.mxu0 0.0
    %7837 = vmatprep.subr.mxu0 0.0
    %7838 = vmatpush1.xpose.msra.mxu0 0.0
    %7839 = vmatprep.subr.mxu0 0.0
    %7840 = vmatpush1.xpose.msra.mxu0 0.0
    %7841 = vmatprep.subr.mxu0 0.0
    %7842 = vmatpush1.xpose.msra.mxu0 0.0
    %7843 = vmatprep.subr.mxu0 0.0
    %7844 = vmatpush1.xpose.msra.mxu0 0.0
    %7845 = vmatprep.subr.mxu0 0.0
    %7846 = vmatpush1.xpose.msra.mxu0 0.0
    %7847 = vmatprep.subr.mxu0 0.0
    %7848 = vmatpush1.xpose.msra.mxu0 0.0
    %7849 = vmatprep.subr.mxu0 0.0
    %7850 = vmatpush1.xpose.msra.mxu0 0.0
    %7851 = vmatprep.subr.mxu0 0.0
    %7852 = vmatpush1.xpose.msra.mxu0 0.0
    %7853 = vmatprep.subr.mxu0 0.0
    %7854 = vmatpush1.xpose.msra.mxu0 0.0
    %7855 = vmatprep.subr.mxu0 0.0
    %7856 = vmatpush1.xpose.msra.mxu0 0.0
    %7857 = vmatprep.subr.mxu0 0.0
    %7858 = vmatpush1.xpose.msra.mxu0 0.0
    %7859 = vmatprep.subr.mxu0 0.0
    %7860 = vmatpush1.xpose.msra.mxu0 0.0
    %7861 = vmatprep.mubr.f32.mxu0 0.0
    %v7862 = vand.u32 %v7712, 4294901760
    %7863 = vmatmul.mubr.f32.gmra.mrb[0].mxu0 %v7862
    %v7864 = vpop.f32.mrb[0].mxu0
    %v7865 = vadd.f32 %v7789, %v7864
    %v7866 = vpop.f32.mrb[0].mxu0
    %7867 = vdwg.mxu0
    %7868 = vmatprep.subr.mxu0 0.0
    %v7869 = vand.u32 %v7714, 4294901760
    %v7870 = vsub.f32 %v7714, %v7869
    %7871 = vmatpush1.xpose.msra.mxu0 %v7870
    %7872 = vmatprep.subr.mxu0 0.0
    %7873 = vmatpush1.xpose.msra.mxu0 0.0
    %7874 = vmatprep.subr.mxu0 0.0
    %7875 = vmatpush1.xpose.msra.mxu0 0.0
    %7876 = vmatprep.subr.mxu0 0.0
    %7877 = vmatpush1.xpose.msra.mxu0 0.0
    %7878 = vmatprep.subr.mxu0 0.0
    %7879 = vmatpush1.xpose.msra.mxu0 0.0
    %7880 = vmatprep.subr.mxu0 0.0
    %7881 = vmatpush1.xpose.msra.mxu0 0.0
    %7882 = vmatprep.subr.mxu0 0.0
    %7883 = vmatpush1.xpose.msra.mxu0 0.0
    %7884 = vmatprep.subr.mxu0 0.0
    %7885 = vmatpush1.xpose.msra.mxu0 0.0
    %7886 = vmatprep.subr.mxu0 0.0
    %7887 = vmatpush1.xpose.msra.mxu0 0.0
    %7888 = vmatprep.subr.mxu0 0.0
    %7889 = vmatpush1.xpose.msra.mxu0 0.0
    %7890 = vmatprep.subr.mxu0 0.0
    %7891 = vmatpush1.xpose.msra.mxu0 0.0
    %7892 = vmatprep.subr.mxu0 0.0
    %7893 = vmatpush1.xpose.msra.mxu0 0.0
    %7894 = vmatprep.subr.mxu0 0.0
    %7895 = vmatpush1.xpose.msra.mxu0 0.0
    %7896 = vmatprep.subr.mxu0 0.0
    %7897 = vmatpush1.xpose.msra.mxu0 0.0
    %7898 = vmatprep.subr.mxu0 0.0
    %7899 = vmatpush1.xpose.msra.mxu0 0.0
    %7900 = vmatprep.subr.mxu0 0.0
    %7901 = vmatpush1.xpose.msra.mxu0 0.0
    %7902 = vmatprep.subr.mxu0 0.0
    %7903 = vmatpush1.xpose.msra.mxu0 0.0
    %7904 = vmatprep.subr.mxu0 0.0
    %7905 = vmatpush1.xpose.msra.mxu0 0.0
    %7906 = vmatprep.subr.mxu0 0.0
    %7907 = vmatpush1.xpose.msra.mxu0 0.0
    %7908 = vmatprep.subr.mxu0 0.0
    %7909 = vmatpush1.xpose.msra.mxu0 0.0
    %7910 = vmatprep.subr.mxu0 0.0
    %7911 = vmatpush1.xpose.msra.mxu0 0.0
    %7912 = vmatprep.subr.mxu0 0.0
    %7913 = vmatpush1.xpose.msra.mxu0 0.0
    %7914 = vmatprep.subr.mxu0 0.0
    %7915 = vmatpush1.xpose.msra.mxu0 0.0
    %7916 = vmatprep.subr.mxu0 0.0
    %7917 = vmatpush1.xpose.msra.mxu0 0.0
    %7918 = vmatprep.subr.mxu0 0.0
    %7919 = vmatpush1.xpose.msra.mxu0 0.0
    %7920 = vmatprep.subr.mxu0 0.0
    %7921 = vmatpush1.xpose.msra.mxu0 0.0
    %7922 = vmatprep.subr.mxu0 0.0
    %7923 = vmatpush1.xpose.msra.mxu0 0.0
    %7924 = vmatprep.subr.mxu0 0.0
    %7925 = vmatpush1.xpose.msra.mxu0 0.0
    %7926 = vmatprep.subr.mxu0 0.0
    %7927 = vmatpush1.xpose.msra.mxu0 0.0
    %7928 = vmatprep.subr.mxu0 0.0
    %7929 = vmatpush1.xpose.msra.mxu0 0.0
    %7930 = vmatprep.subr.mxu0 0.0
    %7931 = vmatpush1.xpose.msra.mxu0 0.0
    %7932 = vmatprep.subr.mxu0 0.0
    %7933 = vmatpush1.xpose.msra.mxu0 0.0
    %7934 = vmatprep.mubr.f32.mxu0 0.0
    %v7935 = vand.u32 %v7712, 4294901760
    %v7936 = vsub.f32 %v7712, %v7935
    %7937 = vmatmul.mubr.f32.gmra.mrb[0].mxu0 %v7936
    %v7938 = vpop.f32.mrb[0].mxu0
    %v7939 = vadd.f32 %v7865, %v7938
    %v7940 = vpop.f32.mrb[0].mxu0
    %7941 = vdwg.mxu0
    %7942 = vmatprep.subr.mxu0 0.0
    %v7943 = vand.u32 %v7714, 4294901760
    %7944 = vmatpush1.xpose.msra.mxu0 %v7943
    %7945 = vmatprep.subr.mxu0 0.0
    %7946 = vmatpush1.xpose.msra.mxu0 0.0
    %7947 = vmatprep.subr.mxu0 0.0
    %7948 = vmatpush1.xpose.msra.mxu0 0.0
    %7949 = vmatprep.subr.mxu0 0.0
    %7950 = vmatpush1.xpose.msra.mxu0 0.0
    %7951 = vmatprep.subr.mxu0 0.0
    %7952 = vmatpush1.xpose.msra.mxu0 0.0
    %7953 = vmatprep.subr.mxu0 0.0
    %7954 = vmatpush1.xpose.msra.mxu0 0.0
    %7955 = vmatprep.subr.mxu0 0.0
    %7956 = vmatpush1.xpose.msra.mxu0 0.0
    %7957 = vmatprep.subr.mxu0 0.0
    %7958 = vmatpush1.xpose.msra.mxu0 0.0
    %7959 = vmatprep.subr.mxu0 0.0
    %7960 = vmatpush1.xpose.msra.mxu0 0.0
    %7961 = vmatprep.subr.mxu0 0.0
    %7962 = vmatpush1.xpose.msra.mxu0 0.0
    %7963 = vmatprep.subr.mxu0 0.0
    %7964 = vmatpush1.xpose.msra.mxu0 0.0
    %7965 = vmatprep.subr.mxu0 0.0
    %7966 = vmatpush1.xpose.msra.mxu0 0.0
    %7967 = vmatprep.subr.mxu0 0.0
    %7968 = vmatpush1.xpose.msra.mxu0 0.0
    %7969 = vmatprep.subr.mxu0 0.0
    %7970 = vmatpush1.xpose.msra.mxu0 0.0
    %7971 = vmatprep.subr.mxu0 0.0
    %7972 = vmatpush1.xpose.msra.mxu0 0.0
    %7973 = vmatprep.subr.mxu0 0.0
    %7974 = vmatpush1.xpose.msra.mxu0 0.0
    %7975 = vmatprep.subr.mxu0 0.0
    %7976 = vmatpush1.xpose.msra.mxu0 0.0
    %7977 = vmatprep.subr.mxu0 0.0
    %7978 = vmatpush1.xpose.msra.mxu0 0.0
    %7979 = vmatprep.subr.mxu0 0.0
    %7980 = vmatpush1.xpose.msra.mxu0 0.0
    %7981 = vmatprep.subr.mxu0 0.0
    %7982 = vmatpush1.xpose.msra.mxu0 0.0
    %7983 = vmatprep.subr.mxu0 0.0
    %7984 = vmatpush1.xpose.msra.mxu0 0.0
    %7985 = vmatprep.subr.mxu0 0.0
    %7986 = vmatpush1.xpose.msra.mxu0 0.0
    %7987 = vmatprep.subr.mxu0 0.0
    %7988 = vmatpush1.xpose.msra.mxu0 0.0
    %7989 = vmatprep.subr.mxu0 0.0
    %7990 = vmatpush1.xpose.msra.mxu0 0.0
    %7991 = vmatprep.subr.mxu0 0.0
    %7992 = vmatpush1.xpose.msra.mxu0 0.0
    %7993 = vmatprep.subr.mxu0 0.0
    %7994 = vmatpush1.xpose.msra.mxu0 0.0
    %7995 = vmatprep.subr.mxu0 0.0
    %7996 = vmatpush1.xpose.msra.mxu0 0.0
    %7997 = vmatprep.subr.mxu0 0.0
    %7998 = vmatpush1.xpose.msra.mxu0 0.0
    %7999 = vmatprep.subr.mxu0 0.0
    %8000 = vmatpush1.xpose.msra.mxu0 0.0
    %8001 = vmatprep.subr.mxu0 0.0
    %8002 = vmatpush1.xpose.msra.mxu0 0.0
    %8003 = vmatprep.subr.mxu0 0.0
    %8004 = vmatpush1.xpose.msra.mxu0 0.0
    %8005 = vmatprep.subr.mxu0 0.0
    %8006 = vmatpush1.xpose.msra.mxu0 0.0
    %8007 = vmatprep.mubr.f32.mxu0 0.0
    %v8008 = vand.u32 %v7712, 4294901760
    %v8009 = vsub.f32 %v7712, %v8008
    %v8010 = vand.u32 %v8009, 4294901760
    %8011 = vmatmul.mubr.f32.gmra.mrb[0].mxu0 %v8010
    %v8012 = vpop.f32.mrb[0].mxu0
    %v8013 = vadd.f32 %v7939, %v8012
    %v8014 = vpop.f32.mrb[0].mxu0
    %8015 = vdwg.mxu0
    %8016 = vmatprep.subr.mxu0 0.0
    %v8017 = vand.u32 %v7714, 4294901760
    %v8018 = vsub.f32 %v7714, %v8017
    %v8019 = vand.u32 %v8018, 4294901760
    %8020 = vmatpush1.xpose.msra.mxu0 %v8019
    %8021 = vmatprep.subr.mxu0 0.0
    %8022 = vmatpush1.xpose.msra.mxu0 0.0
    %8023 = vmatprep.subr.mxu0 0.0
    %8024 = vmatpush1.xpose.msra.mxu0 0.0
    %8025 = vmatprep.subr.mxu0 0.0
    %8026 = vmatpush1.xpose.msra.mxu0 0.0
    %8027 = vmatprep.subr.mxu0 0.0
    %8028 = vmatpush1.xpose.msra.mxu0 0.0
    %8029 = vmatprep.subr.mxu0 0.0
    %8030 = vmatpush1.xpose.msra.mxu0 0.0
    %8031 = vmatprep.subr.mxu0 0.0
    %8032 = vmatpush1.xpose.msra.mxu0 0.0
    %8033 = vmatprep.subr.mxu0 0.0
    %8034 = vmatpush1.xpose.msra.mxu0 0.0
    %8035 = vmatprep.subr.mxu0 0.0
    %8036 = vmatpush1.xpose.msra.mxu0 0.0
    %8037 = vmatprep.subr.mxu0 0.0
    %8038 = vmatpush1.xpose.msra.mxu0 0.0
    %8039 = vmatprep.subr.mxu0 0.0
    %8040 = vmatpush1.xpose.msra.mxu0 0.0
    %8041 = vmatprep.subr.mxu0 0.0
    %8042 = vmatpush1.xpose.msra.mxu0 0.0
    %8043 = vmatprep.subr.mxu0 0.0
    %8044 = vmatpush1.xpose.msra.mxu0 0.0
    %8045 = vmatprep.subr.mxu0 0.0
    %8046 = vmatpush1.xpose.msra.mxu0 0.0
    %8047 = vmatprep.subr.mxu0 0.0
    %8048 = vmatpush1.xpose.msra.mxu0 0.0
    %8049 = vmatprep.subr.mxu0 0.0
    %8050 = vmatpush1.xpose.msra.mxu0 0.0
    %8051 = vmatprep.subr.mxu0 0.0
    %8052 = vmatpush1.xpose.msra.mxu0 0.0
    %8053 = vmatprep.subr.mxu0 0.0
    %8054 = vmatpush1.xpose.msra.mxu0 0.0
    %8055 = vmatprep.subr.mxu0 0.0
    %8056 = vmatpush1.xpose.msra.mxu0 0.0
    %8057 = vmatprep.subr.mxu0 0.0
    %8058 = vmatpush1.xpose.msra.mxu0 0.0
    %8059 = vmatprep.subr.mxu0 0.0
    %8060 = vmatpush1.xpose.msra.mxu0 0.0
    %8061 = vmatprep.subr.mxu0 0.0
    %8062 = vmatpush1.xpose.msra.mxu0 0.0
    %8063 = vmatprep.subr.mxu0 0.0
    %8064 = vmatpush1.xpose.msra.mxu0 0.0
    %8065 = vmatprep.subr.mxu0 0.0
    %8066 = vmatpush1.xpose.msra.mxu0 0.0
    %8067 = vmatprep.subr.mxu0 0.0
    %8068 = vmatpush1.xpose.msra.mxu0 0.0
    %8069 = vmatprep.subr.mxu0 0.0
    %8070 = vmatpush1.xpose.msra.mxu0 0.0
    %8071 = vmatprep.subr.mxu0 0.0
    %8072 = vmatpush1.xpose.msra.mxu0 0.0
    %8073 = vmatprep.subr.mxu0 0.0
    %8074 = vmatpush1.xpose.msra.mxu0 0.0
    %8075 = vmatprep.subr.mxu0 0.0
    %8076 = vmatpush1.xpose.msra.mxu0 0.0
    %8077 = vmatprep.subr.mxu0 0.0
    %8078 = vmatpush1.xpose.msra.mxu0 0.0
    %8079 = vmatprep.subr.mxu0 0.0
    %8080 = vmatpush1.xpose.msra.mxu0 0.0
    %8081 = vmatprep.subr.mxu0 0.0
    %8082 = vmatpush1.xpose.msra.mxu0 0.0
    %8083 = vmatprep.mubr.f32.mxu0 0.0
    %v8084 = vand.u32 %v7712, 4294901760
    %8085 = vmatmul.mubr.f32.gmra.mrb[0].mxu0 %v8084
    %v8086 = vpop.f32.mrb[0].mxu0
    %v8087 = vadd.f32 %v8013, %v8086
    %v8088 = vpop.f32.mrb[0].mxu0
    %8089 = vdwg.mxu0
    %8090 = vmatprep.subr.mxu0 0.0
    %v8091 = vand.u32 %v7714, 4294901760
    %8092 = vmatpush1.xpose.msra.mxu0 %v8091
    %8093 = vmatprep.subr.mxu0 0.0
    %8094 = vmatpush1.xpose.msra.mxu0 0.0
    %8095 = vmatprep.subr.mxu0 0.0
    %8096 = vmatpush1.xpose.msra.mxu0 0.0
    %8097 = vmatprep.subr.mxu0 0.0
    %8098 = vmatpush1.xpose.msra.mxu0 0.0
    %8099 = vmatprep.subr.mxu0 0.0
    %8100 = vmatpush1.xpose.msra.mxu0 0.0
    %8101 = vmatprep.subr.mxu0 0.0
    %8102 = vmatpush1.xpose.msra.mxu0 0.0
    %8103 = vmatprep.subr.mxu0 0.0
    %8104 = vmatpush1.xpose.msra.mxu0 0.0
    %8105 = vmatprep.subr.mxu0 0.0
    %8106 = vmatpush1.xpose.msra.mxu0 0.0
    %8107 = vmatprep.subr.mxu0 0.0
    %8108 = vmatpush1.xpose.msra.mxu0 0.0
    %8109 = vmatprep.subr.mxu0 0.0
    %8110 = vmatpush1.xpose.msra.mxu0 0.0
    %8111 = vmatprep.subr.mxu0 0.0
    %8112 = vmatpush1.xpose.msra.mxu0 0.0
    %8113 = vmatprep.subr.mxu0 0.0
    %8114 = vmatpush1.xpose.msra.mxu0 0.0
    %8115 = vmatprep.subr.mxu0 0.0
    %8116 = vmatpush1.xpose.msra.mxu0 0.0
    %8117 = vmatprep.subr.mxu0 0.0
    %8118 = vmatpush1.xpose.msra.mxu0 0.0
    %8119 = vmatprep.subr.mxu0 0.0
    %8120 = vmatpush1.xpose.msra.mxu0 0.0
    %8121 = vmatprep.subr.mxu0 0.0
    %8122 = vmatpush1.xpose.msra.mxu0 0.0
    %8123 = vmatprep.subr.mxu0 0.0
    %8124 = vmatpush1.xpose.msra.mxu0 0.0
    %8125 = vmatprep.subr.mxu0 0.0
    %8126 = vmatpush1.xpose.msra.mxu0 0.0
    %8127 = vmatprep.subr.mxu0 0.0
    %8128 = vmatpush1.xpose.msra.mxu0 0.0
    %8129 = vmatprep.subr.mxu0 0.0
    %8130 = vmatpush1.xpose.msra.mxu0 0.0
    %8131 = vmatprep.subr.mxu0 0.0
    %8132 = vmatpush1.xpose.msra.mxu0 0.0
    %8133 = vmatprep.subr.mxu0 0.0
    %8134 = vmatpush1.xpose.msra.mxu0 0.0
    %8135 = vmatprep.subr.mxu0 0.0
    %8136 = vmatpush1.xpose.msra.mxu0 0.0
    %8137 = vmatprep.subr.mxu0 0.0
    %8138 = vmatpush1.xpose.msra.mxu0 0.0
    %8139 = vmatprep.subr.mxu0 0.0
    %8140 = vmatpush1.xpose.msra.mxu0 0.0
    %8141 = vmatprep.subr.mxu0 0.0
    %8142 = vmatpush1.xpose.msra.mxu0 0.0
    %8143 = vmatprep.subr.mxu0 0.0
    %8144 = vmatpush1.xpose.msra.mxu0 0.0
    %8145 = vmatprep.subr.mxu0 0.0
    %8146 = vmatpush1.xpose.msra.mxu0 0.0
    %8147 = vmatprep.subr.mxu0 0.0
    %8148 = vmatpush1.xpose.msra.mxu0 0.0
    %8149 = vmatprep.subr.mxu0 0.0
    %8150 = vmatpush1.xpose.msra.mxu0 0.0
    %8151 = vmatprep.subr.mxu0 0.0
    %8152 = vmatpush1.xpose.msra.mxu0 0.0
    %8153 = vmatprep.subr.mxu0 0.0
    %8154 = vmatpush1.xpose.msra.mxu0 0.0
    %8155 = vmatprep.mubr.f32.mxu0 0.0
    %v8156 = vand.u32 %v7712, 4294901760
    %8157 = vmatmul.mubr.f32.gmra.mrb[0].mxu0 %v8156
    %v8158 = vpop.f32.mrb[0].mxu0
    %v8159 = vadd.f32 %v8087, %v8158
    %v8160 = vpop.f32.mrb[0].mxu0
    %8161 = vdwg.mxu0
    %v8162 = vsel %vm1751, %v7705, -inf
    %8163 = vmax.xlane.f32.xlu0 %v8162
    %v8164 = vpop.xlane.xlu0 %8163
    %v8165 = vsel %vm1751, %v8159, -inf
    %8166 = vmax.xlane.f32.xlu0 %v8165
    %v8167 = vpop.xlane.xlu0 %8166
    %v8168 = vsub.f32 %v7705, %v8164
    %v8169 = vsub.f32 %v8159, %v8167
    %v8170 = vmul.f32 %v8168, 1.442695
    %v8171 = vpow.pop %v8170
    %v8172 = vmul.f32 %v8169, 1.442695
    %v8173 = vpow.pop %v8172
    %v8174 = vsel %vm1751, %v8171, 0.0
    %8175 = vadd.xlane.f32.xlu0 %v8174
    %v8176 = vpop.xlane.xlu0 %8175
    %v8177 = vsel %vm1751, %v8173, 0.0
    %8178 = vadd.xlane.f32.xlu0 %v8177
    %v8179 = vpop.xlane.xlu0 %8178
    %v8180 = vrcp.pop %v8176
    %v8181 = vrcp.pop %v8179
    %v8182 = vmul.f32 %v8171, %v8180
    %v8183 = vmul.f32 %v8173, %v8181
    %s8184 = scalar_lea.vmem [#allocation14], 24
    %8185 = vst.msk [vmem:[%s8184] sm:$0xff] %vm1751, %v8182
    %8186 = vst.msk [vmem:[%s8184 + $0x20] sm:$0xff] %vm1751, %v8183
    %8187 = vrot.lane.b32.xlu0 %v1742, 104
    %v8188 = vpop.permute.xlu0 %8187
    %v8191 = vsel %vm1751, %v8182, 0
    %8193 = vmatprep.subr.mxu0 0.0
    %v8194 = vand.u32 %v8188, 4294901760
    %8195 = vmatpush1.msra.mxu0 %v8194
    %8196 = vmatprep.subr.mxu0 0.0
    %8197 = vmatpush1.msra.mxu0 0.0
    %8198 = vmatprep.subr.mxu0 0.0
    %8199 = vmatpush1.msra.mxu0 0.0
    %8200 = vmatprep.subr.mxu0 0.0
    %8201 = vmatpush1.msra.mxu0 0.0
    %8202 = vmatprep.subr.mxu0 0.0
    %8203 = vmatpush1.msra.mxu0 0.0
    %8204 = vmatprep.subr.mxu0 0.0
    %8205 = vmatpush1.msra.mxu0 0.0
    %8206 = vmatprep.subr.mxu0 0.0
    %8207 = vmatpush1.msra.mxu0 0.0
    %8208 = vmatprep.subr.mxu0 0.0
    %8209 = vmatpush1.msra.mxu0 0.0
    %8210 = vmatprep.subr.mxu0 0.0
    %8211 = vmatpush1.msra.mxu0 0.0
    %8212 = vmatprep.subr.mxu0 0.0
    %8213 = vmatpush1.msra.mxu0 0.0
    %8214 = vmatprep.subr.mxu0 0.0
    %8215 = vmatpush1.msra.mxu0 0.0
    %8216 = vmatprep.subr.mxu0 0.0
    %8217 = vmatpush1.msra.mxu0 0.0
    %8218 = vmatprep.subr.mxu0 0.0
    %8219 = vmatpush1.msra.mxu0 0.0
    %8220 = vmatprep.subr.mxu0 0.0
    %8221 = vmatpush1.msra.mxu0 0.0
    %8222 = vmatprep.subr.mxu0 0.0
    %8223 = vmatpush1.msra.mxu0 0.0
    %8224 = vmatprep.subr.mxu0 0.0
    %8225 = vmatpush1.msra.mxu0 0.0
    %8226 = vmatprep.subr.mxu0 0.0
    %8227 = vmatpush1.msra.mxu0 0.0
    %8228 = vmatprep.subr.mxu0 0.0
    %8229 = vmatpush1.msra.mxu0 0.0
    %8230 = vmatprep.subr.mxu0 0.0
    %8231 = vmatpush1.msra.mxu0 0.0
    %8232 = vmatprep.subr.mxu0 0.0
    %8233 = vmatpush1.msra.mxu0 0.0
    %8234 = vmatprep.subr.mxu0 0.0
    %8235 = vmatpush1.msra.mxu0 0.0
    %8236 = vmatprep.subr.mxu0 0.0
    %8237 = vmatpush1.msra.mxu0 0.0
    %8238 = vmatprep.subr.mxu0 0.0
    %8239 = vmatpush1.msra.mxu0 0.0
    %8240 = vmatprep.subr.mxu0 0.0
    %8241 = vmatpush1.msra.mxu0 0.0
    %8242 = vmatprep.subr.mxu0 0.0
    %8243 = vmatpush1.msra.mxu0 0.0
    %8244 = vmatprep.subr.mxu0 0.0
    %8245 = vmatpush1.msra.mxu0 0.0
    %8246 = vmatprep.subr.mxu0 0.0
    %8247 = vmatpush1.msra.mxu0 0.0
    %8248 = vmatprep.subr.mxu0 0.0
    %8249 = vmatpush1.msra.mxu0 0.0
    %8250 = vmatprep.subr.mxu0 0.0
    %8251 = vmatpush1.msra.mxu0 0.0
    %8252 = vmatprep.subr.mxu0 0.0
    %8253 = vmatpush1.msra.mxu0 0.0
    %8254 = vmatprep.subr.mxu0 0.0
    %8255 = vmatpush1.msra.mxu0 0.0
    %8256 = vmatprep.subr.mxu0 0.0
    %8257 = vmatpush1.msra.mxu0 0.0
    %8258 = vmatprep.mubr.f32.mxu0 0.0
    %v8259 = vand.u32 %v8191, 4294901760
    %v8260 = vsub.f32 %v8191, %v8259
    %v8261 = vand.u32 %v8260, 4294901760
    %v8262 = vsub.f32 %v8260, %v8261
    %v8263 = vand.u32 %v8262, 4294901760
    %8264 = vmatmul.mubr.f32.gmra.mrb[0].mxu0 %v8263
    %v8265 = vpop.f32.mrb[0].mxu0
    %v8266 = vadd.f32 0.0, %v8265
    %v8267 = vpop.f32.mrb[0].mxu0
    %8268 = vdwg.mxu0
    %8269 = vmatprep.subr.mxu0 0.0
    %v8270 = vand.u32 %v8188, 4294901760
    %v8271 = vsub.f32 %v8188, %v8270
    %v8272 = vand.u32 %v8271, 4294901760
    %v8273 = vsub.f32 %v8271, %v8272
    %v8274 = vand.u32 %v8273, 4294901760
    %8275 = vmatpush1.msra.mxu0 %v8274
    %8276 = vmatprep.subr.mxu0 0.0
    %8277 = vmatpush1.msra.mxu0 0.0
    %8278 = vmatprep.subr.mxu0 0.0
    %8279 = vmatpush1.msra.mxu0 0.0
    %8280 = vmatprep.subr.mxu0 0.0
    %8281 = vmatpush1.msra.mxu0 0.0
    %8282 = vmatprep.subr.mxu0 0.0
    %8283 = vmatpush1.msra.mxu0 0.0
    %8284 = vmatprep.subr.mxu0 0.0
    %8285 = vmatpush1.msra.mxu0 0.0
    %8286 = vmatprep.subr.mxu0 0.0
    %8287 = vmatpush1.msra.mxu0 0.0
    %8288 = vmatprep.subr.mxu0 0.0
    %8289 = vmatpush1.msra.mxu0 0.0
    %8290 = vmatprep.subr.mxu0 0.0
    %8291 = vmatpush1.msra.mxu0 0.0
    %8292 = vmatprep.subr.mxu0 0.0
    %8293 = vmatpush1.msra.mxu0 0.0
    %8294 = vmatprep.subr.mxu0 0.0
    %8295 = vmatpush1.msra.mxu0 0.0
    %8296 = vmatprep.subr.mxu0 0.0
    %8297 = vmatpush1.msra.mxu0 0.0
    %8298 = vmatprep.subr.mxu0 0.0
    %8299 = vmatpush1.msra.mxu0 0.0
    %8300 = vmatprep.subr.mxu0 0.0
    %8301 = vmatpush1.msra.mxu0 0.0
    %8302 = vmatprep.subr.mxu0 0.0
    %8303 = vmatpush1.msra.mxu0 0.0
    %8304 = vmatprep.subr.mxu0 0.0
    %8305 = vmatpush1.msra.mxu0 0.0
    %8306 = vmatprep.subr.mxu0 0.0
    %8307 = vmatpush1.msra.mxu0 0.0
    %8308 = vmatprep.subr.mxu0 0.0
    %8309 = vmatpush1.msra.mxu0 0.0
    %8310 = vmatprep.subr.mxu0 0.0
    %8311 = vmatpush1.msra.mxu0 0.0
    %8312 = vmatprep.subr.mxu0 0.0
    %8313 = vmatpush1.msra.mxu0 0.0
    %8314 = vmatprep.subr.mxu0 0.0
    %8315 = vmatpush1.msra.mxu0 0.0
    %8316 = vmatprep.subr.mxu0 0.0
    %8317 = vmatpush1.msra.mxu0 0.0
    %8318 = vmatprep.subr.mxu0 0.0
    %8319 = vmatpush1.msra.mxu0 0.0
    %8320 = vmatprep.subr.mxu0 0.0
    %8321 = vmatpush1.msra.mxu0 0.0
    %8322 = vmatprep.subr.mxu0 0.0
    %8323 = vmatpush1.msra.mxu0 0.0
    %8324 = vmatprep.subr.mxu0 0.0
    %8325 = vmatpush1.msra.mxu0 0.0
    %8326 = vmatprep.subr.mxu0 0.0
    %8327 = vmatpush1.msra.mxu0 0.0
    %8328 = vmatprep.subr.mxu0 0.0
    %8329 = vmatpush1.msra.mxu0 0.0
    %8330 = vmatprep.subr.mxu0 0.0
    %8331 = vmatpush1.msra.mxu0 0.0
    %8332 = vmatprep.subr.mxu0 0.0
    %8333 = vmatpush1.msra.mxu0 0.0
    %8334 = vmatprep.subr.mxu0 0.0
    %8335 = vmatpush1.msra.mxu0 0.0
    %8336 = vmatprep.subr.mxu0 0.0
    %8337 = vmatpush1.msra.mxu0 0.0
    %8338 = vmatprep.mubr.f32.mxu0 0.0
    %v8339 = vand.u32 %v8191, 4294901760
    %8340 = vmatmul.mubr.f32.gmra.mrb[0].mxu0 %v8339
    %v8341 = vpop.f32.mrb[0].mxu0
    %v8342 = vadd.f32 %v8266, %v8341
    %v8343 = vpop.f32.mrb[0].mxu0
    %8344 = vdwg.mxu0
    %8345 = vmatprep.subr.mxu0 0.0
    %v8346 = vand.u32 %v8188, 4294901760
    %v8347 = vsub.f32 %v8188, %v8346
    %8348 = vmatpush1.msra.mxu0 %v8347
    %8349 = vmatprep.subr.mxu0 0.0
    %8350 = vmatpush1.msra.mxu0 0.0
    %8351 = vmatprep.subr.mxu0 0.0
    %8352 = vmatpush1.msra.mxu0 0.0
    %8353 = vmatprep.subr.mxu0 0.0
    %8354 = vmatpush1.msra.mxu0 0.0
    %8355 = vmatprep.subr.mxu0 0.0
    %8356 = vmatpush1.msra.mxu0 0.0
    %8357 = vmatprep.subr.mxu0 0.0
    %8358 = vmatpush1.msra.mxu0 0.0
    %8359 = vmatprep.subr.mxu0 0.0
    %8360 = vmatpush1.msra.mxu0 0.0
    %8361 = vmatprep.subr.mxu0 0.0
    %8362 = vmatpush1.msra.mxu0 0.0
    %8363 = vmatprep.subr.mxu0 0.0
    %8364 = vmatpush1.msra.mxu0 0.0
    %8365 = vmatprep.subr.mxu0 0.0
    %8366 = vmatpush1.msra.mxu0 0.0
    %8367 = vmatprep.subr.mxu0 0.0
    %8368 = vmatpush1.msra.mxu0 0.0
    %8369 = vmatprep.subr.mxu0 0.0
    %8370 = vmatpush1.msra.mxu0 0.0
    %8371 = vmatprep.subr.mxu0 0.0
    %8372 = vmatpush1.msra.mxu0 0.0
    %8373 = vmatprep.subr.mxu0 0.0
    %8374 = vmatpush1.msra.mxu0 0.0
    %8375 = vmatprep.subr.mxu0 0.0
    %8376 = vmatpush1.msra.mxu0 0.0
    %8377 = vmatprep.subr.mxu0 0.0
    %8378 = vmatpush1.msra.mxu0 0.0
    %8379 = vmatprep.subr.mxu0 0.0
    %8380 = vmatpush1.msra.mxu0 0.0
    %8381 = vmatprep.subr.mxu0 0.0
    %8382 = vmatpush1.msra.mxu0 0.0
    %8383 = vmatprep.subr.mxu0 0.0
    %8384 = vmatpush1.msra.mxu0 0.0
    %8385 = vmatprep.subr.mxu0 0.0
    %8386 = vmatpush1.msra.mxu0 0.0
    %8387 = vmatprep.subr.mxu0 0.0
    %8388 = vmatpush1.msra.mxu0 0.0
    %8389 = vmatprep.subr.mxu0 0.0
    %8390 = vmatpush1.msra.mxu0 0.0
    %8391 = vmatprep.subr.mxu0 0.0
    %8392 = vmatpush1.msra.mxu0 0.0
    %8393 = vmatprep.subr.mxu0 0.0
    %8394 = vmatpush1.msra.mxu0 0.0
    %8395 = vmatprep.subr.mxu0 0.0
    %8396 = vmatpush1.msra.mxu0 0.0
    %8397 = vmatprep.subr.mxu0 0.0
    %8398 = vmatpush1.msra.mxu0 0.0
    %8399 = vmatprep.subr.mxu0 0.0
    %8400 = vmatpush1.msra.mxu0 0.0
    %8401 = vmatprep.subr.mxu0 0.0
    %8402 = vmatpush1.msra.mxu0 0.0
    %8403 = vmatprep.subr.mxu0 0.0
    %8404 = vmatpush1.msra.mxu0 0.0
    %8405 = vmatprep.subr.mxu0 0.0
    %8406 = vmatpush1.msra.mxu0 0.0
    %8407 = vmatprep.subr.mxu0 0.0
    %8408 = vmatpush1.msra.mxu0 0.0
    %8409 = vmatprep.subr.mxu0 0.0
    %8410 = vmatpush1.msra.mxu0 0.0
    %8411 = vmatprep.mubr.f32.mxu0 0.0
    %v8412 = vand.u32 %v8191, 4294901760
    %v8413 = vsub.f32 %v8191, %v8412
    %8414 = vmatmul.mubr.f32.gmra.mrb[0].mxu0 %v8413
    %v8415 = vpop.f32.mrb[0].mxu0
    %v8416 = vadd.f32 %v8342, %v8415
    %v8417 = vpop.f32.mrb[0].mxu0
    %8418 = vdwg.mxu0
    %8419 = vmatprep.subr.mxu0 0.0
    %v8420 = vand.u32 %v8188, 4294901760
    %8421 = vmatpush1.msra.mxu0 %v8420
    %8422 = vmatprep.subr.mxu0 0.0
    %8423 = vmatpush1.msra.mxu0 0.0
    %8424 = vmatprep.subr.mxu0 0.0
    %8425 = vmatpush1.msra.mxu0 0.0
    %8426 = vmatprep.subr.mxu0 0.0
    %8427 = vmatpush1.msra.mxu0 0.0
    %8428 = vmatprep.subr.mxu0 0.0
    %8429 = vmatpush1.msra.mxu0 0.0
    %8430 = vmatprep.subr.mxu0 0.0
    %8431 = vmatpush1.msra.mxu0 0.0
    %8432 = vmatprep.subr.mxu0 0.0
    %8433 = vmatpush1.msra.mxu0 0.0
    %8434 = vmatprep.subr.mxu0 0.0
    %8435 = vmatpush1.msra.mxu0 0.0
    %8436 = vmatprep.subr.mxu0 0.0
    %8437 = vmatpush1.msra.mxu0 0.0
    %8438 = vmatprep.subr.mxu0 0.0
    %8439 = vmatpush1.msra.mxu0 0.0
    %8440 = vmatprep.subr.mxu0 0.0
    %8441 = vmatpush1.msra.mxu0 0.0
    %8442 = vmatprep.subr.mxu0 0.0
    %8443 = vmatpush1.msra.mxu0 0.0
    %8444 = vmatprep.subr.mxu0 0.0
    %8445 = vmatpush1.msra.mxu0 0.0
    %8446 = vmatprep.subr.mxu0 0.0
    %8447 = vmatpush1.msra.mxu0 0.0
    %8448 = vmatprep.subr.mxu0 0.0
    %8449 = vmatpush1.msra.mxu0 0.0
    %8450 = vmatprep.subr.mxu0 0.0
    %8451 = vmatpush1.msra.mxu0 0.0
    %8452 = vmatprep.subr.mxu0 0.0
    %8453 = vmatpush1.msra.mxu0 0.0
    %8454 = vmatprep.subr.mxu0 0.0
    %8455 = vmatpush1.msra.mxu0 0.0
    %8456 = vmatprep.subr.mxu0 0.0
    %8457 = vmatpush1.msra.mxu0 0.0
    %8458 = vmatprep.subr.mxu0 0.0
    %8459 = vmatpush1.msra.mxu0 0.0
    %8460 = vmatprep.subr.mxu0 0.0
    %8461 = vmatpush1.msra.mxu0 0.0
    %8462 = vmatprep.subr.mxu0 0.0
    %8463 = vmatpush1.msra.mxu0 0.0
    %8464 = vmatprep.subr.mxu0 0.0
    %8465 = vmatpush1.msra.mxu0 0.0
    %8466 = vmatprep.subr.mxu0 0.0
    %8467 = vmatpush1.msra.mxu0 0.0
    %8468 = vmatprep.subr.mxu0 0.0
    %8469 = vmatpush1.msra.mxu0 0.0
    %8470 = vmatprep.subr.mxu0 0.0
    %8471 = vmatpush1.msra.mxu0 0.0
    %8472 = vmatprep.subr.mxu0 0.0
    %8473 = vmatpush1.msra.mxu0 0.0
    %8474 = vmatprep.subr.mxu0 0.0
    %8475 = vmatpush1.msra.mxu0 0.0
    %8476 = vmatprep.subr.mxu0 0.0
    %8477 = vmatpush1.msra.mxu0 0.0
    %8478 = vmatprep.subr.mxu0 0.0
    %8479 = vmatpush1.msra.mxu0 0.0
    %8480 = vmatprep.subr.mxu0 0.0
    %8481 = vmatpush1.msra.mxu0 0.0
    %8482 = vmatprep.subr.mxu0 0.0
    %8483 = vmatpush1.msra.mxu0 0.0
    %8484 = vmatprep.mubr.f32.mxu0 0.0
    %v8485 = vand.u32 %v8191, 4294901760
    %v8486 = vsub.f32 %v8191, %v8485
    %v8487 = vand.u32 %v8486, 4294901760
    %8488 = vmatmul.mubr.f32.gmra.mrb[0].mxu0 %v8487
    %v8489 = vpop.f32.mrb[0].mxu0
    %v8490 = vadd.f32 %v8416, %v8489
    %v8491 = vpop.f32.mrb[0].mxu0
    %8492 = vdwg.mxu0
    %8493 = vmatprep.subr.mxu0 0.0
    %v8494 = vand.u32 %v8188, 4294901760
    %v8495 = vsub.f32 %v8188, %v8494
    %v8496 = vand.u32 %v8495, 4294901760
    %8497 = vmatpush1.msra.mxu0 %v8496
    %8498 = vmatprep.subr.mxu0 0.0
    %8499 = vmatpush1.msra.mxu0 0.0
    %8500 = vmatprep.subr.mxu0 0.0
    %8501 = vmatpush1.msra.mxu0 0.0
    %8502 = vmatprep.subr.mxu0 0.0
    %8503 = vmatpush1.msra.mxu0 0.0
    %8504 = vmatprep.subr.mxu0 0.0
    %8505 = vmatpush1.msra.mxu0 0.0
    %8506 = vmatprep.subr.mxu0 0.0
    %8507 = vmatpush1.msra.mxu0 0.0
    %8508 = vmatprep.subr.mxu0 0.0
    %8509 = vmatpush1.msra.mxu0 0.0
    %8510 = vmatprep.subr.mxu0 0.0
    %8511 = vmatpush1.msra.mxu0 0.0
    %8512 = vmatprep.subr.mxu0 0.0
    %8513 = vmatpush1.msra.mxu0 0.0
    %8514 = vmatprep.subr.mxu0 0.0
    %8515 = vmatpush1.msra.mxu0 0.0
    %8516 = vmatprep.subr.mxu0 0.0
    %8517 = vmatpush1.msra.mxu0 0.0
    %8518 = vmatprep.subr.mxu0 0.0
    %8519 = vmatpush1.msra.mxu0 0.0
    %8520 = vmatprep.subr.mxu0 0.0
    %8521 = vmatpush1.msra.mxu0 0.0
    %8522 = vmatprep.subr.mxu0 0.0
    %8523 = vmatpush1.msra.mxu0 0.0
    %8524 = vmatprep.subr.mxu0 0.0
    %8525 = vmatpush1.msra.mxu0 0.0
    %8526 = vmatprep.subr.mxu0 0.0
    %8527 = vmatpush1.msra.mxu0 0.0
    %8528 = vmatprep.subr.mxu0 0.0
    %8529 = vmatpush1.msra.mxu0 0.0
    %8530 = vmatprep.subr.mxu0 0.0
    %8531 = vmatpush1.msra.mxu0 0.0
    %8532 = vmatprep.subr.mxu0 0.0
    %8533 = vmatpush1.msra.mxu0 0.0
    %8534 = vmatprep.subr.mxu0 0.0
    %8535 = vmatpush1.msra.mxu0 0.0
    %8536 = vmatprep.subr.mxu0 0.0
    %8537 = vmatpush1.msra.mxu0 0.0
    %8538 = vmatprep.subr.mxu0 0.0
    %8539 = vmatpush1.msra.mxu0 0.0
    %8540 = vmatprep.subr.mxu0 0.0
    %8541 = vmatpush1.msra.mxu0 0.0
    %8542 = vmatprep.subr.mxu0 0.0
    %8543 = vmatpush1.msra.mxu0 0.0
    %8544 = vmatprep.subr.mxu0 0.0
    %8545 = vmatpush1.msra.mxu0 0.0
    %8546 = vmatprep.subr.mxu0 0.0
    %8547 = vmatpush1.msra.mxu0 0.0
    %8548 = vmatprep.subr.mxu0 0.0
    %8549 = vmatpush1.msra.mxu0 0.0
    %8550 = vmatprep.subr.mxu0 0.0
    %8551 = vmatpush1.msra.mxu0 0.0
    %8552 = vmatprep.subr.mxu0 0.0
    %8553 = vmatpush1.msra.mxu0 0.0
    %8554 = vmatprep.subr.mxu0 0.0
    %8555 = vmatpush1.msra.mxu0 0.0
    %8556 = vmatprep.subr.mxu0 0.0
    %8557 = vmatpush1.msra.mxu0 0.0
    %8558 = vmatprep.subr.mxu0 0.0
    %8559 = vmatpush1.msra.mxu0 0.0
    %8560 = vmatprep.mubr.f32.mxu0 0.0
    %v8561 = vand.u32 %v8191, 4294901760
    %8562 = vmatmul.mubr.f32.gmra.mrb[0].mxu0 %v8561
    %v8563 = vpop.f32.mrb[0].mxu0
    %v8564 = vadd.f32 %v8490, %v8563
    %v8565 = vpop.f32.mrb[0].mxu0
    %8566 = vdwg.mxu0
    %8567 = vmatprep.subr.mxu0 0.0
    %v8568 = vand.u32 %v8188, 4294901760
    %8569 = vmatpush1.msra.mxu0 %v8568
    %8570 = vmatprep.subr.mxu0 0.0
    %8571 = vmatpush1.msra.mxu0 0.0
    %8572 = vmatprep.subr.mxu0 0.0
    %8573 = vmatpush1.msra.mxu0 0.0
    %8574 = vmatprep.subr.mxu0 0.0
    %8575 = vmatpush1.msra.mxu0 0.0
    %8576 = vmatprep.subr.mxu0 0.0
    %8577 = vmatpush1.msra.mxu0 0.0
    %8578 = vmatprep.subr.mxu0 0.0
    %8579 = vmatpush1.msra.mxu0 0.0
    %8580 = vmatprep.subr.mxu0 0.0
    %8581 = vmatpush1.msra.mxu0 0.0
    %8582 = vmatprep.subr.mxu0 0.0
    %8583 = vmatpush1.msra.mxu0 0.0
    %8584 = vmatprep.subr.mxu0 0.0
    %8585 = vmatpush1.msra.mxu0 0.0
    %8586 = vmatprep.subr.mxu0 0.0
    %8587 = vmatpush1.msra.mxu0 0.0
    %8588 = vmatprep.subr.mxu0 0.0
    %8589 = vmatpush1.msra.mxu0 0.0
    %8590 = vmatprep.subr.mxu0 0.0
    %8591 = vmatpush1.msra.mxu0 0.0
    %8592 = vmatprep.subr.mxu0 0.0
    %8593 = vmatpush1.msra.mxu0 0.0
    %8594 = vmatprep.subr.mxu0 0.0
    %8595 = vmatpush1.msra.mxu0 0.0
    %8596 = vmatprep.subr.mxu0 0.0
    %8597 = vmatpush1.msra.mxu0 0.0
    %8598 = vmatprep.subr.mxu0 0.0
    %8599 = vmatpush1.msra.mxu0 0.0
    %8600 = vmatprep.subr.mxu0 0.0
    %8601 = vmatpush1.msra.mxu0 0.0
    %8602 = vmatprep.subr.mxu0 0.0
    %8603 = vmatpush1.msra.mxu0 0.0
    %8604 = vmatprep.subr.mxu0 0.0
    %8605 = vmatpush1.msra.mxu0 0.0
    %8606 = vmatprep.subr.mxu0 0.0
    %8607 = vmatpush1.msra.mxu0 0.0
    %8608 = vmatprep.subr.mxu0 0.0
    %8609 = vmatpush1.msra.mxu0 0.0
    %8610 = vmatprep.subr.mxu0 0.0
    %8611 = vmatpush1.msra.mxu0 0.0
    %8612 = vmatprep.subr.mxu0 0.0
    %8613 = vmatpush1.msra.mxu0 0.0
    %8614 = vmatprep.subr.mxu0 0.0
    %8615 = vmatpush1.msra.mxu0 0.0
    %8616 = vmatprep.subr.mxu0 0.0
    %8617 = vmatpush1.msra.mxu0 0.0
    %8618 = vmatprep.subr.mxu0 0.0
    %8619 = vmatpush1.msra.mxu0 0.0
    %8620 = vmatprep.subr.mxu0 0.0
    %8621 = vmatpush1.msra.mxu0 0.0
    %8622 = vmatprep.subr.mxu0 0.0
    %8623 = vmatpush1.msra.mxu0 0.0
    %8624 = vmatprep.subr.mxu0 0.0
    %8625 = vmatpush1.msra.mxu0 0.0
    %8626 = vmatprep.subr.mxu0 0.0
    %8627 = vmatpush1.msra.mxu0 0.0
    %8628 = vmatprep.subr.mxu0 0.0
    %8629 = vmatpush1.msra.mxu0 0.0
    %8630 = vmatprep.subr.mxu0 0.0
    %8631 = vmatpush1.msra.mxu0 0.0
    %8632 = vmatprep.mubr.f32.mxu0 0.0
    %v8633 = vand.u32 %v8191, 4294901760
    %8634 = vmatmul.mubr.f32.gmra.mrb[0].mxu0 %v8633
    %v8635 = vpop.f32.mrb[0].mxu0
    %v8636 = vadd.f32 %v8564, %v8635
    %v8637 = vpop.f32.mrb[0].mxu0
    %8638 = vdwg.mxu0
    %8639 = vrot.lane.b32.xlu0 %v1748, 104
    %v8640 = vpop.permute.xlu0 %8639
    %v8643 = vsel %vm1751, %v8183, 0
    %8645 = vmatprep.subr.mxu0 0.0
    %v8646 = vand.u32 %v8640, 4294901760
    %8647 = vmatpush1.msra.mxu0 %v8646
    %8648 = vmatprep.subr.mxu0 0.0
    %8649 = vmatpush1.msra.mxu0 0.0
    %8650 = vmatprep.subr.mxu0 0.0
    %8651 = vmatpush1.msra.mxu0 0.0
    %8652 = vmatprep.subr.mxu0 0.0
    %8653 = vmatpush1.msra.mxu0 0.0
    %8654 = vmatprep.subr.mxu0 0.0
    %8655 = vmatpush1.msra.mxu0 0.0
    %8656 = vmatprep.subr.mxu0 0.0
    %8657 = vmatpush1.msra.mxu0 0.0
    %8658 = vmatprep.subr.mxu0 0.0
    %8659 = vmatpush1.msra.mxu0 0.0
    %8660 = vmatprep.subr.mxu0 0.0
    %8661 = vmatpush1.msra.mxu0 0.0
    %8662 = vmatprep.subr.mxu0 0.0
    %8663 = vmatpush1.msra.mxu0 0.0
    %8664 = vmatprep.subr.mxu0 0.0
    %8665 = vmatpush1.msra.mxu0 0.0
    %8666 = vmatprep.subr.mxu0 0.0
    %8667 = vmatpush1.msra.mxu0 0.0
    %8668 = vmatprep.subr.mxu0 0.0
    %8669 = vmatpush1.msra.mxu0 0.0
    %8670 = vmatprep.subr.mxu0 0.0
    %8671 = vmatpush1.msra.mxu0 0.0
    %8672 = vmatprep.subr.mxu0 0.0
    %8673 = vmatpush1.msra.mxu0 0.0
    %8674 = vmatprep.subr.mxu0 0.0
    %8675 = vmatpush1.msra.mxu0 0.0
    %8676 = vmatprep.subr.mxu0 0.0
    %8677 = vmatpush1.msra.mxu0 0.0
    %8678 = vmatprep.subr.mxu0 0.0
    %8679 = vmatpush1.msra.mxu0 0.0
    %8680 = vmatprep.subr.mxu0 0.0
    %8681 = vmatpush1.msra.mxu0 0.0
    %8682 = vmatprep.subr.mxu0 0.0
    %8683 = vmatpush1.msra.mxu0 0.0
    %8684 = vmatprep.subr.mxu0 0.0
    %8685 = vmatpush1.msra.mxu0 0.0
    %8686 = vmatprep.subr.mxu0 0.0
    %8687 = vmatpush1.msra.mxu0 0.0
    %8688 = vmatprep.subr.mxu0 0.0
    %8689 = vmatpush1.msra.mxu0 0.0
    %8690 = vmatprep.subr.mxu0 0.0
    %8691 = vmatpush1.msra.mxu0 0.0
    %8692 = vmatprep.subr.mxu0 0.0
    %8693 = vmatpush1.msra.mxu0 0.0
    %8694 = vmatprep.subr.mxu0 0.0
    %8695 = vmatpush1.msra.mxu0 0.0
    %8696 = vmatprep.subr.mxu0 0.0
    %8697 = vmatpush1.msra.mxu0 0.0
    %8698 = vmatprep.subr.mxu0 0.0
    %8699 = vmatpush1.msra.mxu0 0.0
    %8700 = vmatprep.subr.mxu0 0.0
    %8701 = vmatpush1.msra.mxu0 0.0
    %8702 = vmatprep.subr.mxu0 0.0
    %8703 = vmatpush1.msra.mxu0 0.0
    %8704 = vmatprep.subr.mxu0 0.0
    %8705 = vmatpush1.msra.mxu0 0.0
    %8706 = vmatprep.subr.mxu0 0.0
    %8707 = vmatpush1.msra.mxu0 0.0
    %8708 = vmatprep.subr.mxu0 0.0
    %8709 = vmatpush1.msra.mxu0 0.0
    %8710 = vmatprep.mubr.f32.mxu0 0.0
    %v8711 = vand.u32 %v8643, 4294901760
    %v8712 = vsub.f32 %v8643, %v8711
    %v8713 = vand.u32 %v8712, 4294901760
    %v8714 = vsub.f32 %v8712, %v8713
    %v8715 = vand.u32 %v8714, 4294901760
    %8716 = vmatmul.mubr.f32.gmra.mrb[0].mxu0 %v8715
    %v8717 = vpop.f32.mrb[0].mxu0
    %v8718 = vadd.f32 0.0, %v8717
    %v8719 = vpop.f32.mrb[0].mxu0
    %8720 = vdwg.mxu0
    %8721 = vmatprep.subr.mxu0 0.0
    %v8722 = vand.u32 %v8640, 4294901760
    %v8723 = vsub.f32 %v8640, %v8722
    %v8724 = vand.u32 %v8723, 4294901760
    %v8725 = vsub.f32 %v8723, %v8724
    %v8726 = vand.u32 %v8725, 4294901760
    %8727 = vmatpush1.msra.mxu0 %v8726
    %8728 = vmatprep.subr.mxu0 0.0
    %8729 = vmatpush1.msra.mxu0 0.0
    %8730 = vmatprep.subr.mxu0 0.0
    %8731 = vmatpush1.msra.mxu0 0.0
    %8732 = vmatprep.subr.mxu0 0.0
    %8733 = vmatpush1.msra.mxu0 0.0
    %8734 = vmatprep.subr.mxu0 0.0
    %8735 = vmatpush1.msra.mxu0 0.0
    %8736 = vmatprep.subr.mxu0 0.0
    %8737 = vmatpush1.msra.mxu0 0.0
    %8738 = vmatprep.subr.mxu0 0.0
    %8739 = vmatpush1.msra.mxu0 0.0
    %8740 = vmatprep.subr.mxu0 0.0
    %8741 = vmatpush1.msra.mxu0 0.0
    %8742 = vmatprep.subr.mxu0 0.0
    %8743 = vmatpush1.msra.mxu0 0.0
    %8744 = vmatprep.subr.mxu0 0.0
    %8745 = vmatpush1.msra.mxu0 0.0
    %8746 = vmatprep.subr.mxu0 0.0
    %8747 = vmatpush1.msra.mxu0 0.0
    %8748 = vmatprep.subr.mxu0 0.0
    %8749 = vmatpush1.msra.mxu0 0.0
    %8750 = vmatprep.subr.mxu0 0.0
    %8751 = vmatpush1.msra.mxu0 0.0
    %8752 = vmatprep.subr.mxu0 0.0
    %8753 = vmatpush1.msra.mxu0 0.0
    %8754 = vmatprep.subr.mxu0 0.0
    %8755 = vmatpush1.msra.mxu0 0.0
    %8756 = vmatprep.subr.mxu0 0.0
    %8757 = vmatpush1.msra.mxu0 0.0
    %8758 = vmatprep.subr.mxu0 0.0
    %8759 = vmatpush1.msra.mxu0 0.0
    %8760 = vmatprep.subr.mxu0 0.0
    %8761 = vmatpush1.msra.mxu0 0.0
    %8762 = vmatprep.subr.mxu0 0.0
    %8763 = vmatpush1.msra.mxu0 0.0
    %8764 = vmatprep.subr.mxu0 0.0
    %8765 = vmatpush1.msra.mxu0 0.0
    %8766 = vmatprep.subr.mxu0 0.0
    %8767 = vmatpush1.msra.mxu0 0.0
    %8768 = vmatprep.subr.mxu0 0.0
    %8769 = vmatpush1.msra.mxu0 0.0
    %8770 = vmatprep.subr.mxu0 0.0
    %8771 = vmatpush1.msra.mxu0 0.0
    %8772 = vmatprep.subr.mxu0 0.0
    %8773 = vmatpush1.msra.mxu0 0.0
    %8774 = vmatprep.subr.mxu0 0.0
    %8775 = vmatpush1.msra.mxu0 0.0
    %8776 = vmatprep.subr.mxu0 0.0
    %8777 = vmatpush1.msra.mxu0 0.0
    %8778 = vmatprep.subr.mxu0 0.0
    %8779 = vmatpush1.msra.mxu0 0.0
    %8780 = vmatprep.subr.mxu0 0.0
    %8781 = vmatpush1.msra.mxu0 0.0
    %8782 = vmatprep.subr.mxu0 0.0
    %8783 = vmatpush1.msra.mxu0 0.0
    %8784 = vmatprep.subr.mxu0 0.0
    %8785 = vmatpush1.msra.mxu0 0.0
    %8786 = vmatprep.subr.mxu0 0.0
    %8787 = vmatpush1.msra.mxu0 0.0
    %8788 = vmatprep.subr.mxu0 0.0
    %8789 = vmatpush1.msra.mxu0 0.0
    %8790 = vmatprep.mubr.f32.mxu0 0.0
    %v8791 = vand.u32 %v8643, 4294901760
    %8792 = vmatmul.mubr.f32.gmra.mrb[0].mxu0 %v8791
    %v8793 = vpop.f32.mrb[0].mxu0
    %v8794 = vadd.f32 %v8718, %v8793
    %v8795 = vpop.f32.mrb[0].mxu0
    %8796 = vdwg.mxu0
    %8797 = vmatprep.subr.mxu0 0.0
    %v8798 = vand.u32 %v8640, 4294901760
    %v8799 = vsub.f32 %v8640, %v8798
    %8800 = vmatpush1.msra.mxu0 %v8799
    %8801 = vmatprep.subr.mxu0 0.0
    %8802 = vmatpush1.msra.mxu0 0.0
    %8803 = vmatprep.subr.mxu0 0.0
    %8804 = vmatpush1.msra.mxu0 0.0
    %8805 = vmatprep.subr.mxu0 0.0
    %8806 = vmatpush1.msra.mxu0 0.0
    %8807 = vmatprep.subr.mxu0 0.0
    %8808 = vmatpush1.msra.mxu0 0.0
    %8809 = vmatprep.subr.mxu0 0.0
    %8810 = vmatpush1.msra.mxu0 0.0
    %8811 = vmatprep.subr.mxu0 0.0
    %8812 = vmatpush1.msra.mxu0 0.0
    %8813 = vmatprep.subr.mxu0 0.0
    %8814 = vmatpush1.msra.mxu0 0.0
    %8815 = vmatprep.subr.mxu0 0.0
    %8816 = vmatpush1.msra.mxu0 0.0
    %8817 = vmatprep.subr.mxu0 0.0
    %8818 = vmatpush1.msra.mxu0 0.0
    %8819 = vmatprep.subr.mxu0 0.0
    %8820 = vmatpush1.msra.mxu0 0.0
    %8821 = vmatprep.subr.mxu0 0.0
    %8822 = vmatpush1.msra.mxu0 0.0
    %8823 = vmatprep.subr.mxu0 0.0
    %8824 = vmatpush1.msra.mxu0 0.0
    %8825 = vmatprep.subr.mxu0 0.0
    %8826 = vmatpush1.msra.mxu0 0.0
    %8827 = vmatprep.subr.mxu0 0.0
    %8828 = vmatpush1.msra.mxu0 0.0
    %8829 = vmatprep.subr.mxu0 0.0
    %8830 = vmatpush1.msra.mxu0 0.0
    %8831 = vmatprep.subr.mxu0 0.0
    %8832 = vmatpush1.msra.mxu0 0.0
    %8833 = vmatprep.subr.mxu0 0.0
    %8834 = vmatpush1.msra.mxu0 0.0
    %8835 = vmatprep.subr.mxu0 0.0
    %8836 = vmatpush1.msra.mxu0 0.0
    %8837 = vmatprep.subr.mxu0 0.0
    %8838 = vmatpush1.msra.mxu0 0.0
    %8839 = vmatprep.subr.mxu0 0.0
    %8840 = vmatpush1.msra.mxu0 0.0
    %8841 = vmatprep.subr.mxu0 0.0
    %8842 = vmatpush1.msra.mxu0 0.0
    %8843 = vmatprep.subr.mxu0 0.0
    %8844 = vmatpush1.msra.mxu0 0.0
    %8845 = vmatprep.subr.mxu0 0.0
    %8846 = vmatpush1.msra.mxu0 0.0
    %8847 = vmatprep.subr.mxu0 0.0
    %8848 = vmatpush1.msra.mxu0 0.0
    %8849 = vmatprep.subr.mxu0 0.0
    %8850 = vmatpush1.msra.mxu0 0.0
    %8851 = vmatprep.subr.mxu0 0.0
    %8852 = vmatpush1.msra.mxu0 0.0
    %8853 = vmatprep.subr.mxu0 0.0
    %8854 = vmatpush1.msra.mxu0 0.0
    %8855 = vmatprep.subr.mxu0 0.0
    %8856 = vmatpush1.msra.mxu0 0.0
    %8857 = vmatprep.subr.mxu0 0.0
    %8858 = vmatpush1.msra.mxu0 0.0
    %8859 = vmatprep.subr.mxu0 0.0
    %8860 = vmatpush1.msra.mxu0 0.0
    %8861 = vmatprep.subr.mxu0 0.0
    %8862 = vmatpush1.msra.mxu0 0.0
    %8863 = vmatprep.mubr.f32.mxu0 0.0
    %v8864 = vand.u32 %v8643, 4294901760
    %v8865 = vsub.f32 %v8643, %v8864
    %8866 = vmatmul.mubr.f32.gmra.mrb[0].mxu0 %v8865
    %v8867 = vpop.f32.mrb[0].mxu0
    %v8868 = vadd.f32 %v8794, %v8867
    %v8869 = vpop.f32.mrb[0].mxu0
    %8870 = vdwg.mxu0
    %8871 = vmatprep.subr.mxu0 0.0
    %v8872 = vand.u32 %v8640, 4294901760
    %8873 = vmatpush1.msra.mxu0 %v8872
    %8874 = vmatprep.subr.mxu0 0.0
    %8875 = vmatpush1.msra.mxu0 0.0
    %8876 = vmatprep.subr.mxu0 0.0
    %8877 = vmatpush1.msra.mxu0 0.0
    %8878 = vmatprep.subr.mxu0 0.0
    %8879 = vmatpush1.msra.mxu0 0.0
    %8880 = vmatprep.subr.mxu0 0.0
    %8881 = vmatpush1.msra.mxu0 0.0
    %8882 = vmatprep.subr.mxu0 0.0
    %8883 = vmatpush1.msra.mxu0 0.0
    %8884 = vmatprep.subr.mxu0 0.0
    %8885 = vmatpush1.msra.mxu0 0.0
    %8886 = vmatprep.subr.mxu0 0.0
    %8887 = vmatpush1.msra.mxu0 0.0
    %8888 = vmatprep.subr.mxu0 0.0
    %8889 = vmatpush1.msra.mxu0 0.0
    %8890 = vmatprep.subr.mxu0 0.0
    %8891 = vmatpush1.msra.mxu0 0.0
    %8892 = vmatprep.subr.mxu0 0.0
    %8893 = vmatpush1.msra.mxu0 0.0
    %8894 = vmatprep.subr.mxu0 0.0
    %8895 = vmatpush1.msra.mxu0 0.0
    %8896 = vmatprep.subr.mxu0 0.0
    %8897 = vmatpush1.msra.mxu0 0.0
    %8898 = vmatprep.subr.mxu0 0.0
    %8899 = vmatpush1.msra.mxu0 0.0
    %8900 = vmatprep.subr.mxu0 0.0
    %8901 = vmatpush1.msra.mxu0 0.0
    %8902 = vmatprep.subr.mxu0 0.0
    %8903 = vmatpush1.msra.mxu0 0.0
    %8904 = vmatprep.subr.mxu0 0.0
    %8905 = vmatpush1.msra.mxu0 0.0
    %8906 = vmatprep.subr.mxu0 0.0
    %8907 = vmatpush1.msra.mxu0 0.0
    %8908 = vmatprep.subr.mxu0 0.0
    %8909 = vmatpush1.msra.mxu0 0.0
    %8910 = vmatprep.subr.mxu0 0.0
    %8911 = vmatpush1.msra.mxu0 0.0
    %8912 = vmatprep.subr.mxu0 0.0
    %8913 = vmatpush1.msra.mxu0 0.0
    %8914 = vmatprep.subr.mxu0 0.0
    %8915 = vmatpush1.msra.mxu0 0.0
    %8916 = vmatprep.subr.mxu0 0.0
    %8917 = vmatpush1.msra.mxu0 0.0
    %8918 = vmatprep.subr.mxu0 0.0
    %8919 = vmatpush1.msra.mxu0 0.0
    %8920 = vmatprep.subr.mxu0 0.0
    %8921 = vmatpush1.msra.mxu0 0.0
    %8922 = vmatprep.subr.mxu0 0.0
    %8923 = vmatpush1.msra.mxu0 0.0
    %8924 = vmatprep.subr.mxu0 0.0
    %8925 = vmatpush1.msra.mxu0 0.0
    %8926 = vmatprep.subr.mxu0 0.0
    %8927 = vmatpush1.msra.mxu0 0.0
    %8928 = vmatprep.subr.mxu0 0.0
    %8929 = vmatpush1.msra.mxu0 0.0
    %8930 = vmatprep.subr.mxu0 0.0
    %8931 = vmatpush1.msra.mxu0 0.0
    %8932 = vmatprep.subr.mxu0 0.0
    %8933 = vmatpush1.msra.mxu0 0.0
    %8934 = vmatprep.subr.mxu0 0.0
    %8935 = vmatpush1.msra.mxu0 0.0
    %8936 = vmatprep.mubr.f32.mxu0 0.0
    %v8937 = vand.u32 %v8643, 4294901760
    %v8938 = vsub.f32 %v8643, %v8937
    %v8939 = vand.u32 %v8938, 4294901760
    %8940 = vmatmul.mubr.f32.gmra.mrb[0].mxu0 %v8939
    %v8941 = vpop.f32.mrb[0].mxu0
    %v8942 = vadd.f32 %v8868, %v8941
    %v8943 = vpop.f32.mrb[0].mxu0
    %8944 = vdwg.mxu0
    %8945 = vmatprep.subr.mxu0 0.0
    %v8946 = vand.u32 %v8640, 4294901760
    %v8947 = vsub.f32 %v8640, %v8946
    %v8948 = vand.u32 %v8947, 4294901760
    %8949 = vmatpush1.msra.mxu0 %v8948
    %8950 = vmatprep.subr.mxu0 0.0
    %8951 = vmatpush1.msra.mxu0 0.0
    %8952 = vmatprep.subr.mxu0 0.0
    %8953 = vmatpush1.msra.mxu0 0.0
    %8954 = vmatprep.subr.mxu0 0.0
    %8955 = vmatpush1.msra.mxu0 0.0
    %8956 = vmatprep.subr.mxu0 0.0
    %8957 = vmatpush1.msra.mxu0 0.0
    %8958 = vmatprep.subr.mxu0 0.0
    %8959 = vmatpush1.msra.mxu0 0.0
    %8960 = vmatprep.subr.mxu0 0.0
    %8961 = vmatpush1.msra.mxu0 0.0
    %8962 = vmatprep.subr.mxu0 0.0
    %8963 = vmatpush1.msra.mxu0 0.0
    %8964 = vmatprep.subr.mxu0 0.0
    %8965 = vmatpush1.msra.mxu0 0.0
    %8966 = vmatprep.subr.mxu0 0.0
    %8967 = vmatpush1.msra.mxu0 0.0
    %8968 = vmatprep.subr.mxu0 0.0
    %8969 = vmatpush1.msra.mxu0 0.0
    %8970 = vmatprep.subr.mxu0 0.0
    %8971 = vmatpush1.msra.mxu0 0.0
    %8972 = vmatprep.subr.mxu0 0.0
    %8973 = vmatpush1.msra.mxu0 0.0
    %8974 = vmatprep.subr.mxu0 0.0
    %8975 = vmatpush1.msra.mxu0 0.0
    %8976 = vmatprep.subr.mxu0 0.0
    %8977 = vmatpush1.msra.mxu0 0.0
    %8978 = vmatprep.subr.mxu0 0.0
    %8979 = vmatpush1.msra.mxu0 0.0
    %8980 = vmatprep.subr.mxu0 0.0
    %8981 = vmatpush1.msra.mxu0 0.0
    %8982 = vmatprep.subr.mxu0 0.0
    %8983 = vmatpush1.msra.mxu0 0.0
    %8984 = vmatprep.subr.mxu0 0.0
    %8985 = vmatpush1.msra.mxu0 0.0
    %8986 = vmatprep.subr.mxu0 0.0
    %8987 = vmatpush1.msra.mxu0 0.0
    %8988 = vmatprep.subr.mxu0 0.0
    %8989 = vmatpush1.msra.mxu0 0.0
    %8990 = vmatprep.subr.mxu0 0.0
    %8991 = vmatpush1.msra.mxu0 0.0
    %8992 = vmatprep.subr.mxu0 0.0
    %8993 = vmatpush1.msra.mxu0 0.0
    %8994 = vmatprep.subr.mxu0 0.0
    %8995 = vmatpush1.msra.mxu0 0.0
    %8996 = vmatprep.subr.mxu0 0.0
    %8997 = vmatpush1.msra.mxu0 0.0
    %8998 = vmatprep.subr.mxu0 0.0
    %8999 = vmatpush1.msra.mxu0 0.0
    %9000 = vmatprep.subr.mxu0 0.0
    %9001 = vmatpush1.msra.mxu0 0.0
    %9002 = vmatprep.subr.mxu0 0.0
    %9003 = vmatpush1.msra.mxu0 0.0
    %9004 = vmatprep.subr.mxu0 0.0
    %9005 = vmatpush1.msra.mxu0 0.0
    %9006 = vmatprep.subr.mxu0 0.0
    %9007 = vmatpush1.msra.mxu0 0.0
    %9008 = vmatprep.subr.mxu0 0.0
    %9009 = vmatpush1.msra.mxu0 0.0
    %9010 = vmatprep.subr.mxu0 0.0
    %9011 = vmatpush1.msra.mxu0 0.0
    %9012 = vmatprep.mubr.f32.mxu0 0.0
    %v9013 = vand.u32 %v8643, 4294901760
    %9014 = vmatmul.mubr.f32.gmra.mrb[0].mxu0 %v9013
    %v9015 = vpop.f32.mrb[0].mxu0
    %v9016 = vadd.f32 %v8942, %v9015
    %v9017 = vpop.f32.mrb[0].mxu0
    %9018 = vdwg.mxu0
    %9019 = vmatprep.subr.mxu0 0.0
    %v9020 = vand.u32 %v8640, 4294901760
    %9021 = vmatpush1.msra.mxu0 %v9020
    %9022 = vmatprep.subr.mxu0 0.0
    %9023 = vmatpush1.msra.mxu0 0.0
    %9024 = vmatprep.subr.mxu0 0.0
    %9025 = vmatpush1.msra.mxu0 0.0
    %9026 = vmatprep.subr.mxu0 0.0
    %9027 = vmatpush1.msra.mxu0 0.0
    %9028 = vmatprep.subr.mxu0 0.0
    %9029 = vmatpush1.msra.mxu0 0.0
    %9030 = vmatprep.subr.mxu0 0.0
    %9031 = vmatpush1.msra.mxu0 0.0
    %9032 = vmatprep.subr.mxu0 0.0
    %9033 = vmatpush1.msra.mxu0 0.0
    %9034 = vmatprep.subr.mxu0 0.0
    %9035 = vmatpush1.msra.mxu0 0.0
    %9036 = vmatprep.subr.mxu0 0.0
    %9037 = vmatpush1.msra.mxu0 0.0
    %9038 = vmatprep.subr.mxu0 0.0
    %9039 = vmatpush1.msra.mxu0 0.0
    %9040 = vmatprep.subr.mxu0 0.0
    %9041 = vmatpush1.msra.mxu0 0.0
    %9042 = vmatprep.subr.mxu0 0.0
    %9043 = vmatpush1.msra.mxu0 0.0
    %9044 = vmatprep.subr.mxu0 0.0
    %9045 = vmatpush1.msra.mxu0 0.0
    %9046 = vmatprep.subr.mxu0 0.0
    %9047 = vmatpush1.msra.mxu0 0.0
    %9048 = vmatprep.subr.mxu0 0.0
    %9049 = vmatpush1.msra.mxu0 0.0
    %9050 = vmatprep.subr.mxu0 0.0
    %9051 = vmatpush1.msra.mxu0 0.0
    %9052 = vmatprep.subr.mxu0 0.0
    %9053 = vmatpush1.msra.mxu0 0.0
    %9054 = vmatprep.subr.mxu0 0.0
    %9055 = vmatpush1.msra.mxu0 0.0
    %9056 = vmatprep.subr.mxu0 0.0
    %9057 = vmatpush1.msra.mxu0 0.0
    %9058 = vmatprep.subr.mxu0 0.0
    %9059 = vmatpush1.msra.mxu0 0.0
    %9060 = vmatprep.subr.mxu0 0.0
    %9061 = vmatpush1.msra.mxu0 0.0
    %9062 = vmatprep.subr.mxu0 0.0
    %9063 = vmatpush1.msra.mxu0 0.0
    %9064 = vmatprep.subr.mxu0 0.0
    %9065 = vmatpush1.msra.mxu0 0.0
    %9066 = vmatprep.subr.mxu0 0.0
    %9067 = vmatpush1.msra.mxu0 0.0
    %9068 = vmatprep.subr.mxu0 0.0
    %9069 = vmatpush1.msra.mxu0 0.0
    %9070 = vmatprep.subr.mxu0 0.0
    %9071 = vmatpush1.msra.mxu0 0.0
    %9072 = vmatprep.subr.mxu0 0.0
    %9073 = vmatpush1.msra.mxu0 0.0
    %9074 = vmatprep.subr.mxu0 0.0
    %9075 = vmatpush1.msra.mxu0 0.0
    %9076 = vmatprep.subr.mxu0 0.0
    %9077 = vmatpush1.msra.mxu0 0.0
    %9078 = vmatprep.subr.mxu0 0.0
    %9079 = vmatpush1.msra.mxu0 0.0
    %9080 = vmatprep.subr.mxu0 0.0
    %9081 = vmatpush1.msra.mxu0 0.0
    %9082 = vmatprep.subr.mxu0 0.0
    %9083 = vmatpush1.msra.mxu0 0.0
    %9084 = vmatprep.mubr.f32.mxu0 0.0
    %v9085 = vand.u32 %v8643, 4294901760
    %9086 = vmatmul.mubr.f32.gmra.mrb[0].mxu0 %v9085
    %v9087 = vpop.f32.mrb[0].mxu0
    %v9088 = vadd.f32 %v9016, %v9087
    %v9089 = vpop.f32.mrb[0].mxu0
    %9090 = vdwg.mxu0
    %9093 = vrot.lane.b32.xlu0 %v4961, 8
    %v9094 = vpop.permute.xlu0 %9093
    %9095 = vrot.lane.b32.xlu0 %v5414, 8
    %v9096 = vpop.permute.xlu0 %9095
    %9101 = vrot.lane.b32.xlu0 %v6799, 16
    %v9102 = vpop.permute.xlu0 %9101
    %9103 = vrot.lane.b32.xlu0 %v7251, 16
    %v9104 = vpop.permute.xlu0 %9103
    %9109 = vrot.lane.b32.xlu0 %v8636, 24
    %v9110 = vpop.permute.xlu0 %9109
    %9111 = vrot.lane.b32.xlu0 %v9088, 24
    %v9112 = vpop.permute.xlu0 %9111
    %v9115 = vsel %vm1751, %v3126, %v9094
    %v9116 = vsel %vm1751, %v3575, %v9096
    %vm9117 = vcmask 130048
    %v9118 = vsel %vm9117, %v9115, %v9102
    %v9119 = vsel %vm9117, %v9116, %v9104
    %vm9120 = vcmask 195584
    %v9121 = vsel %vm9120, %v9118, %v9110
    %v9122 = vsel %vm9120, %v9119, %v9112
    %v9123 = vld [vmem:[%s7] sm:$0xff]
    %v9124 = vld [vmem:[%s7 + $0x8] sm:$0xff]
    %v9125 = vld [vmem:[%s7 + $0x10] sm:$0xff]
    %v9126 = vld [vmem:[%s7 + $0x18] sm:$0xff]
    %v9127 = vld [vmem:[%s6 + $0x3] sm:$0x1]
    %v9128 = vlaneseq
    %v9129 = vshrl.u32 %v9128, 7
    %v9130 = vsub.s32 0, %v9129
    %v9131 = vrot.slane %v9127, %v9130
    %v9133 = vsel %vm126, %v9121, 0
    %v9136 = vsel %vm126, %v9122, 0
    %9138 = vmatprep.subr.mxu0 0.0
    %v9139 = vand.u32 %v9123, 4294901760
    %9140 = vmatpush1.msra.mxu0 %v9139
    %9141 = vmatprep.subr.mxu0 0.0
    %v9142 = vand.u32 %v9124, 4294901760
    %9143 = vmatpush1.msra.mxu0 %v9142
    %9144 = vmatprep.subr.mxu0 0.0
    %v9145 = vand.u32 %v9125, 4294901760
    %9146 = vmatpush1.msra.mxu0 %v9145
    %9147 = vmatprep.subr.mxu0 0.0
    %v9148 = vand.u32 %v9126, 4294901760
    %9149 = vmatpush1.msra.mxu0 %v9148
    %9150 = vmatprep.subr.mxu0 0.0
    %9151 = vmatpush1.msra.mxu0 0.0
    %9152 = vmatprep.subr.mxu0 0.0
    %9153 = vmatpush1.msra.mxu0 0.0
    %9154 = vmatprep.subr.mxu0 0.0
    %9155 = vmatpush1.msra.mxu0 0.0
    %9156 = vmatprep.subr.mxu0 0.0
    %9157 = vmatpush1.msra.mxu0 0.0
    %9158 = vmatprep.subr.mxu0 0.0
    %9159 = vmatpush1.msra.mxu0 0.0
    %9160 = vmatprep.subr.mxu0 0.0
    %9161 = vmatpush1.msra.mxu0 0.0
    %9162 = vmatprep.subr.mxu0 0.0
    %9163 = vmatpush1.msra.mxu0 0.0
    %9164 = vmatprep.subr.mxu0 0.0
    %9165 = vmatpush1.msra.mxu0 0.0
    %9166 = vmatprep.subr.mxu0 0.0
    %9167 = vmatpush1.msra.mxu0 0.0
    %9168 = vmatprep.subr.mxu0 0.0
    %9169 = vmatpush1.msra.mxu0 0.0
    %9170 = vmatprep.subr.mxu0 0.0
    %9171 = vmatpush1.msra.mxu0 0.0
    %9172 = vmatprep.subr.mxu0 0.0
    %9173 = vmatpush1.msra.mxu0 0.0
    %9174 = vmatprep.subr.mxu0 0.0
    %9175 = vmatpush1.msra.mxu0 0.0
    %9176 = vmatprep.subr.mxu0 0.0
    %9177 = vmatpush1.msra.mxu0 0.0
    %9178 = vmatprep.subr.mxu0 0.0
    %9179 = vmatpush1.msra.mxu0 0.0
    %9180 = vmatprep.subr.mxu0 0.0
    %9181 = vmatpush1.msra.mxu0 0.0
    %9182 = vmatprep.subr.mxu0 0.0
    %9183 = vmatpush1.msra.mxu0 0.0
    %9184 = vmatprep.subr.mxu0 0.0
    %9185 = vmatpush1.msra.mxu0 0.0
    %9186 = vmatprep.subr.mxu0 0.0
    %9187 = vmatpush1.msra.mxu0 0.0
    %9188 = vmatprep.subr.mxu0 0.0
    %9189 = vmatpush1.msra.mxu0 0.0
    %9190 = vmatprep.subr.mxu0 0.0
    %9191 = vmatpush1.msra.mxu0 0.0
    %9192 = vmatprep.subr.mxu0 0.0
    %9193 = vmatpush1.msra.mxu0 0.0
    %9194 = vmatprep.subr.mxu0 0.0
    %9195 = vmatpush1.msra.mxu0 0.0
    %9196 = vmatprep.subr.mxu0 0.0
    %9197 = vmatpush1.msra.mxu0 0.0
    %9198 = vmatprep.subr.mxu0 0.0
    %9199 = vmatpush1.msra.mxu0 0.0
    %9200 = vmatprep.subr.mxu0 0.0
    %9201 = vmatpush1.msra.mxu0 0.0
    %9202 = vmatprep.subr.mxu0 0.0
    %9203 = vmatpush1.msra.mxu0 0.0
    %9204 = vmatprep.subr.mxu0 0.0
    %9205 = vmatpush1.msra.mxu0 0.0
    %9206 = vmatprep.mubr.f32.mxu0 0.0
    %v9207 = vand.u32 %v9133, 4294901760
    %v9208 = vsub.f32 %v9133, %v9207
    %v9209 = vand.u32 %v9208, 4294901760
    %v9210 = vsub.f32 %v9208, %v9209
    %v9211 = vand.u32 %v9210, 4294901760
    %9212 = vmatmul.mubr.f32.gmra.mrb[0].mxu0 %v9211
    %v9213 = vpop.f32.mrb[0].mxu0
    %v9214 = vadd.f32 %v9131, %v9213
    %v9215 = vpop.f32.mrb[0].mxu0
    %9216 = vmatprep.mubr.f32.mxu0 0.0
    %v9217 = vand.u32 %v9136, 4294901760
    %v9218 = vsub.f32 %v9136, %v9217
    %v9219 = vand.u32 %v9218, 4294901760
    %v9220 = vsub.f32 %v9218, %v9219
    %v9221 = vand.u32 %v9220, 4294901760
    %9222 = vmatmul.mubr.f32.gmra.mrb[0].mxu0 %v9221
    %v9223 = vpop.f32.mrb[0].mxu0
    %v9224 = vadd.f32 %v9131, %v9223
    %v9225 = vpop.f32.mrb[0].mxu0
    %9226 = vdwg.mxu0
    %9227 = vmatprep.subr.mxu0 0.0
    %v9228 = vand.u32 %v9123, 4294901760
    %v9229 = vsub.f32 %v9123, %v9228
    %v9230 = vand.u32 %v9229, 4294901760
    %v9231 = vsub.f32 %v9229, %v9230
    %v9232 = vand.u32 %v9231, 4294901760
    %9233 = vmatpush1.msra.mxu0 %v9232
    %9234 = vmatprep.subr.mxu0 0.0
    %v9235 = vand.u32 %v9124, 4294901760
    %v9236 = vsub.f32 %v9124, %v9235
    %v9237 = vand.u32 %v9236, 4294901760
    %v9238 = vsub.f32 %v9236, %v9237
    %v9239 = vand.u32 %v9238, 4294901760
    %9240 = vmatpush1.msra.mxu0 %v9239
    %9241 = vmatprep.subr.mxu0 0.0
    %v9242 = vand.u32 %v9125, 4294901760
    %v9243 = vsub.f32 %v9125, %v9242
    %v9244 = vand.u32 %v9243, 4294901760
    %v9245 = vsub.f32 %v9243, %v9244
    %v9246 = vand.u32 %v9245, 4294901760
    %9247 = vmatpush1.msra.mxu0 %v9246
    %9248 = vmatprep.subr.mxu0 0.0
    %v9249 = vand.u32 %v9126, 4294901760
    %v9250 = vsub.f32 %v9126, %v9249
    %v9251 = vand.u32 %v9250, 4294901760
    %v9252 = vsub.f32 %v9250, %v9251
    %v9253 = vand.u32 %v9252, 4294901760
    %9254 = vmatpush1.msra.mxu0 %v9253
    %9255 = vmatprep.subr.mxu0 0.0
    %9256 = vmatpush1.msra.mxu0 0.0
    %9257 = vmatprep.subr.mxu0 0.0
    %9258 = vmatpush1.msra.mxu0 0.0
    %9259 = vmatprep.subr.mxu0 0.0
    %9260 = vmatpush1.msra.mxu0 0.0
    %9261 = vmatprep.subr.mxu0 0.0
    %9262 = vmatpush1.msra.mxu0 0.0
    %9263 = vmatprep.subr.mxu0 0.0
    %9264 = vmatpush1.msra.mxu0 0.0
    %9265 = vmatprep.subr.mxu0 0.0
    %9266 = vmatpush1.msra.mxu0 0.0
    %9267 = vmatprep.subr.mxu0 0.0
    %9268 = vmatpush1.msra.mxu0 0.0
    %9269 = vmatprep.subr.mxu0 0.0
    %9270 = vmatpush1.msra.mxu0 0.0
    %9271 = vmatprep.subr.mxu0 0.0
    %9272 = vmatpush1.msra.mxu0 0.0
    %9273 = vmatprep.subr.mxu0 0.0
    %9274 = vmatpush1.msra.mxu0 0.0
    %9275 = vmatprep.subr.mxu0 0.0
    %9276 = vmatpush1.msra.mxu0 0.0
    %9277 = vmatprep.subr.mxu0 0.0
    %9278 = vmatpush1.msra.mxu0 0.0
    %9279 = vmatprep.subr.mxu0 0.0
    %9280 = vmatpush1.msra.mxu0 0.0
    %9281 = vmatprep.subr.mxu0 0.0
    %9282 = vmatpush1.msra.mxu0 0.0
    %9283 = vmatprep.subr.mxu0 0.0
    %9284 = vmatpush1.msra.mxu0 0.0
    %9285 = vmatprep.subr.mxu0 0.0
    %9286 = vmatpush1.msra.mxu0 0.0
    %9287 = vmatprep.subr.mxu0 0.0
    %9288 = vmatpush1.msra.mxu0 0.0
    %9289 = vmatprep.subr.mxu0 0.0
    %9290 = vmatpush1.msra.mxu0 0.0
    %9291 = vmatprep.subr.mxu0 0.0
    %9292 = vmatpush1.msra.mxu0 0.0
    %9293 = vmatprep.subr.mxu0 0.0
    %9294 = vmatpush1.msra.mxu0 0.0
    %9295 = vmatprep.subr.mxu0 0.0
    %9296 = vmatpush1.msra.mxu0 0.0
    %9297 = vmatprep.subr.mxu0 0.0
    %9298 = vmatpush1.msra.mxu0 0.0
    %9299 = vmatprep.subr.mxu0 0.0
    %9300 = vmatpush1.msra.mxu0 0.0
    %9301 = vmatprep.subr.mxu0 0.0
    %9302 = vmatpush1.msra.mxu0 0.0
    %9303 = vmatprep.subr.mxu0 0.0
    %9304 = vmatpush1.msra.mxu0 0.0
    %9305 = vmatprep.subr.mxu0 0.0
    %9306 = vmatpush1.msra.mxu0 0.0
    %9307 = vmatprep.subr.mxu0 0.0
    %9308 = vmatpush1.msra.mxu0 0.0
    %9309 = vmatprep.subr.mxu0 0.0
    %9310 = vmatpush1.msra.mxu0 0.0
    %9311 = vmatprep.mubr.f32.mxu0 0.0
    %v9312 = vand.u32 %v9133, 4294901760
    %9313 = vmatmul.mubr.f32.gmra.mrb[0].mxu0 %v9312
    %v9314 = vpop.f32.mrb[0].mxu0
    %v9315 = vadd.f32 %v9214, %v9314
    %v9316 = vpop.f32.mrb[0].mxu0
    %9317 = vmatprep.mubr.f32.mxu0 0.0
    %v9318 = vand.u32 %v9136, 4294901760
    %9319 = vmatmul.mubr.f32.gmra.mrb[0].mxu0 %v9318
    %v9320 = vpop.f32.mrb[0].mxu0
    %v9321 = vadd.f32 %v9224, %v9320
    %v9322 = vpop.f32.mrb[0].mxu0
    %9323 = vdwg.mxu0
    %9324 = vmatprep.subr.mxu0 0.0
    %v9325 = vand.u32 %v9123, 4294901760
    %v9326 = vsub.f32 %v9123, %v9325
    %9327 = vmatpush1.msra.mxu0 %v9326
    %9328 = vmatprep.subr.mxu0 0.0
    %v9329 = vand.u32 %v9124, 4294901760
    %v9330 = vsub.f32 %v9124, %v9329
    %9331 = vmatpush1.msra.mxu0 %v9330
    %9332 = vmatprep.subr.mxu0 0.0
    %v9333 = vand.u32 %v9125, 4294901760
    %v9334 = vsub.f32 %v9125, %v9333
    %9335 = vmatpush1.msra.mxu0 %v9334
    %9336 = vmatprep.subr.mxu0 0.0
    %v9337 = vand.u32 %v9126, 4294901760
    %v9338 = vsub.f32 %v9126, %v9337
    %9339 = vmatpush1.msra.mxu0 %v9338
    %9340 = vmatprep.subr.mxu0 0.0
    %9341 = vmatpush1.msra.mxu0 0.0
    %9342 = vmatprep.subr.mxu0 0.0
    %9343 = vmatpush1.msra.mxu0 0.0
    %9344 = vmatprep.subr.mxu0 0.0
    %9345 = vmatpush1.msra.mxu0 0.0
    %9346 = vmatprep.subr.mxu0 0.0
    %9347 = vmatpush1.msra.mxu0 0.0
    %9348 = vmatprep.subr.mxu0 0.0
    %9349 = vmatpush1.msra.mxu0 0.0
    %9350 = vmatprep.subr.mxu0 0.0
    %9351 = vmatpush1.msra.mxu0 0.0
    %9352 = vmatprep.subr.mxu0 0.0
    %9353 = vmatpush1.msra.mxu0 0.0
    %9354 = vmatprep.subr.mxu0 0.0
    %9355 = vmatpush1.msra.mxu0 0.0
    %9356 = vmatprep.subr.mxu0 0.0
    %9357 = vmatpush1.msra.mxu0 0.0
    %9358 = vmatprep.subr.mxu0 0.0
    %9359 = vmatpush1.msra.mxu0 0.0
    %9360 = vmatprep.subr.mxu0 0.0
    %9361 = vmatpush1.msra.mxu0 0.0
    %9362 = vmatprep.subr.mxu0 0.0
    %9363 = vmatpush1.msra.mxu0 0.0
    %9364 = vmatprep.subr.mxu0 0.0
    %9365 = vmatpush1.msra.mxu0 0.0
    %9366 = vmatprep.subr.mxu0 0.0
    %9367 = vmatpush1.msra.mxu0 0.0
    %9368 = vmatprep.subr.mxu0 0.0
    %9369 = vmatpush1.msra.mxu0 0.0
    %9370 = vmatprep.subr.mxu0 0.0
    %9371 = vmatpush1.msra.mxu0 0.0
    %9372 = vmatprep.subr.mxu0 0.0
    %9373 = vmatpush1.msra.mxu0 0.0
    %9374 = vmatprep.subr.mxu0 0.0
    %9375 = vmatpush1.msra.mxu0 0.0
    %9376 = vmatprep.subr.mxu0 0.0
    %9377 = vmatpush1.msra.mxu0 0.0
    %9378 = vmatprep.subr.mxu0 0.0
    %9379 = vmatpush1.msra.mxu0 0.0
    %9380 = vmatprep.subr.mxu0 0.0
    %9381 = vmatpush1.msra.mxu0 0.0
    %9382 = vmatprep.subr.mxu0 0.0
    %9383 = vmatpush1.msra.mxu0 0.0
    %9384 = vmatprep.subr.mxu0 0.0
    %9385 = vmatpush1.msra.mxu0 0.0
    %9386 = vmatprep.subr.mxu0 0.0
    %9387 = vmatpush1.msra.mxu0 0.0
    %9388 = vmatprep.subr.mxu0 0.0
    %9389 = vmatpush1.msra.mxu0 0.0
    %9390 = vmatprep.subr.mxu0 0.0
    %9391 = vmatpush1.msra.mxu0 0.0
    %9392 = vmatprep.subr.mxu0 0.0
    %9393 = vmatpush1.msra.mxu0 0.0
    %9394 = vmatprep.subr.mxu0 0.0
    %9395 = vmatpush1.msra.mxu0 0.0
    %9396 = vmatprep.mubr.f32.mxu0 0.0
    %v9397 = vand.u32 %v9133, 4294901760
    %v9398 = vsub.f32 %v9133, %v9397
    %9399 = vmatmul.mubr.f32.gmra.mrb[0].mxu0 %v9398
    %v9400 = vpop.f32.mrb[0].mxu0
    %v9401 = vadd.f32 %v9315, %v9400
    %v9402 = vpop.f32.mrb[0].mxu0
    %9403 = vmatprep.mubr.f32.mxu0 0.0
    %v9404 = vand.u32 %v9136, 4294901760
    %v9405 = vsub.f32 %v9136, %v9404
    %9406 = vmatmul.mubr.f32.gmra.mrb[0].mxu0 %v9405
    %v9407 = vpop.f32.mrb[0].mxu0
    %v9408 = vadd.f32 %v9321, %v9407
    %v9409 = vpop.f32.mrb[0].mxu0
    %9410 = vdwg.mxu0
    %9411 = vmatprep.subr.mxu0 0.0
    %v9412 = vand.u32 %v9123, 4294901760
    %9413 = vmatpush1.msra.mxu0 %v9412
    %9414 = vmatprep.subr.mxu0 0.0
    %v9415 = vand.u32 %v9124, 4294901760
    %9416 = vmatpush1.msra.mxu0 %v9415
    %9417 = vmatprep.subr.mxu0 0.0
    %v9418 = vand.u32 %v9125, 4294901760
    %9419 = vmatpush1.msra.mxu0 %v9418
    %9420 = vmatprep.subr.mxu0 0.0
    %v9421 = vand.u32 %v9126, 4294901760
    %9422 = vmatpush1.msra.mxu0 %v9421
    %9423 = vmatprep.subr.mxu0 0.0
    %9424 = vmatpush1.msra.mxu0 0.0
    %9425 = vmatprep.subr.mxu0 0.0
    %9426 = vmatpush1.msra.mxu0 0.0
    %9427 = vmatprep.subr.mxu0 0.0
    %9428 = vmatpush1.msra.mxu0 0.0
    %9429 = vmatprep.subr.mxu0 0.0
    %9430 = vmatpush1.msra.mxu0 0.0
    %9431 = vmatprep.subr.mxu0 0.0
    %9432 = vmatpush1.msra.mxu0 0.0
    %9433 = vmatprep.subr.mxu0 0.0
    %9434 = vmatpush1.msra.mxu0 0.0
    %9435 = vmatprep.subr.mxu0 0.0
    %9436 = vmatpush1.msra.mxu0 0.0
    %9437 = vmatprep.subr.mxu0 0.0
    %9438 = vmatpush1.msra.mxu0 0.0
    %9439 = vmatprep.subr.mxu0 0.0
    %9440 = vmatpush1.msra.mxu0 0.0
    %9441 = vmatprep.subr.mxu0 0.0
    %9442 = vmatpush1.msra.mxu0 0.0
    %9443 = vmatprep.subr.mxu0 0.0
    %9444 = vmatpush1.msra.mxu0 0.0
    %9445 = vmatprep.subr.mxu0 0.0
    %9446 = vmatpush1.msra.mxu0 0.0
    %9447 = vmatprep.subr.mxu0 0.0
    %9448 = vmatpush1.msra.mxu0 0.0
    %9449 = vmatprep.subr.mxu0 0.0
    %9450 = vmatpush1.msra.mxu0 0.0
    %9451 = vmatprep.subr.mxu0 0.0
    %9452 = vmatpush1.msra.mxu0 0.0
    %9453 = vmatprep.subr.mxu0 0.0
    %9454 = vmatpush1.msra.mxu0 0.0
    %9455 = vmatprep.subr.mxu0 0.0
    %9456 = vmatpush1.msra.mxu0 0.0
    %9457 = vmatprep.subr.mxu0 0.0
    %9458 = vmatpush1.msra.mxu0 0.0
    %9459 = vmatprep.subr.mxu0 0.0
    %9460 = vmatpush1.msra.mxu0 0.0
    %9461 = vmatprep.subr.mxu0 0.0
    %9462 = vmatpush1.msra.mxu0 0.0
    %9463 = vmatprep.subr.mxu0 0.0
    %9464 = vmatpush1.msra.mxu0 0.0
    %9465 = vmatprep.subr.mxu0 0.0
    %9466 = vmatpush1.msra.mxu0 0.0
    %9467 = vmatprep.subr.mxu0 0.0
    %9468 = vmatpush1.msra.mxu0 0.0
    %9469 = vmatprep.subr.mxu0 0.0
    %9470 = vmatpush1.msra.mxu0 0.0
    %9471 = vmatprep.subr.mxu0 0.0
    %9472 = vmatpush1.msra.mxu0 0.0
    %9473 = vmatprep.subr.mxu0 0.0
    %9474 = vmatpush1.msra.mxu0 0.0
    %9475 = vmatprep.subr.mxu0 0.0
    %9476 = vmatpush1.msra.mxu0 0.0
    %9477 = vmatprep.subr.mxu0 0.0
    %9478 = vmatpush1.msra.mxu0 0.0
    %9479 = vmatprep.mubr.f32.mxu0 0.0
    %v9480 = vand.u32 %v9133, 4294901760
    %v9481 = vsub.f32 %v9133, %v9480
    %v9482 = vand.u32 %v9481, 4294901760
    %9483 = vmatmul.mubr.f32.gmra.mrb[0].mxu0 %v9482
    %v9484 = vpop.f32.mrb[0].mxu0
    %v9485 = vadd.f32 %v9401, %v9484
    %v9486 = vpop.f32.mrb[0].mxu0
    %9487 = vmatprep.mubr.f32.mxu0 0.0
    %v9488 = vand.u32 %v9136, 4294901760
    %v9489 = vsub.f32 %v9136, %v9488
    %v9490 = vand.u32 %v9489, 4294901760
    %9491 = vmatmul.mubr.f32.gmra.mrb[0].mxu0 %v9490
    %v9492 = vpop.f32.mrb[0].mxu0
    %v9493 = vadd.f32 %v9408, %v9492
    %v9494 = vpop.f32.mrb[0].mxu0
    %9495 = vdwg.mxu0
    %9496 = vmatprep.subr.mxu0 0.0
    %v9497 = vand.u32 %v9123, 4294901760
    %v9498 = vsub.f32 %v9123, %v9497
    %v9499 = vand.u32 %v9498, 4294901760
    %9500 = vmatpush1.msra.mxu0 %v9499
    %9501 = vmatprep.subr.mxu0 0.0
    %v9502 = vand.u32 %v9124, 4294901760
    %v9503 = vsub.f32 %v9124, %v9502
    %v9504 = vand.u32 %v9503, 4294901760
    %9505 = vmatpush1.msra.mxu0 %v9504
    %9506 = vmatprep.subr.mxu0 0.0
    %v9507 = vand.u32 %v9125, 4294901760
    %v9508 = vsub.f32 %v9125, %v9507
    %v9509 = vand.u32 %v9508, 4294901760
    %9510 = vmatpush1.msra.mxu0 %v9509
    %9511 = vmatprep.subr.mxu0 0.0
    %v9512 = vand.u32 %v9126, 4294901760
    %v9513 = vsub.f32 %v9126, %v9512
    %v9514 = vand.u32 %v9513, 4294901760
    %9515 = vmatpush1.msra.mxu0 %v9514
    %9516 = vmatprep.subr.mxu0 0.0
    %9517 = vmatpush1.msra.mxu0 0.0
    %9518 = vmatprep.subr.mxu0 0.0
    %9519 = vmatpush1.msra.mxu0 0.0
    %9520 = vmatprep.subr.mxu0 0.0
    %9521 = vmatpush1.msra.mxu0 0.0
    %9522 = vmatprep.subr.mxu0 0.0
    %9523 = vmatpush1.msra.mxu0 0.0
    %9524 = vmatprep.subr.mxu0 0.0
    %9525 = vmatpush1.msra.mxu0 0.0
    %9526 = vmatprep.subr.mxu0 0.0
    %9527 = vmatpush1.msra.mxu0 0.0
    %9528 = vmatprep.subr.mxu0 0.0
    %9529 = vmatpush1.msra.mxu0 0.0
    %9530 = vmatprep.subr.mxu0 0.0
    %9531 = vmatpush1.msra.mxu0 0.0
    %9532 = vmatprep.subr.mxu0 0.0
    %9533 = vmatpush1.msra.mxu0 0.0
    %9534 = vmatprep.subr.mxu0 0.0
    %9535 = vmatpush1.msra.mxu0 0.0
    %9536 = vmatprep.subr.mxu0 0.0
    %9537 = vmatpush1.msra.mxu0 0.0
    %9538 = vmatprep.subr.mxu0 0.0
    %9539 = vmatpush1.msra.mxu0 0.0
    %9540 = vmatprep.subr.mxu0 0.0
    %9541 = vmatpush1.msra.mxu0 0.0
    %9542 = vmatprep.subr.mxu0 0.0
    %9543 = vmatpush1.msra.mxu0 0.0
    %9544 = vmatprep.subr.mxu0 0.0
    %9545 = vmatpush1.msra.mxu0 0.0
    %9546 = vmatprep.subr.mxu0 0.0
    %9547 = vmatpush1.msra.mxu0 0.0
    %9548 = vmatprep.subr.mxu0 0.0
    %9549 = vmatpush1.msra.mxu0 0.0
    %9550 = vmatprep.subr.mxu0 0.0
    %9551 = vmatpush1.msra.mxu0 0.0
    %9552 = vmatprep.subr.mxu0 0.0
    %9553 = vmatpush1.msra.mxu0 0.0
    %9554 = vmatprep.subr.mxu0 0.0
    %9555 = vmatpush1.msra.mxu0 0.0
    %9556 = vmatprep.subr.mxu0 0.0
    %9557 = vmatpush1.msra.mxu0 0.0
    %9558 = vmatprep.subr.mxu0 0.0
    %9559 = vmatpush1.msra.mxu0 0.0
    %9560 = vmatprep.subr.mxu0 0.0
    %9561 = vmatpush1.msra.mxu0 0.0
    %9562 = vmatprep.subr.mxu0 0.0
    %9563 = vmatpush1.msra.mxu0 0.0
    %9564 = vmatprep.subr.mxu0 0.0
    %9565 = vmatpush1.msra.mxu0 0.0
    %9566 = vmatprep.subr.mxu0 0.0
    %9567 = vmatpush1.msra.mxu0 0.0
    %9568 = vmatprep.subr.mxu0 0.0
    %9569 = vmatpush1.msra.mxu0 0.0
    %9570 = vmatprep.subr.mxu0 0.0
    %9571 = vmatpush1.msra.mxu0 0.0
    %9572 = vmatprep.mubr.f32.mxu0 0.0
    %v9573 = vand.u32 %v9133, 4294901760
    %9574 = vmatmul.mubr.f32.gmra.mrb[0].mxu0 %v9573
    %v9575 = vpop.f32.mrb[0].mxu0
    %v9576 = vadd.f32 %v9485, %v9575
    %v9577 = vpop.f32.mrb[0].mxu0
    %9578 = vmatprep.mubr.f32.mxu0 0.0
    %v9579 = vand.u32 %v9136, 4294901760
    %9580 = vmatmul.mubr.f32.gmra.mrb[0].mxu0 %v9579
    %v9581 = vpop.f32.mrb[0].mxu0
    %v9582 = vadd.f32 %v9493, %v9581
    %v9583 = vpop.f32.mrb[0].mxu0
    %9584 = vdwg.mxu0
    %9585 = vmatprep.subr.mxu0 0.0
    %v9586 = vand.u32 %v9123, 4294901760
    %9587 = vmatpush1.msra.mxu0 %v9586
    %9588 = vmatprep.subr.mxu0 0.0
    %v9589 = vand.u32 %v9124, 4294901760
    %9590 = vmatpush1.msra.mxu0 %v9589
    %9591 = vmatprep.subr.mxu0 0.0
    %v9592 = vand.u32 %v9125, 4294901760
    %9593 = vmatpush1.msra.mxu0 %v9592
    %9594 = vmatprep.subr.mxu0 0.0
    %v9595 = vand.u32 %v9126, 4294901760
    %9596 = vmatpush1.msra.mxu0 %v9595
    %9597 = vmatprep.subr.mxu0 0.0
    %9598 = vmatpush1.msra.mxu0 0.0
    %9599 = vmatprep.subr.mxu0 0.0
    %9600 = vmatpush1.msra.mxu0 0.0
    %9601 = vmatprep.subr.mxu0 0.0
    %9602 = vmatpush1.msra.mxu0 0.0
    %9603 = vmatprep.subr.mxu0 0.0
    %9604 = vmatpush1.msra.mxu0 0.0
    %9605 = vmatprep.subr.mxu0 0.0
    %9606 = vmatpush1.msra.mxu0 0.0
    %9607 = vmatprep.subr.mxu0 0.0
    %9608 = vmatpush1.msra.mxu0 0.0
    %9609 = vmatprep.subr.mxu0 0.0
    %9610 = vmatpush1.msra.mxu0 0.0
    %9611 = vmatprep.subr.mxu0 0.0
    %9612 = vmatpush1.msra.mxu0 0.0
    %9613 = vmatprep.subr.mxu0 0.0
    %9614 = vmatpush1.msra.mxu0 0.0
    %9615 = vmatprep.subr.mxu0 0.0
    %9616 = vmatpush1.msra.mxu0 0.0
    %9617 = vmatprep.subr.mxu0 0.0
    %9618 = vmatpush1.msra.mxu0 0.0
    %9619 = vmatprep.subr.mxu0 0.0
    %9620 = vmatpush1.msra.mxu0 0.0
    %9621 = vmatprep.subr.mxu0 0.0
    %9622 = vmatpush1.msra.mxu0 0.0
    %9623 = vmatprep.subr.mxu0 0.0
    %9624 = vmatpush1.msra.mxu0 0.0
    %9625 = vmatprep.subr.mxu0 0.0
    %9626 = vmatpush1.msra.mxu0 0.0
    %9627 = vmatprep.subr.mxu0 0.0
    %9628 = vmatpush1.msra.mxu0 0.0
    %9629 = vmatprep.subr.mxu0 0.0
    %9630 = vmatpush1.msra.mxu0 0.0
    %9631 = vmatprep.subr.mxu0 0.0
    %9632 = vmatpush1.msra.mxu0 0.0
    %9633 = vmatprep.subr.mxu0 0.0
    %9634 = vmatpush1.msra.mxu0 0.0
    %9635 = vmatprep.subr.mxu0 0.0
    %9636 = vmatpush1.msra.mxu0 0.0
    %9637 = vmatprep.subr.mxu0 0.0
    %9638 = vmatpush1.msra.mxu0 0.0
    %9639 = vmatprep.subr.mxu0 0.0
    %9640 = vmatpush1.msra.mxu0 0.0
    %9641 = vmatprep.subr.mxu0 0.0
    %9642 = vmatpush1.msra.mxu0 0.0
    %9643 = vmatprep.subr.mxu0 0.0
    %9644 = vmatpush1.msra.mxu0 0.0
    %9645 = vmatprep.subr.mxu0 0.0
    %9646 = vmatpush1.msra.mxu0 0.0
    %9647 = vmatprep.subr.mxu0 0.0
    %9648 = vmatpush1.msra.mxu0 0.0
    %9649 = vmatprep.subr.mxu0 0.0
    %9650 = vmatpush1.msra.mxu0 0.0
    %9651 = vmatprep.subr.mxu0 0.0
    %9652 = vmatpush1.msra.mxu0 0.0
    %9653 = vmatprep.mubr.f32.mxu0 0.0
    %v9654 = vand.u32 %v9133, 4294901760
    %9655 = vmatmul.mubr.f32.gmra.mrb[0].mxu0 %v9654
    %v9656 = vpop.f32.mrb[0].mxu0
    %v9657 = vadd.f32 %v9576, %v9656
    %v9658 = vpop.f32.mrb[0].mxu0
    %9659 = vmatprep.mubr.f32.mxu0 0.0
    %v9660 = vand.u32 %v9136, 4294901760
    %9661 = vmatmul.mubr.f32.gmra.mrb[0].mxu0 %v9660
    %v9662 = vpop.f32.mrb[0].mxu0
    %v9663 = vadd.f32 %v9582, %v9662
    %v9664 = vpop.f32.mrb[0].mxu0
    %9665 = vdwg.mxu0
    %9666 = vst.msk [vmem:[#allocation13] sm:$0xff] %vm126, %v9657
    %9667 = vst.msk [vmem:[#allocation13 + $0x8] sm:$0xff] %vm126, %v9663
    // Predicated region
    $region58: #{mha_forward.1} parent=1 // pred_check
      _
    $region59: #{mha_forward.1} parent=1 // pred_check_branch
      %9669 = sbr.rel (0) target = $region61
    $region60: #{mha_forward.1} parent=1 // pred_region
      %s9671 = ssub.s32 256, 256
      %9672 = vsyncadd [#allocation4], %s9671
      %s9673 = sshll.u32 [#allocation13], 4
      %s9674 = int_to_ptr.vmem [resolvable:$true] %s9673
      %9679 = dma.vmem_to_hbm [thread:$0]  %s9674, 256, %s8, [#allocation4], 128, 128, 8
    $region61: #{mha_forward.1} parent=1 // pred_fallthru
      _
    // Predicated region
    $region62: #{mha_forward.1} parent=1 // pred_check
      _
    $region63: #{mha_forward.1} parent=1 // pred_check_branch
      %9681 = sbr.rel (0) target = $region65
    $region64: #{mha_forward.1} parent=1 // pred_region
      %s9683 = ssub.s32 1024, 1024
      %9684 = vsyncadd [#allocation15], %s9683
      %s9685 = sshll.u32 [#allocation14], 4
      %s9686 = int_to_ptr.vmem [resolvable:$true] %s9685
      %9691 = dma.vmem_to_hbm [thread:$0]  %s9686, 1024, %s9, [#allocation15], 128, 128, 8
    $region65: #{mha_forward.1} parent=1 // pred_fallthru
      _
    // Predicated region
    $region66: #{mha_forward.1} parent=1 // pred_check
      _
    $region67: #{mha_forward.1} parent=1 // pred_check_branch
      %9693 = sbr.rel (0) target = $region69
    $region68: #{mha_forward.1} parent=1 // pred_region
      %9694 = dma.done [#allocation4], 256
    $region69: #{mha_forward.1} parent=1 // pred_fallthru
      _
    // Predicated region
    $region70: #{mha_forward.1} parent=1 // pred_check
      _
    $region71: #{mha_forward.1} parent=1 // pred_check_branch
      %9696 = sbr.rel (0) target = $region73
    $region72: #{mha_forward.1} parent=1 // pred_region
      %9697 = dma.done [#allocation15], 1024
    $region73: #{mha_forward.1} parent=1 // pred_fallthru
      _
    %9698 = vsyncpa [#allocation3], 1
    %9699 = vsyncpa [#allocation6], 1
    %9700 = vsyncpa [#allocation9], 1
    %9701 = vsyncpa [#allocation12], 1
    %9702 = vsyncpa [#allocation4], 1
    %9703 = vsyncpa [#allocation15], 1

</llo_original>
